<compile_context>
chip_gen: v6e
topology: v6e:2x2x1
jax: 0.10.0
libtpu: 0.0.40
codegen_flags: <defaults>
</compile_context>

<pallas_src>
import functools

import jax
import jax.numpy as jnp
import numpy as np
from jax.experimental import pallas as pl
from jax.experimental.pallas import tpu as pltpu

# ----------------------- model configuration (small) -----------------------
IMAGE_SIZE = 32
PATCH = 4
CHANNELS = 3
DIM = 32
DEPTH = 2
HEADS = 4
DIM_HEAD = DIM // HEADS          # module's reshape assumes dim_head == dim // heads
MLP_DIM = 64
NUM_CLASSES = 10
BATCH = 2

N = (IMAGE_SIZE // PATCH) ** 2   # 64 patches  (> MIN_NUM_PATCHES = 16)
S = N + 1                        # +1 cls token
PATCH_DIM = CHANNELS * PATCH * PATCH
INNER = HEADS * DIM_HEAD
SCALE = DIM_HEAD ** -0.5
LN_EPS = 1e-5


# ------------------------------ kernel helpers ------------------------------
def _layernorm(x, g, b):
    mu = jnp.mean(x, axis=-1, keepdims=True)
    var = jnp.mean((x - mu) ** 2, axis=-1, keepdims=True)
    return (x - mu) * jax.lax.rsqrt(var + LN_EPS) * g + b


def _erf(x):
    # Abramowitz & Stegun 7.1.26 rational approximation (|err| < 1.5e-7),
    # built only from ops that lower cleanly in Mosaic (exp / mul / add).
    a1, a2, a3, a4, a5 = 0.254829592, -0.284496736, 1.421413741, -1.453152027, 1.061405429
    p = 0.3275911
    ax = jnp.abs(x)
    t = 1.0 / (1.0 + p * ax)
    poly = ((((a5 * t + a4) * t + a3) * t + a2) * t + a1) * t
    y = 1.0 - poly * jnp.exp(-ax * ax)
    return jnp.where(x >= 0, y, -y)


def _gelu_exact(x):
    # matches torch.nn.GELU() (erf formulation)
    return 0.5 * x * (1.0 + _erf(x * (1.0 / np.sqrt(2.0))))


def _softmax_last(x):
    x = x - jnp.max(x, axis=-1, keepdims=True)
    e = jnp.exp(x)
    # divide -> EUP approx reciprocal (frees the saturating VALU slot)
    return e * pl.reciprocal(jnp.sum(e, axis=-1, keepdims=True), approx=True)


# --------------------------------- kernel -----------------------------------
def vit_kernel(b_tile,
               patches_ref, pe_w_ref, pe_b_ref, cls_ref, pos_ref,
               ln1g_ref, ln1b_ref, qkvw_ref, qkvb_ref, ow_ref, ob_ref,
               ln2g_ref, ln2b_ref, f1w_ref, f1b_ref, f2w_ref, f2b_ref,
               dg_ref, db_ref, dw_ref, dbias_ref,
               o_ref):
    # ---- patch embedding for the whole batch tile (folded rows) ----
    patches = patches_ref[0]                                  # (b_tile*N, PATCH_DIM)
    emb = jnp.dot(patches, pe_w_ref[...],
                  preferred_element_type=jnp.float32) + pe_b_ref[...]   # (b_tile*N, DIM)

    # ---- prepend cls token + positional embedding, kept as an SSA value ----
    pos = pos_ref[...]                                        # (S, DIM)
    cls_row = cls_ref[...] + pos[0:1, :]                      # (1, DIM)
    pieces = []
    for b in range(b_tile):
        pieces.append(cls_row)
        pieces.append(emb[b * N:(b + 1) * N, :] + pos[1:, :])
    x = jnp.concatenate(pieces, axis=0)                       # (b_tile*S, DIM)

    # ---- transformer blocks ----
    for l in range(DEPTH):
        # --- attention (PreNorm + Residual) ---
        h = _layernorm(x, ln1g_ref[l:l + 1, :], ln1b_ref[l:l + 1, :])
        qkv = jnp.dot(h, qkvw_ref[l],
                      preferred_element_type=jnp.float32) + qkvb_ref[l:l + 1, :]
        # per-image / per-head scaled-dot-product attention (S x S softmax),
        # output projection fused into one matmul over all rows afterwards.
        per_image = []
        for b in range(b_tile):
            qkv_b = qkv[b * S:(b + 1) * S, :]                 # (S, 3*INNER)
            head_outs = []
            for hh in range(HEADS):
                qs = qkv_b[:, hh * DIM_HEAD:(hh + 1) * DIM_HEAD]
                ks = qkv_b[:, INNER + hh * DIM_HEAD:INNER + (hh + 1) * DIM_HEAD]
                vs = qkv_b[:, 2 * INNER + hh * DIM_HEAD:2 * INNER + (hh + 1) * DIM_HEAD]
                # q @ k.T without materializing a transpose
                logits = jax.lax.dot_general(
                    qs, ks, (((1,), (1,)), ((), ())),
                    preferred_element_type=jnp.float32) * SCALE
                probs = _softmax_last(logits)                 # (S, S)
                head_outs.append(jnp.dot(probs, vs,
                                         preferred_element_type=jnp.float32))
            per_image.append(jnp.concatenate(head_outs, axis=1))  # (S, INNER)
        heads_cat = jnp.concatenate(per_image, axis=0)             # (b_tile*S, INNER)
        attn_out = jnp.dot(heads_cat, ow_ref[l],
                           preferred_element_type=jnp.float32) + ob_ref[l:l + 1, :]
        x = x + attn_out

        # --- feed-forward (PreNorm + Residual) ---
        h = _layernorm(x, ln2g_ref[l:l + 1, :], ln2b_ref[l:l + 1, :])
        h1 = _gelu_exact(jnp.dot(h, f1w_ref[l],
                                 preferred_element_type=jnp.float32)
                         + f1b_ref[l:l + 1, :])
        h2 = jnp.dot(h1, f2w_ref[l],
                     preferred_element_type=jnp.float32) + f2b_ref[l:l + 1, :]
        x = x + h2

    # ---- classification decoder: cls token -> LayerNorm -> Linear ----
    cls_rows = jnp.concatenate([x[b * S:b * S + 1, :] for b in range(b_tile)],
                               axis=0)                        # (b_tile, DIM)
    c = _layernorm(cls_rows, dg_ref[...], db_ref[...])
    logits = jnp.dot(c, dw_ref[...],
                     preferred_element_type=jnp.float32) + dbias_ref[...]
    o_ref[0] = logits                                         # (b_tile, NUM_CLASSES)


# ------------------------------- wrapper -------------------------------------
def _rep_spec(shape):
    zeros = (0,) * len(shape)
    return pl.BlockSpec(shape, lambda b, zeros=zeros: zeros)


def _num_tensorcores_per_chip():
    # v7x has 2 TensorCores per chip; v5e/v6e have 1.  Safe fallback: 1.
    try:
        kind = jax.devices()[0].device_kind.lower()
    except Exception:
        return 1
    return 2 if ("v7" in kind or "v5p" in kind or "v4" in kind) else 1


def prepare_params(P):
    """Pre-transpose all weights ONCE so the kernel never computes `w.T`."""
    return {
        'pe_w': jnp.transpose(P['pe_w'], (1, 0)),          # (PATCH_DIM, DIM)
        'pe_b': P['pe_b'],
        'cls': P['cls'],
        'pos': P['pos'],
        'ln1_g': P['ln1_g'], 'ln1_b': P['ln1_b'],
        'qkv_w': jnp.transpose(P['qkv_w'], (0, 2, 1)),     # (DEPTH, DIM, 3*INNER)
        'qkv_b': P['qkv_b'],
        'out_w': jnp.transpose(P['out_w'], (0, 2, 1)),     # (DEPTH, INNER, DIM)
        'out_b': P['out_b'],
        'ln2_g': P['ln2_g'], 'ln2_b': P['ln2_b'],
        'ff1_w': jnp.transpose(P['ff1_w'], (0, 2, 1)),     # (DEPTH, DIM, MLP_DIM)
        'ff1_b': P['ff1_b'],
        'ff2_w': jnp.transpose(P['ff2_w'], (0, 2, 1)),     # (DEPTH, MLP_DIM, DIM)
        'ff2_b': P['ff2_b'],
        'dec_g': P['dec_g'], 'dec_b': P['dec_b'],
        'dec_w': jnp.transpose(P['dec_w'], (1, 0)),        # (DIM, NUM_CLASSES)
        'dec_bias': P['dec_bias'],
    }


def vit_forward(img, PT, batch_tile=None):
    """PT: pre-transposed params (see prepare_params)."""
    B = img.shape[0]
    p = PATCH

    if batch_tile is None:
        ntc = _num_tensorcores_per_chip()
        if ntc > 1 and B % ntc == 0:
            batch_tile = B // ntc        # keep both TensorCores busy on v7x
        else:
            batch_tile = B               # single TC: fold the whole batch
    assert B % batch_tile == 0
    num_blocks = B // batch_tile
    rows = batch_tile * N

    # patchify (glue, plain JAX) — matches torch reshape/permute/reshape
    patches = img.reshape(B, CHANNELS, IMAGE_SIZE // p, p, IMAGE_SIZE // p, p)
    patches = patches.transpose(0, 2, 4, 3, 5, 1).reshape(B, N, PATCH_DIM)
    patches = patches.reshape(num_blocks, rows, PATCH_DIM)

    inputs = [patches,
              PT['pe_w'], PT['pe_b'], PT['cls'], PT['pos'],
              PT['ln1_g'], PT['ln1_b'], PT['qkv_w'], PT['qkv_b'],
              PT['out_w'], PT['out_b'],
              PT['ln2_g'], PT['ln2_b'], PT['ff1_w'], PT['ff1_b'],
              PT['ff2_w'], PT['ff2_b'],
              PT['dec_g'], PT['dec_b'], PT['dec_w'], PT['dec_bias']]

    in_specs = [pl.BlockSpec((1, rows, PATCH_DIM), lambda b: (b, 0, 0))]
    in_specs += [_rep_spec(a.shape) for a in inputs[1:]]

    out = pl.pallas_call(
        functools.partial(vit_kernel, batch_tile),
        out_shape=jax.ShapeDtypeStruct((num_blocks, batch_tile, NUM_CLASSES),
                                       jnp.float32),
        grid_spec=pltpu.PrefetchScalarGridSpec(
            num_scalar_prefetch=0,
            grid=(num_blocks,),
            in_specs=in_specs,
            out_specs=pl.BlockSpec((1, batch_tile, NUM_CLASSES),
                                   lambda b: (b, 0, 0)),
        ),
        compiler_params=pltpu.CompilerParams(dimension_semantics=("parallel",)),
    )(*inputs)
    return out.reshape(B, NUM_CLASSES)


# --------------------------- reference (pure JAX) ----------------------------
def vit_reference(img, P):
    B = img.shape[0]
    p = PATCH
    x = img.reshape(B, CHANNELS, IMAGE_SIZE // p, p, IMAGE_SIZE // p, p)
    x = x.transpose(0, 2, 4, 3, 5, 1).reshape(B, N, PATCH_DIM)
    x = x @ P['pe_w'].T + P['pe_b']
    cls = jnp.broadcast_to(P['cls'][None], (B, 1, DIM))
    x = jnp.concatenate([cls, x], axis=1) + P['pos'][None]

    def ln(t, g, b):
        mu = t.mean(-1, keepdims=True)
        var = ((t - mu) ** 2).mean(-1, keepdims=True)
        return (t - mu) / jnp.sqrt(var + LN_EPS) * g + b

    for l in range(DEPTH):
        h = ln(x, P['ln1_g'][l], P['ln1_b'][l])
        qkv = h @ P['qkv_w'][l].T + P['qkv_b'][l]
        qkv = qkv.reshape(B, S, 3, HEADS, DIM_HEAD).transpose(2, 0, 3, 1, 4)
        q, k, v = qkv[0], qkv[1], qkv[2]
        attn = jnp.einsum('bhqd,bhkd->bhqk', q, k) * SCALE
        attn = jax.nn.softmax(attn, axis=-1)
        o = jnp.einsum('bhqk,bhkd->bhqd', attn, v)
        o = o.transpose(0, 2, 1, 3).reshape(B, S, INNER)
        o = o @ P['out_w'][l].T + P['out_b'][l]
        x = x + o
        h = ln(x, P['ln2_g'][l], P['ln2_b'][l])
        h1 = jax.nn.gelu(h @ P['ff1_w'][l].T + P['ff1_b'][l], approximate=False)
        x = x + (h1 @ P['ff2_w'][l].T + P['ff2_b'][l])

    c = x[:, 0]
    c = ln(c, P['dec_g'], P['dec_b'])
    return c @ P['dec_w'].T + P['dec_bias']


# ------------------------------ parameter init --------------------------------
def init_params(key):
    ks = iter(jax.random.split(key, 64))

    def rnd(shape, scale):
        return (scale * jax.random.normal(next(ks), shape)).astype(jnp.float32)

    P = {
        'pe_w': rnd((DIM, PATCH_DIM), 0.05),
        'pe_b': rnd((1, DIM), 0.01),
        'cls': rnd((1, DIM), 1.0),                  # torch.randn
        'pos': rnd((S, DIM), 1.0),                  # torch.randn
        'ln1_g': jnp.ones((DEPTH, DIM), jnp.float32),
        'ln1_b': jnp.zeros((DEPTH, DIM), jnp.float32),
        'qkv_w': rnd((DEPTH, 3 * INNER, DIM), 0.05),
        'qkv_b': rnd((DEPTH, 3 * INNER), 0.01),
        'out_w': rnd((DEPTH, DIM, INNER), 0.05),
        'out_b': rnd((DEPTH, DIM), 0.01),
        'ln2_g': jnp.ones((DEPTH, DIM), jnp.float32),
        'ln2_b': jnp.zeros((DEPTH, DIM), jnp.float32),
        'ff1_w': rnd((DEPTH, MLP_DIM, DIM), 0.05),
        'ff1_b': rnd((DEPTH, MLP_DIM), 0.01),
        'ff2_w': rnd((DEPTH, DIM, MLP_DIM), 0.05),
        'ff2_b': rnd((DEPTH, DIM), 0.01),
        'dec_g': jnp.ones((1, DIM), jnp.float32),
        'dec_b': jnp.zeros((1, DIM), jnp.float32),
        'dec_w': rnd((NUM_CLASSES, DIM), 0.05),
        'dec_bias': rnd((1, NUM_CLASSES), 0.01),
    }
    return P


# ---------------------------------- main -------------------------------------
if __name__ == "__main__":
    params = init_params(jax.random.PRNGKey(42))
    img = jax.random.normal(jax.random.PRNGKey(0),
                            (BATCH, CHANNELS, IMAGE_SIZE, IMAGE_SIZE),
                            dtype=jnp.float32)

    # one-time layout preparation (pre-transposed weights for the kernel)
    params_t = prepare_params(params)

    out = vit_forward(img, params_t)
    out = jax.block_until_ready(out)
    assert out.shape == (BATCH, NUM_CLASSES)

    ref = jax.block_until_ready(vit_reference(img, params))
    np.testing.assert_allclose(np.asarray(out), np.asarray(ref), atol=2e-2, rtol=2e-2)

    print("KERNEL_OK")
</pallas_src>

<mosaic_0001>
module attributes {stable_mosaic.version = 11 : i64} {
  func.func @vit_kernel(%arg0: i32, %arg1: memref<1x128x48xf32, #tpu.memory_space<vmem>>, %arg2: memref<48x32xf32, #tpu.memory_space<vmem>>, %arg3: memref<1x32xf32, #tpu.memory_space<vmem>>, %arg4: memref<1x32xf32, #tpu.memory_space<vmem>>, %arg5: memref<65x32xf32, #tpu.memory_space<vmem>>, %arg6: memref<2x32xf32, #tpu.memory_space<vmem>>, %arg7: memref<2x32xf32, #tpu.memory_space<vmem>>, %arg8: memref<2x32x96xf32, #tpu.memory_space<vmem>>, %arg9: memref<2x96xf32, #tpu.memory_space<vmem>>, %arg10: memref<2x32x32xf32, #tpu.memory_space<vmem>>, %arg11: memref<2x32xf32, #tpu.memory_space<vmem>>, %arg12: memref<2x32xf32, #tpu.memory_space<vmem>>, %arg13: memref<2x32xf32, #tpu.memory_space<vmem>>, %arg14: memref<2x32x64xf32, #tpu.memory_space<vmem>>, %arg15: memref<2x64xf32, #tpu.memory_space<vmem>>, %arg16: memref<2x64x32xf32, #tpu.memory_space<vmem>>, %arg17: memref<2x32xf32, #tpu.memory_space<vmem>>, %arg18: memref<1x32xf32, #tpu.memory_space<vmem>>, %arg19: memref<1x32xf32, #tpu.memory_space<vmem>>, %arg20: memref<32x10xf32, #tpu.memory_space<vmem>>, %arg21: memref<1x10xf32, #tpu.memory_space<vmem>>, %arg22: memref<1x2x10xf32, #tpu.memory_space<vmem>>) attributes {dimension_semantics = [#tpu.dimension_semantics<parallel>], iteration_bounds = array<i64: 1>, scalar_prefetch = 0 : i64, scratch_operands = 0 : i64, tpu.core_type = #tpu.core_type<tc>, window_params = [{transform_indices = @transform_0, window_bounds = array<i64: 1, 128, 48>}, {pipeline_mode = #tpu.pipeline_mode<synchronous>, transform_indices = @transform_1, window_bounds = array<i64: 48, 32>}, {pipeline_mode = #tpu.pipeline_mode<synchronous>, transform_indices = @transform_2, window_bounds = array<i64: 1, 32>}, {pipeline_mode = #tpu.pipeline_mode<synchronous>, transform_indices = @transform_3, window_bounds = array<i64: 1, 32>}, {pipeline_mode = #tpu.pipeline_mode<synchronous>, transform_indices = @transform_4, window_bounds = array<i64: 65, 32>}, {pipeline_mode = #tpu.pipeline_mode<synchronous>, transform_indices = @transform_5, window_bounds = array<i64: 2, 32>}, {pipeline_mode = #tpu.pipeline_mode<synchronous>, transform_indices = @transform_6, window_bounds = array<i64: 2, 32>}, {pipeline_mode = #tpu.pipeline_mode<synchronous>, transform_indices = @transform_7, window_bounds = array<i64: 2, 32, 96>}, {pipeline_mode = #tpu.pipeline_mode<synchronous>, transform_indices = @transform_8, window_bounds = array<i64: 2, 96>}, {pipeline_mode = #tpu.pipeline_mode<synchronous>, transform_indices = @transform_9, window_bounds = array<i64: 2, 32, 32>}, {pipeline_mode = #tpu.pipeline_mode<synchronous>, transform_indices = @transform_10, window_bounds = array<i64: 2, 32>}, {pipeline_mode = #tpu.pipeline_mode<synchronous>, transform_indices = @transform_11, window_bounds = array<i64: 2, 32>}, {pipeline_mode = #tpu.pipeline_mode<synchronous>, transform_indices = @transform_12, window_bounds = array<i64: 2, 32>}, {pipeline_mode = #tpu.pipeline_mode<synchronous>, transform_indices = @transform_13, window_bounds = array<i64: 2, 32, 64>}, {pipeline_mode = #tpu.pipeline_mode<synchronous>, transform_indices = @transform_14, window_bounds = array<i64: 2, 64>}, {pipeline_mode = #tpu.pipeline_mode<synchronous>, transform_indices = @transform_15, window_bounds = array<i64: 2, 64, 32>}, {pipeline_mode = #tpu.pipeline_mode<synchronous>, transform_indices = @transform_16, window_bounds = array<i64: 2, 32>}, {pipeline_mode = #tpu.pipeline_mode<synchronous>, transform_indices = @transform_17, window_bounds = array<i64: 1, 32>}, {pipeline_mode = #tpu.pipeline_mode<synchronous>, transform_indices = @transform_18, window_bounds = array<i64: 1, 32>}, {pipeline_mode = #tpu.pipeline_mode<synchronous>, transform_indices = @transform_19, window_bounds = array<i64: 32, 10>}, {pipeline_mode = #tpu.pipeline_mode<synchronous>, transform_indices = @transform_20, window_bounds = array<i64: 1, 10>}, {transform_indices = @transform_21, window_bounds = array<i64: 1, 2, 10>}]} {
    %c0 = arith.constant 0 : index
    %c0_0 = arith.constant 0 : index
    %c0_1 = arith.constant 0 : index
    %0 = vector.load %arg1[%c0, %c0_0, %c0_1] : memref<1x128x48xf32, #tpu.memory_space<vmem>>, vector<1x128x48xf32>
    %1 = vector.shape_cast %0 : vector<1x128x48xf32> to vector<128x48xf32>
    %c0_2 = arith.constant 0 : index
    %c0_3 = arith.constant 0 : index
    %2 = vector.load %arg2[%c0_2, %c0_3] : memref<48x32xf32, #tpu.memory_space<vmem>>, vector<48x32xf32>
    %cst = arith.constant dense<0.000000e+00> : vector<128x32xf32>
    %3 = tpu.matmul %1, %2, %cst {dimension_numbers = #tpu.dot_dimension_numbers<[1], [0], [0], [1], [0, 0, 1, 1], [], []>} : vector<128x48xf32>, vector<48x32xf32>, vector<128x32xf32> -> vector<128x32xf32>
    %c0_4 = arith.constant 0 : index
    %c0_5 = arith.constant 0 : index
    %4 = vector.load %arg3[%c0_4, %c0_5] : memref<1x32xf32, #tpu.memory_space<vmem>>, vector<1x32xf32>
    %5 = vector.broadcast %4 : vector<1x32xf32> to vector<128x32xf32>
    %6 = arith.addf %3, %5 : vector<128x32xf32>
    %c0_6 = arith.constant 0 : index
    %c0_7 = arith.constant 0 : index
    %7 = vector.load %arg5[%c0_6, %c0_7] : memref<65x32xf32, #tpu.memory_space<vmem>>, vector<65x32xf32>
    %c0_8 = arith.constant 0 : index
    %c0_9 = arith.constant 0 : index
    %8 = vector.load %arg4[%c0_8, %c0_9] : memref<1x32xf32, #tpu.memory_space<vmem>>, vector<1x32xf32>
    %9 = vector.extract_strided_slice %7 {offsets = [0, 0], sizes = [1, 32], strides = [1, 1]} : vector<65x32xf32> to vector<1x32xf32>
    %10 = arith.addf %8, %9 : vector<1x32xf32>
    %11 = vector.extract_strided_slice %6 {offsets = [0, 0], sizes = [64, 32], strides = [1, 1]} : vector<128x32xf32> to vector<64x32xf32>
    %12 = vector.extract_strided_slice %7 {offsets = [1, 0], sizes = [64, 32], strides = [1, 1]} : vector<65x32xf32> to vector<64x32xf32>
    %13 = arith.addf %11, %12 : vector<64x32xf32>
    %14 = vector.extract_strided_slice %6 {offsets = [64, 0], sizes = [64, 32], strides = [1, 1]} : vector<128x32xf32> to vector<64x32xf32>
    %15 = vector.extract_strided_slice %7 {offsets = [1, 0], sizes = [64, 32], strides = [1, 1]} : vector<65x32xf32> to vector<64x32xf32>
    %16 = arith.addf %14, %15 : vector<64x32xf32>
    %17 = tpu.concatenate %10, %13, %10, %16 in 0 : vector<1x32xf32>, vector<64x32xf32>, vector<1x32xf32>, vector<64x32xf32> -> vector<130x32xf32>
    %c0_10 = arith.constant 0 : index
    %c0_11 = arith.constant 0 : index
    %18 = vector.load %arg6[%c0_10, %c0_11] : memref<2x32xf32, #tpu.memory_space<vmem>>, vector<1x32xf32>
    %c0_12 = arith.constant 0 : index
    %c0_13 = arith.constant 0 : index
    %19 = vector.load %arg7[%c0_12, %c0_13] : memref<2x32xf32, #tpu.memory_space<vmem>>, vector<1x32xf32>
    %cst_14 = arith.constant dense<0.000000e+00> : vector<130xf32>
    %20 = vector.multi_reduction <add>, %17, %cst_14 [1] : vector<130x32xf32> to vector<130xf32>
    %21 = vector.shape_cast %20 : vector<130xf32> to vector<130x1xf32>
    %cst_15 = arith.constant 3.200000e+01 : f32
    %22 = vector.broadcast %cst_15 : f32 to vector<130x1xf32>
    %23 = arith.divf %21, %22 : vector<130x1xf32>
    %24 = vector.broadcast %23 : vector<130x1xf32> to vector<130x32xf32>
    %25 = arith.subf %17, %24 : vector<130x32xf32>
    %26 = arith.mulf %25, %25 : vector<130x32xf32>
    %cst_16 = arith.constant dense<0.000000e+00> : vector<130xf32>
    %27 = vector.multi_reduction <add>, %26, %cst_16 [1] : vector<130x32xf32> to vector<130xf32>
    %28 = vector.shape_cast %27 : vector<130xf32> to vector<130x1xf32>
    %cst_17 = arith.constant 3.200000e+01 : f32
    %29 = vector.broadcast %cst_17 : f32 to vector<130x1xf32>
    %30 = arith.divf %28, %29 : vector<130x1xf32>
    %31 = vector.broadcast %23 : vector<130x1xf32> to vector<130x32xf32>
    %32 = arith.subf %17, %31 : vector<130x32xf32>
    %cst_18 = arith.constant 9.99999974E-6 : f32
    %33 = vector.broadcast %cst_18 : f32 to vector<130x1xf32>
    %34 = arith.addf %30, %33 : vector<130x1xf32>
    %35 = math.rsqrt %34 : vector<130x1xf32>
    %36 = vector.broadcast %35 : vector<130x1xf32> to vector<130x32xf32>
    %37 = arith.mulf %32, %36 : vector<130x32xf32>
    %38 = vector.broadcast %18 : vector<1x32xf32> to vector<130x32xf32>
    %39 = arith.mulf %37, %38 : vector<130x32xf32>
    %40 = vector.broadcast %19 : vector<1x32xf32> to vector<130x32xf32>
    %41 = arith.addf %39, %40 : vector<130x32xf32>
    %c0_19 = arith.constant 0 : index
    %c0_20 = arith.constant 0 : index
    %c0_21 = arith.constant 0 : index
    %42 = vector.load %arg8[%c0_19, %c0_20, %c0_21] : memref<2x32x96xf32, #tpu.memory_space<vmem>>, vector<1x32x96xf32>
    %43 = vector.shape_cast %42 : vector<1x32x96xf32> to vector<32x96xf32>
    %cst_22 = arith.constant dense<0.000000e+00> : vector<130x96xf32>
    %44 = tpu.matmul %41, %43, %cst_22 {dimension_numbers = #tpu.dot_dimension_numbers<[1], [0], [0], [1], [0, 0, 1, 1], [], []>} : vector<130x32xf32>, vector<32x96xf32>, vector<130x96xf32> -> vector<130x96xf32>
    %c0_23 = arith.constant 0 : index
    %c0_24 = arith.constant 0 : index
    %45 = vector.load %arg9[%c0_23, %c0_24] : memref<2x96xf32, #tpu.memory_space<vmem>>, vector<1x96xf32>
    %46 = vector.broadcast %45 : vector<1x96xf32> to vector<130x96xf32>
    %47 = arith.addf %44, %46 : vector<130x96xf32>
    %48 = vector.extract_strided_slice %47 {offsets = [0, 0], sizes = [65, 96], strides = [1, 1]} : vector<130x96xf32> to vector<65x96xf32>
    %49 = vector.extract_strided_slice %48 {offsets = [0, 0], sizes = [65, 8], strides = [1, 1]} : vector<65x96xf32> to vector<65x8xf32>
    %50 = vector.extract_strided_slice %48 {offsets = [0, 32], sizes = [65, 8], strides = [1, 1]} : vector<65x96xf32> to vector<65x8xf32>
    %51 = vector.extract_strided_slice %48 {offsets = [0, 64], sizes = [65, 8], strides = [1, 1]} : vector<65x96xf32> to vector<65x8xf32>
    %cst_25 = arith.constant dense<0.000000e+00> : vector<65x65xf32>
    %52 = tpu.matmul %49, %50, %cst_25 {dimension_numbers = #tpu.dot_dimension_numbers<[1], [1], [0], [0], [0, 0, 1, 0], [], []>} : vector<65x8xf32>, vector<65x8xf32>, vector<65x65xf32> -> vector<65x65xf32>
    %cst_26 = arith.constant 0.353553385 : f32
    %53 = vector.broadcast %cst_26 : f32 to vector<65x65xf32>
    %54 = arith.mulf %52, %53 : vector<65x65xf32>
    %cst_27 = arith.constant dense<0xFF800000> : vector<65xf32>
    %55 = vector.multi_reduction <maximumf>, %54, %cst_27 [1] : vector<65x65xf32> to vector<65xf32>
    %56 = vector.shape_cast %55 : vector<65xf32> to vector<65x1xf32>
    %57 = vector.broadcast %56 : vector<65x1xf32> to vector<65x65xf32>
    %58 = arith.subf %54, %57 : vector<65x65xf32>
    %59 = math.exp %58 : vector<65x65xf32>
    %cst_28 = arith.constant dense<0.000000e+00> : vector<65xf32>
    %60 = vector.multi_reduction <add>, %59, %cst_28 [1] : vector<65x65xf32> to vector<65xf32>
    %61 = vector.shape_cast %60 : vector<65xf32> to vector<65x1xf32>
    %62 = tpu.reciprocal %61 {approx = true} : vector<65x1xf32> -> vector<65x1xf32>
    %63 = vector.broadcast %62 : vector<65x1xf32> to vector<65x65xf32>
    %64 = arith.mulf %59, %63 : vector<65x65xf32>
    %cst_29 = arith.constant dense<0.000000e+00> : vector<65x8xf32>
    %65 = tpu.matmul %64, %51, %cst_29 {dimension_numbers = #tpu.dot_dimension_numbers<[1], [0], [0], [1], [0, 0, 1, 1], [], []>} : vector<65x65xf32>, vector<65x8xf32>, vector<65x8xf32> -> vector<65x8xf32>
    %66 = vector.extract_strided_slice %48 {offsets = [0, 8], sizes = [65, 8], strides = [1, 1]} : vector<65x96xf32> to vector<65x8xf32>
    %67 = vector.extract_strided_slice %48 {offsets = [0, 40], sizes = [65, 8], strides = [1, 1]} : vector<65x96xf32> to vector<65x8xf32>
    %68 = vector.extract_strided_slice %48 {offsets = [0, 72], sizes = [65, 8], strides = [1, 1]} : vector<65x96xf32> to vector<65x8xf32>
    %cst_30 = arith.constant dense<0.000000e+00> : vector<65x65xf32>
    %69 = tpu.matmul %66, %67, %cst_30 {dimension_numbers = #tpu.dot_dimension_numbers<[1], [1], [0], [0], [0, 0, 1, 0], [], []>} : vector<65x8xf32>, vector<65x8xf32>, vector<65x65xf32> -> vector<65x65xf32>
    %cst_31 = arith.constant 0.353553385 : f32
    %70 = vector.broadcast %cst_31 : f32 to vector<65x65xf32>
    %71 = arith.mulf %69, %70 : vector<65x65xf32>
    %cst_32 = arith.constant dense<0xFF800000> : vector<65xf32>
    %72 = vector.multi_reduction <maximumf>, %71, %cst_32 [1] : vector<65x65xf32> to vector<65xf32>
    %73 = vector.shape_cast %72 : vector<65xf32> to vector<65x1xf32>
    %74 = vector.broadcast %73 : vector<65x1xf32> to vector<65x65xf32>
    %75 = arith.subf %71, %74 : vector<65x65xf32>
    %76 = math.exp %75 : vector<65x65xf32>
    %cst_33 = arith.constant dense<0.000000e+00> : vector<65xf32>
    %77 = vector.multi_reduction <add>, %76, %cst_33 [1] : vector<65x65xf32> to vector<65xf32>
    %78 = vector.shape_cast %77 : vector<65xf32> to vector<65x1xf32>
    %79 = tpu.reciprocal %78 {approx = true} : vector<65x1xf32> -> vector<65x1xf32>
    %80 = vector.broadcast %79 : vector<65x1xf32> to vector<65x65xf32>
    %81 = arith.mulf %76, %80 : vector<65x65xf32>
    %cst_34 = arith.constant dense<0.000000e+00> : vector<65x8xf32>
    %82 = tpu.matmul %81, %68, %cst_34 {dimension_numbers = #tpu.dot_dimension_numbers<[1], [0], [0], [1], [0, 0, 1, 1], [], []>} : vector<65x65xf32>, vector<65x8xf32>, vector<65x8xf32> -> vector<65x8xf32>
    %83 = vector.extract_strided_slice %48 {offsets = [0, 16], sizes = [65, 8], strides = [1, 1]} : vector<65x96xf32> to vector<65x8xf32>
    %84 = vector.extract_strided_slice %48 {offsets = [0, 48], sizes = [65, 8], strides = [1, 1]} : vector<65x96xf32> to vector<65x8xf32>
    %85 = vector.extract_strided_slice %48 {offsets = [0, 80], sizes = [65, 8], strides = [1, 1]} : vector<65x96xf32> to vector<65x8xf32>
    %cst_35 = arith.constant dense<0.000000e+00> : vector<65x65xf32>
    %86 = tpu.matmul %83, %84, %cst_35 {dimension_numbers = #tpu.dot_dimension_numbers<[1], [1], [0], [0], [0, 0, 1, 0], [], []>} : vector<65x8xf32>, vector<65x8xf32>, vector<65x65xf32> -> vector<65x65xf32>
    %cst_36 = arith.constant 0.353553385 : f32
    %87 = vector.broadcast %cst_36 : f32 to vector<65x65xf32>
    %88 = arith.mulf %86, %87 : vector<65x65xf32>
    %cst_37 = arith.constant dense<0xFF800000> : vector<65xf32>
    %89 = vector.multi_reduction <maximumf>, %88, %cst_37 [1] : vector<65x65xf32> to vector<65xf32>
    %90 = vector.shape_cast %89 : vector<65xf32> to vector<65x1xf32>
    %91 = vector.broadcast %90 : vector<65x1xf32> to vector<65x65xf32>
    %92 = arith.subf %88, %91 : vector<65x65xf32>
    %93 = math.exp %92 : vector<65x65xf32>
    %cst_38 = arith.constant dense<0.000000e+00> : vector<65xf32>
    %94 = vector.multi_reduction <add>, %93, %cst_38 [1] : vector<65x65xf32> to vector<65xf32>
    %95 = vector.shape_cast %94 : vector<65xf32> to vector<65x1xf32>
    %96 = tpu.reciprocal %95 {approx = true} : vector<65x1xf32> -> vector<65x1xf32>
    %97 = vector.broadcast %96 : vector<65x1xf32> to vector<65x65xf32>
    %98 = arith.mulf %93, %97 : vector<65x65xf32>
    %cst_39 = arith.constant dense<0.000000e+00> : vector<65x8xf32>
    %99 = tpu.matmul %98, %85, %cst_39 {dimension_numbers = #tpu.dot_dimension_numbers<[1], [0], [0], [1], [0, 0, 1, 1], [], []>} : vector<65x65xf32>, vector<65x8xf32>, vector<65x8xf32> -> vector<65x8xf32>
    %100 = vector.extract_strided_slice %48 {offsets = [0, 24], sizes = [65, 8], strides = [1, 1]} : vector<65x96xf32> to vector<65x8xf32>
    %101 = vector.extract_strided_slice %48 {offsets = [0, 56], sizes = [65, 8], strides = [1, 1]} : vector<65x96xf32> to vector<65x8xf32>
    %102 = vector.extract_strided_slice %48 {offsets = [0, 88], sizes = [65, 8], strides = [1, 1]} : vector<65x96xf32> to vector<65x8xf32>
    %cst_40 = arith.constant dense<0.000000e+00> : vector<65x65xf32>
    %103 = tpu.matmul %100, %101, %cst_40 {dimension_numbers = #tpu.dot_dimension_numbers<[1], [1], [0], [0], [0, 0, 1, 0], [], []>} : vector<65x8xf32>, vector<65x8xf32>, vector<65x65xf32> -> vector<65x65xf32>
    %cst_41 = arith.constant 0.353553385 : f32
    %104 = vector.broadcast %cst_41 : f32 to vector<65x65xf32>
    %105 = arith.mulf %103, %104 : vector<65x65xf32>
    %cst_42 = arith.constant dense<0xFF800000> : vector<65xf32>
    %106 = vector.multi_reduction <maximumf>, %105, %cst_42 [1] : vector<65x65xf32> to vector<65xf32>
    %107 = vector.shape_cast %106 : vector<65xf32> to vector<65x1xf32>
    %108 = vector.broadcast %107 : vector<65x1xf32> to vector<65x65xf32>
    %109 = arith.subf %105, %108 : vector<65x65xf32>
    %110 = math.exp %109 : vector<65x65xf32>
    %cst_43 = arith.constant dense<0.000000e+00> : vector<65xf32>
    %111 = vector.multi_reduction <add>, %110, %cst_43 [1] : vector<65x65xf32> to vector<65xf32>
    %112 = vector.shape_cast %111 : vector<65xf32> to vector<65x1xf32>
    %113 = tpu.reciprocal %112 {approx = true} : vector<65x1xf32> -> vector<65x1xf32>
    %114 = vector.broadcast %113 : vector<65x1xf32> to vector<65x65xf32>
    %115 = arith.mulf %110, %114 : vector<65x65xf32>
    %cst_44 = arith.constant dense<0.000000e+00> : vector<65x8xf32>
    %116 = tpu.matmul %115, %102, %cst_44 {dimension_numbers = #tpu.dot_dimension_numbers<[1], [0], [0], [1], [0, 0, 1, 1], [], []>} : vector<65x65xf32>, vector<65x8xf32>, vector<65x8xf32> -> vector<65x8xf32>
    %117 = tpu.concatenate %65, %82, %99, %116 in 1 : vector<65x8xf32>, vector<65x8xf32>, vector<65x8xf32>, vector<65x8xf32> -> vector<65x32xf32>
    %118 = vector.extract_strided_slice %47 {offsets = [65, 0], sizes = [65, 96], strides = [1, 1]} : vector<130x96xf32> to vector<65x96xf32>
    %119 = vector.extract_strided_slice %118 {offsets = [0, 0], sizes = [65, 8], strides = [1, 1]} : vector<65x96xf32> to vector<65x8xf32>
    %120 = vector.extract_strided_slice %118 {offsets = [0, 32], sizes = [65, 8], strides = [1, 1]} : vector<65x96xf32> to vector<65x8xf32>
    %121 = vector.extract_strided_slice %118 {offsets = [0, 64], sizes = [65, 8], strides = [1, 1]} : vector<65x96xf32> to vector<65x8xf32>
    %cst_45 = arith.constant dense<0.000000e+00> : vector<65x65xf32>
    %122 = tpu.matmul %119, %120, %cst_45 {dimension_numbers = #tpu.dot_dimension_numbers<[1], [1], [0], [0], [0, 0, 1, 0], [], []>} : vector<65x8xf32>, vector<65x8xf32>, vector<65x65xf32> -> vector<65x65xf32>
    %cst_46 = arith.constant 0.353553385 : f32
    %123 = vector.broadcast %cst_46 : f32 to vector<65x65xf32>
    %124 = arith.mulf %122, %123 : vector<65x65xf32>
    %cst_47 = arith.constant dense<0xFF800000> : vector<65xf32>
    %125 = vector.multi_reduction <maximumf>, %124, %cst_47 [1] : vector<65x65xf32> to vector<65xf32>
    %126 = vector.shape_cast %125 : vector<65xf32> to vector<65x1xf32>
    %127 = vector.broadcast %126 : vector<65x1xf32> to vector<65x65xf32>
    %128 = arith.subf %124, %127 : vector<65x65xf32>
    %129 = math.exp %128 : vector<65x65xf32>
    %cst_48 = arith.constant dense<0.000000e+00> : vector<65xf32>
    %130 = vector.multi_reduction <add>, %129, %cst_48 [1] : vector<65x65xf32> to vector<65xf32>
    %131 = vector.shape_cast %130 : vector<65xf32> to vector<65x1xf32>
    %132 = tpu.reciprocal %131 {approx = true} : vector<65x1xf32> -> vector<65x1xf32>
    %133 = vector.broadcast %132 : vector<65x1xf32> to vector<65x65xf32>
    %134 = arith.mulf %129, %133 : vector<65x65xf32>
    %cst_49 = arith.constant dense<0.000000e+00> : vector<65x8xf32>
    %135 = tpu.matmul %134, %121, %cst_49 {dimension_numbers = #tpu.dot_dimension_numbers<[1], [0], [0], [1], [0, 0, 1, 1], [], []>} : vector<65x65xf32>, vector<65x8xf32>, vector<65x8xf32> -> vector<65x8xf32>
    %136 = vector.extract_strided_slice %118 {offsets = [0, 8], sizes = [65, 8], strides = [1, 1]} : vector<65x96xf32> to vector<65x8xf32>
    %137 = vector.extract_strided_slice %118 {offsets = [0, 40], sizes = [65, 8], strides = [1, 1]} : vector<65x96xf32> to vector<65x8xf32>
    %138 = vector.extract_strided_slice %118 {offsets = [0, 72], sizes = [65, 8], strides = [1, 1]} : vector<65x96xf32> to vector<65x8xf32>
    %cst_50 = arith.constant dense<0.000000e+00> : vector<65x65xf32>
    %139 = tpu.matmul %136, %137, %cst_50 {dimension_numbers = #tpu.dot_dimension_numbers<[1], [1], [0], [0], [0, 0, 1, 0], [], []>} : vector<65x8xf32>, vector<65x8xf32>, vector<65x65xf32> -> vector<65x65xf32>
    %cst_51 = arith.constant 0.353553385 : f32
    %140 = vector.broadcast %cst_51 : f32 to vector<65x65xf32>
    %141 = arith.mulf %139, %140 : vector<65x65xf32>
    %cst_52 = arith.constant dense<0xFF800000> : vector<65xf32>
    %142 = vector.multi_reduction <maximumf>, %141, %cst_52 [1] : vector<65x65xf32> to vector<65xf32>
    %143 = vector.shape_cast %142 : vector<65xf32> to vector<65x1xf32>
    %144 = vector.broadcast %143 : vector<65x1xf32> to vector<65x65xf32>
    %145 = arith.subf %141, %144 : vector<65x65xf32>
    %146 = math.exp %145 : vector<65x65xf32>
    %cst_53 = arith.constant dense<0.000000e+00> : vector<65xf32>
    %147 = vector.multi_reduction <add>, %146, %cst_53 [1] : vector<65x65xf32> to vector<65xf32>
    %148 = vector.shape_cast %147 : vector<65xf32> to vector<65x1xf32>
    %149 = tpu.reciprocal %148 {approx = true} : vector<65x1xf32> -> vector<65x1xf32>
    %150 = vector.broadcast %149 : vector<65x1xf32> to vector<65x65xf32>
    %151 = arith.mulf %146, %150 : vector<65x65xf32>
    %cst_54 = arith.constant dense<0.000000e+00> : vector<65x8xf32>
    %152 = tpu.matmul %151, %138, %cst_54 {dimension_numbers = #tpu.dot_dimension_numbers<[1], [0], [0], [1], [0, 0, 1, 1], [], []>} : vector<65x65xf32>, vector<65x8xf32>, vector<65x8xf32> -> vector<65x8xf32>
    %153 = vector.extract_strided_slice %118 {offsets = [0, 16], sizes = [65, 8], strides = [1, 1]} : vector<65x96xf32> to vector<65x8xf32>
    %154 = vector.extract_strided_slice %118 {offsets = [0, 48], sizes = [65, 8], strides = [1, 1]} : vector<65x96xf32> to vector<65x8xf32>
    %155 = vector.extract_strided_slice %118 {offsets = [0, 80], sizes = [65, 8], strides = [1, 1]} : vector<65x96xf32> to vector<65x8xf32>
    %cst_55 = arith.constant dense<0.000000e+00> : vector<65x65xf32>
    %156 = tpu.matmul %153, %154, %cst_55 {dimension_numbers = #tpu.dot_dimension_numbers<[1], [1], [0], [0], [0, 0, 1, 0], [], []>} : vector<65x8xf32>, vector<65x8xf32>, vector<65x65xf32> -> vector<65x65xf32>
    %cst_56 = arith.constant 0.353553385 : f32
    %157 = vector.broadcast %cst_56 : f32 to vector<65x65xf32>
    %158 = arith.mulf %156, %157 : vector<65x65xf32>
    %cst_57 = arith.constant dense<0xFF800000> : vector<65xf32>
    %159 = vector.multi_reduction <maximumf>, %158, %cst_57 [1] : vector<65x65xf32> to vector<65xf32>
    %160 = vector.shape_cast %159 : vector<65xf32> to vector<65x1xf32>
    %161 = vector.broadcast %160 : vector<65x1xf32> to vector<65x65xf32>
    %162 = arith.subf %158, %161 : vector<65x65xf32>
    %163 = math.exp %162 : vector<65x65xf32>
    %cst_58 = arith.constant dense<0.000000e+00> : vector<65xf32>
    %164 = vector.multi_reduction <add>, %163, %cst_58 [1] : vector<65x65xf32> to vector<65xf32>
    %165 = vector.shape_cast %164 : vector<65xf32> to vector<65x1xf32>
    %166 = tpu.reciprocal %165 {approx = true} : vector<65x1xf32> -> vector<65x1xf32>
    %167 = vector.broadcast %166 : vector<65x1xf32> to vector<65x65xf32>
    %168 = arith.mulf %163, %167 : vector<65x65xf32>
    %cst_59 = arith.constant dense<0.000000e+00> : vector<65x8xf32>
    %169 = tpu.matmul %168, %155, %cst_59 {dimension_numbers = #tpu.dot_dimension_numbers<[1], [0], [0], [1], [0, 0, 1, 1], [], []>} : vector<65x65xf32>, vector<65x8xf32>, vector<65x8xf32> -> vector<65x8xf32>
    %170 = vector.extract_strided_slice %118 {offsets = [0, 24], sizes = [65, 8], strides = [1, 1]} : vector<65x96xf32> to vector<65x8xf32>
    %171 = vector.extract_strided_slice %118 {offsets = [0, 56], sizes = [65, 8], strides = [1, 1]} : vector<65x96xf32> to vector<65x8xf32>
    %172 = vector.extract_strided_slice %118 {offsets = [0, 88], sizes = [65, 8], strides = [1, 1]} : vector<65x96xf32> to vector<65x8xf32>
    %cst_60 = arith.constant dense<0.000000e+00> : vector<65x65xf32>
    %173 = tpu.matmul %170, %171, %cst_60 {dimension_numbers = #tpu.dot_dimension_numbers<[1], [1], [0], [0], [0, 0, 1, 0], [], []>} : vector<65x8xf32>, vector<65x8xf32>, vector<65x65xf32> -> vector<65x65xf32>
    %cst_61 = arith.constant 0.353553385 : f32
    %174 = vector.broadcast %cst_61 : f32 to vector<65x65xf32>
    %175 = arith.mulf %173, %174 : vector<65x65xf32>
    %cst_62 = arith.constant dense<0xFF800000> : vector<65xf32>
    %176 = vector.multi_reduction <maximumf>, %175, %cst_62 [1] : vector<65x65xf32> to vector<65xf32>
    %177 = vector.shape_cast %176 : vector<65xf32> to vector<65x1xf32>
    %178 = vector.broadcast %177 : vector<65x1xf32> to vector<65x65xf32>
    %179 = arith.subf %175, %178 : vector<65x65xf32>
    %180 = math.exp %179 : vector<65x65xf32>
    %cst_63 = arith.constant dense<0.000000e+00> : vector<65xf32>
    %181 = vector.multi_reduction <add>, %180, %cst_63 [1] : vector<65x65xf32> to vector<65xf32>
    %182 = vector.shape_cast %181 : vector<65xf32> to vector<65x1xf32>
    %183 = tpu.reciprocal %182 {approx = true} : vector<65x1xf32> -> vector<65x1xf32>
    %184 = vector.broadcast %183 : vector<65x1xf32> to vector<65x65xf32>
    %185 = arith.mulf %180, %184 : vector<65x65xf32>
    %cst_64 = arith.constant dense<0.000000e+00> : vector<65x8xf32>
    %186 = tpu.matmul %185, %172, %cst_64 {dimension_numbers = #tpu.dot_dimension_numbers<[1], [0], [0], [1], [0, 0, 1, 1], [], []>} : vector<65x65xf32>, vector<65x8xf32>, vector<65x8xf32> -> vector<65x8xf32>
    %187 = tpu.concatenate %135, %152, %169, %186 in 1 : vector<65x8xf32>, vector<65x8xf32>, vector<65x8xf32>, vector<65x8xf32> -> vector<65x32xf32>
    %188 = tpu.concatenate %117, %187 in 0 : vector<65x32xf32>, vector<65x32xf32> -> vector<130x32xf32>
    %c0_65 = arith.constant 0 : index
    %c0_66 = arith.constant 0 : index
    %c0_67 = arith.constant 0 : index
    %189 = vector.load %arg10[%c0_65, %c0_66, %c0_67] : memref<2x32x32xf32, #tpu.memory_space<vmem>>, vector<1x32x32xf32>
    %190 = vector.shape_cast %189 : vector<1x32x32xf32> to vector<32x32xf32>
    %cst_68 = arith.constant dense<0.000000e+00> : vector<130x32xf32>
    %191 = tpu.matmul %188, %190, %cst_68 {dimension_numbers = #tpu.dot_dimension_numbers<[1], [0], [0], [1], [0, 0, 1, 1], [], []>} : vector<130x32xf32>, vector<32x32xf32>, vector<130x32xf32> -> vector<130x32xf32>
    %c0_69 = arith.constant 0 : index
    %c0_70 = arith.constant 0 : index
    %192 = vector.load %arg11[%c0_69, %c0_70] : memref<2x32xf32, #tpu.memory_space<vmem>>, vector<1x32xf32>
    %193 = vector.broadcast %192 : vector<1x32xf32> to vector<130x32xf32>
    %194 = arith.addf %191, %193 : vector<130x32xf32>
    %195 = arith.addf %17, %194 : vector<130x32xf32>
    %c0_71 = arith.constant 0 : index
    %c0_72 = arith.constant 0 : index
    %196 = vector.load %arg12[%c0_71, %c0_72] : memref<2x32xf32, #tpu.memory_space<vmem>>, vector<1x32xf32>
    %c0_73 = arith.constant 0 : index
    %c0_74 = arith.constant 0 : index
    %197 = vector.load %arg13[%c0_73, %c0_74] : memref<2x32xf32, #tpu.memory_space<vmem>>, vector<1x32xf32>
    %cst_75 = arith.constant dense<0.000000e+00> : vector<130xf32>
    %198 = vector.multi_reduction <add>, %195, %cst_75 [1] : vector<130x32xf32> to vector<130xf32>
    %199 = vector.shape_cast %198 : vector<130xf32> to vector<130x1xf32>
    %cst_76 = arith.constant 3.200000e+01 : f32
    %200 = vector.broadcast %cst_76 : f32 to vector<130x1xf32>
    %201 = arith.divf %199, %200 : vector<130x1xf32>
    %202 = vector.broadcast %201 : vector<130x1xf32> to vector<130x32xf32>
    %203 = arith.subf %195, %202 : vector<130x32xf32>
    %204 = arith.mulf %203, %203 : vector<130x32xf32>
    %cst_77 = arith.constant dense<0.000000e+00> : vector<130xf32>
    %205 = vector.multi_reduction <add>, %204, %cst_77 [1] : vector<130x32xf32> to vector<130xf32>
    %206 = vector.shape_cast %205 : vector<130xf32> to vector<130x1xf32>
    %cst_78 = arith.constant 3.200000e+01 : f32
    %207 = vector.broadcast %cst_78 : f32 to vector<130x1xf32>
    %208 = arith.divf %206, %207 : vector<130x1xf32>
    %209 = vector.broadcast %201 : vector<130x1xf32> to vector<130x32xf32>
    %210 = arith.subf %195, %209 : vector<130x32xf32>
    %cst_79 = arith.constant 9.99999974E-6 : f32
    %211 = vector.broadcast %cst_79 : f32 to vector<130x1xf32>
    %212 = arith.addf %208, %211 : vector<130x1xf32>
    %213 = math.rsqrt %212 : vector<130x1xf32>
    %214 = vector.broadcast %213 : vector<130x1xf32> to vector<130x32xf32>
    %215 = arith.mulf %210, %214 : vector<130x32xf32>
    %216 = vector.broadcast %196 : vector<1x32xf32> to vector<130x32xf32>
    %217 = arith.mulf %215, %216 : vector<130x32xf32>
    %218 = vector.broadcast %197 : vector<1x32xf32> to vector<130x32xf32>
    %219 = arith.addf %217, %218 : vector<130x32xf32>
    %c0_80 = arith.constant 0 : index
    %c0_81 = arith.constant 0 : index
    %c0_82 = arith.constant 0 : index
    %220 = vector.load %arg14[%c0_80, %c0_81, %c0_82] : memref<2x32x64xf32, #tpu.memory_space<vmem>>, vector<1x32x64xf32>
    %221 = vector.shape_cast %220 : vector<1x32x64xf32> to vector<32x64xf32>
    %cst_83 = arith.constant dense<0.000000e+00> : vector<130x64xf32>
    %222 = tpu.matmul %219, %221, %cst_83 {dimension_numbers = #tpu.dot_dimension_numbers<[1], [0], [0], [1], [0, 0, 1, 1], [], []>} : vector<130x32xf32>, vector<32x64xf32>, vector<130x64xf32> -> vector<130x64xf32>
    %c0_84 = arith.constant 0 : index
    %c0_85 = arith.constant 0 : index
    %223 = vector.load %arg15[%c0_84, %c0_85] : memref<2x64xf32, #tpu.memory_space<vmem>>, vector<1x64xf32>
    %224 = vector.broadcast %223 : vector<1x64xf32> to vector<130x64xf32>
    %225 = arith.addf %222, %224 : vector<130x64xf32>
    %cst_86 = arith.constant 5.000000e-01 : f32
    %226 = vector.broadcast %cst_86 : f32 to vector<130x64xf32>
    %227 = arith.mulf %226, %225 : vector<130x64xf32>
    %cst_87 = arith.constant 0.707106769 : f32
    %228 = vector.broadcast %cst_87 : f32 to vector<130x64xf32>
    %229 = arith.mulf %225, %228 : vector<130x64xf32>
    %230 = math.absf %229 : vector<130x64xf32>
    %cst_88 = arith.constant 0.327591091 : f32
    %231 = vector.broadcast %cst_88 : f32 to vector<130x64xf32>
    %232 = arith.mulf %231, %230 : vector<130x64xf32>
    %cst_89 = arith.constant 1.000000e+00 : f32
    %233 = vector.broadcast %cst_89 : f32 to vector<130x64xf32>
    %234 = arith.addf %233, %232 : vector<130x64xf32>
    %cst_90 = arith.constant 1.000000e+00 : f32
    %235 = vector.broadcast %cst_90 : f32 to vector<130x64xf32>
    %236 = arith.divf %235, %234 : vector<130x64xf32>
    %cst_91 = arith.constant 1.06140542 : f32
    %237 = vector.broadcast %cst_91 : f32 to vector<130x64xf32>
    %238 = arith.mulf %237, %236 : vector<130x64xf32>
    %cst_92 = arith.constant -1.45315206 : f32
    %239 = vector.broadcast %cst_92 : f32 to vector<130x64xf32>
    %240 = arith.addf %238, %239 : vector<130x64xf32>
    %241 = arith.mulf %240, %236 : vector<130x64xf32>
    %cst_93 = arith.constant 1.42141378 : f32
    %242 = vector.broadcast %cst_93 : f32 to vector<130x64xf32>
    %243 = arith.addf %241, %242 : vector<130x64xf32>
    %244 = arith.mulf %243, %236 : vector<130x64xf32>
    %cst_94 = arith.constant -0.284496725 : f32
    %245 = vector.broadcast %cst_94 : f32 to vector<130x64xf32>
    %246 = arith.addf %244, %245 : vector<130x64xf32>
    %247 = arith.mulf %246, %236 : vector<130x64xf32>
    %cst_95 = arith.constant 0.254829586 : f32
    %248 = vector.broadcast %cst_95 : f32 to vector<130x64xf32>
    %249 = arith.addf %247, %248 : vector<130x64xf32>
    %250 = arith.mulf %249, %236 : vector<130x64xf32>
    %cst_96 = arith.constant 0.000000e+00 : f32
    %251 = vector.broadcast %cst_96 : f32 to vector<130x64xf32>
    %252 = arith.subf %251, %230 : vector<130x64xf32>
    %253 = arith.mulf %252, %230 : vector<130x64xf32>
    %254 = math.exp %253 : vector<130x64xf32>
    %255 = arith.mulf %250, %254 : vector<130x64xf32>
    %cst_97 = arith.constant 1.000000e+00 : f32
    %256 = vector.broadcast %cst_97 : f32 to vector<130x64xf32>
    %257 = arith.subf %256, %255 : vector<130x64xf32>
    %cst_98 = arith.constant 0.000000e+00 : f32
    %258 = vector.broadcast %cst_98 : f32 to vector<130x64xf32>
    %259 = arith.cmpf oge, %229, %258 : vector<130x64xf32>
    %cst_99 = arith.constant 0.000000e+00 : f32
    %260 = vector.broadcast %cst_99 : f32 to vector<130x64xf32>
    %261 = arith.subf %260, %257 : vector<130x64xf32>
    %262 = arith.select %259, %257, %261 : vector<130x64xi1>, vector<130x64xf32>
    %cst_100 = arith.constant 1.000000e+00 : f32
    %263 = vector.broadcast %cst_100 : f32 to vector<130x64xf32>
    %264 = arith.addf %263, %262 : vector<130x64xf32>
    %265 = arith.mulf %227, %264 : vector<130x64xf32>
    %c0_101 = arith.constant 0 : index
    %c0_102 = arith.constant 0 : index
    %c0_103 = arith.constant 0 : index
    %266 = vector.load %arg16[%c0_101, %c0_102, %c0_103] : memref<2x64x32xf32, #tpu.memory_space<vmem>>, vector<1x64x32xf32>
    %267 = vector.shape_cast %266 : vector<1x64x32xf32> to vector<64x32xf32>
    %cst_104 = arith.constant dense<0.000000e+00> : vector<130x32xf32>
    %268 = tpu.matmul %265, %267, %cst_104 {dimension_numbers = #tpu.dot_dimension_numbers<[1], [0], [0], [1], [0, 0, 1, 1], [], []>} : vector<130x64xf32>, vector<64x32xf32>, vector<130x32xf32> -> vector<130x32xf32>
    %c0_105 = arith.constant 0 : index
    %c0_106 = arith.constant 0 : index
    %269 = vector.load %arg17[%c0_105, %c0_106] : memref<2x32xf32, #tpu.memory_space<vmem>>, vector<1x32xf32>
    %270 = vector.broadcast %269 : vector<1x32xf32> to vector<130x32xf32>
    %271 = arith.addf %268, %270 : vector<130x32xf32>
    %272 = arith.addf %195, %271 : vector<130x32xf32>
    %c1 = arith.constant 1 : index
    %c0_107 = arith.constant 0 : index
    %273 = vector.load %arg6[%c1, %c0_107] : memref<2x32xf32, #tpu.memory_space<vmem>>, vector<1x32xf32>
    %c1_108 = arith.constant 1 : index
    %c0_109 = arith.constant 0 : index
    %274 = vector.load %arg7[%c1_108, %c0_109] : memref<2x32xf32, #tpu.memory_space<vmem>>, vector<1x32xf32>
    %cst_110 = arith.constant dense<0.000000e+00> : vector<130xf32>
    %275 = vector.multi_reduction <add>, %272, %cst_110 [1] : vector<130x32xf32> to vector<130xf32>
    %276 = vector.shape_cast %275 : vector<130xf32> to vector<130x1xf32>
    %cst_111 = arith.constant 3.200000e+01 : f32
    %277 = vector.broadcast %cst_111 : f32 to vector<130x1xf32>
    %278 = arith.divf %276, %277 : vector<130x1xf32>
    %279 = vector.broadcast %278 : vector<130x1xf32> to vector<130x32xf32>
    %280 = arith.subf %272, %279 : vector<130x32xf32>
    %281 = arith.mulf %280, %280 : vector<130x32xf32>
    %cst_112 = arith.constant dense<0.000000e+00> : vector<130xf32>
    %282 = vector.multi_reduction <add>, %281, %cst_112 [1] : vector<130x32xf32> to vector<130xf32>
    %283 = vector.shape_cast %282 : vector<130xf32> to vector<130x1xf32>
    %cst_113 = arith.constant 3.200000e+01 : f32
    %284 = vector.broadcast %cst_113 : f32 to vector<130x1xf32>
    %285 = arith.divf %283, %284 : vector<130x1xf32>
    %286 = vector.broadcast %278 : vector<130x1xf32> to vector<130x32xf32>
    %287 = arith.subf %272, %286 : vector<130x32xf32>
    %cst_114 = arith.constant 9.99999974E-6 : f32
    %288 = vector.broadcast %cst_114 : f32 to vector<130x1xf32>
    %289 = arith.addf %285, %288 : vector<130x1xf32>
    %290 = math.rsqrt %289 : vector<130x1xf32>
    %291 = vector.broadcast %290 : vector<130x1xf32> to vector<130x32xf32>
    %292 = arith.mulf %287, %291 : vector<130x32xf32>
    %293 = vector.broadcast %273 : vector<1x32xf32> to vector<130x32xf32>
    %294 = arith.mulf %292, %293 : vector<130x32xf32>
    %295 = vector.broadcast %274 : vector<1x32xf32> to vector<130x32xf32>
    %296 = arith.addf %294, %295 : vector<130x32xf32>
    %c1_115 = arith.constant 1 : index
    %c0_116 = arith.constant 0 : index
    %c0_117 = arith.constant 0 : index
    %297 = vector.load %arg8[%c1_115, %c0_116, %c0_117] : memref<2x32x96xf32, #tpu.memory_space<vmem>>, vector<1x32x96xf32>
    %298 = vector.shape_cast %297 : vector<1x32x96xf32> to vector<32x96xf32>
    %cst_118 = arith.constant dense<0.000000e+00> : vector<130x96xf32>
    %299 = tpu.matmul %296, %298, %cst_118 {dimension_numbers = #tpu.dot_dimension_numbers<[1], [0], [0], [1], [0, 0, 1, 1], [], []>} : vector<130x32xf32>, vector<32x96xf32>, vector<130x96xf32> -> vector<130x96xf32>
    %c1_119 = arith.constant 1 : index
    %c0_120 = arith.constant 0 : index
    %300 = vector.load %arg9[%c1_119, %c0_120] : memref<2x96xf32, #tpu.memory_space<vmem>>, vector<1x96xf32>
    %301 = vector.broadcast %300 : vector<1x96xf32> to vector<130x96xf32>
    %302 = arith.addf %299, %301 : vector<130x96xf32>
    %303 = vector.extract_strided_slice %302 {offsets = [0, 0], sizes = [65, 96], strides = [1, 1]} : vector<130x96xf32> to vector<65x96xf32>
    %304 = vector.extract_strided_slice %303 {offsets = [0, 0], sizes = [65, 8], strides = [1, 1]} : vector<65x96xf32> to vector<65x8xf32>
    %305 = vector.extract_strided_slice %303 {offsets = [0, 32], sizes = [65, 8], strides = [1, 1]} : vector<65x96xf32> to vector<65x8xf32>
    %306 = vector.extract_strided_slice %303 {offsets = [0, 64], sizes = [65, 8], strides = [1, 1]} : vector<65x96xf32> to vector<65x8xf32>
    %cst_121 = arith.constant dense<0.000000e+00> : vector<65x65xf32>
    %307 = tpu.matmul %304, %305, %cst_121 {dimension_numbers = #tpu.dot_dimension_numbers<[1], [1], [0], [0], [0, 0, 1, 0], [], []>} : vector<65x8xf32>, vector<65x8xf32>, vector<65x65xf32> -> vector<65x65xf32>
    %cst_122 = arith.constant 0.353553385 : f32
    %308 = vector.broadcast %cst_122 : f32 to vector<65x65xf32>
    %309 = arith.mulf %307, %308 : vector<65x65xf32>
    %cst_123 = arith.constant dense<0xFF800000> : vector<65xf32>
    %310 = vector.multi_reduction <maximumf>, %309, %cst_123 [1] : vector<65x65xf32> to vector<65xf32>
    %311 = vector.shape_cast %310 : vector<65xf32> to vector<65x1xf32>
    %312 = vector.broadcast %311 : vector<65x1xf32> to vector<65x65xf32>
    %313 = arith.subf %309, %312 : vector<65x65xf32>
    %314 = math.exp %313 : vector<65x65xf32>
    %cst_124 = arith.constant dense<0.000000e+00> : vector<65xf32>
    %315 = vector.multi_reduction <add>, %314, %cst_124 [1] : vector<65x65xf32> to vector<65xf32>
    %316 = vector.shape_cast %315 : vector<65xf32> to vector<65x1xf32>
    %317 = tpu.reciprocal %316 {approx = true} : vector<65x1xf32> -> vector<65x1xf32>
    %318 = vector.broadcast %317 : vector<65x1xf32> to vector<65x65xf32>
    %319 = arith.mulf %314, %318 : vector<65x65xf32>
    %cst_125 = arith.constant dense<0.000000e+00> : vector<65x8xf32>
    %320 = tpu.matmul %319, %306, %cst_125 {dimension_numbers = #tpu.dot_dimension_numbers<[1], [0], [0], [1], [0, 0, 1, 1], [], []>} : vector<65x65xf32>, vector<65x8xf32>, vector<65x8xf32> -> vector<65x8xf32>
    %321 = vector.extract_strided_slice %303 {offsets = [0, 8], sizes = [65, 8], strides = [1, 1]} : vector<65x96xf32> to vector<65x8xf32>
    %322 = vector.extract_strided_slice %303 {offsets = [0, 40], sizes = [65, 8], strides = [1, 1]} : vector<65x96xf32> to vector<65x8xf32>
    %323 = vector.extract_strided_slice %303 {offsets = [0, 72], sizes = [65, 8], strides = [1, 1]} : vector<65x96xf32> to vector<65x8xf32>
    %cst_126 = arith.constant dense<0.000000e+00> : vector<65x65xf32>
    %324 = tpu.matmul %321, %322, %cst_126 {dimension_numbers = #tpu.dot_dimension_numbers<[1], [1], [0], [0], [0, 0, 1, 0], [], []>} : vector<65x8xf32>, vector<65x8xf32>, vector<65x65xf32> -> vector<65x65xf32>
    %cst_127 = arith.constant 0.353553385 : f32
    %325 = vector.broadcast %cst_127 : f32 to vector<65x65xf32>
    %326 = arith.mulf %324, %325 : vector<65x65xf32>
    %cst_128 = arith.constant dense<0xFF800000> : vector<65xf32>
    %327 = vector.multi_reduction <maximumf>, %326, %cst_128 [1] : vector<65x65xf32> to vector<65xf32>
    %328 = vector.shape_cast %327 : vector<65xf32> to vector<65x1xf32>
    %329 = vector.broadcast %328 : vector<65x1xf32> to vector<65x65xf32>
    %330 = arith.subf %326, %329 : vector<65x65xf32>
    %331 = math.exp %330 : vector<65x65xf32>
    %cst_129 = arith.constant dense<0.000000e+00> : vector<65xf32>
    %332 = vector.multi_reduction <add>, %331, %cst_129 [1] : vector<65x65xf32> to vector<65xf32>
    %333 = vector.shape_cast %332 : vector<65xf32> to vector<65x1xf32>
    %334 = tpu.reciprocal %333 {approx = true} : vector<65x1xf32> -> vector<65x1xf32>
    %335 = vector.broadcast %334 : vector<65x1xf32> to vector<65x65xf32>
    %336 = arith.mulf %331, %335 : vector<65x65xf32>
    %cst_130 = arith.constant dense<0.000000e+00> : vector<65x8xf32>
    %337 = tpu.matmul %336, %323, %cst_130 {dimension_numbers = #tpu.dot_dimension_numbers<[1], [0], [0], [1], [0, 0, 1, 1], [], []>} : vector<65x65xf32>, vector<65x8xf32>, vector<65x8xf32> -> vector<65x8xf32>
    %338 = vector.extract_strided_slice %303 {offsets = [0, 16], sizes = [65, 8], strides = [1, 1]} : vector<65x96xf32> to vector<65x8xf32>
    %339 = vector.extract_strided_slice %303 {offsets = [0, 48], sizes = [65, 8], strides = [1, 1]} : vector<65x96xf32> to vector<65x8xf32>
    %340 = vector.extract_strided_slice %303 {offsets = [0, 80], sizes = [65, 8], strides = [1, 1]} : vector<65x96xf32> to vector<65x8xf32>
    %cst_131 = arith.constant dense<0.000000e+00> : vector<65x65xf32>
    %341 = tpu.matmul %338, %339, %cst_131 {dimension_numbers = #tpu.dot_dimension_numbers<[1], [1], [0], [0], [0, 0, 1, 0], [], []>} : vector<65x8xf32>, vector<65x8xf32>, vector<65x65xf32> -> vector<65x65xf32>
    %cst_132 = arith.constant 0.353553385 : f32
    %342 = vector.broadcast %cst_132 : f32 to vector<65x65xf32>
    %343 = arith.mulf %341, %342 : vector<65x65xf32>
    %cst_133 = arith.constant dense<0xFF800000> : vector<65xf32>
    %344 = vector.multi_reduction <maximumf>, %343, %cst_133 [1] : vector<65x65xf32> to vector<65xf32>
    %345 = vector.shape_cast %344 : vector<65xf32> to vector<65x1xf32>
    %346 = vector.broadcast %345 : vector<65x1xf32> to vector<65x65xf32>
    %347 = arith.subf %343, %346 : vector<65x65xf32>
    %348 = math.exp %347 : vector<65x65xf32>
    %cst_134 = arith.constant dense<0.000000e+00> : vector<65xf32>
    %349 = vector.multi_reduction <add>, %348, %cst_134 [1] : vector<65x65xf32> to vector<65xf32>
    %350 = vector.shape_cast %349 : vector<65xf32> to vector<65x1xf32>
    %351 = tpu.reciprocal %350 {approx = true} : vector<65x1xf32> -> vector<65x1xf32>
    %352 = vector.broadcast %351 : vector<65x1xf32> to vector<65x65xf32>
    %353 = arith.mulf %348, %352 : vector<65x65xf32>
    %cst_135 = arith.constant dense<0.000000e+00> : vector<65x8xf32>
    %354 = tpu.matmul %353, %340, %cst_135 {dimension_numbers = #tpu.dot_dimension_numbers<[1], [0], [0], [1], [0, 0, 1, 1], [], []>} : vector<65x65xf32>, vector<65x8xf32>, vector<65x8xf32> -> vector<65x8xf32>
    %355 = vector.extract_strided_slice %303 {offsets = [0, 24], sizes = [65, 8], strides = [1, 1]} : vector<65x96xf32> to vector<65x8xf32>
    %356 = vector.extract_strided_slice %303 {offsets = [0, 56], sizes = [65, 8], strides = [1, 1]} : vector<65x96xf32> to vector<65x8xf32>
    %357 = vector.extract_strided_slice %303 {offsets = [0, 88], sizes = [65, 8], strides = [1, 1]} : vector<65x96xf32> to vector<65x8xf32>
    %cst_136 = arith.constant dense<0.000000e+00> : vector<65x65xf32>
    %358 = tpu.matmul %355, %356, %cst_136 {dimension_numbers = #tpu.dot_dimension_numbers<[1], [1], [0], [0], [0, 0, 1, 0], [], []>} : vector<65x8xf32>, vector<65x8xf32>, vector<65x65xf32> -> vector<65x65xf32>
    %cst_137 = arith.constant 0.353553385 : f32
    %359 = vector.broadcast %cst_137 : f32 to vector<65x65xf32>
    %360 = arith.mulf %358, %359 : vector<65x65xf32>
    %cst_138 = arith.constant dense<0xFF800000> : vector<65xf32>
    %361 = vector.multi_reduction <maximumf>, %360, %cst_138 [1] : vector<65x65xf32> to vector<65xf32>
    %362 = vector.shape_cast %361 : vector<65xf32> to vector<65x1xf32>
    %363 = vector.broadcast %362 : vector<65x1xf32> to vector<65x65xf32>
    %364 = arith.subf %360, %363 : vector<65x65xf32>
    %365 = math.exp %364 : vector<65x65xf32>
    %cst_139 = arith.constant dense<0.000000e+00> : vector<65xf32>
    %366 = vector.multi_reduction <add>, %365, %cst_139 [1] : vector<65x65xf32> to vector<65xf32>
    %367 = vector.shape_cast %366 : vector<65xf32> to vector<65x1xf32>
    %368 = tpu.reciprocal %367 {approx = true} : vector<65x1xf32> -> vector<65x1xf32>
    %369 = vector.broadcast %368 : vector<65x1xf32> to vector<65x65xf32>
    %370 = arith.mulf %365, %369 : vector<65x65xf32>
    %cst_140 = arith.constant dense<0.000000e+00> : vector<65x8xf32>
    %371 = tpu.matmul %370, %357, %cst_140 {dimension_numbers = #tpu.dot_dimension_numbers<[1], [0], [0], [1], [0, 0, 1, 1], [], []>} : vector<65x65xf32>, vector<65x8xf32>, vector<65x8xf32> -> vector<65x8xf32>
    %372 = tpu.concatenate %320, %337, %354, %371 in 1 : vector<65x8xf32>, vector<65x8xf32>, vector<65x8xf32>, vector<65x8xf32> -> vector<65x32xf32>
    %373 = vector.extract_strided_slice %302 {offsets = [65, 0], sizes = [65, 96], strides = [1, 1]} : vector<130x96xf32> to vector<65x96xf32>
    %374 = vector.extract_strided_slice %373 {offsets = [0, 0], sizes = [65, 8], strides = [1, 1]} : vector<65x96xf32> to vector<65x8xf32>
    %375 = vector.extract_strided_slice %373 {offsets = [0, 32], sizes = [65, 8], strides = [1, 1]} : vector<65x96xf32> to vector<65x8xf32>
    %376 = vector.extract_strided_slice %373 {offsets = [0, 64], sizes = [65, 8], strides = [1, 1]} : vector<65x96xf32> to vector<65x8xf32>
    %cst_141 = arith.constant dense<0.000000e+00> : vector<65x65xf32>
    %377 = tpu.matmul %374, %375, %cst_141 {dimension_numbers = #tpu.dot_dimension_numbers<[1], [1], [0], [0], [0, 0, 1, 0], [], []>} : vector<65x8xf32>, vector<65x8xf32>, vector<65x65xf32> -> vector<65x65xf32>
    %cst_142 = arith.constant 0.353553385 : f32
    %378 = vector.broadcast %cst_142 : f32 to vector<65x65xf32>
    %379 = arith.mulf %377, %378 : vector<65x65xf32>
    %cst_143 = arith.constant dense<0xFF800000> : vector<65xf32>
    %380 = vector.multi_reduction <maximumf>, %379, %cst_143 [1] : vector<65x65xf32> to vector<65xf32>
    %381 = vector.shape_cast %380 : vector<65xf32> to vector<65x1xf32>
    %382 = vector.broadcast %381 : vector<65x1xf32> to vector<65x65xf32>
    %383 = arith.subf %379, %382 : vector<65x65xf32>
    %384 = math.exp %383 : vector<65x65xf32>
    %cst_144 = arith.constant dense<0.000000e+00> : vector<65xf32>
    %385 = vector.multi_reduction <add>, %384, %cst_144 [1] : vector<65x65xf32> to vector<65xf32>
    %386 = vector.shape_cast %385 : vector<65xf32> to vector<65x1xf32>
    %387 = tpu.reciprocal %386 {approx = true} : vector<65x1xf32> -> vector<65x1xf32>
    %388 = vector.broadcast %387 : vector<65x1xf32> to vector<65x65xf32>
    %389 = arith.mulf %384, %388 : vector<65x65xf32>
    %cst_145 = arith.constant dense<0.000000e+00> : vector<65x8xf32>
    %390 = tpu.matmul %389, %376, %cst_145 {dimension_numbers = #tpu.dot_dimension_numbers<[1], [0], [0], [1], [0, 0, 1, 1], [], []>} : vector<65x65xf32>, vector<65x8xf32>, vector<65x8xf32> -> vector<65x8xf32>
    %391 = vector.extract_strided_slice %373 {offsets = [0, 8], sizes = [65, 8], strides = [1, 1]} : vector<65x96xf32> to vector<65x8xf32>
    %392 = vector.extract_strided_slice %373 {offsets = [0, 40], sizes = [65, 8], strides = [1, 1]} : vector<65x96xf32> to vector<65x8xf32>
    %393 = vector.extract_strided_slice %373 {offsets = [0, 72], sizes = [65, 8], strides = [1, 1]} : vector<65x96xf32> to vector<65x8xf32>
    %cst_146 = arith.constant dense<0.000000e+00> : vector<65x65xf32>
    %394 = tpu.matmul %391, %392, %cst_146 {dimension_numbers = #tpu.dot_dimension_numbers<[1], [1], [0], [0], [0, 0, 1, 0], [], []>} : vector<65x8xf32>, vector<65x8xf32>, vector<65x65xf32> -> vector<65x65xf32>
    %cst_147 = arith.constant 0.353553385 : f32
    %395 = vector.broadcast %cst_147 : f32 to vector<65x65xf32>
    %396 = arith.mulf %394, %395 : vector<65x65xf32>
    %cst_148 = arith.constant dense<0xFF800000> : vector<65xf32>
    %397 = vector.multi_reduction <maximumf>, %396, %cst_148 [1] : vector<65x65xf32> to vector<65xf32>
    %398 = vector.shape_cast %397 : vector<65xf32> to vector<65x1xf32>
    %399 = vector.broadcast %398 : vector<65x1xf32> to vector<65x65xf32>
    %400 = arith.subf %396, %399 : vector<65x65xf32>
    %401 = math.exp %400 : vector<65x65xf32>
    %cst_149 = arith.constant dense<0.000000e+00> : vector<65xf32>
    %402 = vector.multi_reduction <add>, %401, %cst_149 [1] : vector<65x65xf32> to vector<65xf32>
    %403 = vector.shape_cast %402 : vector<65xf32> to vector<65x1xf32>
    %404 = tpu.reciprocal %403 {approx = true} : vector<65x1xf32> -> vector<65x1xf32>
    %405 = vector.broadcast %404 : vector<65x1xf32> to vector<65x65xf32>
    %406 = arith.mulf %401, %405 : vector<65x65xf32>
    %cst_150 = arith.constant dense<0.000000e+00> : vector<65x8xf32>
    %407 = tpu.matmul %406, %393, %cst_150 {dimension_numbers = #tpu.dot_dimension_numbers<[1], [0], [0], [1], [0, 0, 1, 1], [], []>} : vector<65x65xf32>, vector<65x8xf32>, vector<65x8xf32> -> vector<65x8xf32>
    %408 = vector.extract_strided_slice %373 {offsets = [0, 16], sizes = [65, 8], strides = [1, 1]} : vector<65x96xf32> to vector<65x8xf32>
    %409 = vector.extract_strided_slice %373 {offsets = [0, 48], sizes = [65, 8], strides = [1, 1]} : vector<65x96xf32> to vector<65x8xf32>
    %410 = vector.extract_strided_slice %373 {offsets = [0, 80], sizes = [65, 8], strides = [1, 1]} : vector<65x96xf32> to vector<65x8xf32>
    %cst_151 = arith.constant dense<0.000000e+00> : vector<65x65xf32>
    %411 = tpu.matmul %408, %409, %cst_151 {dimension_numbers = #tpu.dot_dimension_numbers<[1], [1], [0], [0], [0, 0, 1, 0], [], []>} : vector<65x8xf32>, vector<65x8xf32>, vector<65x65xf32> -> vector<65x65xf32>
    %cst_152 = arith.constant 0.353553385 : f32
    %412 = vector.broadcast %cst_152 : f32 to vector<65x65xf32>
    %413 = arith.mulf %411, %412 : vector<65x65xf32>
    %cst_153 = arith.constant dense<0xFF800000> : vector<65xf32>
    %414 = vector.multi_reduction <maximumf>, %413, %cst_153 [1] : vector<65x65xf32> to vector<65xf32>
    %415 = vector.shape_cast %414 : vector<65xf32> to vector<65x1xf32>
    %416 = vector.broadcast %415 : vector<65x1xf32> to vector<65x65xf32>
    %417 = arith.subf %413, %416 : vector<65x65xf32>
    %418 = math.exp %417 : vector<65x65xf32>
    %cst_154 = arith.constant dense<0.000000e+00> : vector<65xf32>
    %419 = vector.multi_reduction <add>, %418, %cst_154 [1] : vector<65x65xf32> to vector<65xf32>
    %420 = vector.shape_cast %419 : vector<65xf32> to vector<65x1xf32>
    %421 = tpu.reciprocal %420 {approx = true} : vector<65x1xf32> -> vector<65x1xf32>
    %422 = vector.broadcast %421 : vector<65x1xf32> to vector<65x65xf32>
    %423 = arith.mulf %418, %422 : vector<65x65xf32>
    %cst_155 = arith.constant dense<0.000000e+00> : vector<65x8xf32>
    %424 = tpu.matmul %423, %410, %cst_155 {dimension_numbers = #tpu.dot_dimension_numbers<[1], [0], [0], [1], [0, 0, 1, 1], [], []>} : vector<65x65xf32>, vector<65x8xf32>, vector<65x8xf32> -> vector<65x8xf32>
    %425 = vector.extract_strided_slice %373 {offsets = [0, 24], sizes = [65, 8], strides = [1, 1]} : vector<65x96xf32> to vector<65x8xf32>
    %426 = vector.extract_strided_slice %373 {offsets = [0, 56], sizes = [65, 8], strides = [1, 1]} : vector<65x96xf32> to vector<65x8xf32>
    %427 = vector.extract_strided_slice %373 {offsets = [0, 88], sizes = [65, 8], strides = [1, 1]} : vector<65x96xf32> to vector<65x8xf32>
    %cst_156 = arith.constant dense<0.000000e+00> : vector<65x65xf32>
    %428 = tpu.matmul %425, %426, %cst_156 {dimension_numbers = #tpu.dot_dimension_numbers<[1], [1], [0], [0], [0, 0, 1, 0], [], []>} : vector<65x8xf32>, vector<65x8xf32>, vector<65x65xf32> -> vector<65x65xf32>
    %cst_157 = arith.constant 0.353553385 : f32
    %429 = vector.broadcast %cst_157 : f32 to vector<65x65xf32>
    %430 = arith.mulf %428, %429 : vector<65x65xf32>
    %cst_158 = arith.constant dense<0xFF800000> : vector<65xf32>
    %431 = vector.multi_reduction <maximumf>, %430, %cst_158 [1] : vector<65x65xf32> to vector<65xf32>
    %432 = vector.shape_cast %431 : vector<65xf32> to vector<65x1xf32>
    %433 = vector.broadcast %432 : vector<65x1xf32> to vector<65x65xf32>
    %434 = arith.subf %430, %433 : vector<65x65xf32>
    %435 = math.exp %434 : vector<65x65xf32>
    %cst_159 = arith.constant dense<0.000000e+00> : vector<65xf32>
    %436 = vector.multi_reduction <add>, %435, %cst_159 [1] : vector<65x65xf32> to vector<65xf32>
    %437 = vector.shape_cast %436 : vector<65xf32> to vector<65x1xf32>
    %438 = tpu.reciprocal %437 {approx = true} : vector<65x1xf32> -> vector<65x1xf32>
    %439 = vector.broadcast %438 : vector<65x1xf32> to vector<65x65xf32>
    %440 = arith.mulf %435, %439 : vector<65x65xf32>
    %cst_160 = arith.constant dense<0.000000e+00> : vector<65x8xf32>
    %441 = tpu.matmul %440, %427, %cst_160 {dimension_numbers = #tpu.dot_dimension_numbers<[1], [0], [0], [1], [0, 0, 1, 1], [], []>} : vector<65x65xf32>, vector<65x8xf32>, vector<65x8xf32> -> vector<65x8xf32>
    %442 = tpu.concatenate %390, %407, %424, %441 in 1 : vector<65x8xf32>, vector<65x8xf32>, vector<65x8xf32>, vector<65x8xf32> -> vector<65x32xf32>
    %443 = tpu.concatenate %372, %442 in 0 : vector<65x32xf32>, vector<65x32xf32> -> vector<130x32xf32>
    %c1_161 = arith.constant 1 : index
    %c0_162 = arith.constant 0 : index
    %c0_163 = arith.constant 0 : index
    %444 = vector.load %arg10[%c1_161, %c0_162, %c0_163] : memref<2x32x32xf32, #tpu.memory_space<vmem>>, vector<1x32x32xf32>
    %445 = vector.shape_cast %444 : vector<1x32x32xf32> to vector<32x32xf32>
    %cst_164 = arith.constant dense<0.000000e+00> : vector<130x32xf32>
    %446 = tpu.matmul %443, %445, %cst_164 {dimension_numbers = #tpu.dot_dimension_numbers<[1], [0], [0], [1], [0, 0, 1, 1], [], []>} : vector<130x32xf32>, vector<32x32xf32>, vector<130x32xf32> -> vector<130x32xf32>
    %c1_165 = arith.constant 1 : index
    %c0_166 = arith.constant 0 : index
    %447 = vector.load %arg11[%c1_165, %c0_166] : memref<2x32xf32, #tpu.memory_space<vmem>>, vector<1x32xf32>
    %448 = vector.broadcast %447 : vector<1x32xf32> to vector<130x32xf32>
    %449 = arith.addf %446, %448 : vector<130x32xf32>
    %450 = arith.addf %272, %449 : vector<130x32xf32>
    %c1_167 = arith.constant 1 : index
    %c0_168 = arith.constant 0 : index
    %451 = vector.load %arg12[%c1_167, %c0_168] : memref<2x32xf32, #tpu.memory_space<vmem>>, vector<1x32xf32>
    %c1_169 = arith.constant 1 : index
    %c0_170 = arith.constant 0 : index
    %452 = vector.load %arg13[%c1_169, %c0_170] : memref<2x32xf32, #tpu.memory_space<vmem>>, vector<1x32xf32>
    %cst_171 = arith.constant dense<0.000000e+00> : vector<130xf32>
    %453 = vector.multi_reduction <add>, %450, %cst_171 [1] : vector<130x32xf32> to vector<130xf32>
    %454 = vector.shape_cast %453 : vector<130xf32> to vector<130x1xf32>
    %cst_172 = arith.constant 3.200000e+01 : f32
    %455 = vector.broadcast %cst_172 : f32 to vector<130x1xf32>
    %456 = arith.divf %454, %455 : vector<130x1xf32>
    %457 = vector.broadcast %456 : vector<130x1xf32> to vector<130x32xf32>
    %458 = arith.subf %450, %457 : vector<130x32xf32>
    %459 = arith.mulf %458, %458 : vector<130x32xf32>
    %cst_173 = arith.constant dense<0.000000e+00> : vector<130xf32>
    %460 = vector.multi_reduction <add>, %459, %cst_173 [1] : vector<130x32xf32> to vector<130xf32>
    %461 = vector.shape_cast %460 : vector<130xf32> to vector<130x1xf32>
    %cst_174 = arith.constant 3.200000e+01 : f32
    %462 = vector.broadcast %cst_174 : f32 to vector<130x1xf32>
    %463 = arith.divf %461, %462 : vector<130x1xf32>
    %464 = vector.broadcast %456 : vector<130x1xf32> to vector<130x32xf32>
    %465 = arith.subf %450, %464 : vector<130x32xf32>
    %cst_175 = arith.constant 9.99999974E-6 : f32
    %466 = vector.broadcast %cst_175 : f32 to vector<130x1xf32>
    %467 = arith.addf %463, %466 : vector<130x1xf32>
    %468 = math.rsqrt %467 : vector<130x1xf32>
    %469 = vector.broadcast %468 : vector<130x1xf32> to vector<130x32xf32>
    %470 = arith.mulf %465, %469 : vector<130x32xf32>
    %471 = vector.broadcast %451 : vector<1x32xf32> to vector<130x32xf32>
    %472 = arith.mulf %470, %471 : vector<130x32xf32>
    %473 = vector.broadcast %452 : vector<1x32xf32> to vector<130x32xf32>
    %474 = arith.addf %472, %473 : vector<130x32xf32>
    %c1_176 = arith.constant 1 : index
    %c0_177 = arith.constant 0 : index
    %c0_178 = arith.constant 0 : index
    %475 = vector.load %arg14[%c1_176, %c0_177, %c0_178] : memref<2x32x64xf32, #tpu.memory_space<vmem>>, vector<1x32x64xf32>
    %476 = vector.shape_cast %475 : vector<1x32x64xf32> to vector<32x64xf32>
    %cst_179 = arith.constant dense<0.000000e+00> : vector<130x64xf32>
    %477 = tpu.matmul %474, %476, %cst_179 {dimension_numbers = #tpu.dot_dimension_numbers<[1], [0], [0], [1], [0, 0, 1, 1], [], []>} : vector<130x32xf32>, vector<32x64xf32>, vector<130x64xf32> -> vector<130x64xf32>
    %c1_180 = arith.constant 1 : index
    %c0_181 = arith.constant 0 : index
    %478 = vector.load %arg15[%c1_180, %c0_181] : memref<2x64xf32, #tpu.memory_space<vmem>>, vector<1x64xf32>
    %479 = vector.broadcast %478 : vector<1x64xf32> to vector<130x64xf32>
    %480 = arith.addf %477, %479 : vector<130x64xf32>
    %cst_182 = arith.constant 5.000000e-01 : f32
    %481 = vector.broadcast %cst_182 : f32 to vector<130x64xf32>
    %482 = arith.mulf %481, %480 : vector<130x64xf32>
    %cst_183 = arith.constant 0.707106769 : f32
    %483 = vector.broadcast %cst_183 : f32 to vector<130x64xf32>
    %484 = arith.mulf %480, %483 : vector<130x64xf32>
    %485 = math.absf %484 : vector<130x64xf32>
    %cst_184 = arith.constant 0.327591091 : f32
    %486 = vector.broadcast %cst_184 : f32 to vector<130x64xf32>
    %487 = arith.mulf %486, %485 : vector<130x64xf32>
    %cst_185 = arith.constant 1.000000e+00 : f32
    %488 = vector.broadcast %cst_185 : f32 to vector<130x64xf32>
    %489 = arith.addf %488, %487 : vector<130x64xf32>
    %cst_186 = arith.constant 1.000000e+00 : f32
    %490 = vector.broadcast %cst_186 : f32 to vector<130x64xf32>
    %491 = arith.divf %490, %489 : vector<130x64xf32>
    %cst_187 = arith.constant 1.06140542 : f32
    %492 = vector.broadcast %cst_187 : f32 to vector<130x64xf32>
    %493 = arith.mulf %492, %491 : vector<130x64xf32>
    %cst_188 = arith.constant -1.45315206 : f32
    %494 = vector.broadcast %cst_188 : f32 to vector<130x64xf32>
    %495 = arith.addf %493, %494 : vector<130x64xf32>
    %496 = arith.mulf %495, %491 : vector<130x64xf32>
    %cst_189 = arith.constant 1.42141378 : f32
    %497 = vector.broadcast %cst_189 : f32 to vector<130x64xf32>
    %498 = arith.addf %496, %497 : vector<130x64xf32>
    %499 = arith.mulf %498, %491 : vector<130x64xf32>
    %cst_190 = arith.constant -0.284496725 : f32
    %500 = vector.broadcast %cst_190 : f32 to vector<130x64xf32>
    %501 = arith.addf %499, %500 : vector<130x64xf32>
    %502 = arith.mulf %501, %491 : vector<130x64xf32>
    %cst_191 = arith.constant 0.254829586 : f32
    %503 = vector.broadcast %cst_191 : f32 to vector<130x64xf32>
    %504 = arith.addf %502, %503 : vector<130x64xf32>
    %505 = arith.mulf %504, %491 : vector<130x64xf32>
    %cst_192 = arith.constant 0.000000e+00 : f32
    %506 = vector.broadcast %cst_192 : f32 to vector<130x64xf32>
    %507 = arith.subf %506, %485 : vector<130x64xf32>
    %508 = arith.mulf %507, %485 : vector<130x64xf32>
    %509 = math.exp %508 : vector<130x64xf32>
    %510 = arith.mulf %505, %509 : vector<130x64xf32>
    %cst_193 = arith.constant 1.000000e+00 : f32
    %511 = vector.broadcast %cst_193 : f32 to vector<130x64xf32>
    %512 = arith.subf %511, %510 : vector<130x64xf32>
    %cst_194 = arith.constant 0.000000e+00 : f32
    %513 = vector.broadcast %cst_194 : f32 to vector<130x64xf32>
    %514 = arith.cmpf oge, %484, %513 : vector<130x64xf32>
    %cst_195 = arith.constant 0.000000e+00 : f32
    %515 = vector.broadcast %cst_195 : f32 to vector<130x64xf32>
    %516 = arith.subf %515, %512 : vector<130x64xf32>
    %517 = arith.select %514, %512, %516 : vector<130x64xi1>, vector<130x64xf32>
    %cst_196 = arith.constant 1.000000e+00 : f32
    %518 = vector.broadcast %cst_196 : f32 to vector<130x64xf32>
    %519 = arith.addf %518, %517 : vector<130x64xf32>
    %520 = arith.mulf %482, %519 : vector<130x64xf32>
    %c1_197 = arith.constant 1 : index
    %c0_198 = arith.constant 0 : index
    %c0_199 = arith.constant 0 : index
    %521 = vector.load %arg16[%c1_197, %c0_198, %c0_199] : memref<2x64x32xf32, #tpu.memory_space<vmem>>, vector<1x64x32xf32>
    %522 = vector.shape_cast %521 : vector<1x64x32xf32> to vector<64x32xf32>
    %cst_200 = arith.constant dense<0.000000e+00> : vector<130x32xf32>
    %523 = tpu.matmul %520, %522, %cst_200 {dimension_numbers = #tpu.dot_dimension_numbers<[1], [0], [0], [1], [0, 0, 1, 1], [], []>} : vector<130x64xf32>, vector<64x32xf32>, vector<130x32xf32> -> vector<130x32xf32>
    %c1_201 = arith.constant 1 : index
    %c0_202 = arith.constant 0 : index
    %524 = vector.load %arg17[%c1_201, %c0_202] : memref<2x32xf32, #tpu.memory_space<vmem>>, vector<1x32xf32>
    %525 = vector.broadcast %524 : vector<1x32xf32> to vector<130x32xf32>
    %526 = arith.addf %523, %525 : vector<130x32xf32>
    %527 = arith.addf %450, %526 : vector<130x32xf32>
    %528 = vector.extract_strided_slice %527 {offsets = [0, 0], sizes = [1, 32], strides = [1, 1]} : vector<130x32xf32> to vector<1x32xf32>
    %529 = vector.extract_strided_slice %527 {offsets = [65, 0], sizes = [1, 32], strides = [1, 1]} : vector<130x32xf32> to vector<1x32xf32>
    %530 = tpu.concatenate %528, %529 in 0 : vector<1x32xf32>, vector<1x32xf32> -> vector<2x32xf32>
    %c0_203 = arith.constant 0 : index
    %c0_204 = arith.constant 0 : index
    %531 = vector.load %arg18[%c0_203, %c0_204] : memref<1x32xf32, #tpu.memory_space<vmem>>, vector<1x32xf32>
    %c0_205 = arith.constant 0 : index
    %c0_206 = arith.constant 0 : index
    %532 = vector.load %arg19[%c0_205, %c0_206] : memref<1x32xf32, #tpu.memory_space<vmem>>, vector<1x32xf32>
    %cst_207 = arith.constant dense<0.000000e+00> : vector<2xf32>
    %533 = vector.multi_reduction <add>, %530, %cst_207 [1] : vector<2x32xf32> to vector<2xf32>
    %534 = vector.shape_cast %533 : vector<2xf32> to vector<2x1xf32>
    %cst_208 = arith.constant 3.200000e+01 : f32
    %535 = vector.broadcast %cst_208 : f32 to vector<2x1xf32>
    %536 = arith.divf %534, %535 : vector<2x1xf32>
    %537 = vector.broadcast %536 : vector<2x1xf32> to vector<2x32xf32>
    %538 = arith.subf %530, %537 : vector<2x32xf32>
    %539 = arith.mulf %538, %538 : vector<2x32xf32>
    %cst_209 = arith.constant dense<0.000000e+00> : vector<2xf32>
    %540 = vector.multi_reduction <add>, %539, %cst_209 [1] : vector<2x32xf32> to vector<2xf32>
    %541 = vector.shape_cast %540 : vector<2xf32> to vector<2x1xf32>
    %cst_210 = arith.constant 3.200000e+01 : f32
    %542 = vector.broadcast %cst_210 : f32 to vector<2x1xf32>
    %543 = arith.divf %541, %542 : vector<2x1xf32>
    %544 = vector.broadcast %536 : vector<2x1xf32> to vector<2x32xf32>
    %545 = arith.subf %530, %544 : vector<2x32xf32>
    %cst_211 = arith.constant 9.99999974E-6 : f32
    %546 = vector.broadcast %cst_211 : f32 to vector<2x1xf32>
    %547 = arith.addf %543, %546 : vector<2x1xf32>
    %548 = math.rsqrt %547 : vector<2x1xf32>
    %549 = vector.broadcast %548 : vector<2x1xf32> to vector<2x32xf32>
    %550 = arith.mulf %545, %549 : vector<2x32xf32>
    %551 = vector.broadcast %531 : vector<1x32xf32> to vector<2x32xf32>
    %552 = arith.mulf %550, %551 : vector<2x32xf32>
    %553 = vector.broadcast %532 : vector<1x32xf32> to vector<2x32xf32>
    %554 = arith.addf %552, %553 : vector<2x32xf32>
    %c0_212 = arith.constant 0 : index
    %c0_213 = arith.constant 0 : index
    %555 = vector.load %arg20[%c0_212, %c0_213] : memref<32x10xf32, #tpu.memory_space<vmem>>, vector<32x10xf32>
    %cst_214 = arith.constant dense<0.000000e+00> : vector<2x10xf32>
    %556 = tpu.matmul %554, %555, %cst_214 {dimension_numbers = #tpu.dot_dimension_numbers<[1], [0], [0], [1], [0, 0, 1, 1], [], []>} : vector<2x32xf32>, vector<32x10xf32>, vector<2x10xf32> -> vector<2x10xf32>
    %c0_215 = arith.constant 0 : index
    %c0_216 = arith.constant 0 : index
    %557 = vector.load %arg21[%c0_215, %c0_216] : memref<1x10xf32, #tpu.memory_space<vmem>>, vector<1x10xf32>
    %558 = vector.broadcast %557 : vector<1x10xf32> to vector<2x10xf32>
    %559 = arith.addf %556, %558 : vector<2x10xf32>
    %c0_217 = arith.constant 0 : index
    %c0_218 = arith.constant 0 : index
    %c0_219 = arith.constant 0 : index
    %560 = vector.load %arg22[%c0_217, %c0_218, %c0_219] : memref<1x2x10xf32, #tpu.memory_space<vmem>>, vector<1x2x10xf32>
    %561 = vector.shape_cast %560 : vector<1x2x10xf32> to vector<2x10xf32>
    %562 = vector.shape_cast %559 : vector<2x10xf32> to vector<1x2x10xf32>
    tpu.vector_store %arg22[%c0_217, %c0_218, %c0_219], %562 {strides = array<i32>} : memref<1x2x10xf32, #tpu.memory_space<vmem>>, vector<1x2x10xf32>,
    return
  }
  func.func @transform_0(%arg0: i32) -> (i32, i32, i32) {
    %c0_i32 = arith.constant 0 : i32
    %c0_i32_0 = arith.constant 0 : i32
    %c0_i32_1 = arith.constant 0 : i32
    return %arg0, %c0_i32, %c0_i32_0 : i32, i32, i32
  }
  func.func @transform_1(%arg0: i32) -> (i32, i32) {
    %c0_i32 = arith.constant 0 : i32
    %c0_i32_0 = arith.constant 0 : i32
    %c0_i32_1 = arith.constant 0 : i32
    return %c0_i32, %c0_i32_0 : i32, i32
  }
  func.func @transform_2(%arg0: i32) -> (i32, i32) {
    %c0_i32 = arith.constant 0 : i32
    %c0_i32_0 = arith.constant 0 : i32
    %c0_i32_1 = arith.constant 0 : i32
    return %c0_i32, %c0_i32_0 : i32, i32
  }
  func.func @transform_3(%arg0: i32) -> (i32, i32) {
    %c0_i32 = arith.constant 0 : i32
    %c0_i32_0 = arith.constant 0 : i32
    %c0_i32_1 = arith.constant 0 : i32
    return %c0_i32, %c0_i32_0 : i32, i32
  }
  func.func @transform_4(%arg0: i32) -> (i32, i32) {
    %c0_i32 = arith.constant 0 : i32
    %c0_i32_0 = arith.constant 0 : i32
    %c0_i32_1 = arith.constant 0 : i32
    return %c0_i32, %c0_i32_0 : i32, i32
  }
  func.func @transform_5(%arg0: i32) -> (i32, i32) {
    %c0_i32 = arith.constant 0 : i32
    %c0_i32_0 = arith.constant 0 : i32
    %c0_i32_1 = arith.constant 0 : i32
    return %c0_i32, %c0_i32_0 : i32, i32
  }
  func.func @transform_6(%arg0: i32) -> (i32, i32) {
    %c0_i32 = arith.constant 0 : i32
    %c0_i32_0 = arith.constant 0 : i32
    %c0_i32_1 = arith.constant 0 : i32
    return %c0_i32, %c0_i32_0 : i32, i32
  }
  func.func @transform_7(%arg0: i32) -> (i32, i32, i32) {
    %c0_i32 = arith.constant 0 : i32
    %c0_i32_0 = arith.constant 0 : i32
    %c0_i32_1 = arith.constant 0 : i32
    %c0_i32_2 = arith.constant 0 : i32
    return %c0_i32, %c0_i32_0, %c0_i32_1 : i32, i32, i32
  }
  func.func @transform_8(%arg0: i32) -> (i32, i32) {
    %c0_i32 = arith.constant 0 : i32
    %c0_i32_0 = arith.constant 0 : i32
    %c0_i32_1 = arith.constant 0 : i32
    return %c0_i32, %c0_i32_0 : i32, i32
  }
  func.func @transform_9(%arg0: i32) -> (i32, i32, i32) {
    %c0_i32 = arith.constant 0 : i32
    %c0_i32_0 = arith.constant 0 : i32
    %c0_i32_1 = arith.constant 0 : i32
    %c0_i32_2 = arith.constant 0 : i32
    return %c0_i32, %c0_i32_0, %c0_i32_1 : i32, i32, i32
  }
  func.func @transform_10(%arg0: i32) -> (i32, i32) {
    %c0_i32 = arith.constant 0 : i32
    %c0_i32_0 = arith.constant 0 : i32
    %c0_i32_1 = arith.constant 0 : i32
    return %c0_i32, %c0_i32_0 : i32, i32
  }
  func.func @transform_11(%arg0: i32) -> (i32, i32) {
    %c0_i32 = arith.constant 0 : i32
    %c0_i32_0 = arith.constant 0 : i32
    %c0_i32_1 = arith.constant 0 : i32
    return %c0_i32, %c0_i32_0 : i32, i32
  }
  func.func @transform_12(%arg0: i32) -> (i32, i32) {
    %c0_i32 = arith.constant 0 : i32
    %c0_i32_0 = arith.constant 0 : i32
    %c0_i32_1 = arith.constant 0 : i32
    return %c0_i32, %c0_i32_0 : i32, i32
  }
  func.func @transform_13(%arg0: i32) -> (i32, i32, i32) {
    %c0_i32 = arith.constant 0 : i32
    %c0_i32_0 = arith.constant 0 : i32
    %c0_i32_1 = arith.constant 0 : i32
    %c0_i32_2 = arith.constant 0 : i32
    return %c0_i32, %c0_i32_0, %c0_i32_1 : i32, i32, i32
  }
  func.func @transform_14(%arg0: i32) -> (i32, i32) {
    %c0_i32 = arith.constant 0 : i32
    %c0_i32_0 = arith.constant 0 : i32
    %c0_i32_1 = arith.constant 0 : i32
    return %c0_i32, %c0_i32_0 : i32, i32
  }
  func.func @transform_15(%arg0: i32) -> (i32, i32, i32) {
    %c0_i32 = arith.constant 0 : i32
    %c0_i32_0 = arith.constant 0 : i32
    %c0_i32_1 = arith.constant 0 : i32
    %c0_i32_2 = arith.constant 0 : i32
    return %c0_i32, %c0_i32_0, %c0_i32_1 : i32, i32, i32
  }
  func.func @transform_16(%arg0: i32) -> (i32, i32) {
    %c0_i32 = arith.constant 0 : i32
    %c0_i32_0 = arith.constant 0 : i32
    %c0_i32_1 = arith.constant 0 : i32
    return %c0_i32, %c0_i32_0 : i32, i32
  }
  func.func @transform_17(%arg0: i32) -> (i32, i32) {
    %c0_i32 = arith.constant 0 : i32
    %c0_i32_0 = arith.constant 0 : i32
    %c0_i32_1 = arith.constant 0 : i32
    return %c0_i32, %c0_i32_0 : i32, i32
  }
  func.func @transform_18(%arg0: i32) -> (i32, i32) {
    %c0_i32 = arith.constant 0 : i32
    %c0_i32_0 = arith.constant 0 : i32
    %c0_i32_1 = arith.constant 0 : i32
    return %c0_i32, %c0_i32_0 : i32, i32
  }
  func.func @transform_19(%arg0: i32) -> (i32, i32) {
    %c0_i32 = arith.constant 0 : i32
    %c0_i32_0 = arith.constant 0 : i32
    %c0_i32_1 = arith.constant 0 : i32
    return %c0_i32, %c0_i32_0 : i32, i32
  }
  func.func @transform_20(%arg0: i32) -> (i32, i32) {
    %c0_i32 = arith.constant 0 : i32
    %c0_i32_0 = arith.constant 0 : i32
    %c0_i32_1 = arith.constant 0 : i32
    return %c0_i32, %c0_i32_0 : i32, i32
  }
  func.func @transform_21(%arg0: i32) -> (i32, i32, i32) {
    %c0_i32 = arith.constant 0 : i32
    %c0_i32_0 = arith.constant 0 : i32
    %c0_i32_1 = arith.constant 0 : i32
    return %arg0, %c0_i32, %c0_i32_0 : i32, i32, i32
  }
}

</mosaic_0001>

<llo_original>
// kernel: tpu_custom_call.1
$region0: #{tpu_custom_call.1}
  #allocation0 [shape = 'u32[]', space=smem, size = 0x4, offset = 0x4, fixed_abs, tag = 'smem constant byte address 0x4 - core index']
  #allocation1 [shape = 'u32[144,128]{1,0:T(1,128)}', space=vmem, size = 0x12000, scoped, tag = 'internal scratch']
  %s0 = inlined_call_operand.vmem [shape: f32[1,128,48], index: 0, kind: input, shape index: {}]
  %s1 = inlined_call_operand.vmem [shape: f32[48,32], index: 1, kind: input, shape index: {}]
  %s2 = inlined_call_operand.vmem [shape: f32[1,32], index: 2, kind: input, shape index: {}]
  %s3 = inlined_call_operand.vmem [shape: f32[1,32], index: 3, kind: input, shape index: {}]
  %s4 = inlined_call_operand.vmem [shape: f32[65,32], index: 4, kind: input, shape index: {}]
  %s5 = inlined_call_operand.vmem [shape: f32[2,32], index: 5, kind: input, shape index: {}]
  %s6 = inlined_call_operand.vmem [shape: f32[2,32], index: 6, kind: input, shape index: {}]
  %s7 = inlined_call_operand.vmem [shape: f32[2,32,96], index: 7, kind: input, shape index: {}]
  %s8 = inlined_call_operand.vmem [shape: f32[2,96], index: 8, kind: input, shape index: {}]
  %s9 = inlined_call_operand.vmem [shape: f32[2,32,32], index: 9, kind: input, shape index: {}]
  %s10 = inlined_call_operand.vmem [shape: f32[2,32], index: 10, kind: input, shape index: {}]
  %s11 = inlined_call_operand.vmem [shape: f32[2,32], index: 11, kind: input, shape index: {}]
  %s12 = inlined_call_operand.vmem [shape: f32[2,32], index: 12, kind: input, shape index: {}]
  %s13 = inlined_call_operand.vmem [shape: f32[2,32,64], index: 13, kind: input, shape index: {}]
  %s14 = inlined_call_operand.vmem [shape: f32[2,64], index: 14, kind: input, shape index: {}]
  %s15 = inlined_call_operand.vmem [shape: f32[2,64,32], index: 15, kind: input, shape index: {}]
  %s16 = inlined_call_operand.vmem [shape: f32[2,32], index: 16, kind: input, shape index: {}]
  %s17 = inlined_call_operand.vmem [shape: f32[1,32], index: 17, kind: input, shape index: {}]
  %s18 = inlined_call_operand.vmem [shape: f32[1,32], index: 18, kind: input, shape index: {}]
  %s19 = inlined_call_operand.vmem [shape: f32[32,10], index: 19, kind: input, shape index: {}]
  %s20 = inlined_call_operand.vmem [shape: f32[1,10], index: 20, kind: input, shape index: {}]
  %s21 = inlined_call_operand.hbm [shape: f32[1,2,10], index: 21, kind: output, shape index: {}]
  %s22 = sld [smem:[#allocation0]]
  $region94: #{tpu_custom_call.1} parent=0
    _
  %s24 = ssub.s32 1, %s22
  %s25 = scalar_select 0, %s24, %s22
  $region1: #{tpu_custom_call.1} parent=0
    #allocation2 [shape = 'u8[1024]{0}', space=vmem, size = 0x400, scoped, tag = 'output window, operand 0, single buffered']
    #allocation3 [shape = 's32[1]{0}', space=sflag, size = 0x4, scoped, tag = 'scoped memory for tpu_custom_call.1']
    %26 = vsyncpa [#allocation3], 0
    // Predicated region
    $region2: #{tpu_custom_call.1} parent=1 // pred_check
      _
    $region3: #{tpu_custom_call.1} parent=1 // pred_check_branch
      %28 = sbr.rel (0) target = $region5
    $region4: #{tpu_custom_call.1} parent=1 // pred_region
      _
    $region5: #{tpu_custom_call.1} parent=1 // pred_fallthru
      _
    // Predicated region
    $region6: #{tpu_custom_call.1} parent=1 // pred_check
      _
    $region7: #{tpu_custom_call.1} parent=1 // pred_check_branch
      %30 = sbr.rel (0) target = $region9
    $region8: #{tpu_custom_call.1} parent=1 // pred_region
      _
    $region9: #{tpu_custom_call.1} parent=1 // pred_fallthru
      _
    // Predicated region
    $region10: #{tpu_custom_call.1} parent=1 // pred_check
      _
    $region11: #{tpu_custom_call.1} parent=1 // pred_check_branch
      %32 = sbr.rel (0) target = $region13
    $region12: #{tpu_custom_call.1} parent=1 // pred_region
      _
    $region13: #{tpu_custom_call.1} parent=1 // pred_fallthru
      _
    // Predicated region
    $region14: #{tpu_custom_call.1} parent=1 // pred_check
      _
    $region15: #{tpu_custom_call.1} parent=1 // pred_check_branch
      %34 = sbr.rel (0) target = $region17
    $region16: #{tpu_custom_call.1} parent=1 // pred_region
      _
    $region17: #{tpu_custom_call.1} parent=1 // pred_fallthru
      _
    // Predicated region
    $region18: #{tpu_custom_call.1} parent=1 // pred_check
      _
    $region19: #{tpu_custom_call.1} parent=1 // pred_check_branch
      %36 = sbr.rel (0) target = $region21
    $region20: #{tpu_custom_call.1} parent=1 // pred_region
      _
    $region21: #{tpu_custom_call.1} parent=1 // pred_fallthru
      _
    // Predicated region
    $region22: #{tpu_custom_call.1} parent=1 // pred_check
      _
    $region23: #{tpu_custom_call.1} parent=1 // pred_check_branch
      %38 = sbr.rel (0) target = $region25
    $region24: #{tpu_custom_call.1} parent=1 // pred_region
      _
    $region25: #{tpu_custom_call.1} parent=1 // pred_fallthru
      _
    // Predicated region
    $region26: #{tpu_custom_call.1} parent=1 // pred_check
      _
    $region27: #{tpu_custom_call.1} parent=1 // pred_check_branch
      %40 = sbr.rel (0) target = $region29
    $region28: #{tpu_custom_call.1} parent=1 // pred_region
      _
    $region29: #{tpu_custom_call.1} parent=1 // pred_fallthru
      _
    // Predicated region
    $region30: #{tpu_custom_call.1} parent=1 // pred_check
      _
    $region31: #{tpu_custom_call.1} parent=1 // pred_check_branch
      %42 = sbr.rel (0) target = $region33
    $region32: #{tpu_custom_call.1} parent=1 // pred_region
      _
    $region33: #{tpu_custom_call.1} parent=1 // pred_fallthru
      _
    // Predicated region
    $region34: #{tpu_custom_call.1} parent=1 // pred_check
      _
    $region35: #{tpu_custom_call.1} parent=1 // pred_check_branch
      %44 = sbr.rel (0) target = $region37
    $region36: #{tpu_custom_call.1} parent=1 // pred_region
      _
    $region37: #{tpu_custom_call.1} parent=1 // pred_fallthru
      _
    // Predicated region
    $region38: #{tpu_custom_call.1} parent=1 // pred_check
      _
    $region39: #{tpu_custom_call.1} parent=1 // pred_check_branch
      %46 = sbr.rel (0) target = $region41
    $region40: #{tpu_custom_call.1} parent=1 // pred_region
      _
    $region41: #{tpu_custom_call.1} parent=1 // pred_fallthru
      _
    // Predicated region
    $region42: #{tpu_custom_call.1} parent=1 // pred_check
      _
    $region43: #{tpu_custom_call.1} parent=1 // pred_check_branch
      %48 = sbr.rel (0) target = $region45
    $region44: #{tpu_custom_call.1} parent=1 // pred_region
      _
    $region45: #{tpu_custom_call.1} parent=1 // pred_fallthru
      _
    // Predicated region
    $region46: #{tpu_custom_call.1} parent=1 // pred_check
      _
    $region47: #{tpu_custom_call.1} parent=1 // pred_check_branch
      %50 = sbr.rel (0) target = $region49
    $region48: #{tpu_custom_call.1} parent=1 // pred_region
      _
    $region49: #{tpu_custom_call.1} parent=1 // pred_fallthru
      _
    // Predicated region
    $region50: #{tpu_custom_call.1} parent=1 // pred_check
      _
    $region51: #{tpu_custom_call.1} parent=1 // pred_check_branch
      %52 = sbr.rel (0) target = $region53
    $region52: #{tpu_custom_call.1} parent=1 // pred_region
      _
    $region53: #{tpu_custom_call.1} parent=1 // pred_fallthru
      _
    // Predicated region
    $region54: #{tpu_custom_call.1} parent=1 // pred_check
      _
    $region55: #{tpu_custom_call.1} parent=1 // pred_check_branch
      %54 = sbr.rel (0) target = $region57
    $region56: #{tpu_custom_call.1} parent=1 // pred_region
      _
    $region57: #{tpu_custom_call.1} parent=1 // pred_fallthru
      _
    // Predicated region
    $region58: #{tpu_custom_call.1} parent=1 // pred_check
      _
    $region59: #{tpu_custom_call.1} parent=1 // pred_check_branch
      %56 = sbr.rel (0) target = $region61
    $region60: #{tpu_custom_call.1} parent=1 // pred_region
      _
    $region61: #{tpu_custom_call.1} parent=1 // pred_fallthru
      _
    // Predicated region
    $region62: #{tpu_custom_call.1} parent=1 // pred_check
      _
    $region63: #{tpu_custom_call.1} parent=1 // pred_check_branch
      %58 = sbr.rel (0) target = $region65
    $region64: #{tpu_custom_call.1} parent=1 // pred_region
      _
    $region65: #{tpu_custom_call.1} parent=1 // pred_fallthru
      _
    // Predicated region
    $region66: #{tpu_custom_call.1} parent=1 // pred_check
      _
    $region67: #{tpu_custom_call.1} parent=1 // pred_check_branch
      %60 = sbr.rel (0) target = $region69
    $region68: #{tpu_custom_call.1} parent=1 // pred_region
      _
    $region69: #{tpu_custom_call.1} parent=1 // pred_fallthru
      _
    // Predicated region
    $region70: #{tpu_custom_call.1} parent=1 // pred_check
      _
    $region71: #{tpu_custom_call.1} parent=1 // pred_check_branch
      %62 = sbr.rel (0) target = $region73
    $region72: #{tpu_custom_call.1} parent=1 // pred_region
      _
    $region73: #{tpu_custom_call.1} parent=1 // pred_fallthru
      _
    // Predicated region
    $region74: #{tpu_custom_call.1} parent=1 // pred_check
      _
    $region75: #{tpu_custom_call.1} parent=1 // pred_check_branch
      %64 = sbr.rel (0) target = $region77
    $region76: #{tpu_custom_call.1} parent=1 // pred_region
      _
    $region77: #{tpu_custom_call.1} parent=1 // pred_fallthru
      _
    // Predicated region
    $region78: #{tpu_custom_call.1} parent=1 // pred_check
      _
    $region79: #{tpu_custom_call.1} parent=1 // pred_check_branch
      %66 = sbr.rel (0) target = $region81
    $region80: #{tpu_custom_call.1} parent=1 // pred_region
      _
    $region81: #{tpu_custom_call.1} parent=1 // pred_fallthru
      _
    // Predicated region
    $region82: #{tpu_custom_call.1} parent=1 // pred_check
      _
    $region83: #{tpu_custom_call.1} parent=1 // pred_check_branch
      %68 = sbr.rel (0) target = $region85
    $region84: #{tpu_custom_call.1} parent=1 // pred_region
      _
    $region85: #{tpu_custom_call.1} parent=1 // pred_fallthru
      _
    %v69 = vld [vmem:[%s0] sm:$0xff]
    %v70 = vld [vmem:[%s0 + $0x8] sm:$0xff]
    %v71 = vld [vmem:[%s0 + $0x10] sm:$0xff]
    %v72 = vld [vmem:[%s0 + $0x18] sm:$0xff]
    %v73 = vld [vmem:[%s0 + $0x20] sm:$0xff]
    %v74 = vld [vmem:[%s0 + $0x28] sm:$0xff]
    %v75 = vld [vmem:[%s0 + $0x30] sm:$0xff]
    %v76 = vld [vmem:[%s0 + $0x38] sm:$0xff]
    %v77 = vld [vmem:[%s0 + $0x40] sm:$0xff]
    %v78 = vld [vmem:[%s0 + $0x48] sm:$0xff]
    %v79 = vld [vmem:[%s0 + $0x50] sm:$0xff]
    %v80 = vld [vmem:[%s0 + $0x58] sm:$0xff]
    %v81 = vld [vmem:[%s0 + $0x60] sm:$0xff]
    %v82 = vld [vmem:[%s0 + $0x68] sm:$0xff]
    %v83 = vld [vmem:[%s0 + $0x70] sm:$0xff]
    %v84 = vld [vmem:[%s0 + $0x78] sm:$0xff]
    %v85 = vld [vmem:[%s1] sm:$0xff]
    %v86 = vld [vmem:[%s1 + $0x8] sm:$0xff]
    %v87 = vld [vmem:[%s1 + $0x10] sm:$0xff]
    %v88 = vld [vmem:[%s1 + $0x18] sm:$0xff]
    %v89 = vld [vmem:[%s1 + $0x20] sm:$0xff]
    %v90 = vld [vmem:[%s1 + $0x28] sm:$0xff]
    %v91 = vld [vmem:[%s2] sm:$0x1]
    %v93 = vlaneseq
    %v94 = vshrl.u32 %v93, 7
    %v95 = vsub.s32 0, %v94
    %v96 = vrot.slane %v91, %v95
    %vm98 = vcmask 392192
    %v100 = vsel %vm98, %v69, 0
    %v103 = vsel %vm98, %v70, 0
    %v106 = vsel %vm98, %v71, 0
    %v109 = vsel %vm98, %v72, 0
    %v112 = vsel %vm98, %v73, 0
    %v115 = vsel %vm98, %v74, 0
    %v118 = vsel %vm98, %v75, 0
    %v121 = vsel %vm98, %v76, 0
    %v124 = vsel %vm98, %v77, 0
    %v127 = vsel %vm98, %v78, 0
    %v130 = vsel %vm98, %v79, 0
    %v133 = vsel %vm98, %v80, 0
    %v136 = vsel %vm98, %v81, 0
    %v139 = vsel %vm98, %v82, 0
    %v142 = vsel %vm98, %v83, 0
    %v145 = vsel %vm98, %v84, 0
    %147 = vmatprep.subr.mxu0 0.0
    %148 = vmatpush1.msra.mxu0 0.0
    %149 = vmatprep.subr.mxu0 0.0
    %150 = vmatpush1.msra.mxu0 0.0
    %151 = vmatprep.subr.mxu0 0.0
    %152 = vmatpush1.msra.mxu0 0.0
    %153 = vmatprep.subr.mxu0 0.0
    %154 = vmatpush1.msra.mxu0 0.0
    %155 = vmatprep.subr.mxu0 0.0
    %156 = vmatpush1.msra.mxu0 0.0
    %157 = vmatprep.subr.mxu0 0.0
    %158 = vmatpush1.msra.mxu0 0.0
    %159 = vmatprep.subr.mxu0 0.0
    %160 = vmatpush1.msra.mxu0 0.0
    %161 = vmatprep.subr.mxu0 0.0
    %162 = vmatpush1.msra.mxu0 0.0
    %163 = vmatprep.subr.mxu0 0.0
    %164 = vmatpush1.msra.mxu0 0.0
    %165 = vmatprep.subr.mxu0 0.0
    %166 = vmatpush1.msra.mxu0 0.0
    %167 = vmatprep.subr.mxu0 0.0
    %168 = vmatpush1.msra.mxu0 %v90
    %169 = vmatprep.subr.mxu0 0.0
    %170 = vmatpush1.msra.mxu0 %v89
    %171 = vmatprep.subr.mxu0 0.0
    %172 = vmatpush1.msra.mxu0 %v88
    %173 = vmatprep.subr.mxu0 0.0
    %174 = vmatpush1.msra.mxu0 %v87
    %175 = vmatprep.subr.mxu0 0.0
    %176 = vmatpush1.msra.mxu0 %v86
    %177 = vmatprep.subr.mxu0 0.0
    %178 = vmatpush1.msra.mxu0 %v85
    %179 = vmatprep.subr.mxu0 0.0
    %180 = vmatpush2.msra.mxu0 0.0
    %181 = vmatprep.subr.mxu0 0.0
    %182 = vmatpush2.msra.mxu0 0.0
    %183 = vmatprep.subr.mxu0 0.0
    %184 = vmatpush2.msra.mxu0 0.0
    %185 = vmatprep.subr.mxu0 0.0
    %186 = vmatpush2.msra.mxu0 0.0
    %187 = vmatprep.subr.mxu0 0.0
    %188 = vmatpush2.msra.mxu0 0.0
    %189 = vmatprep.subr.mxu0 0.0
    %190 = vmatpush2.msra.mxu0 0.0
    %191 = vmatprep.subr.mxu0 0.0
    %192 = vmatpush2.msra.mxu0 0.0
    %193 = vmatprep.subr.mxu0 0.0
    %194 = vmatpush2.msra.mxu0 0.0
    %195 = vmatprep.subr.mxu0 0.0
    %196 = vmatpush2.msra.mxu0 0.0
    %197 = vmatprep.subr.mxu0 0.0
    %198 = vmatpush2.msra.mxu0 0.0
    %199 = vmatprep.subr.mxu0 0.0
    %200 = vmatpush2.msra.mxu0 0.0
    %201 = vmatprep.subr.mxu0 0.0
    %202 = vmatpush2.msra.mxu0 0.0
    %203 = vmatprep.subr.mxu0 0.0
    %204 = vmatpush2.msra.mxu0 0.0
    %205 = vmatprep.subr.mxu0 0.0
    %206 = vmatpush2.msra.mxu0 0.0
    %207 = vmatprep.subr.mxu0 0.0
    %208 = vmatpush2.msra.mxu0 0.0
    %209 = vmatprep.subr.mxu0 0.0
    %210 = vmatpush2.msra.mxu0 0.0
    %211 = vmatprep.mubr.f32.mxu0 0.0
    %212 = vmatmul.mubr.f32.gmra.mxu0 %v100
    %v213 = vpop.f32.mrf.mxu0
    %v214 = vadd.f32 %v96, %v213
    %v215 = vpop.f32.mrf.mxu0
    %216 = vmatprep.mubr.f32.mxu0 0.0
    %217 = vmatmul.mubr.f32.gmra.mxu0 %v103
    %v218 = vpop.f32.mrf.mxu0
    %v219 = vadd.f32 %v96, %v218
    %v220 = vpop.f32.mrf.mxu0
    %221 = vmatprep.mubr.f32.mxu0 0.0
    %222 = vmatmul.mubr.f32.gmra.mxu0 %v106
    %v223 = vpop.f32.mrf.mxu0
    %v224 = vadd.f32 %v96, %v223
    %v225 = vpop.f32.mrf.mxu0
    %226 = vmatprep.mubr.f32.mxu0 0.0
    %227 = vmatmul.mubr.f32.gmra.mxu0 %v109
    %v228 = vpop.f32.mrf.mxu0
    %v229 = vadd.f32 %v96, %v228
    %v230 = vpop.f32.mrf.mxu0
    %231 = vmatprep.mubr.f32.mxu0 0.0
    %232 = vmatmul.mubr.f32.gmra.mxu0 %v112
    %v233 = vpop.f32.mrf.mxu0
    %v234 = vadd.f32 %v96, %v233
    %v235 = vpop.f32.mrf.mxu0
    %236 = vmatprep.mubr.f32.mxu0 0.0
    %237 = vmatmul.mubr.f32.gmra.mxu0 %v115
    %v238 = vpop.f32.mrf.mxu0
    %v239 = vadd.f32 %v96, %v238
    %v240 = vpop.f32.mrf.mxu0
    %241 = vmatprep.mubr.f32.mxu0 0.0
    %242 = vmatmul.mubr.f32.gmra.mxu0 %v118
    %v243 = vpop.f32.mrf.mxu0
    %v244 = vadd.f32 %v96, %v243
    %v245 = vpop.f32.mrf.mxu0
    %246 = vmatprep.mubr.f32.mxu0 0.0
    %247 = vmatmul.mubr.f32.gmra.mxu0 %v121
    %v248 = vpop.f32.mrf.mxu0
    %v249 = vadd.f32 %v96, %v248
    %v250 = vpop.f32.mrf.mxu0
    %251 = vmatprep.mubr.f32.mxu0 0.0
    %252 = vmatmul.mubr.f32.gmra.mxu0 %v124
    %v253 = vpop.f32.mrf.mxu0
    %v254 = vadd.f32 %v96, %v253
    %v255 = vpop.f32.mrf.mxu0
    %256 = vmatprep.mubr.f32.mxu0 0.0
    %257 = vmatmul.mubr.f32.gmra.mxu0 %v127
    %v258 = vpop.f32.mrf.mxu0
    %v259 = vadd.f32 %v96, %v258
    %v260 = vpop.f32.mrf.mxu0
    %261 = vmatprep.mubr.f32.mxu0 0.0
    %262 = vmatmul.mubr.f32.gmra.mxu0 %v130
    %v263 = vpop.f32.mrf.mxu0
    %v264 = vadd.f32 %v96, %v263
    %v265 = vpop.f32.mrf.mxu0
    %266 = vmatprep.mubr.f32.mxu0 0.0
    %267 = vmatmul.mubr.f32.gmra.mxu0 %v133
    %v268 = vpop.f32.mrf.mxu0
    %v269 = vadd.f32 %v96, %v268
    %v270 = vpop.f32.mrf.mxu0
    %271 = vmatprep.mubr.f32.mxu0 0.0
    %272 = vmatmul.mubr.f32.gmra.mxu0 %v136
    %v273 = vpop.f32.mrf.mxu0
    %v274 = vadd.f32 %v96, %v273
    %v275 = vpop.f32.mrf.mxu0
    %276 = vmatprep.mubr.f32.mxu0 0.0
    %277 = vmatmul.mubr.f32.gmra.mxu0 %v139
    %v278 = vpop.f32.mrf.mxu0
    %v279 = vadd.f32 %v96, %v278
    %v280 = vpop.f32.mrf.mxu0
    %281 = vmatprep.mubr.f32.mxu0 0.0
    %282 = vmatmul.mubr.f32.gmra.mxu0 %v142
    %v283 = vpop.f32.mrf.mxu0
    %v284 = vadd.f32 %v96, %v283
    %v285 = vpop.f32.mrf.mxu0
    %286 = vmatprep.mubr.f32.mxu0 0.0
    %287 = vmatmul.mubr.f32.gmra.mxu0 %v145
    %v288 = vpop.f32.mrf.mxu0
    %v289 = vadd.f32 %v96, %v288
    %v290 = vpop.f32.mrf.mxu0
    %291 = vdwg.mxu0
    %v292 = vld [vmem:[%s4] sm:$0xff]
    %v293 = vld [vmem:[%s4 + $0x8] sm:$0xff]
    %v294 = vld [vmem:[%s4 + $0x10] sm:$0xff]
    %v295 = vld [vmem:[%s4 + $0x18] sm:$0xff]
    %v296 = vld [vmem:[%s4 + $0x20] sm:$0xff]
    %v297 = vld [vmem:[%s4 + $0x28] sm:$0xff]
    %v298 = vld [vmem:[%s4 + $0x30] sm:$0xff]
    %v299 = vld [vmem:[%s4 + $0x38] sm:$0xff]
    %v300 = vld [vmem:[%s4 + $0x40] sm:$0x1]
    %v301 = vld [vmem:[%s3] sm:$0x1]
    %v302 = vadd.f32 %v301, %v292
    %vm312 = vcmask 1046528
    %v313 = vrot.slane %v292, 1
    %v314 = vrot.slane %v293, 1
    %v315 = vsel %vm312, %v313, %v314
    %v316 = vrot.slane %v294, 1
    %v317 = vsel %vm312, %v314, %v316
    %v318 = vrot.slane %v295, 1
    %v319 = vsel %vm312, %v316, %v318
    %v320 = vrot.slane %v296, 1
    %v321 = vsel %vm312, %v318, %v320
    %v322 = vrot.slane %v297, 1
    %v323 = vsel %vm312, %v320, %v322
    %v324 = vrot.slane %v298, 1
    %v325 = vsel %vm312, %v322, %v324
    %v326 = vrot.slane %v299, 1
    %v327 = vsel %vm312, %v324, %v326
    %v328 = vrot.slane %v300, 1
    %v329 = vsel %vm312, %v326, %v328
    %v338 = vadd.f32 %v214, %v315
    %v339 = vadd.f32 %v219, %v317
    %v340 = vadd.f32 %v224, %v319
    %v341 = vadd.f32 %v229, %v321
    %v342 = vadd.f32 %v234, %v323
    %v343 = vadd.f32 %v239, %v325
    %v344 = vadd.f32 %v244, %v327
    %v345 = vadd.f32 %v249, %v329
    %v346 = vadd.f32 %v254, %v315
    %v347 = vadd.f32 %v259, %v317
    %v348 = vadd.f32 %v264, %v319
    %v349 = vadd.f32 %v269, %v321
    %v350 = vadd.f32 %v274, %v323
    %v351 = vadd.f32 %v279, %v325
    %v352 = vadd.f32 %v284, %v327
    %v353 = vadd.f32 %v289, %v329
    %vm362 = vcmask 1040384
    %v363 = vrot.slane %v338, 7
    %v364 = vrot.slane %v339, 7
    %v365 = vsel %vm362, %v363, %v364
    %v366 = vrot.slane %v340, 7
    %v367 = vsel %vm362, %v364, %v366
    %v368 = vrot.slane %v341, 7
    %v369 = vsel %vm362, %v366, %v368
    %v370 = vrot.slane %v342, 7
    %v371 = vsel %vm362, %v368, %v370
    %v372 = vrot.slane %v343, 7
    %v373 = vsel %vm362, %v370, %v372
    %v374 = vrot.slane %v344, 7
    %v375 = vsel %vm362, %v372, %v374
    %v376 = vrot.slane %v345, 7
    %v377 = vsel %vm362, %v374, %v376
    %v388 = vlaneseq
    %v389 = vshrl.u32 %v388, 7
    %v390 = vsub.s32 0, %v389
    %v391 = vrot.slane %v302, %v390
    %vm401 = vcmask 1041408
    %v402 = vrot.slane %v346, 6
    %v403 = vrot.slane %v347, 6
    %v404 = vsel %vm401, %v402, %v403
    %v405 = vrot.slane %v348, 6
    %v406 = vsel %vm401, %v403, %v405
    %v407 = vrot.slane %v349, 6
    %v408 = vsel %vm401, %v405, %v407
    %v409 = vrot.slane %v350, 6
    %v410 = vsel %vm401, %v407, %v409
    %v411 = vrot.slane %v351, 6
    %v412 = vsel %vm401, %v409, %v411
    %v413 = vrot.slane %v352, 6
    %v414 = vsel %vm401, %v411, %v413
    %v415 = vrot.slane %v353, 6
    %v416 = vsel %vm401, %v413, %v415
    %v426 = vsel %vm362, %v302, %v363
    %v427 = vsel %vm362, %v376, %v391
    %v428 = vsel %vm401, %v427, %v402
    %v429 = vld [vmem:[%s5] sm:$0x1]
    %v430 = vld [vmem:[%s6] sm:$0x1]
    %vm431 = vcmask 261120
    %v432 = vsel %vm431, %v426, 0.0
    %433 = vadd.xlane.f32.xlu0 %v432
    %v434 = vpop.xlane.xlu0 %433
    %v435 = vsel %vm431, %v365, 0.0
    %436 = vadd.xlane.f32.xlu0 %v435
    %v437 = vpop.xlane.xlu0 %436
    %v438 = vsel %vm431, %v367, 0.0
    %439 = vadd.xlane.f32.xlu0 %v438
    %v440 = vpop.xlane.xlu0 %439
    %v441 = vsel %vm431, %v369, 0.0
    %442 = vadd.xlane.f32.xlu0 %v441
    %v443 = vpop.xlane.xlu0 %442
    %v444 = vsel %vm431, %v371, 0.0
    %445 = vadd.xlane.f32.xlu0 %v444
    %v446 = vpop.xlane.xlu0 %445
    %v447 = vsel %vm431, %v373, 0.0
    %448 = vadd.xlane.f32.xlu0 %v447
    %v449 = vpop.xlane.xlu0 %448
    %v450 = vsel %vm431, %v375, 0.0
    %451 = vadd.xlane.f32.xlu0 %v450
    %v452 = vpop.xlane.xlu0 %451
    %v453 = vsel %vm431, %v377, 0.0
    %454 = vadd.xlane.f32.xlu0 %v453
    %v455 = vpop.xlane.xlu0 %454
    %v456 = vsel %vm431, %v428, 0.0
    %457 = vadd.xlane.f32.xlu0 %v456
    %v458 = vpop.xlane.xlu0 %457
    %v459 = vsel %vm431, %v404, 0.0
    %460 = vadd.xlane.f32.xlu0 %v459
    %v461 = vpop.xlane.xlu0 %460
    %v462 = vsel %vm431, %v406, 0.0
    %463 = vadd.xlane.f32.xlu0 %v462
    %v464 = vpop.xlane.xlu0 %463
    %v465 = vsel %vm431, %v408, 0.0
    %466 = vadd.xlane.f32.xlu0 %v465
    %v467 = vpop.xlane.xlu0 %466
    %v468 = vsel %vm431, %v410, 0.0
    %469 = vadd.xlane.f32.xlu0 %v468
    %v470 = vpop.xlane.xlu0 %469
    %v471 = vsel %vm431, %v412, 0.0
    %472 = vadd.xlane.f32.xlu0 %v471
    %v473 = vpop.xlane.xlu0 %472
    %v474 = vsel %vm431, %v414, 0.0
    %475 = vadd.xlane.f32.xlu0 %v474
    %v476 = vpop.xlane.xlu0 %475
    %v477 = vsel %vm431, %v416, 0.0
    %478 = vadd.xlane.f32.xlu0 %v477
    %v479 = vpop.xlane.xlu0 %478
    %vm480 = vcmask 254976
    %v481 = vsel %vm480, %v415, 0.0
    %482 = vadd.xlane.f32.xlu0 %v481
    %v483 = vpop.xlane.xlu0 %482
    %v484 = vrcp.pop 32.0
    %v485 = vmul.f32 %v434, %v484
    %v486 = vmul.f32 %v437, %v484
    %v487 = vmul.f32 %v440, %v484
    %v488 = vmul.f32 %v443, %v484
    %v489 = vmul.f32 %v446, %v484
    %v490 = vmul.f32 %v449, %v484
    %v491 = vmul.f32 %v452, %v484
    %v492 = vmul.f32 %v455, %v484
    %v493 = vmul.f32 %v458, %v484
    %v494 = vmul.f32 %v461, %v484
    %v495 = vmul.f32 %v464, %v484
    %v496 = vmul.f32 %v467, %v484
    %v497 = vmul.f32 %v470, %v484
    %v498 = vmul.f32 %v473, %v484
    %v499 = vmul.f32 %v476, %v484
    %v500 = vmul.f32 %v479, %v484
    %v501 = vmul.f32 %v483, %v484
    %v502 = vsub.f32 %v426, %v485
    %v503 = vsub.f32 %v365, %v486
    %v504 = vsub.f32 %v367, %v487
    %v505 = vsub.f32 %v369, %v488
    %v506 = vsub.f32 %v371, %v489
    %v507 = vsub.f32 %v373, %v490
    %v508 = vsub.f32 %v375, %v491
    %v509 = vsub.f32 %v377, %v492
    %v510 = vsub.f32 %v428, %v493
    %v511 = vsub.f32 %v404, %v494
    %v512 = vsub.f32 %v406, %v495
    %v513 = vsub.f32 %v408, %v496
    %v514 = vsub.f32 %v410, %v497
    %v515 = vsub.f32 %v412, %v498
    %v516 = vsub.f32 %v414, %v499
    %v517 = vsub.f32 %v416, %v500
    %v518 = vsub.f32 %v415, %v501
    %v519 = vmul.f32 %v502, %v502
    %v520 = vmul.f32 %v503, %v503
    %v521 = vmul.f32 %v504, %v504
    %v522 = vmul.f32 %v505, %v505
    %v523 = vmul.f32 %v506, %v506
    %v524 = vmul.f32 %v507, %v507
    %v525 = vmul.f32 %v508, %v508
    %v526 = vmul.f32 %v509, %v509
    %v527 = vmul.f32 %v510, %v510
    %v528 = vmul.f32 %v511, %v511
    %v529 = vmul.f32 %v512, %v512
    %v530 = vmul.f32 %v513, %v513
    %v531 = vmul.f32 %v514, %v514
    %v532 = vmul.f32 %v515, %v515
    %v533 = vmul.f32 %v516, %v516
    %v534 = vmul.f32 %v517, %v517
    %v535 = vmul.f32 %v518, %v518
    %v536 = vsel %vm431, %v519, 0.0
    %537 = vadd.xlane.f32.xlu0 %v536
    %v538 = vpop.xlane.xlu0 %537
    %v539 = vsel %vm431, %v520, 0.0
    %540 = vadd.xlane.f32.xlu0 %v539
    %v541 = vpop.xlane.xlu0 %540
    %v542 = vsel %vm431, %v521, 0.0
    %543 = vadd.xlane.f32.xlu0 %v542
    %v544 = vpop.xlane.xlu0 %543
    %v545 = vsel %vm431, %v522, 0.0
    %546 = vadd.xlane.f32.xlu0 %v545
    %v547 = vpop.xlane.xlu0 %546
    %v548 = vsel %vm431, %v523, 0.0
    %549 = vadd.xlane.f32.xlu0 %v548
    %v550 = vpop.xlane.xlu0 %549
    %v551 = vsel %vm431, %v524, 0.0
    %552 = vadd.xlane.f32.xlu0 %v551
    %v553 = vpop.xlane.xlu0 %552
    %v554 = vsel %vm431, %v525, 0.0
    %555 = vadd.xlane.f32.xlu0 %v554
    %v556 = vpop.xlane.xlu0 %555
    %v557 = vsel %vm431, %v526, 0.0
    %558 = vadd.xlane.f32.xlu0 %v557
    %v559 = vpop.xlane.xlu0 %558
    %v560 = vsel %vm431, %v527, 0.0
    %561 = vadd.xlane.f32.xlu0 %v560
    %v562 = vpop.xlane.xlu0 %561
    %v563 = vsel %vm431, %v528, 0.0
    %564 = vadd.xlane.f32.xlu0 %v563
    %v565 = vpop.xlane.xlu0 %564
    %v566 = vsel %vm431, %v529, 0.0
    %567 = vadd.xlane.f32.xlu0 %v566
    %v568 = vpop.xlane.xlu0 %567
    %v569 = vsel %vm431, %v530, 0.0
    %570 = vadd.xlane.f32.xlu0 %v569
    %v571 = vpop.xlane.xlu0 %570
    %v572 = vsel %vm431, %v531, 0.0
    %573 = vadd.xlane.f32.xlu0 %v572
    %v574 = vpop.xlane.xlu0 %573
    %v575 = vsel %vm431, %v532, 0.0
    %576 = vadd.xlane.f32.xlu0 %v575
    %v577 = vpop.xlane.xlu0 %576
    %v578 = vsel %vm431, %v533, 0.0
    %579 = vadd.xlane.f32.xlu0 %v578
    %v580 = vpop.xlane.xlu0 %579
    %v581 = vsel %vm431, %v534, 0.0
    %582 = vadd.xlane.f32.xlu0 %v581
    %v583 = vpop.xlane.xlu0 %582
    %v584 = vsel %vm480, %v535, 0.0
    %585 = vadd.xlane.f32.xlu0 %v584
    %v586 = vpop.xlane.xlu0 %585
    %v587 = vmul.f32 %v538, %v484
    %v588 = vmul.f32 %v541, %v484
    %v589 = vmul.f32 %v544, %v484
    %v590 = vmul.f32 %v547, %v484
    %v591 = vmul.f32 %v550, %v484
    %v592 = vmul.f32 %v553, %v484
    %v593 = vmul.f32 %v556, %v484
    %v594 = vmul.f32 %v559, %v484
    %v595 = vmul.f32 %v562, %v484
    %v596 = vmul.f32 %v565, %v484
    %v597 = vmul.f32 %v568, %v484
    %v598 = vmul.f32 %v571, %v484
    %v599 = vmul.f32 %v574, %v484
    %v600 = vmul.f32 %v577, %v484
    %v601 = vmul.f32 %v580, %v484
    %v602 = vmul.f32 %v583, %v484
    %v603 = vmul.f32 %v586, %v484
    %v604 = vadd.f32 %v587, 1e-05
    %v605 = vadd.f32 %v588, 1e-05
    %v606 = vadd.f32 %v589, 1e-05
    %v607 = vadd.f32 %v590, 1e-05
    %v608 = vadd.f32 %v591, 1e-05
    %v609 = vadd.f32 %v592, 1e-05
    %v610 = vadd.f32 %v593, 1e-05
    %v611 = vadd.f32 %v594, 1e-05
    %v612 = vadd.f32 %v595, 1e-05
    %v613 = vadd.f32 %v596, 1e-05
    %v614 = vadd.f32 %v597, 1e-05
    %v615 = vadd.f32 %v598, 1e-05
    %v616 = vadd.f32 %v599, 1e-05
    %v617 = vadd.f32 %v600, 1e-05
    %v618 = vadd.f32 %v601, 1e-05
    %v619 = vadd.f32 %v602, 1e-05
    %v620 = vadd.f32 %v603, 1e-05
    %v621 = vrsqrt.pop %v604
    %v622 = vrsqrt.pop %v605
    %v623 = vrsqrt.pop %v606
    %v624 = vrsqrt.pop %v607
    %v625 = vrsqrt.pop %v608
    %v626 = vrsqrt.pop %v609
    %v627 = vrsqrt.pop %v610
    %v628 = vrsqrt.pop %v611
    %v629 = vrsqrt.pop %v612
    %v630 = vrsqrt.pop %v613
    %v631 = vrsqrt.pop %v614
    %v632 = vrsqrt.pop %v615
    %v633 = vrsqrt.pop %v616
    %v634 = vrsqrt.pop %v617
    %v635 = vrsqrt.pop %v618
    %v636 = vrsqrt.pop %v619
    %v637 = vrsqrt.pop %v620
    %v638 = vmul.f32 %v502, %v621
    %v639 = vmul.f32 %v503, %v622
    %v640 = vmul.f32 %v504, %v623
    %v641 = vmul.f32 %v505, %v624
    %v642 = vmul.f32 %v506, %v625
    %v643 = vmul.f32 %v507, %v626
    %v644 = vmul.f32 %v508, %v627
    %v645 = vmul.f32 %v509, %v628
    %v646 = vmul.f32 %v510, %v629
    %v647 = vmul.f32 %v511, %v630
    %v648 = vmul.f32 %v512, %v631
    %v649 = vmul.f32 %v513, %v632
    %v650 = vmul.f32 %v514, %v633
    %v651 = vmul.f32 %v515, %v634
    %v652 = vmul.f32 %v516, %v635
    %v653 = vmul.f32 %v517, %v636
    %v654 = vmul.f32 %v518, %v637
    %v655 = vlaneseq
    %v656 = vshrl.u32 %v655, 7
    %v657 = vsub.s32 0, %v656
    %v658 = vrot.slane %v429, %v657
    %v659 = vmul.f32 %v638, %v658
    %v660 = vmul.f32 %v639, %v658
    %v661 = vmul.f32 %v640, %v658
    %v662 = vmul.f32 %v641, %v658
    %v663 = vmul.f32 %v642, %v658
    %v664 = vmul.f32 %v643, %v658
    %v665 = vmul.f32 %v644, %v658
    %v666 = vmul.f32 %v645, %v658
    %v667 = vmul.f32 %v646, %v658
    %v668 = vmul.f32 %v647, %v658
    %v669 = vmul.f32 %v648, %v658
    %v670 = vmul.f32 %v649, %v658
    %v671 = vmul.f32 %v650, %v658
    %v672 = vmul.f32 %v651, %v658
    %v673 = vmul.f32 %v652, %v658
    %v674 = vmul.f32 %v653, %v658
    %v675 = vmul.f32 %v654, %v658
    %v676 = vlaneseq
    %v677 = vshrl.u32 %v676, 7
    %v678 = vsub.s32 0, %v677
    %v679 = vrot.slane %v430, %v678
    %v680 = vadd.f32 %v659, %v679
    %v681 = vadd.f32 %v660, %v679
    %v682 = vadd.f32 %v661, %v679
    %v683 = vadd.f32 %v662, %v679
    %v684 = vadd.f32 %v663, %v679
    %v685 = vadd.f32 %v664, %v679
    %v686 = vadd.f32 %v665, %v679
    %v687 = vadd.f32 %v666, %v679
    %v688 = vadd.f32 %v667, %v679
    %v689 = vadd.f32 %v668, %v679
    %v690 = vadd.f32 %v669, %v679
    %v691 = vadd.f32 %v670, %v679
    %v692 = vadd.f32 %v671, %v679
    %v693 = vadd.f32 %v672, %v679
    %v694 = vadd.f32 %v673, %v679
    %v695 = vadd.f32 %v674, %v679
    %v696 = vadd.f32 %v675, %v679
    %v697 = vld [vmem:[%s7] sm:$0xff]
    %v698 = vld [vmem:[%s7 + $0x8] sm:$0xff]
    %v699 = vld [vmem:[%s7 + $0x10] sm:$0xff]
    %v700 = vld [vmem:[%s7 + $0x18] sm:$0xff]
    %v701 = vld [vmem:[%s8] sm:$0x1]
    %v702 = vlaneseq
    %v703 = vshrl.u32 %v702, 7
    %v704 = vsub.s32 0, %v703
    %v705 = vrot.slane %v701, %v704
    %v707 = vsel %vm431, %v680, 0
    %v710 = vsel %vm431, %v681, 0
    %v713 = vsel %vm431, %v682, 0
    %v716 = vsel %vm431, %v683, 0
    %v719 = vsel %vm431, %v684, 0
    %v722 = vsel %vm431, %v685, 0
    %v725 = vsel %vm431, %v686, 0
    %v728 = vsel %vm431, %v687, 0
    %v731 = vsel %vm431, %v688, 0
    %v734 = vsel %vm431, %v689, 0
    %v737 = vsel %vm431, %v690, 0
    %v740 = vsel %vm431, %v691, 0
    %v743 = vsel %vm431, %v692, 0
    %v746 = vsel %vm431, %v693, 0
    %v749 = vsel %vm431, %v694, 0
    %v752 = vsel %vm431, %v695, 0
    %v755 = vsel %vm431, %v696, 0
    %757 = vmatprep.subr.mxu0 0.0
    %758 = vmatpush1.msra.mxu0 0.0
    %759 = vmatprep.subr.mxu0 0.0
    %760 = vmatpush1.msra.mxu0 0.0
    %761 = vmatprep.subr.mxu0 0.0
    %762 = vmatpush1.msra.mxu0 0.0
    %763 = vmatprep.subr.mxu0 0.0
    %764 = vmatpush1.msra.mxu0 0.0
    %765 = vmatprep.subr.mxu0 0.0
    %766 = vmatpush1.msra.mxu0 0.0
    %767 = vmatprep.subr.mxu0 0.0
    %768 = vmatpush1.msra.mxu0 0.0
    %769 = vmatprep.subr.mxu0 0.0
    %770 = vmatpush1.msra.mxu0 0.0
    %771 = vmatprep.subr.mxu0 0.0
    %772 = vmatpush1.msra.mxu0 0.0
    %773 = vmatprep.subr.mxu0 0.0
    %774 = vmatpush1.msra.mxu0 0.0
    %775 = vmatprep.subr.mxu0 0.0
    %776 = vmatpush1.msra.mxu0 0.0
    %777 = vmatprep.subr.mxu0 0.0
    %778 = vmatpush1.msra.mxu0 0.0
    %779 = vmatprep.subr.mxu0 0.0
    %780 = vmatpush1.msra.mxu0 0.0
    %781 = vmatprep.subr.mxu0 0.0
    %782 = vmatpush1.msra.mxu0 %v700
    %783 = vmatprep.subr.mxu0 0.0
    %784 = vmatpush1.msra.mxu0 %v699
    %785 = vmatprep.subr.mxu0 0.0
    %786 = vmatpush1.msra.mxu0 %v698
    %787 = vmatprep.subr.mxu0 0.0
    %788 = vmatpush1.msra.mxu0 %v697
    %789 = vmatprep.subr.mxu0 0.0
    %790 = vmatpush2.msra.mxu0 0.0
    %791 = vmatprep.subr.mxu0 0.0
    %792 = vmatpush2.msra.mxu0 0.0
    %793 = vmatprep.subr.mxu0 0.0
    %794 = vmatpush2.msra.mxu0 0.0
    %795 = vmatprep.subr.mxu0 0.0
    %796 = vmatpush2.msra.mxu0 0.0
    %797 = vmatprep.subr.mxu0 0.0
    %798 = vmatpush2.msra.mxu0 0.0
    %799 = vmatprep.subr.mxu0 0.0
    %800 = vmatpush2.msra.mxu0 0.0
    %801 = vmatprep.subr.mxu0 0.0
    %802 = vmatpush2.msra.mxu0 0.0
    %803 = vmatprep.subr.mxu0 0.0
    %804 = vmatpush2.msra.mxu0 0.0
    %805 = vmatprep.subr.mxu0 0.0
    %806 = vmatpush2.msra.mxu0 0.0
    %807 = vmatprep.subr.mxu0 0.0
    %808 = vmatpush2.msra.mxu0 0.0
    %809 = vmatprep.subr.mxu0 0.0
    %810 = vmatpush2.msra.mxu0 0.0
    %811 = vmatprep.subr.mxu0 0.0
    %812 = vmatpush2.msra.mxu0 0.0
    %813 = vmatprep.subr.mxu0 0.0
    %814 = vmatpush2.msra.mxu0 0.0
    %815 = vmatprep.subr.mxu0 0.0
    %816 = vmatpush2.msra.mxu0 0.0
    %817 = vmatprep.subr.mxu0 0.0
    %818 = vmatpush2.msra.mxu0 0.0
    %819 = vmatprep.subr.mxu0 0.0
    %820 = vmatpush2.msra.mxu0 0.0
    %821 = vmatprep.mubr.f32.mxu0 0.0
    %822 = vmatmul.mubr.f32.gmra.mxu0 %v707
    %v823 = vpop.f32.mrf.mxu0
    %v824 = vadd.f32 %v705, %v823
    %v825 = vpop.f32.mrf.mxu0
    %826 = vmatprep.mubr.f32.mxu0 0.0
    %827 = vmatmul.mubr.f32.gmra.mxu0 %v710
    %v828 = vpop.f32.mrf.mxu0
    %v829 = vadd.f32 %v705, %v828
    %v830 = vpop.f32.mrf.mxu0
    %831 = vmatprep.mubr.f32.mxu0 0.0
    %832 = vmatmul.mubr.f32.gmra.mxu0 %v713
    %v833 = vpop.f32.mrf.mxu0
    %v834 = vadd.f32 %v705, %v833
    %v835 = vpop.f32.mrf.mxu0
    %836 = vmatprep.mubr.f32.mxu0 0.0
    %837 = vmatmul.mubr.f32.gmra.mxu0 %v716
    %v838 = vpop.f32.mrf.mxu0
    %v839 = vadd.f32 %v705, %v838
    %v840 = vpop.f32.mrf.mxu0
    %841 = vmatprep.mubr.f32.mxu0 0.0
    %842 = vmatmul.mubr.f32.gmra.mxu0 %v719
    %v843 = vpop.f32.mrf.mxu0
    %v844 = vadd.f32 %v705, %v843
    %v845 = vpop.f32.mrf.mxu0
    %846 = vmatprep.mubr.f32.mxu0 0.0
    %847 = vmatmul.mubr.f32.gmra.mxu0 %v722
    %v848 = vpop.f32.mrf.mxu0
    %v849 = vadd.f32 %v705, %v848
    %v850 = vpop.f32.mrf.mxu0
    %851 = vmatprep.mubr.f32.mxu0 0.0
    %852 = vmatmul.mubr.f32.gmra.mxu0 %v725
    %v853 = vpop.f32.mrf.mxu0
    %v854 = vadd.f32 %v705, %v853
    %v855 = vpop.f32.mrf.mxu0
    %856 = vmatprep.mubr.f32.mxu0 0.0
    %857 = vmatmul.mubr.f32.gmra.mxu0 %v728
    %v858 = vpop.f32.mrf.mxu0
    %v859 = vadd.f32 %v705, %v858
    %v860 = vpop.f32.mrf.mxu0
    %861 = vmatprep.mubr.f32.mxu0 0.0
    %862 = vmatmul.mubr.f32.gmra.mxu0 %v731
    %v863 = vpop.f32.mrf.mxu0
    %v864 = vadd.f32 %v705, %v863
    %v865 = vpop.f32.mrf.mxu0
    %866 = vmatprep.mubr.f32.mxu0 0.0
    %867 = vmatmul.mubr.f32.gmra.mxu0 %v734
    %v868 = vpop.f32.mrf.mxu0
    %v869 = vadd.f32 %v705, %v868
    %v870 = vpop.f32.mrf.mxu0
    %871 = vmatprep.mubr.f32.mxu0 0.0
    %872 = vmatmul.mubr.f32.gmra.mxu0 %v737
    %v873 = vpop.f32.mrf.mxu0
    %v874 = vadd.f32 %v705, %v873
    %v875 = vpop.f32.mrf.mxu0
    %876 = vmatprep.mubr.f32.mxu0 0.0
    %877 = vmatmul.mubr.f32.gmra.mxu0 %v740
    %v878 = vpop.f32.mrf.mxu0
    %v879 = vadd.f32 %v705, %v878
    %v880 = vpop.f32.mrf.mxu0
    %881 = vmatprep.mubr.f32.mxu0 0.0
    %882 = vmatmul.mubr.f32.gmra.mxu0 %v743
    %v883 = vpop.f32.mrf.mxu0
    %v884 = vadd.f32 %v705, %v883
    %v885 = vpop.f32.mrf.mxu0
    %886 = vmatprep.mubr.f32.mxu0 0.0
    %887 = vmatmul.mubr.f32.gmra.mxu0 %v746
    %v888 = vpop.f32.mrf.mxu0
    %v889 = vadd.f32 %v705, %v888
    %v890 = vpop.f32.mrf.mxu0
    %891 = vmatprep.mubr.f32.mxu0 0.0
    %892 = vmatmul.mubr.f32.gmra.mxu0 %v749
    %v893 = vpop.f32.mrf.mxu0
    %v894 = vadd.f32 %v705, %v893
    %v895 = vpop.f32.mrf.mxu0
    %896 = vmatprep.mubr.f32.mxu0 0.0
    %897 = vmatmul.mubr.f32.gmra.mxu0 %v752
    %v898 = vpop.f32.mrf.mxu0
    %v899 = vadd.f32 %v705, %v898
    %v900 = vpop.f32.mrf.mxu0
    %901 = vmatprep.mubr.f32.mxu0 0.0
    %902 = vmatmul.mubr.f32.gmra.mxu0 %v755
    %v903 = vpop.f32.mrf.mxu0
    %v904 = vadd.f32 %v705, %v903
    %v905 = vpop.f32.mrf.mxu0
    %906 = vdwg.mxu0
    %916 = vrot.lane.b32.xlu0 %v824, 96
    %v917 = vpop.permute.xlu0 %916
    %918 = vrot.lane.b32.xlu0 %v829, 96
    %v919 = vpop.permute.xlu0 %918
    %920 = vrot.lane.b32.xlu0 %v834, 96
    %v921 = vpop.permute.xlu0 %920
    %922 = vrot.lane.b32.xlu0 %v839, 96
    %v923 = vpop.permute.xlu0 %922
    %924 = vrot.lane.b32.xlu0 %v844, 96
    %v925 = vpop.permute.xlu0 %924
    %926 = vrot.lane.b32.xlu0 %v849, 96
    %v927 = vpop.permute.xlu0 %926
    %928 = vrot.lane.b32.xlu0 %v854, 96
    %v929 = vpop.permute.xlu0 %928
    %930 = vrot.lane.b32.xlu0 %v859, 96
    %v931 = vpop.permute.xlu0 %930
    %932 = vrot.lane.b32.xlu0 %v864, 96
    %v933 = vpop.permute.xlu0 %932
    %vm934 = vcmask 64512
    %v935 = vsel %vm934, %v824, 0
    %v937 = vsel %vm934, %v829, 0
    %v939 = vsel %vm934, %v834, 0
    %v941 = vsel %vm934, %v839, 0
    %v943 = vsel %vm934, %v844, 0
    %v945 = vsel %vm934, %v849, 0
    %v947 = vsel %vm934, %v854, 0
    %v949 = vsel %vm934, %v859, 0
    %v951 = vsel %vm934, %v864, 0
    %v953 = vsel %vm934, %v917, 0
    %v955 = vsel %vm934, %v919, 0
    %v957 = vsel %vm934, %v921, 0
    %v959 = vsel %vm934, %v923, 0
    %v961 = vsel %vm934, %v925, 0
    %v963 = vsel %vm934, %v927, 0
    %v965 = vsel %vm934, %v929, 0
    %v967 = vsel %vm934, %v931, 0
    %v969 = vsel %vm934, %v933, 0
    %971 = vmatprep.subr.mxu0 0.0
    %972 = vmatpush1.xpose.msra.mxu0 0.0
    %973 = vmatprep.subr.mxu0 0.0
    %974 = vmatpush1.xpose.msra.mxu0 0.0
    %975 = vmatprep.subr.mxu0 0.0
    %976 = vmatpush1.xpose.msra.mxu0 0.0
    %977 = vmatprep.subr.mxu0 0.0
    %978 = vmatpush1.xpose.msra.mxu0 0.0
    %979 = vmatprep.subr.mxu0 0.0
    %980 = vmatpush1.xpose.msra.mxu0 0.0
    %981 = vmatprep.subr.mxu0 0.0
    %982 = vmatpush1.xpose.msra.mxu0 0.0
    %983 = vmatprep.subr.mxu0 0.0
    %984 = vmatpush1.xpose.msra.mxu0 0.0
    %985 = vmatprep.subr.mxu0 0.0
    %986 = vmatpush1.xpose.msra.mxu0 %v969
    %987 = vmatprep.subr.mxu0 0.0
    %988 = vmatpush1.xpose.msra.mxu0 %v967
    %989 = vmatprep.subr.mxu0 0.0
    %990 = vmatpush1.xpose.msra.mxu0 %v965
    %991 = vmatprep.subr.mxu0 0.0
    %992 = vmatpush1.xpose.msra.mxu0 %v963
    %993 = vmatprep.subr.mxu0 0.0
    %994 = vmatpush1.xpose.msra.mxu0 %v961
    %995 = vmatprep.subr.mxu0 0.0
    %996 = vmatpush1.xpose.msra.mxu0 %v959
    %997 = vmatprep.subr.mxu0 0.0
    %998 = vmatpush1.xpose.msra.mxu0 %v957
    %999 = vmatprep.subr.mxu0 0.0
    %1000 = vmatpush1.xpose.msra.mxu0 %v955
    %1001 = vmatprep.subr.mxu0 0.0
    %1002 = vmatpush1.xpose.msra.mxu0 %v953
    %1003 = vmatprep.subr.mxu0 0.0
    %1004 = vmatpush2.xpose.msra.mxu0 0.0
    %1005 = vmatprep.subr.mxu0 0.0
    %1006 = vmatpush2.xpose.msra.mxu0 0.0
    %1007 = vmatprep.subr.mxu0 0.0
    %1008 = vmatpush2.xpose.msra.mxu0 0.0
    %1009 = vmatprep.subr.mxu0 0.0
    %1010 = vmatpush2.xpose.msra.mxu0 0.0
    %1011 = vmatprep.subr.mxu0 0.0
    %1012 = vmatpush2.xpose.msra.mxu0 0.0
    %1013 = vmatprep.subr.mxu0 0.0
    %1014 = vmatpush2.xpose.msra.mxu0 0.0
    %1015 = vmatprep.subr.mxu0 0.0
    %1016 = vmatpush2.xpose.msra.mxu0 0.0
    %1017 = vmatprep.subr.mxu0 0.0
    %1018 = vmatpush2.xpose.msra.mxu0 0.0
    %1019 = vmatprep.subr.mxu0 0.0
    %1020 = vmatpush2.xpose.msra.mxu0 0.0
    %1021 = vmatprep.subr.mxu0 0.0
    %1022 = vmatpush2.xpose.msra.mxu0 0.0
    %1023 = vmatprep.subr.mxu0 0.0
    %1024 = vmatpush2.xpose.msra.mxu0 0.0
    %1025 = vmatprep.subr.mxu0 0.0
    %1026 = vmatpush2.xpose.msra.mxu0 0.0
    %1027 = vmatprep.subr.mxu0 0.0
    %1028 = vmatpush2.xpose.msra.mxu0 0.0
    %1029 = vmatprep.subr.mxu0 0.0
    %1030 = vmatpush2.xpose.msra.mxu0 0.0
    %1031 = vmatprep.subr.mxu0 0.0
    %1032 = vmatpush2.xpose.msra.mxu0 0.0
    %1033 = vmatprep.subr.mxu0 0.0
    %1034 = vmatpush2.xpose.msra.mxu0 0.0
    %1035 = vmatprep.mubr.f32.mxu0 0.0
    %1036 = vmatmul.mubr.f32.gmra.mxu0 %v935
    %v1037 = vpop.f32.mrf.mxu0
    %v1038 = vadd.f32 0.0, %v1037
    %v1039 = vpop.f32.mrf.mxu0
    %1040 = vmatprep.mubr.f32.mxu0 0.0
    %1041 = vmatmul.mubr.f32.gmra.mxu0 %v937
    %v1042 = vpop.f32.mrf.mxu0
    %v1043 = vadd.f32 0.0, %v1042
    %v1044 = vpop.f32.mrf.mxu0
    %1045 = vmatprep.mubr.f32.mxu0 0.0
    %1046 = vmatmul.mubr.f32.gmra.mxu0 %v939
    %v1047 = vpop.f32.mrf.mxu0
    %v1048 = vadd.f32 0.0, %v1047
    %v1049 = vpop.f32.mrf.mxu0
    %1050 = vmatprep.mubr.f32.mxu0 0.0
    %1051 = vmatmul.mubr.f32.gmra.mxu0 %v941
    %v1052 = vpop.f32.mrf.mxu0
    %v1053 = vadd.f32 0.0, %v1052
    %v1054 = vpop.f32.mrf.mxu0
    %1055 = vmatprep.mubr.f32.mxu0 0.0
    %1056 = vmatmul.mubr.f32.gmra.mxu0 %v943
    %v1057 = vpop.f32.mrf.mxu0
    %v1058 = vadd.f32 0.0, %v1057
    %v1059 = vpop.f32.mrf.mxu0
    %1060 = vmatprep.mubr.f32.mxu0 0.0
    %1061 = vmatmul.mubr.f32.gmra.mxu0 %v945
    %v1062 = vpop.f32.mrf.mxu0
    %v1063 = vadd.f32 0.0, %v1062
    %v1064 = vpop.f32.mrf.mxu0
    %1065 = vmatprep.mubr.f32.mxu0 0.0
    %1066 = vmatmul.mubr.f32.gmra.mxu0 %v947
    %v1067 = vpop.f32.mrf.mxu0
    %v1068 = vadd.f32 0.0, %v1067
    %v1069 = vpop.f32.mrf.mxu0
    %1070 = vmatprep.mubr.f32.mxu0 0.0
    %1071 = vmatmul.mubr.f32.gmra.mxu0 %v949
    %v1072 = vpop.f32.mrf.mxu0
    %v1073 = vadd.f32 0.0, %v1072
    %v1074 = vpop.f32.mrf.mxu0
    %1075 = vmatprep.mubr.f32.mxu0 0.0
    %1076 = vmatmul.mubr.f32.gmra.mxu0 %v951
    %v1077 = vpop.f32.mrf.mxu0
    %v1078 = vadd.f32 0.0, %v1077
    %v1079 = vpop.f32.mrf.mxu0
    %1080 = vdwg.mxu0
    %v1081 = vmul.f32 %v1038, 0.35355338
    %v1082 = vmul.f32 %v1043, 0.35355338
    %v1083 = vmul.f32 %v1048, 0.35355338
    %v1084 = vmul.f32 %v1053, 0.35355338
    %v1085 = vmul.f32 %v1058, 0.35355338
    %v1086 = vmul.f32 %v1063, 0.35355338
    %v1087 = vmul.f32 %v1068, 0.35355338
    %v1088 = vmul.f32 %v1073, 0.35355338
    %v1089 = vmul.f32 %v1078, 0.35355338
    %vm1090 = vcmask 531456
    %v1091 = vsel %vm1090, %v1081, -inf
    %1092 = vmax.xlane.f32.xlu0 %v1091
    %v1093 = vpop.xlane.xlu0 %1092
    %v1094 = vsel %vm1090, %v1082, -inf
    %1095 = vmax.xlane.f32.xlu0 %v1094
    %v1096 = vpop.xlane.xlu0 %1095
    %v1097 = vsel %vm1090, %v1083, -inf
    %1098 = vmax.xlane.f32.xlu0 %v1097
    %v1099 = vpop.xlane.xlu0 %1098
    %v1100 = vsel %vm1090, %v1084, -inf
    %1101 = vmax.xlane.f32.xlu0 %v1100
    %v1102 = vpop.xlane.xlu0 %1101
    %v1103 = vsel %vm1090, %v1085, -inf
    %1104 = vmax.xlane.f32.xlu0 %v1103
    %v1105 = vpop.xlane.xlu0 %1104
    %v1106 = vsel %vm1090, %v1086, -inf
    %1107 = vmax.xlane.f32.xlu0 %v1106
    %v1108 = vpop.xlane.xlu0 %1107
    %v1109 = vsel %vm1090, %v1087, -inf
    %1110 = vmax.xlane.f32.xlu0 %v1109
    %v1111 = vpop.xlane.xlu0 %1110
    %v1112 = vsel %vm1090, %v1088, -inf
    %1113 = vmax.xlane.f32.xlu0 %v1112
    %v1114 = vpop.xlane.xlu0 %1113
    %vm1115 = vcmask 524288
    %v1116 = vsel %vm1115, %v1089, -inf
    %1117 = vmax.xlane.f32.xlu0 %v1116
    %v1118 = vpop.xlane.xlu0 %1117
    %v1119 = vsub.f32 %v1081, %v1093
    %v1120 = vsub.f32 %v1082, %v1096
    %v1121 = vsub.f32 %v1083, %v1099
    %v1122 = vsub.f32 %v1084, %v1102
    %v1123 = vsub.f32 %v1085, %v1105
    %v1124 = vsub.f32 %v1086, %v1108
    %v1125 = vsub.f32 %v1087, %v1111
    %v1126 = vsub.f32 %v1088, %v1114
    %v1127 = vsub.f32 %v1089, %v1118
    %v1128 = vmul.f32 %v1119, 1.442695
    %v1129 = vpow.pop %v1128
    %v1130 = vmul.f32 %v1120, 1.442695
    %v1131 = vpow.pop %v1130
    %v1132 = vmul.f32 %v1121, 1.442695
    %v1133 = vpow.pop %v1132
    %v1134 = vmul.f32 %v1122, 1.442695
    %v1135 = vpow.pop %v1134
    %v1136 = vmul.f32 %v1123, 1.442695
    %v1137 = vpow.pop %v1136
    %v1138 = vmul.f32 %v1124, 1.442695
    %v1139 = vpow.pop %v1138
    %v1140 = vmul.f32 %v1125, 1.442695
    %v1141 = vpow.pop %v1140
    %v1142 = vmul.f32 %v1126, 1.442695
    %v1143 = vpow.pop %v1142
    %v1144 = vmul.f32 %v1127, 1.442695
    %v1145 = vpow.pop %v1144
    %v1146 = vsel %vm1090, %v1129, 0.0
    %1147 = vadd.xlane.f32.xlu0 %v1146
    %v1148 = vpop.xlane.xlu0 %1147
    %v1149 = vsel %vm1090, %v1131, 0.0
    %1150 = vadd.xlane.f32.xlu0 %v1149
    %v1151 = vpop.xlane.xlu0 %1150
    %v1152 = vsel %vm1090, %v1133, 0.0
    %1153 = vadd.xlane.f32.xlu0 %v1152
    %v1154 = vpop.xlane.xlu0 %1153
    %v1155 = vsel %vm1090, %v1135, 0.0
    %1156 = vadd.xlane.f32.xlu0 %v1155
    %v1157 = vpop.xlane.xlu0 %1156
    %v1158 = vsel %vm1090, %v1137, 0.0
    %1159 = vadd.xlane.f32.xlu0 %v1158
    %v1160 = vpop.xlane.xlu0 %1159
    %v1161 = vsel %vm1090, %v1139, 0.0
    %1162 = vadd.xlane.f32.xlu0 %v1161
    %v1163 = vpop.xlane.xlu0 %1162
    %v1164 = vsel %vm1090, %v1141, 0.0
    %1165 = vadd.xlane.f32.xlu0 %v1164
    %v1166 = vpop.xlane.xlu0 %1165
    %v1167 = vsel %vm1090, %v1143, 0.0
    %1168 = vadd.xlane.f32.xlu0 %v1167
    %v1169 = vpop.xlane.xlu0 %1168
    %v1170 = vsel %vm1115, %v1145, 0.0
    %1171 = vadd.xlane.f32.xlu0 %v1170
    %v1172 = vpop.xlane.xlu0 %1171
    %v1173 = vrcp.pop %v1148
    %v1174 = vrcp.pop %v1151
    %v1175 = vrcp.pop %v1154
    %v1176 = vrcp.pop %v1157
    %v1177 = vrcp.pop %v1160
    %v1178 = vrcp.pop %v1163
    %v1179 = vrcp.pop %v1166
    %v1180 = vrcp.pop %v1169
    %v1181 = vrcp.pop %v1172
    %v1182 = vmul.f32 %v1129, %v1173
    %v1183 = vmul.f32 %v1131, %v1174
    %v1184 = vmul.f32 %v1133, %v1175
    %v1185 = vmul.f32 %v1135, %v1176
    %v1186 = vmul.f32 %v1137, %v1177
    %v1187 = vmul.f32 %v1139, %v1178
    %v1188 = vmul.f32 %v1141, %v1179
    %v1189 = vmul.f32 %v1143, %v1180
    %v1190 = vmul.f32 %v1145, %v1181
    %1191 = vrot.lane.b32.xlu0 %v824, 64
    %v1192 = vpop.permute.xlu0 %1191
    %1193 = vrot.lane.b32.xlu0 %v829, 64
    %v1194 = vpop.permute.xlu0 %1193
    %1195 = vrot.lane.b32.xlu0 %v834, 64
    %v1196 = vpop.permute.xlu0 %1195
    %1197 = vrot.lane.b32.xlu0 %v839, 64
    %v1198 = vpop.permute.xlu0 %1197
    %1199 = vrot.lane.b32.xlu0 %v844, 64
    %v1200 = vpop.permute.xlu0 %1199
    %1201 = vrot.lane.b32.xlu0 %v849, 64
    %v1202 = vpop.permute.xlu0 %1201
    %1203 = vrot.lane.b32.xlu0 %v854, 64
    %v1204 = vpop.permute.xlu0 %1203
    %1205 = vrot.lane.b32.xlu0 %v859, 64
    %v1206 = vpop.permute.xlu0 %1205
    %1207 = vrot.lane.b32.xlu0 %v864, 64
    %v1208 = vpop.permute.xlu0 %1207
    %v1218 = vsel %vm1090, %v1182, 0
    %v1221 = vsel %vm1090, %v1183, 0
    %v1224 = vsel %vm1090, %v1184, 0
    %v1227 = vsel %vm1090, %v1185, 0
    %v1230 = vsel %vm1090, %v1186, 0
    %v1233 = vsel %vm1090, %v1187, 0
    %v1236 = vsel %vm1090, %v1188, 0
    %v1239 = vsel %vm1090, %v1189, 0
    %v1242 = vsel %vm1090, %v1190, 0
    %v1244 = vsel %vm362, %v1208, 0
    %1246 = vmatprep.subr.mxu0 0.0
    %1247 = vmatpush1.msra.mxu0 0.0
    %1248 = vmatprep.subr.mxu0 0.0
    %1249 = vmatpush1.msra.mxu0 0.0
    %1250 = vmatprep.subr.mxu0 0.0
    %1251 = vmatpush1.msra.mxu0 0.0
    %1252 = vmatprep.subr.mxu0 0.0
    %1253 = vmatpush1.msra.mxu0 0.0
    %1254 = vmatprep.subr.mxu0 0.0
    %1255 = vmatpush1.msra.mxu0 0.0
    %1256 = vmatprep.subr.mxu0 0.0
    %1257 = vmatpush1.msra.mxu0 0.0
    %1258 = vmatprep.subr.mxu0 0.0
    %1259 = vmatpush1.msra.mxu0 0.0
    %1260 = vmatprep.subr.mxu0 0.0
    %1261 = vmatpush1.msra.mxu0 %v1244
    %1262 = vmatprep.subr.mxu0 0.0
    %1263 = vmatpush1.msra.mxu0 %v1206
    %1264 = vmatprep.subr.mxu0 0.0
    %1265 = vmatpush1.msra.mxu0 %v1204
    %1266 = vmatprep.subr.mxu0 0.0
    %1267 = vmatpush1.msra.mxu0 %v1202
    %1268 = vmatprep.subr.mxu0 0.0
    %1269 = vmatpush1.msra.mxu0 %v1200
    %1270 = vmatprep.subr.mxu0 0.0
    %1271 = vmatpush1.msra.mxu0 %v1198
    %1272 = vmatprep.subr.mxu0 0.0
    %1273 = vmatpush1.msra.mxu0 %v1196
    %1274 = vmatprep.subr.mxu0 0.0
    %1275 = vmatpush1.msra.mxu0 %v1194
    %1276 = vmatprep.subr.mxu0 0.0
    %1277 = vmatpush1.msra.mxu0 %v1192
    %1278 = vmatprep.subr.mxu0 0.0
    %1279 = vmatpush2.msra.mxu0 0.0
    %1280 = vmatprep.subr.mxu0 0.0
    %1281 = vmatpush2.msra.mxu0 0.0
    %1282 = vmatprep.subr.mxu0 0.0
    %1283 = vmatpush2.msra.mxu0 0.0
    %1284 = vmatprep.subr.mxu0 0.0
    %1285 = vmatpush2.msra.mxu0 0.0
    %1286 = vmatprep.subr.mxu0 0.0
    %1287 = vmatpush2.msra.mxu0 0.0
    %1288 = vmatprep.subr.mxu0 0.0
    %1289 = vmatpush2.msra.mxu0 0.0
    %1290 = vmatprep.subr.mxu0 0.0
    %1291 = vmatpush2.msra.mxu0 0.0
    %1292 = vmatprep.subr.mxu0 0.0
    %1293 = vmatpush2.msra.mxu0 0.0
    %1294 = vmatprep.subr.mxu0 0.0
    %1295 = vmatpush2.msra.mxu0 0.0
    %1296 = vmatprep.subr.mxu0 0.0
    %1297 = vmatpush2.msra.mxu0 0.0
    %1298 = vmatprep.subr.mxu0 0.0
    %1299 = vmatpush2.msra.mxu0 0.0
    %1300 = vmatprep.subr.mxu0 0.0
    %1301 = vmatpush2.msra.mxu0 0.0
    %1302 = vmatprep.subr.mxu0 0.0
    %1303 = vmatpush2.msra.mxu0 0.0
    %1304 = vmatprep.subr.mxu0 0.0
    %1305 = vmatpush2.msra.mxu0 0.0
    %1306 = vmatprep.subr.mxu0 0.0
    %1307 = vmatpush2.msra.mxu0 0.0
    %1308 = vmatprep.subr.mxu0 0.0
    %1309 = vmatpush2.msra.mxu0 0.0
    %1310 = vmatprep.mubr.f32.mxu0 0.0
    %1311 = vmatmul.mubr.f32.gmra.mxu0 %v1218
    %v1312 = vpop.f32.mrf.mxu0
    %v1313 = vadd.f32 0.0, %v1312
    %v1314 = vpop.f32.mrf.mxu0
    %1315 = vmatprep.mubr.f32.mxu0 0.0
    %1316 = vmatmul.mubr.f32.gmra.mxu0 %v1221
    %v1317 = vpop.f32.mrf.mxu0
    %v1318 = vadd.f32 0.0, %v1317
    %v1319 = vpop.f32.mrf.mxu0
    %1320 = vmatprep.mubr.f32.mxu0 0.0
    %1321 = vmatmul.mubr.f32.gmra.mxu0 %v1224
    %v1322 = vpop.f32.mrf.mxu0
    %v1323 = vadd.f32 0.0, %v1322
    %v1324 = vpop.f32.mrf.mxu0
    %1325 = vmatprep.mubr.f32.mxu0 0.0
    %1326 = vmatmul.mubr.f32.gmra.mxu0 %v1227
    %v1327 = vpop.f32.mrf.mxu0
    %v1328 = vadd.f32 0.0, %v1327
    %v1329 = vpop.f32.mrf.mxu0
    %1330 = vmatprep.mubr.f32.mxu0 0.0
    %1331 = vmatmul.mubr.f32.gmra.mxu0 %v1230
    %v1332 = vpop.f32.mrf.mxu0
    %v1333 = vadd.f32 0.0, %v1332
    %v1334 = vpop.f32.mrf.mxu0
    %1335 = vmatprep.mubr.f32.mxu0 0.0
    %1336 = vmatmul.mubr.f32.gmra.mxu0 %v1233
    %v1337 = vpop.f32.mrf.mxu0
    %v1338 = vadd.f32 0.0, %v1337
    %v1339 = vpop.f32.mrf.mxu0
    %1340 = vmatprep.mubr.f32.mxu0 0.0
    %1341 = vmatmul.mubr.f32.gmra.mxu0 %v1236
    %v1342 = vpop.f32.mrf.mxu0
    %v1343 = vadd.f32 0.0, %v1342
    %v1344 = vpop.f32.mrf.mxu0
    %1345 = vmatprep.mubr.f32.mxu0 0.0
    %1346 = vmatmul.mubr.f32.gmra.mxu0 %v1239
    %v1347 = vpop.f32.mrf.mxu0
    %v1348 = vadd.f32 0.0, %v1347
    %v1349 = vpop.f32.mrf.mxu0
    %1350 = vmatprep.mubr.f32.mxu0 0.0
    %1351 = vmatmul.mubr.f32.gmra.mxu0 %v1242
    %v1352 = vpop.f32.mrf.mxu0
    %v1353 = vadd.f32 0.0, %v1352
    %v1354 = vpop.f32.mrf.mxu0
    %1355 = vdwg.mxu0
    %1356 = vrot.lane.b32.xlu0 %v824, 120
    %v1357 = vpop.permute.xlu0 %1356
    %1358 = vrot.lane.b32.xlu0 %v829, 120
    %v1359 = vpop.permute.xlu0 %1358
    %1360 = vrot.lane.b32.xlu0 %v834, 120
    %v1361 = vpop.permute.xlu0 %1360
    %1362 = vrot.lane.b32.xlu0 %v839, 120
    %v1363 = vpop.permute.xlu0 %1362
    %1364 = vrot.lane.b32.xlu0 %v844, 120
    %v1365 = vpop.permute.xlu0 %1364
    %1366 = vrot.lane.b32.xlu0 %v849, 120
    %v1367 = vpop.permute.xlu0 %1366
    %1368 = vrot.lane.b32.xlu0 %v854, 120
    %v1369 = vpop.permute.xlu0 %1368
    %1370 = vrot.lane.b32.xlu0 %v859, 120
    %v1371 = vpop.permute.xlu0 %1370
    %1372 = vrot.lane.b32.xlu0 %v864, 120
    %v1373 = vpop.permute.xlu0 %1372
    %1374 = vrot.lane.b32.xlu0 %v824, 88
    %v1375 = vpop.permute.xlu0 %1374
    %1376 = vrot.lane.b32.xlu0 %v829, 88
    %v1377 = vpop.permute.xlu0 %1376
    %1378 = vrot.lane.b32.xlu0 %v834, 88
    %v1379 = vpop.permute.xlu0 %1378
    %1380 = vrot.lane.b32.xlu0 %v839, 88
    %v1381 = vpop.permute.xlu0 %1380
    %1382 = vrot.lane.b32.xlu0 %v844, 88
    %v1383 = vpop.permute.xlu0 %1382
    %1384 = vrot.lane.b32.xlu0 %v849, 88
    %v1385 = vpop.permute.xlu0 %1384
    %1386 = vrot.lane.b32.xlu0 %v854, 88
    %v1387 = vpop.permute.xlu0 %1386
    %1388 = vrot.lane.b32.xlu0 %v859, 88
    %v1389 = vpop.permute.xlu0 %1388
    %1390 = vrot.lane.b32.xlu0 %v864, 88
    %v1391 = vpop.permute.xlu0 %1390
    %v1392 = vsel %vm934, %v1357, 0
    %v1394 = vsel %vm934, %v1359, 0
    %v1396 = vsel %vm934, %v1361, 0
    %v1398 = vsel %vm934, %v1363, 0
    %v1400 = vsel %vm934, %v1365, 0
    %v1402 = vsel %vm934, %v1367, 0
    %v1404 = vsel %vm934, %v1369, 0
    %v1406 = vsel %vm934, %v1371, 0
    %v1408 = vsel %vm934, %v1373, 0
    %v1410 = vsel %vm934, %v1375, 0
    %v1412 = vsel %vm934, %v1377, 0
    %v1414 = vsel %vm934, %v1379, 0
    %v1416 = vsel %vm934, %v1381, 0
    %v1418 = vsel %vm934, %v1383, 0
    %v1420 = vsel %vm934, %v1385, 0
    %v1422 = vsel %vm934, %v1387, 0
    %v1424 = vsel %vm934, %v1389, 0
    %v1426 = vsel %vm934, %v1391, 0
    %1428 = vmatprep.subr.mxu0 0.0
    %1429 = vmatpush1.xpose.msra.mxu0 0.0
    %1430 = vmatprep.subr.mxu0 0.0
    %1431 = vmatpush1.xpose.msra.mxu0 0.0
    %1432 = vmatprep.subr.mxu0 0.0
    %1433 = vmatpush1.xpose.msra.mxu0 0.0
    %1434 = vmatprep.subr.mxu0 0.0
    %1435 = vmatpush1.xpose.msra.mxu0 0.0
    %1436 = vmatprep.subr.mxu0 0.0
    %1437 = vmatpush1.xpose.msra.mxu0 0.0
    %1438 = vmatprep.subr.mxu0 0.0
    %1439 = vmatpush1.xpose.msra.mxu0 0.0
    %1440 = vmatprep.subr.mxu0 0.0
    %1441 = vmatpush1.xpose.msra.mxu0 0.0
    %1442 = vmatprep.subr.mxu0 0.0
    %1443 = vmatpush1.xpose.msra.mxu0 %v1426
    %1444 = vmatprep.subr.mxu0 0.0
    %1445 = vmatpush1.xpose.msra.mxu0 %v1424
    %1446 = vmatprep.subr.mxu0 0.0
    %1447 = vmatpush1.xpose.msra.mxu0 %v1422
    %1448 = vmatprep.subr.mxu0 0.0
    %1449 = vmatpush1.xpose.msra.mxu0 %v1420
    %1450 = vmatprep.subr.mxu0 0.0
    %1451 = vmatpush1.xpose.msra.mxu0 %v1418
    %1452 = vmatprep.subr.mxu0 0.0
    %1453 = vmatpush1.xpose.msra.mxu0 %v1416
    %1454 = vmatprep.subr.mxu0 0.0
    %1455 = vmatpush1.xpose.msra.mxu0 %v1414
    %1456 = vmatprep.subr.mxu0 0.0
    %1457 = vmatpush1.xpose.msra.mxu0 %v1412
    %1458 = vmatprep.subr.mxu0 0.0
    %1459 = vmatpush1.xpose.msra.mxu0 %v1410
    %1460 = vmatprep.subr.mxu0 0.0
    %1461 = vmatpush2.xpose.msra.mxu0 0.0
    %1462 = vmatprep.subr.mxu0 0.0
    %1463 = vmatpush2.xpose.msra.mxu0 0.0
    %1464 = vmatprep.subr.mxu0 0.0
    %1465 = vmatpush2.xpose.msra.mxu0 0.0
    %1466 = vmatprep.subr.mxu0 0.0
    %1467 = vmatpush2.xpose.msra.mxu0 0.0
    %1468 = vmatprep.subr.mxu0 0.0
    %1469 = vmatpush2.xpose.msra.mxu0 0.0
    %1470 = vmatprep.subr.mxu0 0.0
    %1471 = vmatpush2.xpose.msra.mxu0 0.0
    %1472 = vmatprep.subr.mxu0 0.0
    %1473 = vmatpush2.xpose.msra.mxu0 0.0
    %1474 = vmatprep.subr.mxu0 0.0
    %1475 = vmatpush2.xpose.msra.mxu0 0.0
    %1476 = vmatprep.subr.mxu0 0.0
    %1477 = vmatpush2.xpose.msra.mxu0 0.0
    %1478 = vmatprep.subr.mxu0 0.0
    %1479 = vmatpush2.xpose.msra.mxu0 0.0
    %1480 = vmatprep.subr.mxu0 0.0
    %1481 = vmatpush2.xpose.msra.mxu0 0.0
    %1482 = vmatprep.subr.mxu0 0.0
    %1483 = vmatpush2.xpose.msra.mxu0 0.0
    %1484 = vmatprep.subr.mxu0 0.0
    %1485 = vmatpush2.xpose.msra.mxu0 0.0
    %1486 = vmatprep.subr.mxu0 0.0
    %1487 = vmatpush2.xpose.msra.mxu0 0.0
    %1488 = vmatprep.subr.mxu0 0.0
    %1489 = vmatpush2.xpose.msra.mxu0 0.0
    %1490 = vmatprep.subr.mxu0 0.0
    %1491 = vmatpush2.xpose.msra.mxu0 0.0
    %1492 = vmatprep.mubr.f32.mxu0 0.0
    %1493 = vmatmul.mubr.f32.gmra.mxu0 %v1392
    %v1494 = vpop.f32.mrf.mxu0
    %v1495 = vadd.f32 0.0, %v1494
    %v1496 = vpop.f32.mrf.mxu0
    %1497 = vmatprep.mubr.f32.mxu0 0.0
    %1498 = vmatmul.mubr.f32.gmra.mxu0 %v1394
    %v1499 = vpop.f32.mrf.mxu0
    %v1500 = vadd.f32 0.0, %v1499
    %v1501 = vpop.f32.mrf.mxu0
    %1502 = vmatprep.mubr.f32.mxu0 0.0
    %1503 = vmatmul.mubr.f32.gmra.mxu0 %v1396
    %v1504 = vpop.f32.mrf.mxu0
    %v1505 = vadd.f32 0.0, %v1504
    %v1506 = vpop.f32.mrf.mxu0
    %1507 = vmatprep.mubr.f32.mxu0 0.0
    %1508 = vmatmul.mubr.f32.gmra.mxu0 %v1398
    %v1509 = vpop.f32.mrf.mxu0
    %v1510 = vadd.f32 0.0, %v1509
    %v1511 = vpop.f32.mrf.mxu0
    %1512 = vmatprep.mubr.f32.mxu0 0.0
    %1513 = vmatmul.mubr.f32.gmra.mxu0 %v1400
    %v1514 = vpop.f32.mrf.mxu0
    %v1515 = vadd.f32 0.0, %v1514
    %v1516 = vpop.f32.mrf.mxu0
    %1517 = vmatprep.mubr.f32.mxu0 0.0
    %1518 = vmatmul.mubr.f32.gmra.mxu0 %v1402
    %v1519 = vpop.f32.mrf.mxu0
    %v1520 = vadd.f32 0.0, %v1519
    %v1521 = vpop.f32.mrf.mxu0
    %1522 = vmatprep.mubr.f32.mxu0 0.0
    %1523 = vmatmul.mubr.f32.gmra.mxu0 %v1404
    %v1524 = vpop.f32.mrf.mxu0
    %v1525 = vadd.f32 0.0, %v1524
    %v1526 = vpop.f32.mrf.mxu0
    %1527 = vmatprep.mubr.f32.mxu0 0.0
    %1528 = vmatmul.mubr.f32.gmra.mxu0 %v1406
    %v1529 = vpop.f32.mrf.mxu0
    %v1530 = vadd.f32 0.0, %v1529
    %v1531 = vpop.f32.mrf.mxu0
    %1532 = vmatprep.mubr.f32.mxu0 0.0
    %1533 = vmatmul.mubr.f32.gmra.mxu0 %v1408
    %v1534 = vpop.f32.mrf.mxu0
    %v1535 = vadd.f32 0.0, %v1534
    %v1536 = vpop.f32.mrf.mxu0
    %1537 = vdwg.mxu0
    %v1538 = vmul.f32 %v1495, 0.35355338
    %v1539 = vmul.f32 %v1500, 0.35355338
    %v1540 = vmul.f32 %v1505, 0.35355338
    %v1541 = vmul.f32 %v1510, 0.35355338
    %v1542 = vmul.f32 %v1515, 0.35355338
    %v1543 = vmul.f32 %v1520, 0.35355338
    %v1544 = vmul.f32 %v1525, 0.35355338
    %v1545 = vmul.f32 %v1530, 0.35355338
    %v1546 = vmul.f32 %v1535, 0.35355338
    %v1547 = vsel %vm1090, %v1538, -inf
    %1548 = vmax.xlane.f32.xlu0 %v1547
    %v1549 = vpop.xlane.xlu0 %1548
    %v1550 = vsel %vm1090, %v1539, -inf
    %1551 = vmax.xlane.f32.xlu0 %v1550
    %v1552 = vpop.xlane.xlu0 %1551
    %v1553 = vsel %vm1090, %v1540, -inf
    %1554 = vmax.xlane.f32.xlu0 %v1553
    %v1555 = vpop.xlane.xlu0 %1554
    %v1556 = vsel %vm1090, %v1541, -inf
    %1557 = vmax.xlane.f32.xlu0 %v1556
    %v1558 = vpop.xlane.xlu0 %1557
    %v1559 = vsel %vm1090, %v1542, -inf
    %1560 = vmax.xlane.f32.xlu0 %v1559
    %v1561 = vpop.xlane.xlu0 %1560
    %v1562 = vsel %vm1090, %v1543, -inf
    %1563 = vmax.xlane.f32.xlu0 %v1562
    %v1564 = vpop.xlane.xlu0 %1563
    %v1565 = vsel %vm1090, %v1544, -inf
    %1566 = vmax.xlane.f32.xlu0 %v1565
    %v1567 = vpop.xlane.xlu0 %1566
    %v1568 = vsel %vm1090, %v1545, -inf
    %1569 = vmax.xlane.f32.xlu0 %v1568
    %v1570 = vpop.xlane.xlu0 %1569
    %v1571 = vsel %vm1115, %v1546, -inf
    %1572 = vmax.xlane.f32.xlu0 %v1571
    %v1573 = vpop.xlane.xlu0 %1572
    %v1574 = vsub.f32 %v1538, %v1549
    %v1575 = vsub.f32 %v1539, %v1552
    %v1576 = vsub.f32 %v1540, %v1555
    %v1577 = vsub.f32 %v1541, %v1558
    %v1578 = vsub.f32 %v1542, %v1561
    %v1579 = vsub.f32 %v1543, %v1564
    %v1580 = vsub.f32 %v1544, %v1567
    %v1581 = vsub.f32 %v1545, %v1570
    %v1582 = vsub.f32 %v1546, %v1573
    %v1583 = vmul.f32 %v1574, 1.442695
    %v1584 = vpow.pop %v1583
    %v1585 = vmul.f32 %v1575, 1.442695
    %v1586 = vpow.pop %v1585
    %v1587 = vmul.f32 %v1576, 1.442695
    %v1588 = vpow.pop %v1587
    %v1589 = vmul.f32 %v1577, 1.442695
    %v1590 = vpow.pop %v1589
    %v1591 = vmul.f32 %v1578, 1.442695
    %v1592 = vpow.pop %v1591
    %v1593 = vmul.f32 %v1579, 1.442695
    %v1594 = vpow.pop %v1593
    %v1595 = vmul.f32 %v1580, 1.442695
    %v1596 = vpow.pop %v1595
    %v1597 = vmul.f32 %v1581, 1.442695
    %v1598 = vpow.pop %v1597
    %v1599 = vmul.f32 %v1582, 1.442695
    %v1600 = vpow.pop %v1599
    %v1601 = vsel %vm1090, %v1584, 0.0
    %1602 = vadd.xlane.f32.xlu0 %v1601
    %v1603 = vpop.xlane.xlu0 %1602
    %v1604 = vsel %vm1090, %v1586, 0.0
    %1605 = vadd.xlane.f32.xlu0 %v1604
    %v1606 = vpop.xlane.xlu0 %1605
    %v1607 = vsel %vm1090, %v1588, 0.0
    %1608 = vadd.xlane.f32.xlu0 %v1607
    %v1609 = vpop.xlane.xlu0 %1608
    %v1610 = vsel %vm1090, %v1590, 0.0
    %1611 = vadd.xlane.f32.xlu0 %v1610
    %v1612 = vpop.xlane.xlu0 %1611
    %v1613 = vsel %vm1090, %v1592, 0.0
    %1614 = vadd.xlane.f32.xlu0 %v1613
    %v1615 = vpop.xlane.xlu0 %1614
    %v1616 = vsel %vm1090, %v1594, 0.0
    %1617 = vadd.xlane.f32.xlu0 %v1616
    %v1618 = vpop.xlane.xlu0 %1617
    %v1619 = vsel %vm1090, %v1596, 0.0
    %1620 = vadd.xlane.f32.xlu0 %v1619
    %v1621 = vpop.xlane.xlu0 %1620
    %v1622 = vsel %vm1090, %v1598, 0.0
    %1623 = vadd.xlane.f32.xlu0 %v1622
    %v1624 = vpop.xlane.xlu0 %1623
    %v1625 = vsel %vm1115, %v1600, 0.0
    %1626 = vadd.xlane.f32.xlu0 %v1625
    %v1627 = vpop.xlane.xlu0 %1626
    %v1628 = vrcp.pop %v1603
    %v1629 = vrcp.pop %v1606
    %v1630 = vrcp.pop %v1609
    %v1631 = vrcp.pop %v1612
    %v1632 = vrcp.pop %v1615
    %v1633 = vrcp.pop %v1618
    %v1634 = vrcp.pop %v1621
    %v1635 = vrcp.pop %v1624
    %v1636 = vrcp.pop %v1627
    %v1637 = vmul.f32 %v1584, %v1628
    %v1638 = vmul.f32 %v1586, %v1629
    %v1639 = vmul.f32 %v1588, %v1630
    %v1640 = vmul.f32 %v1590, %v1631
    %v1641 = vmul.f32 %v1592, %v1632
    %v1642 = vmul.f32 %v1594, %v1633
    %v1643 = vmul.f32 %v1596, %v1634
    %v1644 = vmul.f32 %v1598, %v1635
    %v1645 = vmul.f32 %v1600, %v1636
    %1646 = vrot.lane.b32.xlu0 %v824, 56
    %v1647 = vpop.permute.xlu0 %1646
    %1648 = vrot.lane.b32.xlu0 %v829, 56
    %v1649 = vpop.permute.xlu0 %1648
    %1650 = vrot.lane.b32.xlu0 %v834, 56
    %v1651 = vpop.permute.xlu0 %1650
    %1652 = vrot.lane.b32.xlu0 %v839, 56
    %v1653 = vpop.permute.xlu0 %1652
    %1654 = vrot.lane.b32.xlu0 %v844, 56
    %v1655 = vpop.permute.xlu0 %1654
    %1656 = vrot.lane.b32.xlu0 %v849, 56
    %v1657 = vpop.permute.xlu0 %1656
    %1658 = vrot.lane.b32.xlu0 %v854, 56
    %v1659 = vpop.permute.xlu0 %1658
    %1660 = vrot.lane.b32.xlu0 %v859, 56
    %v1661 = vpop.permute.xlu0 %1660
    %1662 = vrot.lane.b32.xlu0 %v864, 56
    %v1663 = vpop.permute.xlu0 %1662
    %v1673 = vsel %vm1090, %v1637, 0
    %v1676 = vsel %vm1090, %v1638, 0
    %v1679 = vsel %vm1090, %v1639, 0
    %v1682 = vsel %vm1090, %v1640, 0
    %v1685 = vsel %vm1090, %v1641, 0
    %v1688 = vsel %vm1090, %v1642, 0
    %v1691 = vsel %vm1090, %v1643, 0
    %v1694 = vsel %vm1090, %v1644, 0
    %v1697 = vsel %vm1090, %v1645, 0
    %v1699 = vsel %vm362, %v1663, 0
    %1701 = vmatprep.subr.mxu0 0.0
    %1702 = vmatpush1.msra.mxu0 0.0
    %1703 = vmatprep.subr.mxu0 0.0
    %1704 = vmatpush1.msra.mxu0 0.0
    %1705 = vmatprep.subr.mxu0 0.0
    %1706 = vmatpush1.msra.mxu0 0.0
    %1707 = vmatprep.subr.mxu0 0.0
    %1708 = vmatpush1.msra.mxu0 0.0
    %1709 = vmatprep.subr.mxu0 0.0
    %1710 = vmatpush1.msra.mxu0 0.0
    %1711 = vmatprep.subr.mxu0 0.0
    %1712 = vmatpush1.msra.mxu0 0.0
    %1713 = vmatprep.subr.mxu0 0.0
    %1714 = vmatpush1.msra.mxu0 0.0
    %1715 = vmatprep.subr.mxu0 0.0
    %1716 = vmatpush1.msra.mxu0 %v1699
    %1717 = vmatprep.subr.mxu0 0.0
    %1718 = vmatpush1.msra.mxu0 %v1661
    %1719 = vmatprep.subr.mxu0 0.0
    %1720 = vmatpush1.msra.mxu0 %v1659
    %1721 = vmatprep.subr.mxu0 0.0
    %1722 = vmatpush1.msra.mxu0 %v1657
    %1723 = vmatprep.subr.mxu0 0.0
    %1724 = vmatpush1.msra.mxu0 %v1655
    %1725 = vmatprep.subr.mxu0 0.0
    %1726 = vmatpush1.msra.mxu0 %v1653
    %1727 = vmatprep.subr.mxu0 0.0
    %1728 = vmatpush1.msra.mxu0 %v1651
    %1729 = vmatprep.subr.mxu0 0.0
    %1730 = vmatpush1.msra.mxu0 %v1649
    %1731 = vmatprep.subr.mxu0 0.0
    %1732 = vmatpush1.msra.mxu0 %v1647
    %1733 = vmatprep.subr.mxu0 0.0
    %1734 = vmatpush2.msra.mxu0 0.0
    %1735 = vmatprep.subr.mxu0 0.0
    %1736 = vmatpush2.msra.mxu0 0.0
    %1737 = vmatprep.subr.mxu0 0.0
    %1738 = vmatpush2.msra.mxu0 0.0
    %1739 = vmatprep.subr.mxu0 0.0
    %1740 = vmatpush2.msra.mxu0 0.0
    %1741 = vmatprep.subr.mxu0 0.0
    %1742 = vmatpush2.msra.mxu0 0.0
    %1743 = vmatprep.subr.mxu0 0.0
    %1744 = vmatpush2.msra.mxu0 0.0
    %1745 = vmatprep.subr.mxu0 0.0
    %1746 = vmatpush2.msra.mxu0 0.0
    %1747 = vmatprep.subr.mxu0 0.0
    %1748 = vmatpush2.msra.mxu0 0.0
    %1749 = vmatprep.subr.mxu0 0.0
    %1750 = vmatpush2.msra.mxu0 0.0
    %1751 = vmatprep.subr.mxu0 0.0
    %1752 = vmatpush2.msra.mxu0 0.0
    %1753 = vmatprep.subr.mxu0 0.0
    %1754 = vmatpush2.msra.mxu0 0.0
    %1755 = vmatprep.subr.mxu0 0.0
    %1756 = vmatpush2.msra.mxu0 0.0
    %1757 = vmatprep.subr.mxu0 0.0
    %1758 = vmatpush2.msra.mxu0 0.0
    %1759 = vmatprep.subr.mxu0 0.0
    %1760 = vmatpush2.msra.mxu0 0.0
    %1761 = vmatprep.subr.mxu0 0.0
    %1762 = vmatpush2.msra.mxu0 0.0
    %1763 = vmatprep.subr.mxu0 0.0
    %1764 = vmatpush2.msra.mxu0 0.0
    %1765 = vmatprep.mubr.f32.mxu0 0.0
    %1766 = vmatmul.mubr.f32.gmra.mxu0 %v1673
    %v1767 = vpop.f32.mrf.mxu0
    %v1768 = vadd.f32 0.0, %v1767
    %v1769 = vpop.f32.mrf.mxu0
    %1770 = vmatprep.mubr.f32.mxu0 0.0
    %1771 = vmatmul.mubr.f32.gmra.mxu0 %v1676
    %v1772 = vpop.f32.mrf.mxu0
    %v1773 = vadd.f32 0.0, %v1772
    %v1774 = vpop.f32.mrf.mxu0
    %1775 = vmatprep.mubr.f32.mxu0 0.0
    %1776 = vmatmul.mubr.f32.gmra.mxu0 %v1679
    %v1777 = vpop.f32.mrf.mxu0
    %v1778 = vadd.f32 0.0, %v1777
    %v1779 = vpop.f32.mrf.mxu0
    %1780 = vmatprep.mubr.f32.mxu0 0.0
    %1781 = vmatmul.mubr.f32.gmra.mxu0 %v1682
    %v1782 = vpop.f32.mrf.mxu0
    %v1783 = vadd.f32 0.0, %v1782
    %v1784 = vpop.f32.mrf.mxu0
    %1785 = vmatprep.mubr.f32.mxu0 0.0
    %1786 = vmatmul.mubr.f32.gmra.mxu0 %v1685
    %v1787 = vpop.f32.mrf.mxu0
    %v1788 = vadd.f32 0.0, %v1787
    %v1789 = vpop.f32.mrf.mxu0
    %1790 = vmatprep.mubr.f32.mxu0 0.0
    %1791 = vmatmul.mubr.f32.gmra.mxu0 %v1688
    %v1792 = vpop.f32.mrf.mxu0
    %v1793 = vadd.f32 0.0, %v1792
    %v1794 = vpop.f32.mrf.mxu0
    %1795 = vmatprep.mubr.f32.mxu0 0.0
    %1796 = vmatmul.mubr.f32.gmra.mxu0 %v1691
    %v1797 = vpop.f32.mrf.mxu0
    %v1798 = vadd.f32 0.0, %v1797
    %v1799 = vpop.f32.mrf.mxu0
    %1800 = vmatprep.mubr.f32.mxu0 0.0
    %1801 = vmatmul.mubr.f32.gmra.mxu0 %v1694
    %v1802 = vpop.f32.mrf.mxu0
    %v1803 = vadd.f32 0.0, %v1802
    %v1804 = vpop.f32.mrf.mxu0
    %1805 = vmatprep.mubr.f32.mxu0 0.0
    %1806 = vmatmul.mubr.f32.gmra.mxu0 %v1697
    %v1807 = vpop.f32.mrf.mxu0
    %v1808 = vadd.f32 0.0, %v1807
    %v1809 = vpop.f32.mrf.mxu0
    %1810 = vdwg.mxu0
    %1811 = vrot.lane.b32.xlu0 %v824, 112
    %v1812 = vpop.permute.xlu0 %1811
    %1813 = vrot.lane.b32.xlu0 %v829, 112
    %v1814 = vpop.permute.xlu0 %1813
    %1815 = vrot.lane.b32.xlu0 %v834, 112
    %v1816 = vpop.permute.xlu0 %1815
    %1817 = vrot.lane.b32.xlu0 %v839, 112
    %v1818 = vpop.permute.xlu0 %1817
    %1819 = vrot.lane.b32.xlu0 %v844, 112
    %v1820 = vpop.permute.xlu0 %1819
    %1821 = vrot.lane.b32.xlu0 %v849, 112
    %v1822 = vpop.permute.xlu0 %1821
    %1823 = vrot.lane.b32.xlu0 %v854, 112
    %v1824 = vpop.permute.xlu0 %1823
    %1825 = vrot.lane.b32.xlu0 %v859, 112
    %v1826 = vpop.permute.xlu0 %1825
    %1827 = vrot.lane.b32.xlu0 %v864, 112
    %v1828 = vpop.permute.xlu0 %1827
    %1829 = vrot.lane.b32.xlu0 %v824, 80
    %v1830 = vpop.permute.xlu0 %1829
    %1831 = vrot.lane.b32.xlu0 %v829, 80
    %v1832 = vpop.permute.xlu0 %1831
    %1833 = vrot.lane.b32.xlu0 %v834, 80
    %v1834 = vpop.permute.xlu0 %1833
    %1835 = vrot.lane.b32.xlu0 %v839, 80
    %v1836 = vpop.permute.xlu0 %1835
    %1837 = vrot.lane.b32.xlu0 %v844, 80
    %v1838 = vpop.permute.xlu0 %1837
    %1839 = vrot.lane.b32.xlu0 %v849, 80
    %v1840 = vpop.permute.xlu0 %1839
    %1841 = vrot.lane.b32.xlu0 %v854, 80
    %v1842 = vpop.permute.xlu0 %1841
    %1843 = vrot.lane.b32.xlu0 %v859, 80
    %v1844 = vpop.permute.xlu0 %1843
    %1845 = vrot.lane.b32.xlu0 %v864, 80
    %v1846 = vpop.permute.xlu0 %1845
    %v1847 = vsel %vm934, %v1812, 0
    %v1849 = vsel %vm934, %v1814, 0
    %v1851 = vsel %vm934, %v1816, 0
    %v1853 = vsel %vm934, %v1818, 0
    %v1855 = vsel %vm934, %v1820, 0
    %v1857 = vsel %vm934, %v1822, 0
    %v1859 = vsel %vm934, %v1824, 0
    %v1861 = vsel %vm934, %v1826, 0
    %v1863 = vsel %vm934, %v1828, 0
    %v1865 = vsel %vm934, %v1830, 0
    %v1867 = vsel %vm934, %v1832, 0
    %v1869 = vsel %vm934, %v1834, 0
    %v1871 = vsel %vm934, %v1836, 0
    %v1873 = vsel %vm934, %v1838, 0
    %v1875 = vsel %vm934, %v1840, 0
    %v1877 = vsel %vm934, %v1842, 0
    %v1879 = vsel %vm934, %v1844, 0
    %v1881 = vsel %vm934, %v1846, 0
    %1883 = vmatprep.subr.mxu0 0.0
    %1884 = vmatpush1.xpose.msra.mxu0 0.0
    %1885 = vmatprep.subr.mxu0 0.0
    %1886 = vmatpush1.xpose.msra.mxu0 0.0
    %1887 = vmatprep.subr.mxu0 0.0
    %1888 = vmatpush1.xpose.msra.mxu0 0.0
    %1889 = vmatprep.subr.mxu0 0.0
    %1890 = vmatpush1.xpose.msra.mxu0 0.0
    %1891 = vmatprep.subr.mxu0 0.0
    %1892 = vmatpush1.xpose.msra.mxu0 0.0
    %1893 = vmatprep.subr.mxu0 0.0
    %1894 = vmatpush1.xpose.msra.mxu0 0.0
    %1895 = vmatprep.subr.mxu0 0.0
    %1896 = vmatpush1.xpose.msra.mxu0 0.0
    %1897 = vmatprep.subr.mxu0 0.0
    %1898 = vmatpush1.xpose.msra.mxu0 %v1881
    %1899 = vmatprep.subr.mxu0 0.0
    %1900 = vmatpush1.xpose.msra.mxu0 %v1879
    %1901 = vmatprep.subr.mxu0 0.0
    %1902 = vmatpush1.xpose.msra.mxu0 %v1877
    %1903 = vmatprep.subr.mxu0 0.0
    %1904 = vmatpush1.xpose.msra.mxu0 %v1875
    %1905 = vmatprep.subr.mxu0 0.0
    %1906 = vmatpush1.xpose.msra.mxu0 %v1873
    %1907 = vmatprep.subr.mxu0 0.0
    %1908 = vmatpush1.xpose.msra.mxu0 %v1871
    %1909 = vmatprep.subr.mxu0 0.0
    %1910 = vmatpush1.xpose.msra.mxu0 %v1869
    %1911 = vmatprep.subr.mxu0 0.0
    %1912 = vmatpush1.xpose.msra.mxu0 %v1867
    %1913 = vmatprep.subr.mxu0 0.0
    %1914 = vmatpush1.xpose.msra.mxu0 %v1865
    %1915 = vmatprep.subr.mxu0 0.0
    %1916 = vmatpush2.xpose.msra.mxu0 0.0
    %1917 = vmatprep.subr.mxu0 0.0
    %1918 = vmatpush2.xpose.msra.mxu0 0.0
    %1919 = vmatprep.subr.mxu0 0.0
    %1920 = vmatpush2.xpose.msra.mxu0 0.0
    %1921 = vmatprep.subr.mxu0 0.0
    %1922 = vmatpush2.xpose.msra.mxu0 0.0
    %1923 = vmatprep.subr.mxu0 0.0
    %1924 = vmatpush2.xpose.msra.mxu0 0.0
    %1925 = vmatprep.subr.mxu0 0.0
    %1926 = vmatpush2.xpose.msra.mxu0 0.0
    %1927 = vmatprep.subr.mxu0 0.0
    %1928 = vmatpush2.xpose.msra.mxu0 0.0
    %1929 = vmatprep.subr.mxu0 0.0
    %1930 = vmatpush2.xpose.msra.mxu0 0.0
    %1931 = vmatprep.subr.mxu0 0.0
    %1932 = vmatpush2.xpose.msra.mxu0 0.0
    %1933 = vmatprep.subr.mxu0 0.0
    %1934 = vmatpush2.xpose.msra.mxu0 0.0
    %1935 = vmatprep.subr.mxu0 0.0
    %1936 = vmatpush2.xpose.msra.mxu0 0.0
    %1937 = vmatprep.subr.mxu0 0.0
    %1938 = vmatpush2.xpose.msra.mxu0 0.0
    %1939 = vmatprep.subr.mxu0 0.0
    %1940 = vmatpush2.xpose.msra.mxu0 0.0
    %1941 = vmatprep.subr.mxu0 0.0
    %1942 = vmatpush2.xpose.msra.mxu0 0.0
    %1943 = vmatprep.subr.mxu0 0.0
    %1944 = vmatpush2.xpose.msra.mxu0 0.0
    %1945 = vmatprep.subr.mxu0 0.0
    %1946 = vmatpush2.xpose.msra.mxu0 0.0
    %1947 = vmatprep.mubr.f32.mxu0 0.0
    %1948 = vmatmul.mubr.f32.gmra.mxu0 %v1847
    %v1949 = vpop.f32.mrf.mxu0
    %v1950 = vadd.f32 0.0, %v1949
    %v1951 = vpop.f32.mrf.mxu0
    %1952 = vmatprep.mubr.f32.mxu0 0.0
    %1953 = vmatmul.mubr.f32.gmra.mxu0 %v1849
    %v1954 = vpop.f32.mrf.mxu0
    %v1955 = vadd.f32 0.0, %v1954
    %v1956 = vpop.f32.mrf.mxu0
    %1957 = vmatprep.mubr.f32.mxu0 0.0
    %1958 = vmatmul.mubr.f32.gmra.mxu0 %v1851
    %v1959 = vpop.f32.mrf.mxu0
    %v1960 = vadd.f32 0.0, %v1959
    %v1961 = vpop.f32.mrf.mxu0
    %1962 = vmatprep.mubr.f32.mxu0 0.0
    %1963 = vmatmul.mubr.f32.gmra.mxu0 %v1853
    %v1964 = vpop.f32.mrf.mxu0
    %v1965 = vadd.f32 0.0, %v1964
    %v1966 = vpop.f32.mrf.mxu0
    %1967 = vmatprep.mubr.f32.mxu0 0.0
    %1968 = vmatmul.mubr.f32.gmra.mxu0 %v1855
    %v1969 = vpop.f32.mrf.mxu0
    %v1970 = vadd.f32 0.0, %v1969
    %v1971 = vpop.f32.mrf.mxu0
    %1972 = vmatprep.mubr.f32.mxu0 0.0
    %1973 = vmatmul.mubr.f32.gmra.mxu0 %v1857
    %v1974 = vpop.f32.mrf.mxu0
    %v1975 = vadd.f32 0.0, %v1974
    %v1976 = vpop.f32.mrf.mxu0
    %1977 = vmatprep.mubr.f32.mxu0 0.0
    %1978 = vmatmul.mubr.f32.gmra.mxu0 %v1859
    %v1979 = vpop.f32.mrf.mxu0
    %v1980 = vadd.f32 0.0, %v1979
    %v1981 = vpop.f32.mrf.mxu0
    %1982 = vmatprep.mubr.f32.mxu0 0.0
    %1983 = vmatmul.mubr.f32.gmra.mxu0 %v1861
    %v1984 = vpop.f32.mrf.mxu0
    %v1985 = vadd.f32 0.0, %v1984
    %v1986 = vpop.f32.mrf.mxu0
    %1987 = vmatprep.mubr.f32.mxu0 0.0
    %1988 = vmatmul.mubr.f32.gmra.mxu0 %v1863
    %v1989 = vpop.f32.mrf.mxu0
    %v1990 = vadd.f32 0.0, %v1989
    %v1991 = vpop.f32.mrf.mxu0
    %1992 = vdwg.mxu0
    %v1993 = vmul.f32 %v1950, 0.35355338
    %v1994 = vmul.f32 %v1955, 0.35355338
    %v1995 = vmul.f32 %v1960, 0.35355338
    %v1996 = vmul.f32 %v1965, 0.35355338
    %v1997 = vmul.f32 %v1970, 0.35355338
    %v1998 = vmul.f32 %v1975, 0.35355338
    %v1999 = vmul.f32 %v1980, 0.35355338
    %v2000 = vmul.f32 %v1985, 0.35355338
    %v2001 = vmul.f32 %v1990, 0.35355338
    %v2002 = vsel %vm1090, %v1993, -inf
    %2003 = vmax.xlane.f32.xlu0 %v2002
    %v2004 = vpop.xlane.xlu0 %2003
    %v2005 = vsel %vm1090, %v1994, -inf
    %2006 = vmax.xlane.f32.xlu0 %v2005
    %v2007 = vpop.xlane.xlu0 %2006
    %v2008 = vsel %vm1090, %v1995, -inf
    %2009 = vmax.xlane.f32.xlu0 %v2008
    %v2010 = vpop.xlane.xlu0 %2009
    %v2011 = vsel %vm1090, %v1996, -inf
    %2012 = vmax.xlane.f32.xlu0 %v2011
    %v2013 = vpop.xlane.xlu0 %2012
    %v2014 = vsel %vm1090, %v1997, -inf
    %2015 = vmax.xlane.f32.xlu0 %v2014
    %v2016 = vpop.xlane.xlu0 %2015
    %v2017 = vsel %vm1090, %v1998, -inf
    %2018 = vmax.xlane.f32.xlu0 %v2017
    %v2019 = vpop.xlane.xlu0 %2018
    %v2020 = vsel %vm1090, %v1999, -inf
    %2021 = vmax.xlane.f32.xlu0 %v2020
    %v2022 = vpop.xlane.xlu0 %2021
    %v2023 = vsel %vm1090, %v2000, -inf
    %2024 = vmax.xlane.f32.xlu0 %v2023
    %v2025 = vpop.xlane.xlu0 %2024
    %v2026 = vsel %vm1115, %v2001, -inf
    %2027 = vmax.xlane.f32.xlu0 %v2026
    %v2028 = vpop.xlane.xlu0 %2027
    %v2029 = vsub.f32 %v1993, %v2004
    %v2030 = vsub.f32 %v1994, %v2007
    %v2031 = vsub.f32 %v1995, %v2010
    %v2032 = vsub.f32 %v1996, %v2013
    %v2033 = vsub.f32 %v1997, %v2016
    %v2034 = vsub.f32 %v1998, %v2019
    %v2035 = vsub.f32 %v1999, %v2022
    %v2036 = vsub.f32 %v2000, %v2025
    %v2037 = vsub.f32 %v2001, %v2028
    %v2038 = vmul.f32 %v2029, 1.442695
    %v2039 = vpow.pop %v2038
    %v2040 = vmul.f32 %v2030, 1.442695
    %v2041 = vpow.pop %v2040
    %v2042 = vmul.f32 %v2031, 1.442695
    %v2043 = vpow.pop %v2042
    %v2044 = vmul.f32 %v2032, 1.442695
    %v2045 = vpow.pop %v2044
    %v2046 = vmul.f32 %v2033, 1.442695
    %v2047 = vpow.pop %v2046
    %v2048 = vmul.f32 %v2034, 1.442695
    %v2049 = vpow.pop %v2048
    %v2050 = vmul.f32 %v2035, 1.442695
    %v2051 = vpow.pop %v2050
    %v2052 = vmul.f32 %v2036, 1.442695
    %v2053 = vpow.pop %v2052
    %v2054 = vmul.f32 %v2037, 1.442695
    %v2055 = vpow.pop %v2054
    %v2056 = vsel %vm1090, %v2039, 0.0
    %2057 = vadd.xlane.f32.xlu0 %v2056
    %v2058 = vpop.xlane.xlu0 %2057
    %v2059 = vsel %vm1090, %v2041, 0.0
    %2060 = vadd.xlane.f32.xlu0 %v2059
    %v2061 = vpop.xlane.xlu0 %2060
    %v2062 = vsel %vm1090, %v2043, 0.0
    %2063 = vadd.xlane.f32.xlu0 %v2062
    %v2064 = vpop.xlane.xlu0 %2063
    %v2065 = vsel %vm1090, %v2045, 0.0
    %2066 = vadd.xlane.f32.xlu0 %v2065
    %v2067 = vpop.xlane.xlu0 %2066
    %v2068 = vsel %vm1090, %v2047, 0.0
    %2069 = vadd.xlane.f32.xlu0 %v2068
    %v2070 = vpop.xlane.xlu0 %2069
    %v2071 = vsel %vm1090, %v2049, 0.0
    %2072 = vadd.xlane.f32.xlu0 %v2071
    %v2073 = vpop.xlane.xlu0 %2072
    %v2074 = vsel %vm1090, %v2051, 0.0
    %2075 = vadd.xlane.f32.xlu0 %v2074
    %v2076 = vpop.xlane.xlu0 %2075
    %v2077 = vsel %vm1090, %v2053, 0.0
    %2078 = vadd.xlane.f32.xlu0 %v2077
    %v2079 = vpop.xlane.xlu0 %2078
    %v2080 = vsel %vm1115, %v2055, 0.0
    %2081 = vadd.xlane.f32.xlu0 %v2080
    %v2082 = vpop.xlane.xlu0 %2081
    %v2083 = vrcp.pop %v2058
    %v2084 = vrcp.pop %v2061
    %v2085 = vrcp.pop %v2064
    %v2086 = vrcp.pop %v2067
    %v2087 = vrcp.pop %v2070
    %v2088 = vrcp.pop %v2073
    %v2089 = vrcp.pop %v2076
    %v2090 = vrcp.pop %v2079
    %v2091 = vrcp.pop %v2082
    %v2092 = vmul.f32 %v2039, %v2083
    %v2093 = vmul.f32 %v2041, %v2084
    %v2094 = vmul.f32 %v2043, %v2085
    %v2095 = vmul.f32 %v2045, %v2086
    %v2096 = vmul.f32 %v2047, %v2087
    %v2097 = vmul.f32 %v2049, %v2088
    %v2098 = vmul.f32 %v2051, %v2089
    %v2099 = vmul.f32 %v2053, %v2090
    %v2100 = vmul.f32 %v2055, %v2091
    %2101 = vrot.lane.b32.xlu0 %v824, 48
    %v2102 = vpop.permute.xlu0 %2101
    %2103 = vrot.lane.b32.xlu0 %v829, 48
    %v2104 = vpop.permute.xlu0 %2103
    %2105 = vrot.lane.b32.xlu0 %v834, 48
    %v2106 = vpop.permute.xlu0 %2105
    %2107 = vrot.lane.b32.xlu0 %v839, 48
    %v2108 = vpop.permute.xlu0 %2107
    %2109 = vrot.lane.b32.xlu0 %v844, 48
    %v2110 = vpop.permute.xlu0 %2109
    %2111 = vrot.lane.b32.xlu0 %v849, 48
    %v2112 = vpop.permute.xlu0 %2111
    %2113 = vrot.lane.b32.xlu0 %v854, 48
    %v2114 = vpop.permute.xlu0 %2113
    %2115 = vrot.lane.b32.xlu0 %v859, 48
    %v2116 = vpop.permute.xlu0 %2115
    %2117 = vrot.lane.b32.xlu0 %v864, 48
    %v2118 = vpop.permute.xlu0 %2117
    %v2128 = vsel %vm1090, %v2092, 0
    %v2131 = vsel %vm1090, %v2093, 0
    %v2134 = vsel %vm1090, %v2094, 0
    %v2137 = vsel %vm1090, %v2095, 0
    %v2140 = vsel %vm1090, %v2096, 0
    %v2143 = vsel %vm1090, %v2097, 0
    %v2146 = vsel %vm1090, %v2098, 0
    %v2149 = vsel %vm1090, %v2099, 0
    %v2152 = vsel %vm1090, %v2100, 0
    %v2154 = vsel %vm362, %v2118, 0
    %2156 = vmatprep.subr.mxu0 0.0
    %2157 = vmatpush1.msra.mxu0 0.0
    %2158 = vmatprep.subr.mxu0 0.0
    %2159 = vmatpush1.msra.mxu0 0.0
    %2160 = vmatprep.subr.mxu0 0.0
    %2161 = vmatpush1.msra.mxu0 0.0
    %2162 = vmatprep.subr.mxu0 0.0
    %2163 = vmatpush1.msra.mxu0 0.0
    %2164 = vmatprep.subr.mxu0 0.0
    %2165 = vmatpush1.msra.mxu0 0.0
    %2166 = vmatprep.subr.mxu0 0.0
    %2167 = vmatpush1.msra.mxu0 0.0
    %2168 = vmatprep.subr.mxu0 0.0
    %2169 = vmatpush1.msra.mxu0 0.0
    %2170 = vmatprep.subr.mxu0 0.0
    %2171 = vmatpush1.msra.mxu0 %v2154
    %2172 = vmatprep.subr.mxu0 0.0
    %2173 = vmatpush1.msra.mxu0 %v2116
    %2174 = vmatprep.subr.mxu0 0.0
    %2175 = vmatpush1.msra.mxu0 %v2114
    %2176 = vmatprep.subr.mxu0 0.0
    %2177 = vmatpush1.msra.mxu0 %v2112
    %2178 = vmatprep.subr.mxu0 0.0
    %2179 = vmatpush1.msra.mxu0 %v2110
    %2180 = vmatprep.subr.mxu0 0.0
    %2181 = vmatpush1.msra.mxu0 %v2108
    %2182 = vmatprep.subr.mxu0 0.0
    %2183 = vmatpush1.msra.mxu0 %v2106
    %2184 = vmatprep.subr.mxu0 0.0
    %2185 = vmatpush1.msra.mxu0 %v2104
    %2186 = vmatprep.subr.mxu0 0.0
    %2187 = vmatpush1.msra.mxu0 %v2102
    %2188 = vmatprep.subr.mxu0 0.0
    %2189 = vmatpush2.msra.mxu0 0.0
    %2190 = vmatprep.subr.mxu0 0.0
    %2191 = vmatpush2.msra.mxu0 0.0
    %2192 = vmatprep.subr.mxu0 0.0
    %2193 = vmatpush2.msra.mxu0 0.0
    %2194 = vmatprep.subr.mxu0 0.0
    %2195 = vmatpush2.msra.mxu0 0.0
    %2196 = vmatprep.subr.mxu0 0.0
    %2197 = vmatpush2.msra.mxu0 0.0
    %2198 = vmatprep.subr.mxu0 0.0
    %2199 = vmatpush2.msra.mxu0 0.0
    %2200 = vmatprep.subr.mxu0 0.0
    %2201 = vmatpush2.msra.mxu0 0.0
    %2202 = vmatprep.subr.mxu0 0.0
    %2203 = vmatpush2.msra.mxu0 0.0
    %2204 = vmatprep.subr.mxu0 0.0
    %2205 = vmatpush2.msra.mxu0 0.0
    %2206 = vmatprep.subr.mxu0 0.0
    %2207 = vmatpush2.msra.mxu0 0.0
    %2208 = vmatprep.subr.mxu0 0.0
    %2209 = vmatpush2.msra.mxu0 0.0
    %2210 = vmatprep.subr.mxu0 0.0
    %2211 = vmatpush2.msra.mxu0 0.0
    %2212 = vmatprep.subr.mxu0 0.0
    %2213 = vmatpush2.msra.mxu0 0.0
    %2214 = vmatprep.subr.mxu0 0.0
    %2215 = vmatpush2.msra.mxu0 0.0
    %2216 = vmatprep.subr.mxu0 0.0
    %2217 = vmatpush2.msra.mxu0 0.0
    %2218 = vmatprep.subr.mxu0 0.0
    %2219 = vmatpush2.msra.mxu0 0.0
    %2220 = vmatprep.mubr.f32.mxu0 0.0
    %2221 = vmatmul.mubr.f32.gmra.mxu0 %v2128
    %v2222 = vpop.f32.mrf.mxu0
    %v2223 = vadd.f32 0.0, %v2222
    %v2224 = vpop.f32.mrf.mxu0
    %2225 = vmatprep.mubr.f32.mxu0 0.0
    %2226 = vmatmul.mubr.f32.gmra.mxu0 %v2131
    %v2227 = vpop.f32.mrf.mxu0
    %v2228 = vadd.f32 0.0, %v2227
    %v2229 = vpop.f32.mrf.mxu0
    %2230 = vmatprep.mubr.f32.mxu0 0.0
    %2231 = vmatmul.mubr.f32.gmra.mxu0 %v2134
    %v2232 = vpop.f32.mrf.mxu0
    %v2233 = vadd.f32 0.0, %v2232
    %v2234 = vpop.f32.mrf.mxu0
    %2235 = vmatprep.mubr.f32.mxu0 0.0
    %2236 = vmatmul.mubr.f32.gmra.mxu0 %v2137
    %v2237 = vpop.f32.mrf.mxu0
    %v2238 = vadd.f32 0.0, %v2237
    %v2239 = vpop.f32.mrf.mxu0
    %2240 = vmatprep.mubr.f32.mxu0 0.0
    %2241 = vmatmul.mubr.f32.gmra.mxu0 %v2140
    %v2242 = vpop.f32.mrf.mxu0
    %v2243 = vadd.f32 0.0, %v2242
    %v2244 = vpop.f32.mrf.mxu0
    %2245 = vmatprep.mubr.f32.mxu0 0.0
    %2246 = vmatmul.mubr.f32.gmra.mxu0 %v2143
    %v2247 = vpop.f32.mrf.mxu0
    %v2248 = vadd.f32 0.0, %v2247
    %v2249 = vpop.f32.mrf.mxu0
    %2250 = vmatprep.mubr.f32.mxu0 0.0
    %2251 = vmatmul.mubr.f32.gmra.mxu0 %v2146
    %v2252 = vpop.f32.mrf.mxu0
    %v2253 = vadd.f32 0.0, %v2252
    %v2254 = vpop.f32.mrf.mxu0
    %2255 = vmatprep.mubr.f32.mxu0 0.0
    %2256 = vmatmul.mubr.f32.gmra.mxu0 %v2149
    %v2257 = vpop.f32.mrf.mxu0
    %v2258 = vadd.f32 0.0, %v2257
    %v2259 = vpop.f32.mrf.mxu0
    %2260 = vmatprep.mubr.f32.mxu0 0.0
    %2261 = vmatmul.mubr.f32.gmra.mxu0 %v2152
    %v2262 = vpop.f32.mrf.mxu0
    %v2263 = vadd.f32 0.0, %v2262
    %v2264 = vpop.f32.mrf.mxu0
    %2265 = vdwg.mxu0
    %2266 = vrot.lane.b32.xlu0 %v824, 104
    %v2267 = vpop.permute.xlu0 %2266
    %2268 = vrot.lane.b32.xlu0 %v829, 104
    %v2269 = vpop.permute.xlu0 %2268
    %2270 = vrot.lane.b32.xlu0 %v834, 104
    %v2271 = vpop.permute.xlu0 %2270
    %2272 = vrot.lane.b32.xlu0 %v839, 104
    %v2273 = vpop.permute.xlu0 %2272
    %2274 = vrot.lane.b32.xlu0 %v844, 104
    %v2275 = vpop.permute.xlu0 %2274
    %2276 = vrot.lane.b32.xlu0 %v849, 104
    %v2277 = vpop.permute.xlu0 %2276
    %2278 = vrot.lane.b32.xlu0 %v854, 104
    %v2279 = vpop.permute.xlu0 %2278
    %2280 = vrot.lane.b32.xlu0 %v859, 104
    %v2281 = vpop.permute.xlu0 %2280
    %2282 = vrot.lane.b32.xlu0 %v864, 104
    %v2283 = vpop.permute.xlu0 %2282
    %2284 = vrot.lane.b32.xlu0 %v824, 72
    %v2285 = vpop.permute.xlu0 %2284
    %2286 = vrot.lane.b32.xlu0 %v829, 72
    %v2287 = vpop.permute.xlu0 %2286
    %2288 = vrot.lane.b32.xlu0 %v834, 72
    %v2289 = vpop.permute.xlu0 %2288
    %2290 = vrot.lane.b32.xlu0 %v839, 72
    %v2291 = vpop.permute.xlu0 %2290
    %2292 = vrot.lane.b32.xlu0 %v844, 72
    %v2293 = vpop.permute.xlu0 %2292
    %2294 = vrot.lane.b32.xlu0 %v849, 72
    %v2295 = vpop.permute.xlu0 %2294
    %2296 = vrot.lane.b32.xlu0 %v854, 72
    %v2297 = vpop.permute.xlu0 %2296
    %2298 = vrot.lane.b32.xlu0 %v859, 72
    %v2299 = vpop.permute.xlu0 %2298
    %2300 = vrot.lane.b32.xlu0 %v864, 72
    %v2301 = vpop.permute.xlu0 %2300
    %v2302 = vsel %vm934, %v2267, 0
    %v2304 = vsel %vm934, %v2269, 0
    %v2306 = vsel %vm934, %v2271, 0
    %v2308 = vsel %vm934, %v2273, 0
    %v2310 = vsel %vm934, %v2275, 0
    %v2312 = vsel %vm934, %v2277, 0
    %v2314 = vsel %vm934, %v2279, 0
    %v2316 = vsel %vm934, %v2281, 0
    %v2318 = vsel %vm934, %v2283, 0
    %v2320 = vsel %vm934, %v2285, 0
    %v2322 = vsel %vm934, %v2287, 0
    %v2324 = vsel %vm934, %v2289, 0
    %v2326 = vsel %vm934, %v2291, 0
    %v2328 = vsel %vm934, %v2293, 0
    %v2330 = vsel %vm934, %v2295, 0
    %v2332 = vsel %vm934, %v2297, 0
    %v2334 = vsel %vm934, %v2299, 0
    %v2336 = vsel %vm934, %v2301, 0
    %2338 = vmatprep.subr.mxu0 0.0
    %2339 = vmatpush1.xpose.msra.mxu0 0.0
    %2340 = vmatprep.subr.mxu0 0.0
    %2341 = vmatpush1.xpose.msra.mxu0 0.0
    %2342 = vmatprep.subr.mxu0 0.0
    %2343 = vmatpush1.xpose.msra.mxu0 0.0
    %2344 = vmatprep.subr.mxu0 0.0
    %2345 = vmatpush1.xpose.msra.mxu0 0.0
    %2346 = vmatprep.subr.mxu0 0.0
    %2347 = vmatpush1.xpose.msra.mxu0 0.0
    %2348 = vmatprep.subr.mxu0 0.0
    %2349 = vmatpush1.xpose.msra.mxu0 0.0
    %2350 = vmatprep.subr.mxu0 0.0
    %2351 = vmatpush1.xpose.msra.mxu0 0.0
    %2352 = vmatprep.subr.mxu0 0.0
    %2353 = vmatpush1.xpose.msra.mxu0 %v2336
    %2354 = vmatprep.subr.mxu0 0.0
    %2355 = vmatpush1.xpose.msra.mxu0 %v2334
    %2356 = vmatprep.subr.mxu0 0.0
    %2357 = vmatpush1.xpose.msra.mxu0 %v2332
    %2358 = vmatprep.subr.mxu0 0.0
    %2359 = vmatpush1.xpose.msra.mxu0 %v2330
    %2360 = vmatprep.subr.mxu0 0.0
    %2361 = vmatpush1.xpose.msra.mxu0 %v2328
    %2362 = vmatprep.subr.mxu0 0.0
    %2363 = vmatpush1.xpose.msra.mxu0 %v2326
    %2364 = vmatprep.subr.mxu0 0.0
    %2365 = vmatpush1.xpose.msra.mxu0 %v2324
    %2366 = vmatprep.subr.mxu0 0.0
    %2367 = vmatpush1.xpose.msra.mxu0 %v2322
    %2368 = vmatprep.subr.mxu0 0.0
    %2369 = vmatpush1.xpose.msra.mxu0 %v2320
    %2370 = vmatprep.subr.mxu0 0.0
    %2371 = vmatpush2.xpose.msra.mxu0 0.0
    %2372 = vmatprep.subr.mxu0 0.0
    %2373 = vmatpush2.xpose.msra.mxu0 0.0
    %2374 = vmatprep.subr.mxu0 0.0
    %2375 = vmatpush2.xpose.msra.mxu0 0.0
    %2376 = vmatprep.subr.mxu0 0.0
    %2377 = vmatpush2.xpose.msra.mxu0 0.0
    %2378 = vmatprep.subr.mxu0 0.0
    %2379 = vmatpush2.xpose.msra.mxu0 0.0
    %2380 = vmatprep.subr.mxu0 0.0
    %2381 = vmatpush2.xpose.msra.mxu0 0.0
    %2382 = vmatprep.subr.mxu0 0.0
    %2383 = vmatpush2.xpose.msra.mxu0 0.0
    %2384 = vmatprep.subr.mxu0 0.0
    %2385 = vmatpush2.xpose.msra.mxu0 0.0
    %2386 = vmatprep.subr.mxu0 0.0
    %2387 = vmatpush2.xpose.msra.mxu0 0.0
    %2388 = vmatprep.subr.mxu0 0.0
    %2389 = vmatpush2.xpose.msra.mxu0 0.0
    %2390 = vmatprep.subr.mxu0 0.0
    %2391 = vmatpush2.xpose.msra.mxu0 0.0
    %2392 = vmatprep.subr.mxu0 0.0
    %2393 = vmatpush2.xpose.msra.mxu0 0.0
    %2394 = vmatprep.subr.mxu0 0.0
    %2395 = vmatpush2.xpose.msra.mxu0 0.0
    %2396 = vmatprep.subr.mxu0 0.0
    %2397 = vmatpush2.xpose.msra.mxu0 0.0
    %2398 = vmatprep.subr.mxu0 0.0
    %2399 = vmatpush2.xpose.msra.mxu0 0.0
    %2400 = vmatprep.subr.mxu0 0.0
    %2401 = vmatpush2.xpose.msra.mxu0 0.0
    %2402 = vmatprep.mubr.f32.mxu0 0.0
    %2403 = vmatmul.mubr.f32.gmra.mxu0 %v2302
    %v2404 = vpop.f32.mrf.mxu0
    %v2405 = vadd.f32 0.0, %v2404
    %v2406 = vpop.f32.mrf.mxu0
    %2407 = vmatprep.mubr.f32.mxu0 0.0
    %2408 = vmatmul.mubr.f32.gmra.mxu0 %v2304
    %v2409 = vpop.f32.mrf.mxu0
    %v2410 = vadd.f32 0.0, %v2409
    %v2411 = vpop.f32.mrf.mxu0
    %2412 = vmatprep.mubr.f32.mxu0 0.0
    %2413 = vmatmul.mubr.f32.gmra.mxu0 %v2306
    %v2414 = vpop.f32.mrf.mxu0
    %v2415 = vadd.f32 0.0, %v2414
    %v2416 = vpop.f32.mrf.mxu0
    %2417 = vmatprep.mubr.f32.mxu0 0.0
    %2418 = vmatmul.mubr.f32.gmra.mxu0 %v2308
    %v2419 = vpop.f32.mrf.mxu0
    %v2420 = vadd.f32 0.0, %v2419
    %v2421 = vpop.f32.mrf.mxu0
    %2422 = vmatprep.mubr.f32.mxu0 0.0
    %2423 = vmatmul.mubr.f32.gmra.mxu0 %v2310
    %v2424 = vpop.f32.mrf.mxu0
    %v2425 = vadd.f32 0.0, %v2424
    %v2426 = vpop.f32.mrf.mxu0
    %2427 = vmatprep.mubr.f32.mxu0 0.0
    %2428 = vmatmul.mubr.f32.gmra.mxu0 %v2312
    %v2429 = vpop.f32.mrf.mxu0
    %v2430 = vadd.f32 0.0, %v2429
    %v2431 = vpop.f32.mrf.mxu0
    %2432 = vmatprep.mubr.f32.mxu0 0.0
    %2433 = vmatmul.mubr.f32.gmra.mxu0 %v2314
    %v2434 = vpop.f32.mrf.mxu0
    %v2435 = vadd.f32 0.0, %v2434
    %v2436 = vpop.f32.mrf.mxu0
    %2437 = vmatprep.mubr.f32.mxu0 0.0
    %2438 = vmatmul.mubr.f32.gmra.mxu0 %v2316
    %v2439 = vpop.f32.mrf.mxu0
    %v2440 = vadd.f32 0.0, %v2439
    %v2441 = vpop.f32.mrf.mxu0
    %2442 = vmatprep.mubr.f32.mxu0 0.0
    %2443 = vmatmul.mubr.f32.gmra.mxu0 %v2318
    %v2444 = vpop.f32.mrf.mxu0
    %v2445 = vadd.f32 0.0, %v2444
    %v2446 = vpop.f32.mrf.mxu0
    %2447 = vdwg.mxu0
    %v2448 = vmul.f32 %v2405, 0.35355338
    %v2449 = vmul.f32 %v2410, 0.35355338
    %v2450 = vmul.f32 %v2415, 0.35355338
    %v2451 = vmul.f32 %v2420, 0.35355338
    %v2452 = vmul.f32 %v2425, 0.35355338
    %v2453 = vmul.f32 %v2430, 0.35355338
    %v2454 = vmul.f32 %v2435, 0.35355338
    %v2455 = vmul.f32 %v2440, 0.35355338
    %v2456 = vmul.f32 %v2445, 0.35355338
    %v2457 = vsel %vm1090, %v2448, -inf
    %2458 = vmax.xlane.f32.xlu0 %v2457
    %v2459 = vpop.xlane.xlu0 %2458
    %v2460 = vsel %vm1090, %v2449, -inf
    %2461 = vmax.xlane.f32.xlu0 %v2460
    %v2462 = vpop.xlane.xlu0 %2461
    %v2463 = vsel %vm1090, %v2450, -inf
    %2464 = vmax.xlane.f32.xlu0 %v2463
    %v2465 = vpop.xlane.xlu0 %2464
    %v2466 = vsel %vm1090, %v2451, -inf
    %2467 = vmax.xlane.f32.xlu0 %v2466
    %v2468 = vpop.xlane.xlu0 %2467
    %v2469 = vsel %vm1090, %v2452, -inf
    %2470 = vmax.xlane.f32.xlu0 %v2469
    %v2471 = vpop.xlane.xlu0 %2470
    %v2472 = vsel %vm1090, %v2453, -inf
    %2473 = vmax.xlane.f32.xlu0 %v2472
    %v2474 = vpop.xlane.xlu0 %2473
    %v2475 = vsel %vm1090, %v2454, -inf
    %2476 = vmax.xlane.f32.xlu0 %v2475
    %v2477 = vpop.xlane.xlu0 %2476
    %v2478 = vsel %vm1090, %v2455, -inf
    %2479 = vmax.xlane.f32.xlu0 %v2478
    %v2480 = vpop.xlane.xlu0 %2479
    %v2481 = vsel %vm1115, %v2456, -inf
    %2482 = vmax.xlane.f32.xlu0 %v2481
    %v2483 = vpop.xlane.xlu0 %2482
    %v2484 = vsub.f32 %v2448, %v2459
    %v2485 = vsub.f32 %v2449, %v2462
    %v2486 = vsub.f32 %v2450, %v2465
    %v2487 = vsub.f32 %v2451, %v2468
    %v2488 = vsub.f32 %v2452, %v2471
    %v2489 = vsub.f32 %v2453, %v2474
    %v2490 = vsub.f32 %v2454, %v2477
    %v2491 = vsub.f32 %v2455, %v2480
    %v2492 = vsub.f32 %v2456, %v2483
    %v2493 = vmul.f32 %v2484, 1.442695
    %v2494 = vpow.pop %v2493
    %v2495 = vmul.f32 %v2485, 1.442695
    %v2496 = vpow.pop %v2495
    %v2497 = vmul.f32 %v2486, 1.442695
    %v2498 = vpow.pop %v2497
    %v2499 = vmul.f32 %v2487, 1.442695
    %v2500 = vpow.pop %v2499
    %v2501 = vmul.f32 %v2488, 1.442695
    %v2502 = vpow.pop %v2501
    %v2503 = vmul.f32 %v2489, 1.442695
    %v2504 = vpow.pop %v2503
    %v2505 = vmul.f32 %v2490, 1.442695
    %v2506 = vpow.pop %v2505
    %v2507 = vmul.f32 %v2491, 1.442695
    %v2508 = vpow.pop %v2507
    %v2509 = vmul.f32 %v2492, 1.442695
    %v2510 = vpow.pop %v2509
    %v2511 = vsel %vm1090, %v2494, 0.0
    %2512 = vadd.xlane.f32.xlu0 %v2511
    %v2513 = vpop.xlane.xlu0 %2512
    %v2514 = vsel %vm1090, %v2496, 0.0
    %2515 = vadd.xlane.f32.xlu0 %v2514
    %v2516 = vpop.xlane.xlu0 %2515
    %v2517 = vsel %vm1090, %v2498, 0.0
    %2518 = vadd.xlane.f32.xlu0 %v2517
    %v2519 = vpop.xlane.xlu0 %2518
    %v2520 = vsel %vm1090, %v2500, 0.0
    %2521 = vadd.xlane.f32.xlu0 %v2520
    %v2522 = vpop.xlane.xlu0 %2521
    %v2523 = vsel %vm1090, %v2502, 0.0
    %2524 = vadd.xlane.f32.xlu0 %v2523
    %v2525 = vpop.xlane.xlu0 %2524
    %v2526 = vsel %vm1090, %v2504, 0.0
    %2527 = vadd.xlane.f32.xlu0 %v2526
    %v2528 = vpop.xlane.xlu0 %2527
    %v2529 = vsel %vm1090, %v2506, 0.0
    %2530 = vadd.xlane.f32.xlu0 %v2529
    %v2531 = vpop.xlane.xlu0 %2530
    %v2532 = vsel %vm1090, %v2508, 0.0
    %2533 = vadd.xlane.f32.xlu0 %v2532
    %v2534 = vpop.xlane.xlu0 %2533
    %v2535 = vsel %vm1115, %v2510, 0.0
    %2536 = vadd.xlane.f32.xlu0 %v2535
    %v2537 = vpop.xlane.xlu0 %2536
    %v2538 = vrcp.pop %v2513
    %v2539 = vrcp.pop %v2516
    %v2540 = vrcp.pop %v2519
    %v2541 = vrcp.pop %v2522
    %v2542 = vrcp.pop %v2525
    %v2543 = vrcp.pop %v2528
    %v2544 = vrcp.pop %v2531
    %v2545 = vrcp.pop %v2534
    %v2546 = vrcp.pop %v2537
    %v2547 = vmul.f32 %v2494, %v2538
    %v2548 = vmul.f32 %v2496, %v2539
    %v2549 = vmul.f32 %v2498, %v2540
    %v2550 = vmul.f32 %v2500, %v2541
    %v2551 = vmul.f32 %v2502, %v2542
    %v2552 = vmul.f32 %v2504, %v2543
    %v2553 = vmul.f32 %v2506, %v2544
    %v2554 = vmul.f32 %v2508, %v2545
    %v2555 = vmul.f32 %v2510, %v2546
    %2556 = vrot.lane.b32.xlu0 %v824, 40
    %v2557 = vpop.permute.xlu0 %2556
    %2558 = vrot.lane.b32.xlu0 %v829, 40
    %v2559 = vpop.permute.xlu0 %2558
    %2560 = vrot.lane.b32.xlu0 %v834, 40
    %v2561 = vpop.permute.xlu0 %2560
    %2562 = vrot.lane.b32.xlu0 %v839, 40
    %v2563 = vpop.permute.xlu0 %2562
    %2564 = vrot.lane.b32.xlu0 %v844, 40
    %v2565 = vpop.permute.xlu0 %2564
    %2566 = vrot.lane.b32.xlu0 %v849, 40
    %v2567 = vpop.permute.xlu0 %2566
    %2568 = vrot.lane.b32.xlu0 %v854, 40
    %v2569 = vpop.permute.xlu0 %2568
    %2570 = vrot.lane.b32.xlu0 %v859, 40
    %v2571 = vpop.permute.xlu0 %2570
    %2572 = vrot.lane.b32.xlu0 %v864, 40
    %v2573 = vpop.permute.xlu0 %2572
    %v2583 = vsel %vm1090, %v2547, 0
    %v2586 = vsel %vm1090, %v2548, 0
    %v2589 = vsel %vm1090, %v2549, 0
    %v2592 = vsel %vm1090, %v2550, 0
    %v2595 = vsel %vm1090, %v2551, 0
    %v2598 = vsel %vm1090, %v2552, 0
    %v2601 = vsel %vm1090, %v2553, 0
    %v2604 = vsel %vm1090, %v2554, 0
    %v2607 = vsel %vm1090, %v2555, 0
    %v2609 = vsel %vm362, %v2573, 0
    %2611 = vmatprep.subr.mxu0 0.0
    %2612 = vmatpush1.msra.mxu0 0.0
    %2613 = vmatprep.subr.mxu0 0.0
    %2614 = vmatpush1.msra.mxu0 0.0
    %2615 = vmatprep.subr.mxu0 0.0
    %2616 = vmatpush1.msra.mxu0 0.0
    %2617 = vmatprep.subr.mxu0 0.0
    %2618 = vmatpush1.msra.mxu0 0.0
    %2619 = vmatprep.subr.mxu0 0.0
    %2620 = vmatpush1.msra.mxu0 0.0
    %2621 = vmatprep.subr.mxu0 0.0
    %2622 = vmatpush1.msra.mxu0 0.0
    %2623 = vmatprep.subr.mxu0 0.0
    %2624 = vmatpush1.msra.mxu0 0.0
    %2625 = vmatprep.subr.mxu0 0.0
    %2626 = vmatpush1.msra.mxu0 %v2609
    %2627 = vmatprep.subr.mxu0 0.0
    %2628 = vmatpush1.msra.mxu0 %v2571
    %2629 = vmatprep.subr.mxu0 0.0
    %2630 = vmatpush1.msra.mxu0 %v2569
    %2631 = vmatprep.subr.mxu0 0.0
    %2632 = vmatpush1.msra.mxu0 %v2567
    %2633 = vmatprep.subr.mxu0 0.0
    %2634 = vmatpush1.msra.mxu0 %v2565
    %2635 = vmatprep.subr.mxu0 0.0
    %2636 = vmatpush1.msra.mxu0 %v2563
    %2637 = vmatprep.subr.mxu0 0.0
    %2638 = vmatpush1.msra.mxu0 %v2561
    %2639 = vmatprep.subr.mxu0 0.0
    %2640 = vmatpush1.msra.mxu0 %v2559
    %2641 = vmatprep.subr.mxu0 0.0
    %2642 = vmatpush1.msra.mxu0 %v2557
    %2643 = vmatprep.subr.mxu0 0.0
    %2644 = vmatpush2.msra.mxu0 0.0
    %2645 = vmatprep.subr.mxu0 0.0
    %2646 = vmatpush2.msra.mxu0 0.0
    %2647 = vmatprep.subr.mxu0 0.0
    %2648 = vmatpush2.msra.mxu0 0.0
    %2649 = vmatprep.subr.mxu0 0.0
    %2650 = vmatpush2.msra.mxu0 0.0
    %2651 = vmatprep.subr.mxu0 0.0
    %2652 = vmatpush2.msra.mxu0 0.0
    %2653 = vmatprep.subr.mxu0 0.0
    %2654 = vmatpush2.msra.mxu0 0.0
    %2655 = vmatprep.subr.mxu0 0.0
    %2656 = vmatpush2.msra.mxu0 0.0
    %2657 = vmatprep.subr.mxu0 0.0
    %2658 = vmatpush2.msra.mxu0 0.0
    %2659 = vmatprep.subr.mxu0 0.0
    %2660 = vmatpush2.msra.mxu0 0.0
    %2661 = vmatprep.subr.mxu0 0.0
    %2662 = vmatpush2.msra.mxu0 0.0
    %2663 = vmatprep.subr.mxu0 0.0
    %2664 = vmatpush2.msra.mxu0 0.0
    %2665 = vmatprep.subr.mxu0 0.0
    %2666 = vmatpush2.msra.mxu0 0.0
    %2667 = vmatprep.subr.mxu0 0.0
    %2668 = vmatpush2.msra.mxu0 0.0
    %2669 = vmatprep.subr.mxu0 0.0
    %2670 = vmatpush2.msra.mxu0 0.0
    %2671 = vmatprep.subr.mxu0 0.0
    %2672 = vmatpush2.msra.mxu0 0.0
    %2673 = vmatprep.subr.mxu0 0.0
    %2674 = vmatpush2.msra.mxu0 0.0
    %2675 = vmatprep.mubr.f32.mxu0 0.0
    %2676 = vmatmul.mubr.f32.gmra.mxu0 %v2583
    %v2677 = vpop.f32.mrf.mxu0
    %v2678 = vadd.f32 0.0, %v2677
    %v2679 = vpop.f32.mrf.mxu0
    %2680 = vmatprep.mubr.f32.mxu0 0.0
    %2681 = vmatmul.mubr.f32.gmra.mxu0 %v2586
    %v2682 = vpop.f32.mrf.mxu0
    %v2683 = vadd.f32 0.0, %v2682
    %v2684 = vpop.f32.mrf.mxu0
    %2685 = vmatprep.mubr.f32.mxu0 0.0
    %2686 = vmatmul.mubr.f32.gmra.mxu0 %v2589
    %v2687 = vpop.f32.mrf.mxu0
    %v2688 = vadd.f32 0.0, %v2687
    %v2689 = vpop.f32.mrf.mxu0
    %2690 = vmatprep.mubr.f32.mxu0 0.0
    %2691 = vmatmul.mubr.f32.gmra.mxu0 %v2592
    %v2692 = vpop.f32.mrf.mxu0
    %v2693 = vadd.f32 0.0, %v2692
    %v2694 = vpop.f32.mrf.mxu0
    %2695 = vmatprep.mubr.f32.mxu0 0.0
    %2696 = vmatmul.mubr.f32.gmra.mxu0 %v2595
    %v2697 = vpop.f32.mrf.mxu0
    %v2698 = vadd.f32 0.0, %v2697
    %v2699 = vpop.f32.mrf.mxu0
    %2700 = vmatprep.mubr.f32.mxu0 0.0
    %2701 = vmatmul.mubr.f32.gmra.mxu0 %v2598
    %v2702 = vpop.f32.mrf.mxu0
    %v2703 = vadd.f32 0.0, %v2702
    %v2704 = vpop.f32.mrf.mxu0
    %2705 = vmatprep.mubr.f32.mxu0 0.0
    %2706 = vmatmul.mubr.f32.gmra.mxu0 %v2601
    %v2707 = vpop.f32.mrf.mxu0
    %v2708 = vadd.f32 0.0, %v2707
    %v2709 = vpop.f32.mrf.mxu0
    %2710 = vmatprep.mubr.f32.mxu0 0.0
    %2711 = vmatmul.mubr.f32.gmra.mxu0 %v2604
    %v2712 = vpop.f32.mrf.mxu0
    %v2713 = vadd.f32 0.0, %v2712
    %v2714 = vpop.f32.mrf.mxu0
    %2715 = vmatprep.mubr.f32.mxu0 0.0
    %2716 = vmatmul.mubr.f32.gmra.mxu0 %v2607
    %v2717 = vpop.f32.mrf.mxu0
    %v2718 = vadd.f32 0.0, %v2717
    %v2719 = vpop.f32.mrf.mxu0
    %2720 = vdwg.mxu0
    %2730 = vrot.lane.b32.xlu0 %v1768, 8
    %v2731 = vpop.permute.xlu0 %2730
    %2732 = vrot.lane.b32.xlu0 %v1773, 8
    %v2733 = vpop.permute.xlu0 %2732
    %2734 = vrot.lane.b32.xlu0 %v1778, 8
    %v2735 = vpop.permute.xlu0 %2734
    %2736 = vrot.lane.b32.xlu0 %v1783, 8
    %v2737 = vpop.permute.xlu0 %2736
    %2738 = vrot.lane.b32.xlu0 %v1788, 8
    %v2739 = vpop.permute.xlu0 %2738
    %2740 = vrot.lane.b32.xlu0 %v1793, 8
    %v2741 = vpop.permute.xlu0 %2740
    %2742 = vrot.lane.b32.xlu0 %v1798, 8
    %v2743 = vpop.permute.xlu0 %2742
    %2744 = vrot.lane.b32.xlu0 %v1803, 8
    %v2745 = vpop.permute.xlu0 %2744
    %2746 = vrot.lane.b32.xlu0 %v1808, 8
    %v2747 = vpop.permute.xlu0 %2746
    %2766 = vrot.lane.b32.xlu0 %v2223, 16
    %v2767 = vpop.permute.xlu0 %2766
    %2768 = vrot.lane.b32.xlu0 %v2228, 16
    %v2769 = vpop.permute.xlu0 %2768
    %2770 = vrot.lane.b32.xlu0 %v2233, 16
    %v2771 = vpop.permute.xlu0 %2770
    %2772 = vrot.lane.b32.xlu0 %v2238, 16
    %v2773 = vpop.permute.xlu0 %2772
    %2774 = vrot.lane.b32.xlu0 %v2243, 16
    %v2775 = vpop.permute.xlu0 %2774
    %2776 = vrot.lane.b32.xlu0 %v2248, 16
    %v2777 = vpop.permute.xlu0 %2776
    %2778 = vrot.lane.b32.xlu0 %v2253, 16
    %v2779 = vpop.permute.xlu0 %2778
    %2780 = vrot.lane.b32.xlu0 %v2258, 16
    %v2781 = vpop.permute.xlu0 %2780
    %2782 = vrot.lane.b32.xlu0 %v2263, 16
    %v2783 = vpop.permute.xlu0 %2782
    %2802 = vrot.lane.b32.xlu0 %v2678, 24
    %v2803 = vpop.permute.xlu0 %2802
    %2804 = vrot.lane.b32.xlu0 %v2683, 24
    %v2805 = vpop.permute.xlu0 %2804
    %2806 = vrot.lane.b32.xlu0 %v2688, 24
    %v2807 = vpop.permute.xlu0 %2806
    %2808 = vrot.lane.b32.xlu0 %v2693, 24
    %v2809 = vpop.permute.xlu0 %2808
    %2810 = vrot.lane.b32.xlu0 %v2698, 24
    %v2811 = vpop.permute.xlu0 %2810
    %2812 = vrot.lane.b32.xlu0 %v2703, 24
    %v2813 = vpop.permute.xlu0 %2812
    %2814 = vrot.lane.b32.xlu0 %v2708, 24
    %v2815 = vpop.permute.xlu0 %2814
    %2816 = vrot.lane.b32.xlu0 %v2713, 24
    %v2817 = vpop.permute.xlu0 %2816
    %2818 = vrot.lane.b32.xlu0 %v2718, 24
    %v2819 = vpop.permute.xlu0 %2818
    %v2829 = vsel %vm934, %v1313, %v2731
    %v2830 = vsel %vm934, %v1318, %v2733
    %v2831 = vsel %vm934, %v1323, %v2735
    %v2832 = vsel %vm934, %v1328, %v2737
    %v2833 = vsel %vm934, %v1333, %v2739
    %v2834 = vsel %vm934, %v1338, %v2741
    %v2835 = vsel %vm934, %v1343, %v2743
    %v2836 = vsel %vm934, %v1348, %v2745
    %v2837 = vsel %vm934, %v1353, %v2747
    %vm2838 = vcmask 130048
    %v2839 = vsel %vm2838, %v2829, %v2767
    %v2840 = vsel %vm2838, %v2830, %v2769
    %v2841 = vsel %vm2838, %v2831, %v2771
    %v2842 = vsel %vm2838, %v2832, %v2773
    %v2843 = vsel %vm2838, %v2833, %v2775
    %v2844 = vsel %vm2838, %v2834, %v2777
    %v2845 = vsel %vm2838, %v2835, %v2779
    %v2846 = vsel %vm2838, %v2836, %v2781
    %v2847 = vsel %vm2838, %v2837, %v2783
    %vm2848 = vcmask 195584
    %v2849 = vsel %vm2848, %v2839, %v2803
    %v2850 = vsel %vm2848, %v2840, %v2805
    %v2851 = vsel %vm2848, %v2841, %v2807
    %v2852 = vsel %vm2848, %v2842, %v2809
    %v2853 = vsel %vm2848, %v2843, %v2811
    %v2854 = vsel %vm2848, %v2844, %v2813
    %v2855 = vsel %vm2848, %v2845, %v2815
    %v2856 = vsel %vm2848, %v2846, %v2817
    %v2857 = vsel %vm2848, %v2847, %v2819
    %v2866 = vrot.slane %v864, 1
    %v2867 = vrot.slane %v869, 1
    %v2868 = vsel %vm312, %v2866, %v2867
    %v2869 = vrot.slane %v874, 1
    %v2870 = vsel %vm312, %v2867, %v2869
    %v2871 = vrot.slane %v879, 1
    %v2872 = vsel %vm312, %v2869, %v2871
    %v2873 = vrot.slane %v884, 1
    %v2874 = vsel %vm312, %v2871, %v2873
    %v2875 = vrot.slane %v889, 1
    %v2876 = vsel %vm312, %v2873, %v2875
    %v2877 = vrot.slane %v894, 1
    %v2878 = vsel %vm312, %v2875, %v2877
    %v2879 = vrot.slane %v899, 1
    %v2880 = vsel %vm312, %v2877, %v2879
    %v2881 = vrot.slane %v904, 1
    %v2882 = vsel %vm312, %v2879, %v2881
    %2883 = vrot.lane.b32.xlu0 %v2868, 96
    %v2884 = vpop.permute.xlu0 %2883
    %2885 = vrot.lane.b32.xlu0 %v2870, 96
    %v2886 = vpop.permute.xlu0 %2885
    %2887 = vrot.lane.b32.xlu0 %v2872, 96
    %v2888 = vpop.permute.xlu0 %2887
    %2889 = vrot.lane.b32.xlu0 %v2874, 96
    %v2890 = vpop.permute.xlu0 %2889
    %2891 = vrot.lane.b32.xlu0 %v2876, 96
    %v2892 = vpop.permute.xlu0 %2891
    %2893 = vrot.lane.b32.xlu0 %v2878, 96
    %v2894 = vpop.permute.xlu0 %2893
    %2895 = vrot.lane.b32.xlu0 %v2880, 96
    %v2896 = vpop.permute.xlu0 %2895
    %2897 = vrot.lane.b32.xlu0 %v2882, 96
    %v2898 = vpop.permute.xlu0 %2897
    %2899 = vrot.lane.b32.xlu0 %v2881, 96
    %v2900 = vpop.permute.xlu0 %2899
    %v2901 = vsel %vm934, %v2868, 0
    %v2903 = vsel %vm934, %v2870, 0
    %v2905 = vsel %vm934, %v2872, 0
    %v2907 = vsel %vm934, %v2874, 0
    %v2909 = vsel %vm934, %v2876, 0
    %v2911 = vsel %vm934, %v2878, 0
    %v2913 = vsel %vm934, %v2880, 0
    %v2915 = vsel %vm934, %v2882, 0
    %v2917 = vsel %vm934, %v2881, 0
    %v2919 = vsel %vm934, %v2884, 0
    %v2921 = vsel %vm934, %v2886, 0
    %v2923 = vsel %vm934, %v2888, 0
    %v2925 = vsel %vm934, %v2890, 0
    %v2927 = vsel %vm934, %v2892, 0
    %v2929 = vsel %vm934, %v2894, 0
    %v2931 = vsel %vm934, %v2896, 0
    %v2933 = vsel %vm934, %v2898, 0
    %v2935 = vsel %vm934, %v2900, 0
    %2937 = vmatprep.subr.mxu0 0.0
    %2938 = vmatpush1.xpose.msra.mxu0 0.0
    %2939 = vmatprep.subr.mxu0 0.0
    %2940 = vmatpush1.xpose.msra.mxu0 0.0
    %2941 = vmatprep.subr.mxu0 0.0
    %2942 = vmatpush1.xpose.msra.mxu0 0.0
    %2943 = vmatprep.subr.mxu0 0.0
    %2944 = vmatpush1.xpose.msra.mxu0 0.0
    %2945 = vmatprep.subr.mxu0 0.0
    %2946 = vmatpush1.xpose.msra.mxu0 0.0
    %2947 = vmatprep.subr.mxu0 0.0
    %2948 = vmatpush1.xpose.msra.mxu0 0.0
    %2949 = vmatprep.subr.mxu0 0.0
    %2950 = vmatpush1.xpose.msra.mxu0 0.0
    %2951 = vmatprep.subr.mxu0 0.0
    %2952 = vmatpush1.xpose.msra.mxu0 %v2935
    %2953 = vmatprep.subr.mxu0 0.0
    %2954 = vmatpush1.xpose.msra.mxu0 %v2933
    %2955 = vmatprep.subr.mxu0 0.0
    %2956 = vmatpush1.xpose.msra.mxu0 %v2931
    %2957 = vmatprep.subr.mxu0 0.0
    %2958 = vmatpush1.xpose.msra.mxu0 %v2929
    %2959 = vmatprep.subr.mxu0 0.0
    %2960 = vmatpush1.xpose.msra.mxu0 %v2927
    %2961 = vmatprep.subr.mxu0 0.0
    %2962 = vmatpush1.xpose.msra.mxu0 %v2925
    %2963 = vmatprep.subr.mxu0 0.0
    %2964 = vmatpush1.xpose.msra.mxu0 %v2923
    %2965 = vmatprep.subr.mxu0 0.0
    %2966 = vmatpush1.xpose.msra.mxu0 %v2921
    %2967 = vmatprep.subr.mxu0 0.0
    %2968 = vmatpush1.xpose.msra.mxu0 %v2919
    %2969 = vmatprep.subr.mxu0 0.0
    %2970 = vmatpush2.xpose.msra.mxu0 0.0
    %2971 = vmatprep.subr.mxu0 0.0
    %2972 = vmatpush2.xpose.msra.mxu0 0.0
    %2973 = vmatprep.subr.mxu0 0.0
    %2974 = vmatpush2.xpose.msra.mxu0 0.0
    %2975 = vmatprep.subr.mxu0 0.0
    %2976 = vmatpush2.xpose.msra.mxu0 0.0
    %2977 = vmatprep.subr.mxu0 0.0
    %2978 = vmatpush2.xpose.msra.mxu0 0.0
    %2979 = vmatprep.subr.mxu0 0.0
    %2980 = vmatpush2.xpose.msra.mxu0 0.0
    %2981 = vmatprep.subr.mxu0 0.0
    %2982 = vmatpush2.xpose.msra.mxu0 0.0
    %2983 = vmatprep.subr.mxu0 0.0
    %2984 = vmatpush2.xpose.msra.mxu0 0.0
    %2985 = vmatprep.subr.mxu0 0.0
    %2986 = vmatpush2.xpose.msra.mxu0 0.0
    %2987 = vmatprep.subr.mxu0 0.0
    %2988 = vmatpush2.xpose.msra.mxu0 0.0
    %2989 = vmatprep.subr.mxu0 0.0
    %2990 = vmatpush2.xpose.msra.mxu0 0.0
    %2991 = vmatprep.subr.mxu0 0.0
    %2992 = vmatpush2.xpose.msra.mxu0 0.0
    %2993 = vmatprep.subr.mxu0 0.0
    %2994 = vmatpush2.xpose.msra.mxu0 0.0
    %2995 = vmatprep.subr.mxu0 0.0
    %2996 = vmatpush2.xpose.msra.mxu0 0.0
    %2997 = vmatprep.subr.mxu0 0.0
    %2998 = vmatpush2.xpose.msra.mxu0 0.0
    %2999 = vmatprep.subr.mxu0 0.0
    %3000 = vmatpush2.xpose.msra.mxu0 0.0
    %3001 = vmatprep.mubr.f32.mxu0 0.0
    %3002 = vmatmul.mubr.f32.gmra.mxu0 %v2901
    %v3003 = vpop.f32.mrf.mxu0
    %v3004 = vadd.f32 0.0, %v3003
    %v3005 = vpop.f32.mrf.mxu0
    %3006 = vmatprep.mubr.f32.mxu0 0.0
    %3007 = vmatmul.mubr.f32.gmra.mxu0 %v2903
    %v3008 = vpop.f32.mrf.mxu0
    %v3009 = vadd.f32 0.0, %v3008
    %v3010 = vpop.f32.mrf.mxu0
    %3011 = vmatprep.mubr.f32.mxu0 0.0
    %3012 = vmatmul.mubr.f32.gmra.mxu0 %v2905
    %v3013 = vpop.f32.mrf.mxu0
    %v3014 = vadd.f32 0.0, %v3013
    %v3015 = vpop.f32.mrf.mxu0
    %3016 = vmatprep.mubr.f32.mxu0 0.0
    %3017 = vmatmul.mubr.f32.gmra.mxu0 %v2907
    %v3018 = vpop.f32.mrf.mxu0
    %v3019 = vadd.f32 0.0, %v3018
    %v3020 = vpop.f32.mrf.mxu0
    %3021 = vmatprep.mubr.f32.mxu0 0.0
    %3022 = vmatmul.mubr.f32.gmra.mxu0 %v2909
    %v3023 = vpop.f32.mrf.mxu0
    %v3024 = vadd.f32 0.0, %v3023
    %v3025 = vpop.f32.mrf.mxu0
    %3026 = vmatprep.mubr.f32.mxu0 0.0
    %3027 = vmatmul.mubr.f32.gmra.mxu0 %v2911
    %v3028 = vpop.f32.mrf.mxu0
    %v3029 = vadd.f32 0.0, %v3028
    %v3030 = vpop.f32.mrf.mxu0
    %3031 = vmatprep.mubr.f32.mxu0 0.0
    %3032 = vmatmul.mubr.f32.gmra.mxu0 %v2913
    %v3033 = vpop.f32.mrf.mxu0
    %v3034 = vadd.f32 0.0, %v3033
    %v3035 = vpop.f32.mrf.mxu0
    %3036 = vmatprep.mubr.f32.mxu0 0.0
    %3037 = vmatmul.mubr.f32.gmra.mxu0 %v2915
    %v3038 = vpop.f32.mrf.mxu0
    %v3039 = vadd.f32 0.0, %v3038
    %v3040 = vpop.f32.mrf.mxu0
    %3041 = vmatprep.mubr.f32.mxu0 0.0
    %3042 = vmatmul.mubr.f32.gmra.mxu0 %v2917
    %v3043 = vpop.f32.mrf.mxu0
    %v3044 = vadd.f32 0.0, %v3043
    %v3045 = vpop.f32.mrf.mxu0
    %3046 = vdwg.mxu0
    %v3047 = vmul.f32 %v3004, 0.35355338
    %v3048 = vmul.f32 %v3009, 0.35355338
    %v3049 = vmul.f32 %v3014, 0.35355338
    %v3050 = vmul.f32 %v3019, 0.35355338
    %v3051 = vmul.f32 %v3024, 0.35355338
    %v3052 = vmul.f32 %v3029, 0.35355338
    %v3053 = vmul.f32 %v3034, 0.35355338
    %v3054 = vmul.f32 %v3039, 0.35355338
    %v3055 = vmul.f32 %v3044, 0.35355338
    %v3056 = vsel %vm1090, %v3047, -inf
    %3057 = vmax.xlane.f32.xlu0 %v3056
    %v3058 = vpop.xlane.xlu0 %3057
    %v3059 = vsel %vm1090, %v3048, -inf
    %3060 = vmax.xlane.f32.xlu0 %v3059
    %v3061 = vpop.xlane.xlu0 %3060
    %v3062 = vsel %vm1090, %v3049, -inf
    %3063 = vmax.xlane.f32.xlu0 %v3062
    %v3064 = vpop.xlane.xlu0 %3063
    %v3065 = vsel %vm1090, %v3050, -inf
    %3066 = vmax.xlane.f32.xlu0 %v3065
    %v3067 = vpop.xlane.xlu0 %3066
    %v3068 = vsel %vm1090, %v3051, -inf
    %3069 = vmax.xlane.f32.xlu0 %v3068
    %v3070 = vpop.xlane.xlu0 %3069
    %v3071 = vsel %vm1090, %v3052, -inf
    %3072 = vmax.xlane.f32.xlu0 %v3071
    %v3073 = vpop.xlane.xlu0 %3072
    %v3074 = vsel %vm1090, %v3053, -inf
    %3075 = vmax.xlane.f32.xlu0 %v3074
    %v3076 = vpop.xlane.xlu0 %3075
    %v3077 = vsel %vm1090, %v3054, -inf
    %3078 = vmax.xlane.f32.xlu0 %v3077
    %v3079 = vpop.xlane.xlu0 %3078
    %v3080 = vsel %vm1115, %v3055, -inf
    %3081 = vmax.xlane.f32.xlu0 %v3080
    %v3082 = vpop.xlane.xlu0 %3081
    %v3083 = vsub.f32 %v3047, %v3058
    %v3084 = vsub.f32 %v3048, %v3061
    %v3085 = vsub.f32 %v3049, %v3064
    %v3086 = vsub.f32 %v3050, %v3067
    %v3087 = vsub.f32 %v3051, %v3070
    %v3088 = vsub.f32 %v3052, %v3073
    %v3089 = vsub.f32 %v3053, %v3076
    %v3090 = vsub.f32 %v3054, %v3079
    %v3091 = vsub.f32 %v3055, %v3082
    %v3092 = vmul.f32 %v3083, 1.442695
    %v3093 = vpow.pop %v3092
    %v3094 = vmul.f32 %v3084, 1.442695
    %v3095 = vpow.pop %v3094
    %v3096 = vmul.f32 %v3085, 1.442695
    %v3097 = vpow.pop %v3096
    %v3098 = vmul.f32 %v3086, 1.442695
    %v3099 = vpow.pop %v3098
    %v3100 = vmul.f32 %v3087, 1.442695
    %v3101 = vpow.pop %v3100
    %v3102 = vmul.f32 %v3088, 1.442695
    %v3103 = vpow.pop %v3102
    %v3104 = vmul.f32 %v3089, 1.442695
    %v3105 = vpow.pop %v3104
    %v3106 = vmul.f32 %v3090, 1.442695
    %v3107 = vpow.pop %v3106
    %v3108 = vmul.f32 %v3091, 1.442695
    %v3109 = vpow.pop %v3108
    %v3110 = vsel %vm1090, %v3093, 0.0
    %3111 = vadd.xlane.f32.xlu0 %v3110
    %v3112 = vpop.xlane.xlu0 %3111
    %v3113 = vsel %vm1090, %v3095, 0.0
    %3114 = vadd.xlane.f32.xlu0 %v3113
    %v3115 = vpop.xlane.xlu0 %3114
    %v3116 = vsel %vm1090, %v3097, 0.0
    %3117 = vadd.xlane.f32.xlu0 %v3116
    %v3118 = vpop.xlane.xlu0 %3117
    %v3119 = vsel %vm1090, %v3099, 0.0
    %3120 = vadd.xlane.f32.xlu0 %v3119
    %v3121 = vpop.xlane.xlu0 %3120
    %v3122 = vsel %vm1090, %v3101, 0.0
    %3123 = vadd.xlane.f32.xlu0 %v3122
    %v3124 = vpop.xlane.xlu0 %3123
    %v3125 = vsel %vm1090, %v3103, 0.0
    %3126 = vadd.xlane.f32.xlu0 %v3125
    %v3127 = vpop.xlane.xlu0 %3126
    %v3128 = vsel %vm1090, %v3105, 0.0
    %3129 = vadd.xlane.f32.xlu0 %v3128
    %v3130 = vpop.xlane.xlu0 %3129
    %v3131 = vsel %vm1090, %v3107, 0.0
    %3132 = vadd.xlane.f32.xlu0 %v3131
    %v3133 = vpop.xlane.xlu0 %3132
    %v3134 = vsel %vm1115, %v3109, 0.0
    %3135 = vadd.xlane.f32.xlu0 %v3134
    %v3136 = vpop.xlane.xlu0 %3135
    %v3137 = vrcp.pop %v3112
    %v3138 = vrcp.pop %v3115
    %v3139 = vrcp.pop %v3118
    %v3140 = vrcp.pop %v3121
    %v3141 = vrcp.pop %v3124
    %v3142 = vrcp.pop %v3127
    %v3143 = vrcp.pop %v3130
    %v3144 = vrcp.pop %v3133
    %v3145 = vrcp.pop %v3136
    %v3146 = vmul.f32 %v3093, %v3137
    %v3147 = vmul.f32 %v3095, %v3138
    %v3148 = vmul.f32 %v3097, %v3139
    %v3149 = vmul.f32 %v3099, %v3140
    %v3150 = vmul.f32 %v3101, %v3141
    %v3151 = vmul.f32 %v3103, %v3142
    %v3152 = vmul.f32 %v3105, %v3143
    %v3153 = vmul.f32 %v3107, %v3144
    %v3154 = vmul.f32 %v3109, %v3145
    %3155 = vrot.lane.b32.xlu0 %v2868, 64
    %v3156 = vpop.permute.xlu0 %3155
    %3157 = vrot.lane.b32.xlu0 %v2870, 64
    %v3158 = vpop.permute.xlu0 %3157
    %3159 = vrot.lane.b32.xlu0 %v2872, 64
    %v3160 = vpop.permute.xlu0 %3159
    %3161 = vrot.lane.b32.xlu0 %v2874, 64
    %v3162 = vpop.permute.xlu0 %3161
    %3163 = vrot.lane.b32.xlu0 %v2876, 64
    %v3164 = vpop.permute.xlu0 %3163
    %3165 = vrot.lane.b32.xlu0 %v2878, 64
    %v3166 = vpop.permute.xlu0 %3165
    %3167 = vrot.lane.b32.xlu0 %v2880, 64
    %v3168 = vpop.permute.xlu0 %3167
    %3169 = vrot.lane.b32.xlu0 %v2882, 64
    %v3170 = vpop.permute.xlu0 %3169
    %3171 = vrot.lane.b32.xlu0 %v2881, 64
    %v3172 = vpop.permute.xlu0 %3171
    %v3182 = vsel %vm1090, %v3146, 0
    %v3185 = vsel %vm1090, %v3147, 0
    %v3188 = vsel %vm1090, %v3148, 0
    %v3191 = vsel %vm1090, %v3149, 0
    %v3194 = vsel %vm1090, %v3150, 0
    %v3197 = vsel %vm1090, %v3151, 0
    %v3200 = vsel %vm1090, %v3152, 0
    %v3203 = vsel %vm1090, %v3153, 0
    %v3206 = vsel %vm1090, %v3154, 0
    %v3208 = vsel %vm362, %v3172, 0
    %3210 = vmatprep.subr.mxu0 0.0
    %3211 = vmatpush1.msra.mxu0 0.0
    %3212 = vmatprep.subr.mxu0 0.0
    %3213 = vmatpush1.msra.mxu0 0.0
    %3214 = vmatprep.subr.mxu0 0.0
    %3215 = vmatpush1.msra.mxu0 0.0
    %3216 = vmatprep.subr.mxu0 0.0
    %3217 = vmatpush1.msra.mxu0 0.0
    %3218 = vmatprep.subr.mxu0 0.0
    %3219 = vmatpush1.msra.mxu0 0.0
    %3220 = vmatprep.subr.mxu0 0.0
    %3221 = vmatpush1.msra.mxu0 0.0
    %3222 = vmatprep.subr.mxu0 0.0
    %3223 = vmatpush1.msra.mxu0 0.0
    %3224 = vmatprep.subr.mxu0 0.0
    %3225 = vmatpush1.msra.mxu0 %v3208
    %3226 = vmatprep.subr.mxu0 0.0
    %3227 = vmatpush1.msra.mxu0 %v3170
    %3228 = vmatprep.subr.mxu0 0.0
    %3229 = vmatpush1.msra.mxu0 %v3168
    %3230 = vmatprep.subr.mxu0 0.0
    %3231 = vmatpush1.msra.mxu0 %v3166
    %3232 = vmatprep.subr.mxu0 0.0
    %3233 = vmatpush1.msra.mxu0 %v3164
    %3234 = vmatprep.subr.mxu0 0.0
    %3235 = vmatpush1.msra.mxu0 %v3162
    %3236 = vmatprep.subr.mxu0 0.0
    %3237 = vmatpush1.msra.mxu0 %v3160
    %3238 = vmatprep.subr.mxu0 0.0
    %3239 = vmatpush1.msra.mxu0 %v3158
    %3240 = vmatprep.subr.mxu0 0.0
    %3241 = vmatpush1.msra.mxu0 %v3156
    %3242 = vmatprep.subr.mxu0 0.0
    %3243 = vmatpush2.msra.mxu0 0.0
    %3244 = vmatprep.subr.mxu0 0.0
    %3245 = vmatpush2.msra.mxu0 0.0
    %3246 = vmatprep.subr.mxu0 0.0
    %3247 = vmatpush2.msra.mxu0 0.0
    %3248 = vmatprep.subr.mxu0 0.0
    %3249 = vmatpush2.msra.mxu0 0.0
    %3250 = vmatprep.subr.mxu0 0.0
    %3251 = vmatpush2.msra.mxu0 0.0
    %3252 = vmatprep.subr.mxu0 0.0
    %3253 = vmatpush2.msra.mxu0 0.0
    %3254 = vmatprep.subr.mxu0 0.0
    %3255 = vmatpush2.msra.mxu0 0.0
    %3256 = vmatprep.subr.mxu0 0.0
    %3257 = vmatpush2.msra.mxu0 0.0
    %3258 = vmatprep.subr.mxu0 0.0
    %3259 = vmatpush2.msra.mxu0 0.0
    %3260 = vmatprep.subr.mxu0 0.0
    %3261 = vmatpush2.msra.mxu0 0.0
    %3262 = vmatprep.subr.mxu0 0.0
    %3263 = vmatpush2.msra.mxu0 0.0
    %3264 = vmatprep.subr.mxu0 0.0
    %3265 = vmatpush2.msra.mxu0 0.0
    %3266 = vmatprep.subr.mxu0 0.0
    %3267 = vmatpush2.msra.mxu0 0.0
    %3268 = vmatprep.subr.mxu0 0.0
    %3269 = vmatpush2.msra.mxu0 0.0
    %3270 = vmatprep.subr.mxu0 0.0
    %3271 = vmatpush2.msra.mxu0 0.0
    %3272 = vmatprep.subr.mxu0 0.0
    %3273 = vmatpush2.msra.mxu0 0.0
    %3274 = vmatprep.mubr.f32.mxu0 0.0
    %3275 = vmatmul.mubr.f32.gmra.mxu0 %v3182
    %v3276 = vpop.f32.mrf.mxu0
    %v3277 = vadd.f32 0.0, %v3276
    %v3278 = vpop.f32.mrf.mxu0
    %3279 = vmatprep.mubr.f32.mxu0 0.0
    %3280 = vmatmul.mubr.f32.gmra.mxu0 %v3185
    %v3281 = vpop.f32.mrf.mxu0
    %v3282 = vadd.f32 0.0, %v3281
    %v3283 = vpop.f32.mrf.mxu0
    %3284 = vmatprep.mubr.f32.mxu0 0.0
    %3285 = vmatmul.mubr.f32.gmra.mxu0 %v3188
    %v3286 = vpop.f32.mrf.mxu0
    %v3287 = vadd.f32 0.0, %v3286
    %v3288 = vpop.f32.mrf.mxu0
    %3289 = vmatprep.mubr.f32.mxu0 0.0
    %3290 = vmatmul.mubr.f32.gmra.mxu0 %v3191
    %v3291 = vpop.f32.mrf.mxu0
    %v3292 = vadd.f32 0.0, %v3291
    %v3293 = vpop.f32.mrf.mxu0
    %3294 = vmatprep.mubr.f32.mxu0 0.0
    %3295 = vmatmul.mubr.f32.gmra.mxu0 %v3194
    %v3296 = vpop.f32.mrf.mxu0
    %v3297 = vadd.f32 0.0, %v3296
    %v3298 = vpop.f32.mrf.mxu0
    %3299 = vmatprep.mubr.f32.mxu0 0.0
    %3300 = vmatmul.mubr.f32.gmra.mxu0 %v3197
    %v3301 = vpop.f32.mrf.mxu0
    %v3302 = vadd.f32 0.0, %v3301
    %v3303 = vpop.f32.mrf.mxu0
    %3304 = vmatprep.mubr.f32.mxu0 0.0
    %3305 = vmatmul.mubr.f32.gmra.mxu0 %v3200
    %v3306 = vpop.f32.mrf.mxu0
    %v3307 = vadd.f32 0.0, %v3306
    %v3308 = vpop.f32.mrf.mxu0
    %3309 = vmatprep.mubr.f32.mxu0 0.0
    %3310 = vmatmul.mubr.f32.gmra.mxu0 %v3203
    %v3311 = vpop.f32.mrf.mxu0
    %v3312 = vadd.f32 0.0, %v3311
    %v3313 = vpop.f32.mrf.mxu0
    %3314 = vmatprep.mubr.f32.mxu0 0.0
    %3315 = vmatmul.mubr.f32.gmra.mxu0 %v3206
    %v3316 = vpop.f32.mrf.mxu0
    %v3317 = vadd.f32 0.0, %v3316
    %v3318 = vpop.f32.mrf.mxu0
    %3319 = vdwg.mxu0
    %3320 = vrot.lane.b32.xlu0 %v2868, 120
    %v3321 = vpop.permute.xlu0 %3320
    %3322 = vrot.lane.b32.xlu0 %v2870, 120
    %v3323 = vpop.permute.xlu0 %3322
    %3324 = vrot.lane.b32.xlu0 %v2872, 120
    %v3325 = vpop.permute.xlu0 %3324
    %3326 = vrot.lane.b32.xlu0 %v2874, 120
    %v3327 = vpop.permute.xlu0 %3326
    %3328 = vrot.lane.b32.xlu0 %v2876, 120
    %v3329 = vpop.permute.xlu0 %3328
    %3330 = vrot.lane.b32.xlu0 %v2878, 120
    %v3331 = vpop.permute.xlu0 %3330
    %3332 = vrot.lane.b32.xlu0 %v2880, 120
    %v3333 = vpop.permute.xlu0 %3332
    %3334 = vrot.lane.b32.xlu0 %v2882, 120
    %v3335 = vpop.permute.xlu0 %3334
    %3336 = vrot.lane.b32.xlu0 %v2881, 120
    %v3337 = vpop.permute.xlu0 %3336
    %3338 = vrot.lane.b32.xlu0 %v2868, 88
    %v3339 = vpop.permute.xlu0 %3338
    %3340 = vrot.lane.b32.xlu0 %v2870, 88
    %v3341 = vpop.permute.xlu0 %3340
    %3342 = vrot.lane.b32.xlu0 %v2872, 88
    %v3343 = vpop.permute.xlu0 %3342
    %3344 = vrot.lane.b32.xlu0 %v2874, 88
    %v3345 = vpop.permute.xlu0 %3344
    %3346 = vrot.lane.b32.xlu0 %v2876, 88
    %v3347 = vpop.permute.xlu0 %3346
    %3348 = vrot.lane.b32.xlu0 %v2878, 88
    %v3349 = vpop.permute.xlu0 %3348
    %3350 = vrot.lane.b32.xlu0 %v2880, 88
    %v3351 = vpop.permute.xlu0 %3350
    %3352 = vrot.lane.b32.xlu0 %v2882, 88
    %v3353 = vpop.permute.xlu0 %3352
    %3354 = vrot.lane.b32.xlu0 %v2881, 88
    %v3355 = vpop.permute.xlu0 %3354
    %v3356 = vsel %vm934, %v3321, 0
    %v3358 = vsel %vm934, %v3323, 0
    %v3360 = vsel %vm934, %v3325, 0
    %v3362 = vsel %vm934, %v3327, 0
    %v3364 = vsel %vm934, %v3329, 0
    %v3366 = vsel %vm934, %v3331, 0
    %v3368 = vsel %vm934, %v3333, 0
    %v3370 = vsel %vm934, %v3335, 0
    %v3372 = vsel %vm934, %v3337, 0
    %v3374 = vsel %vm934, %v3339, 0
    %v3376 = vsel %vm934, %v3341, 0
    %v3378 = vsel %vm934, %v3343, 0
    %v3380 = vsel %vm934, %v3345, 0
    %v3382 = vsel %vm934, %v3347, 0
    %v3384 = vsel %vm934, %v3349, 0
    %v3386 = vsel %vm934, %v3351, 0
    %v3388 = vsel %vm934, %v3353, 0
    %v3390 = vsel %vm934, %v3355, 0
    %3392 = vmatprep.subr.mxu0 0.0
    %3393 = vmatpush1.xpose.msra.mxu0 0.0
    %3394 = vmatprep.subr.mxu0 0.0
    %3395 = vmatpush1.xpose.msra.mxu0 0.0
    %3396 = vmatprep.subr.mxu0 0.0
    %3397 = vmatpush1.xpose.msra.mxu0 0.0
    %3398 = vmatprep.subr.mxu0 0.0
    %3399 = vmatpush1.xpose.msra.mxu0 0.0
    %3400 = vmatprep.subr.mxu0 0.0
    %3401 = vmatpush1.xpose.msra.mxu0 0.0
    %3402 = vmatprep.subr.mxu0 0.0
    %3403 = vmatpush1.xpose.msra.mxu0 0.0
    %3404 = vmatprep.subr.mxu0 0.0
    %3405 = vmatpush1.xpose.msra.mxu0 0.0
    %3406 = vmatprep.subr.mxu0 0.0
    %3407 = vmatpush1.xpose.msra.mxu0 %v3390
    %3408 = vmatprep.subr.mxu0 0.0
    %3409 = vmatpush1.xpose.msra.mxu0 %v3388
    %3410 = vmatprep.subr.mxu0 0.0
    %3411 = vmatpush1.xpose.msra.mxu0 %v3386
    %3412 = vmatprep.subr.mxu0 0.0
    %3413 = vmatpush1.xpose.msra.mxu0 %v3384
    %3414 = vmatprep.subr.mxu0 0.0
    %3415 = vmatpush1.xpose.msra.mxu0 %v3382
    %3416 = vmatprep.subr.mxu0 0.0
    %3417 = vmatpush1.xpose.msra.mxu0 %v3380
    %3418 = vmatprep.subr.mxu0 0.0
    %3419 = vmatpush1.xpose.msra.mxu0 %v3378
    %3420 = vmatprep.subr.mxu0 0.0
    %3421 = vmatpush1.xpose.msra.mxu0 %v3376
    %3422 = vmatprep.subr.mxu0 0.0
    %3423 = vmatpush1.xpose.msra.mxu0 %v3374
    %3424 = vmatprep.subr.mxu0 0.0
    %3425 = vmatpush2.xpose.msra.mxu0 0.0
    %3426 = vmatprep.subr.mxu0 0.0
    %3427 = vmatpush2.xpose.msra.mxu0 0.0
    %3428 = vmatprep.subr.mxu0 0.0
    %3429 = vmatpush2.xpose.msra.mxu0 0.0
    %3430 = vmatprep.subr.mxu0 0.0
    %3431 = vmatpush2.xpose.msra.mxu0 0.0
    %3432 = vmatprep.subr.mxu0 0.0
    %3433 = vmatpush2.xpose.msra.mxu0 0.0
    %3434 = vmatprep.subr.mxu0 0.0
    %3435 = vmatpush2.xpose.msra.mxu0 0.0
    %3436 = vmatprep.subr.mxu0 0.0
    %3437 = vmatpush2.xpose.msra.mxu0 0.0
    %3438 = vmatprep.subr.mxu0 0.0
    %3439 = vmatpush2.xpose.msra.mxu0 0.0
    %3440 = vmatprep.subr.mxu0 0.0
    %3441 = vmatpush2.xpose.msra.mxu0 0.0
    %3442 = vmatprep.subr.mxu0 0.0
    %3443 = vmatpush2.xpose.msra.mxu0 0.0
    %3444 = vmatprep.subr.mxu0 0.0
    %3445 = vmatpush2.xpose.msra.mxu0 0.0
    %3446 = vmatprep.subr.mxu0 0.0
    %3447 = vmatpush2.xpose.msra.mxu0 0.0
    %3448 = vmatprep.subr.mxu0 0.0
    %3449 = vmatpush2.xpose.msra.mxu0 0.0
    %3450 = vmatprep.subr.mxu0 0.0
    %3451 = vmatpush2.xpose.msra.mxu0 0.0
    %3452 = vmatprep.subr.mxu0 0.0
    %3453 = vmatpush2.xpose.msra.mxu0 0.0
    %3454 = vmatprep.subr.mxu0 0.0
    %3455 = vmatpush2.xpose.msra.mxu0 0.0
    %3456 = vmatprep.mubr.f32.mxu0 0.0
    %3457 = vmatmul.mubr.f32.gmra.mxu0 %v3356
    %v3458 = vpop.f32.mrf.mxu0
    %v3459 = vadd.f32 0.0, %v3458
    %v3460 = vpop.f32.mrf.mxu0
    %3461 = vmatprep.mubr.f32.mxu0 0.0
    %3462 = vmatmul.mubr.f32.gmra.mxu0 %v3358
    %v3463 = vpop.f32.mrf.mxu0
    %v3464 = vadd.f32 0.0, %v3463
    %v3465 = vpop.f32.mrf.mxu0
    %3466 = vmatprep.mubr.f32.mxu0 0.0
    %3467 = vmatmul.mubr.f32.gmra.mxu0 %v3360
    %v3468 = vpop.f32.mrf.mxu0
    %v3469 = vadd.f32 0.0, %v3468
    %v3470 = vpop.f32.mrf.mxu0
    %3471 = vmatprep.mubr.f32.mxu0 0.0
    %3472 = vmatmul.mubr.f32.gmra.mxu0 %v3362
    %v3473 = vpop.f32.mrf.mxu0
    %v3474 = vadd.f32 0.0, %v3473
    %v3475 = vpop.f32.mrf.mxu0
    %3476 = vmatprep.mubr.f32.mxu0 0.0
    %3477 = vmatmul.mubr.f32.gmra.mxu0 %v3364
    %v3478 = vpop.f32.mrf.mxu0
    %v3479 = vadd.f32 0.0, %v3478
    %v3480 = vpop.f32.mrf.mxu0
    %3481 = vmatprep.mubr.f32.mxu0 0.0
    %3482 = vmatmul.mubr.f32.gmra.mxu0 %v3366
    %v3483 = vpop.f32.mrf.mxu0
    %v3484 = vadd.f32 0.0, %v3483
    %v3485 = vpop.f32.mrf.mxu0
    %3486 = vmatprep.mubr.f32.mxu0 0.0
    %3487 = vmatmul.mubr.f32.gmra.mxu0 %v3368
    %v3488 = vpop.f32.mrf.mxu0
    %v3489 = vadd.f32 0.0, %v3488
    %v3490 = vpop.f32.mrf.mxu0
    %3491 = vmatprep.mubr.f32.mxu0 0.0
    %3492 = vmatmul.mubr.f32.gmra.mxu0 %v3370
    %v3493 = vpop.f32.mrf.mxu0
    %v3494 = vadd.f32 0.0, %v3493
    %v3495 = vpop.f32.mrf.mxu0
    %3496 = vmatprep.mubr.f32.mxu0 0.0
    %3497 = vmatmul.mubr.f32.gmra.mxu0 %v3372
    %v3498 = vpop.f32.mrf.mxu0
    %v3499 = vadd.f32 0.0, %v3498
    %v3500 = vpop.f32.mrf.mxu0
    %3501 = vdwg.mxu0
    %v3502 = vmul.f32 %v3459, 0.35355338
    %v3503 = vmul.f32 %v3464, 0.35355338
    %v3504 = vmul.f32 %v3469, 0.35355338
    %v3505 = vmul.f32 %v3474, 0.35355338
    %v3506 = vmul.f32 %v3479, 0.35355338
    %v3507 = vmul.f32 %v3484, 0.35355338
    %v3508 = vmul.f32 %v3489, 0.35355338
    %v3509 = vmul.f32 %v3494, 0.35355338
    %v3510 = vmul.f32 %v3499, 0.35355338
    %v3511 = vsel %vm1090, %v3502, -inf
    %3512 = vmax.xlane.f32.xlu0 %v3511
    %v3513 = vpop.xlane.xlu0 %3512
    %v3514 = vsel %vm1090, %v3503, -inf
    %3515 = vmax.xlane.f32.xlu0 %v3514
    %v3516 = vpop.xlane.xlu0 %3515
    %v3517 = vsel %vm1090, %v3504, -inf
    %3518 = vmax.xlane.f32.xlu0 %v3517
    %v3519 = vpop.xlane.xlu0 %3518
    %v3520 = vsel %vm1090, %v3505, -inf
    %3521 = vmax.xlane.f32.xlu0 %v3520
    %v3522 = vpop.xlane.xlu0 %3521
    %v3523 = vsel %vm1090, %v3506, -inf
    %3524 = vmax.xlane.f32.xlu0 %v3523
    %v3525 = vpop.xlane.xlu0 %3524
    %v3526 = vsel %vm1090, %v3507, -inf
    %3527 = vmax.xlane.f32.xlu0 %v3526
    %v3528 = vpop.xlane.xlu0 %3527
    %v3529 = vsel %vm1090, %v3508, -inf
    %3530 = vmax.xlane.f32.xlu0 %v3529
    %v3531 = vpop.xlane.xlu0 %3530
    %v3532 = vsel %vm1090, %v3509, -inf
    %3533 = vmax.xlane.f32.xlu0 %v3532
    %v3534 = vpop.xlane.xlu0 %3533
    %v3535 = vsel %vm1115, %v3510, -inf
    %3536 = vmax.xlane.f32.xlu0 %v3535
    %v3537 = vpop.xlane.xlu0 %3536
    %v3538 = vsub.f32 %v3502, %v3513
    %v3539 = vsub.f32 %v3503, %v3516
    %v3540 = vsub.f32 %v3504, %v3519
    %v3541 = vsub.f32 %v3505, %v3522
    %v3542 = vsub.f32 %v3506, %v3525
    %v3543 = vsub.f32 %v3507, %v3528
    %v3544 = vsub.f32 %v3508, %v3531
    %v3545 = vsub.f32 %v3509, %v3534
    %v3546 = vsub.f32 %v3510, %v3537
    %v3547 = vmul.f32 %v3538, 1.442695
    %v3548 = vpow.pop %v3547
    %v3549 = vmul.f32 %v3539, 1.442695
    %v3550 = vpow.pop %v3549
    %v3551 = vmul.f32 %v3540, 1.442695
    %v3552 = vpow.pop %v3551
    %v3553 = vmul.f32 %v3541, 1.442695
    %v3554 = vpow.pop %v3553
    %v3555 = vmul.f32 %v3542, 1.442695
    %v3556 = vpow.pop %v3555
    %v3557 = vmul.f32 %v3543, 1.442695
    %v3558 = vpow.pop %v3557
    %v3559 = vmul.f32 %v3544, 1.442695
    %v3560 = vpow.pop %v3559
    %v3561 = vmul.f32 %v3545, 1.442695
    %v3562 = vpow.pop %v3561
    %v3563 = vmul.f32 %v3546, 1.442695
    %v3564 = vpow.pop %v3563
    %v3565 = vsel %vm1090, %v3548, 0.0
    %3566 = vadd.xlane.f32.xlu0 %v3565
    %v3567 = vpop.xlane.xlu0 %3566
    %v3568 = vsel %vm1090, %v3550, 0.0
    %3569 = vadd.xlane.f32.xlu0 %v3568
    %v3570 = vpop.xlane.xlu0 %3569
    %v3571 = vsel %vm1090, %v3552, 0.0
    %3572 = vadd.xlane.f32.xlu0 %v3571
    %v3573 = vpop.xlane.xlu0 %3572
    %v3574 = vsel %vm1090, %v3554, 0.0
    %3575 = vadd.xlane.f32.xlu0 %v3574
    %v3576 = vpop.xlane.xlu0 %3575
    %v3577 = vsel %vm1090, %v3556, 0.0
    %3578 = vadd.xlane.f32.xlu0 %v3577
    %v3579 = vpop.xlane.xlu0 %3578
    %v3580 = vsel %vm1090, %v3558, 0.0
    %3581 = vadd.xlane.f32.xlu0 %v3580
    %v3582 = vpop.xlane.xlu0 %3581
    %v3583 = vsel %vm1090, %v3560, 0.0
    %3584 = vadd.xlane.f32.xlu0 %v3583
    %v3585 = vpop.xlane.xlu0 %3584
    %v3586 = vsel %vm1090, %v3562, 0.0
    %3587 = vadd.xlane.f32.xlu0 %v3586
    %v3588 = vpop.xlane.xlu0 %3587
    %v3589 = vsel %vm1115, %v3564, 0.0
    %3590 = vadd.xlane.f32.xlu0 %v3589
    %v3591 = vpop.xlane.xlu0 %3590
    %v3592 = vrcp.pop %v3567
    %v3593 = vrcp.pop %v3570
    %v3594 = vrcp.pop %v3573
    %v3595 = vrcp.pop %v3576
    %v3596 = vrcp.pop %v3579
    %v3597 = vrcp.pop %v3582
    %v3598 = vrcp.pop %v3585
    %v3599 = vrcp.pop %v3588
    %v3600 = vrcp.pop %v3591
    %v3601 = vmul.f32 %v3548, %v3592
    %v3602 = vmul.f32 %v3550, %v3593
    %v3603 = vmul.f32 %v3552, %v3594
    %v3604 = vmul.f32 %v3554, %v3595
    %v3605 = vmul.f32 %v3556, %v3596
    %v3606 = vmul.f32 %v3558, %v3597
    %v3607 = vmul.f32 %v3560, %v3598
    %v3608 = vmul.f32 %v3562, %v3599
    %v3609 = vmul.f32 %v3564, %v3600
    %3610 = vrot.lane.b32.xlu0 %v2868, 56
    %v3611 = vpop.permute.xlu0 %3610
    %3612 = vrot.lane.b32.xlu0 %v2870, 56
    %v3613 = vpop.permute.xlu0 %3612
    %3614 = vrot.lane.b32.xlu0 %v2872, 56
    %v3615 = vpop.permute.xlu0 %3614
    %3616 = vrot.lane.b32.xlu0 %v2874, 56
    %v3617 = vpop.permute.xlu0 %3616
    %3618 = vrot.lane.b32.xlu0 %v2876, 56
    %v3619 = vpop.permute.xlu0 %3618
    %3620 = vrot.lane.b32.xlu0 %v2878, 56
    %v3621 = vpop.permute.xlu0 %3620
    %3622 = vrot.lane.b32.xlu0 %v2880, 56
    %v3623 = vpop.permute.xlu0 %3622
    %3624 = vrot.lane.b32.xlu0 %v2882, 56
    %v3625 = vpop.permute.xlu0 %3624
    %3626 = vrot.lane.b32.xlu0 %v2881, 56
    %v3627 = vpop.permute.xlu0 %3626
    %v3637 = vsel %vm1090, %v3601, 0
    %v3640 = vsel %vm1090, %v3602, 0
    %v3643 = vsel %vm1090, %v3603, 0
    %v3646 = vsel %vm1090, %v3604, 0
    %v3649 = vsel %vm1090, %v3605, 0
    %v3652 = vsel %vm1090, %v3606, 0
    %v3655 = vsel %vm1090, %v3607, 0
    %v3658 = vsel %vm1090, %v3608, 0
    %v3661 = vsel %vm1090, %v3609, 0
    %v3663 = vsel %vm362, %v3627, 0
    %3665 = vmatprep.subr.mxu0 0.0
    %3666 = vmatpush1.msra.mxu0 0.0
    %3667 = vmatprep.subr.mxu0 0.0
    %3668 = vmatpush1.msra.mxu0 0.0
    %3669 = vmatprep.subr.mxu0 0.0
    %3670 = vmatpush1.msra.mxu0 0.0
    %3671 = vmatprep.subr.mxu0 0.0
    %3672 = vmatpush1.msra.mxu0 0.0
    %3673 = vmatprep.subr.mxu0 0.0
    %3674 = vmatpush1.msra.mxu0 0.0
    %3675 = vmatprep.subr.mxu0 0.0
    %3676 = vmatpush1.msra.mxu0 0.0
    %3677 = vmatprep.subr.mxu0 0.0
    %3678 = vmatpush1.msra.mxu0 0.0
    %3679 = vmatprep.subr.mxu0 0.0
    %3680 = vmatpush1.msra.mxu0 %v3663
    %3681 = vmatprep.subr.mxu0 0.0
    %3682 = vmatpush1.msra.mxu0 %v3625
    %3683 = vmatprep.subr.mxu0 0.0
    %3684 = vmatpush1.msra.mxu0 %v3623
    %3685 = vmatprep.subr.mxu0 0.0
    %3686 = vmatpush1.msra.mxu0 %v3621
    %3687 = vmatprep.subr.mxu0 0.0
    %3688 = vmatpush1.msra.mxu0 %v3619
    %3689 = vmatprep.subr.mxu0 0.0
    %3690 = vmatpush1.msra.mxu0 %v3617
    %3691 = vmatprep.subr.mxu0 0.0
    %3692 = vmatpush1.msra.mxu0 %v3615
    %3693 = vmatprep.subr.mxu0 0.0
    %3694 = vmatpush1.msra.mxu0 %v3613
    %3695 = vmatprep.subr.mxu0 0.0
    %3696 = vmatpush1.msra.mxu0 %v3611
    %3697 = vmatprep.subr.mxu0 0.0
    %3698 = vmatpush2.msra.mxu0 0.0
    %3699 = vmatprep.subr.mxu0 0.0
    %3700 = vmatpush2.msra.mxu0 0.0
    %3701 = vmatprep.subr.mxu0 0.0
    %3702 = vmatpush2.msra.mxu0 0.0
    %3703 = vmatprep.subr.mxu0 0.0
    %3704 = vmatpush2.msra.mxu0 0.0
    %3705 = vmatprep.subr.mxu0 0.0
    %3706 = vmatpush2.msra.mxu0 0.0
    %3707 = vmatprep.subr.mxu0 0.0
    %3708 = vmatpush2.msra.mxu0 0.0
    %3709 = vmatprep.subr.mxu0 0.0
    %3710 = vmatpush2.msra.mxu0 0.0
    %3711 = vmatprep.subr.mxu0 0.0
    %3712 = vmatpush2.msra.mxu0 0.0
    %3713 = vmatprep.subr.mxu0 0.0
    %3714 = vmatpush2.msra.mxu0 0.0
    %3715 = vmatprep.subr.mxu0 0.0
    %3716 = vmatpush2.msra.mxu0 0.0
    %3717 = vmatprep.subr.mxu0 0.0
    %3718 = vmatpush2.msra.mxu0 0.0
    %3719 = vmatprep.subr.mxu0 0.0
    %3720 = vmatpush2.msra.mxu0 0.0
    %3721 = vmatprep.subr.mxu0 0.0
    %3722 = vmatpush2.msra.mxu0 0.0
    %3723 = vmatprep.subr.mxu0 0.0
    %3724 = vmatpush2.msra.mxu0 0.0
    %3725 = vmatprep.subr.mxu0 0.0
    %3726 = vmatpush2.msra.mxu0 0.0
    %3727 = vmatprep.subr.mxu0 0.0
    %3728 = vmatpush2.msra.mxu0 0.0
    %3729 = vmatprep.mubr.f32.mxu0 0.0
    %3730 = vmatmul.mubr.f32.gmra.mxu0 %v3637
    %v3731 = vpop.f32.mrf.mxu0
    %v3732 = vadd.f32 0.0, %v3731
    %v3733 = vpop.f32.mrf.mxu0
    %3734 = vmatprep.mubr.f32.mxu0 0.0
    %3735 = vmatmul.mubr.f32.gmra.mxu0 %v3640
    %v3736 = vpop.f32.mrf.mxu0
    %v3737 = vadd.f32 0.0, %v3736
    %v3738 = vpop.f32.mrf.mxu0
    %3739 = vmatprep.mubr.f32.mxu0 0.0
    %3740 = vmatmul.mubr.f32.gmra.mxu0 %v3643
    %v3741 = vpop.f32.mrf.mxu0
    %v3742 = vadd.f32 0.0, %v3741
    %v3743 = vpop.f32.mrf.mxu0
    %3744 = vmatprep.mubr.f32.mxu0 0.0
    %3745 = vmatmul.mubr.f32.gmra.mxu0 %v3646
    %v3746 = vpop.f32.mrf.mxu0
    %v3747 = vadd.f32 0.0, %v3746
    %v3748 = vpop.f32.mrf.mxu0
    %3749 = vmatprep.mubr.f32.mxu0 0.0
    %3750 = vmatmul.mubr.f32.gmra.mxu0 %v3649
    %v3751 = vpop.f32.mrf.mxu0
    %v3752 = vadd.f32 0.0, %v3751
    %v3753 = vpop.f32.mrf.mxu0
    %3754 = vmatprep.mubr.f32.mxu0 0.0
    %3755 = vmatmul.mubr.f32.gmra.mxu0 %v3652
    %v3756 = vpop.f32.mrf.mxu0
    %v3757 = vadd.f32 0.0, %v3756
    %v3758 = vpop.f32.mrf.mxu0
    %3759 = vmatprep.mubr.f32.mxu0 0.0
    %3760 = vmatmul.mubr.f32.gmra.mxu0 %v3655
    %v3761 = vpop.f32.mrf.mxu0
    %v3762 = vadd.f32 0.0, %v3761
    %v3763 = vpop.f32.mrf.mxu0
    %3764 = vmatprep.mubr.f32.mxu0 0.0
    %3765 = vmatmul.mubr.f32.gmra.mxu0 %v3658
    %v3766 = vpop.f32.mrf.mxu0
    %v3767 = vadd.f32 0.0, %v3766
    %v3768 = vpop.f32.mrf.mxu0
    %3769 = vmatprep.mubr.f32.mxu0 0.0
    %3770 = vmatmul.mubr.f32.gmra.mxu0 %v3661
    %v3771 = vpop.f32.mrf.mxu0
    %v3772 = vadd.f32 0.0, %v3771
    %v3773 = vpop.f32.mrf.mxu0
    %3774 = vdwg.mxu0
    %3775 = vrot.lane.b32.xlu0 %v2868, 112
    %v3776 = vpop.permute.xlu0 %3775
    %3777 = vrot.lane.b32.xlu0 %v2870, 112
    %v3778 = vpop.permute.xlu0 %3777
    %3779 = vrot.lane.b32.xlu0 %v2872, 112
    %v3780 = vpop.permute.xlu0 %3779
    %3781 = vrot.lane.b32.xlu0 %v2874, 112
    %v3782 = vpop.permute.xlu0 %3781
    %3783 = vrot.lane.b32.xlu0 %v2876, 112
    %v3784 = vpop.permute.xlu0 %3783
    %3785 = vrot.lane.b32.xlu0 %v2878, 112
    %v3786 = vpop.permute.xlu0 %3785
    %3787 = vrot.lane.b32.xlu0 %v2880, 112
    %v3788 = vpop.permute.xlu0 %3787
    %3789 = vrot.lane.b32.xlu0 %v2882, 112
    %v3790 = vpop.permute.xlu0 %3789
    %3791 = vrot.lane.b32.xlu0 %v2881, 112
    %v3792 = vpop.permute.xlu0 %3791
    %3793 = vrot.lane.b32.xlu0 %v2868, 80
    %v3794 = vpop.permute.xlu0 %3793
    %3795 = vrot.lane.b32.xlu0 %v2870, 80
    %v3796 = vpop.permute.xlu0 %3795
    %3797 = vrot.lane.b32.xlu0 %v2872, 80
    %v3798 = vpop.permute.xlu0 %3797
    %3799 = vrot.lane.b32.xlu0 %v2874, 80
    %v3800 = vpop.permute.xlu0 %3799
    %3801 = vrot.lane.b32.xlu0 %v2876, 80
    %v3802 = vpop.permute.xlu0 %3801
    %3803 = vrot.lane.b32.xlu0 %v2878, 80
    %v3804 = vpop.permute.xlu0 %3803
    %3805 = vrot.lane.b32.xlu0 %v2880, 80
    %v3806 = vpop.permute.xlu0 %3805
    %3807 = vrot.lane.b32.xlu0 %v2882, 80
    %v3808 = vpop.permute.xlu0 %3807
    %3809 = vrot.lane.b32.xlu0 %v2881, 80
    %v3810 = vpop.permute.xlu0 %3809
    %v3811 = vsel %vm934, %v3776, 0
    %v3813 = vsel %vm934, %v3778, 0
    %v3815 = vsel %vm934, %v3780, 0
    %v3817 = vsel %vm934, %v3782, 0
    %v3819 = vsel %vm934, %v3784, 0
    %v3821 = vsel %vm934, %v3786, 0
    %v3823 = vsel %vm934, %v3788, 0
    %v3825 = vsel %vm934, %v3790, 0
    %v3827 = vsel %vm934, %v3792, 0
    %v3829 = vsel %vm934, %v3794, 0
    %v3831 = vsel %vm934, %v3796, 0
    %v3833 = vsel %vm934, %v3798, 0
    %v3835 = vsel %vm934, %v3800, 0
    %v3837 = vsel %vm934, %v3802, 0
    %v3839 = vsel %vm934, %v3804, 0
    %v3841 = vsel %vm934, %v3806, 0
    %v3843 = vsel %vm934, %v3808, 0
    %v3845 = vsel %vm934, %v3810, 0
    %3847 = vmatprep.subr.mxu0 0.0
    %3848 = vmatpush1.xpose.msra.mxu0 0.0
    %3849 = vmatprep.subr.mxu0 0.0
    %3850 = vmatpush1.xpose.msra.mxu0 0.0
    %3851 = vmatprep.subr.mxu0 0.0
    %3852 = vmatpush1.xpose.msra.mxu0 0.0
    %3853 = vmatprep.subr.mxu0 0.0
    %3854 = vmatpush1.xpose.msra.mxu0 0.0
    %3855 = vmatprep.subr.mxu0 0.0
    %3856 = vmatpush1.xpose.msra.mxu0 0.0
    %3857 = vmatprep.subr.mxu0 0.0
    %3858 = vmatpush1.xpose.msra.mxu0 0.0
    %3859 = vmatprep.subr.mxu0 0.0
    %3860 = vmatpush1.xpose.msra.mxu0 0.0
    %3861 = vmatprep.subr.mxu0 0.0
    %3862 = vmatpush1.xpose.msra.mxu0 %v3845
    %3863 = vmatprep.subr.mxu0 0.0
    %3864 = vmatpush1.xpose.msra.mxu0 %v3843
    %3865 = vmatprep.subr.mxu0 0.0
    %3866 = vmatpush1.xpose.msra.mxu0 %v3841
    %3867 = vmatprep.subr.mxu0 0.0
    %3868 = vmatpush1.xpose.msra.mxu0 %v3839
    %3869 = vmatprep.subr.mxu0 0.0
    %3870 = vmatpush1.xpose.msra.mxu0 %v3837
    %3871 = vmatprep.subr.mxu0 0.0
    %3872 = vmatpush1.xpose.msra.mxu0 %v3835
    %3873 = vmatprep.subr.mxu0 0.0
    %3874 = vmatpush1.xpose.msra.mxu0 %v3833
    %3875 = vmatprep.subr.mxu0 0.0
    %3876 = vmatpush1.xpose.msra.mxu0 %v3831
    %3877 = vmatprep.subr.mxu0 0.0
    %3878 = vmatpush1.xpose.msra.mxu0 %v3829
    %3879 = vmatprep.subr.mxu0 0.0
    %3880 = vmatpush2.xpose.msra.mxu0 0.0
    %3881 = vmatprep.subr.mxu0 0.0
    %3882 = vmatpush2.xpose.msra.mxu0 0.0
    %3883 = vmatprep.subr.mxu0 0.0
    %3884 = vmatpush2.xpose.msra.mxu0 0.0
    %3885 = vmatprep.subr.mxu0 0.0
    %3886 = vmatpush2.xpose.msra.mxu0 0.0
    %3887 = vmatprep.subr.mxu0 0.0
    %3888 = vmatpush2.xpose.msra.mxu0 0.0
    %3889 = vmatprep.subr.mxu0 0.0
    %3890 = vmatpush2.xpose.msra.mxu0 0.0
    %3891 = vmatprep.subr.mxu0 0.0
    %3892 = vmatpush2.xpose.msra.mxu0 0.0
    %3893 = vmatprep.subr.mxu0 0.0
    %3894 = vmatpush2.xpose.msra.mxu0 0.0
    %3895 = vmatprep.subr.mxu0 0.0
    %3896 = vmatpush2.xpose.msra.mxu0 0.0
    %3897 = vmatprep.subr.mxu0 0.0
    %3898 = vmatpush2.xpose.msra.mxu0 0.0
    %3899 = vmatprep.subr.mxu0 0.0
    %3900 = vmatpush2.xpose.msra.mxu0 0.0
    %3901 = vmatprep.subr.mxu0 0.0
    %3902 = vmatpush2.xpose.msra.mxu0 0.0
    %3903 = vmatprep.subr.mxu0 0.0
    %3904 = vmatpush2.xpose.msra.mxu0 0.0
    %3905 = vmatprep.subr.mxu0 0.0
    %3906 = vmatpush2.xpose.msra.mxu0 0.0
    %3907 = vmatprep.subr.mxu0 0.0
    %3908 = vmatpush2.xpose.msra.mxu0 0.0
    %3909 = vmatprep.subr.mxu0 0.0
    %3910 = vmatpush2.xpose.msra.mxu0 0.0
    %3911 = vmatprep.mubr.f32.mxu0 0.0
    %3912 = vmatmul.mubr.f32.gmra.mxu0 %v3811
    %v3913 = vpop.f32.mrf.mxu0
    %v3914 = vadd.f32 0.0, %v3913
    %v3915 = vpop.f32.mrf.mxu0
    %3916 = vmatprep.mubr.f32.mxu0 0.0
    %3917 = vmatmul.mubr.f32.gmra.mxu0 %v3813
    %v3918 = vpop.f32.mrf.mxu0
    %v3919 = vadd.f32 0.0, %v3918
    %v3920 = vpop.f32.mrf.mxu0
    %3921 = vmatprep.mubr.f32.mxu0 0.0
    %3922 = vmatmul.mubr.f32.gmra.mxu0 %v3815
    %v3923 = vpop.f32.mrf.mxu0
    %v3924 = vadd.f32 0.0, %v3923
    %v3925 = vpop.f32.mrf.mxu0
    %3926 = vmatprep.mubr.f32.mxu0 0.0
    %3927 = vmatmul.mubr.f32.gmra.mxu0 %v3817
    %v3928 = vpop.f32.mrf.mxu0
    %v3929 = vadd.f32 0.0, %v3928
    %v3930 = vpop.f32.mrf.mxu0
    %3931 = vmatprep.mubr.f32.mxu0 0.0
    %3932 = vmatmul.mubr.f32.gmra.mxu0 %v3819
    %v3933 = vpop.f32.mrf.mxu0
    %v3934 = vadd.f32 0.0, %v3933
    %v3935 = vpop.f32.mrf.mxu0
    %3936 = vmatprep.mubr.f32.mxu0 0.0
    %3937 = vmatmul.mubr.f32.gmra.mxu0 %v3821
    %v3938 = vpop.f32.mrf.mxu0
    %v3939 = vadd.f32 0.0, %v3938
    %v3940 = vpop.f32.mrf.mxu0
    %3941 = vmatprep.mubr.f32.mxu0 0.0
    %3942 = vmatmul.mubr.f32.gmra.mxu0 %v3823
    %v3943 = vpop.f32.mrf.mxu0
    %v3944 = vadd.f32 0.0, %v3943
    %v3945 = vpop.f32.mrf.mxu0
    %3946 = vmatprep.mubr.f32.mxu0 0.0
    %3947 = vmatmul.mubr.f32.gmra.mxu0 %v3825
    %v3948 = vpop.f32.mrf.mxu0
    %v3949 = vadd.f32 0.0, %v3948
    %v3950 = vpop.f32.mrf.mxu0
    %3951 = vmatprep.mubr.f32.mxu0 0.0
    %3952 = vmatmul.mubr.f32.gmra.mxu0 %v3827
    %v3953 = vpop.f32.mrf.mxu0
    %v3954 = vadd.f32 0.0, %v3953
    %v3955 = vpop.f32.mrf.mxu0
    %3956 = vdwg.mxu0
    %v3957 = vmul.f32 %v3914, 0.35355338
    %v3958 = vmul.f32 %v3919, 0.35355338
    %v3959 = vmul.f32 %v3924, 0.35355338
    %v3960 = vmul.f32 %v3929, 0.35355338
    %v3961 = vmul.f32 %v3934, 0.35355338
    %v3962 = vmul.f32 %v3939, 0.35355338
    %v3963 = vmul.f32 %v3944, 0.35355338
    %v3964 = vmul.f32 %v3949, 0.35355338
    %v3965 = vmul.f32 %v3954, 0.35355338
    %v3966 = vsel %vm1090, %v3957, -inf
    %3967 = vmax.xlane.f32.xlu0 %v3966
    %v3968 = vpop.xlane.xlu0 %3967
    %v3969 = vsel %vm1090, %v3958, -inf
    %3970 = vmax.xlane.f32.xlu0 %v3969
    %v3971 = vpop.xlane.xlu0 %3970
    %v3972 = vsel %vm1090, %v3959, -inf
    %3973 = vmax.xlane.f32.xlu0 %v3972
    %v3974 = vpop.xlane.xlu0 %3973
    %v3975 = vsel %vm1090, %v3960, -inf
    %3976 = vmax.xlane.f32.xlu0 %v3975
    %v3977 = vpop.xlane.xlu0 %3976
    %v3978 = vsel %vm1090, %v3961, -inf
    %3979 = vmax.xlane.f32.xlu0 %v3978
    %v3980 = vpop.xlane.xlu0 %3979
    %v3981 = vsel %vm1090, %v3962, -inf
    %3982 = vmax.xlane.f32.xlu0 %v3981
    %v3983 = vpop.xlane.xlu0 %3982
    %v3984 = vsel %vm1090, %v3963, -inf
    %3985 = vmax.xlane.f32.xlu0 %v3984
    %v3986 = vpop.xlane.xlu0 %3985
    %v3987 = vsel %vm1090, %v3964, -inf
    %3988 = vmax.xlane.f32.xlu0 %v3987
    %v3989 = vpop.xlane.xlu0 %3988
    %v3990 = vsel %vm1115, %v3965, -inf
    %3991 = vmax.xlane.f32.xlu0 %v3990
    %v3992 = vpop.xlane.xlu0 %3991
    %v3993 = vsub.f32 %v3957, %v3968
    %v3994 = vsub.f32 %v3958, %v3971
    %v3995 = vsub.f32 %v3959, %v3974
    %v3996 = vsub.f32 %v3960, %v3977
    %v3997 = vsub.f32 %v3961, %v3980
    %v3998 = vsub.f32 %v3962, %v3983
    %v3999 = vsub.f32 %v3963, %v3986
    %v4000 = vsub.f32 %v3964, %v3989
    %v4001 = vsub.f32 %v3965, %v3992
    %v4002 = vmul.f32 %v3993, 1.442695
    %v4003 = vpow.pop %v4002
    %v4004 = vmul.f32 %v3994, 1.442695
    %v4005 = vpow.pop %v4004
    %v4006 = vmul.f32 %v3995, 1.442695
    %v4007 = vpow.pop %v4006
    %v4008 = vmul.f32 %v3996, 1.442695
    %v4009 = vpow.pop %v4008
    %v4010 = vmul.f32 %v3997, 1.442695
    %v4011 = vpow.pop %v4010
    %v4012 = vmul.f32 %v3998, 1.442695
    %v4013 = vpow.pop %v4012
    %v4014 = vmul.f32 %v3999, 1.442695
    %v4015 = vpow.pop %v4014
    %v4016 = vmul.f32 %v4000, 1.442695
    %v4017 = vpow.pop %v4016
    %v4018 = vmul.f32 %v4001, 1.442695
    %v4019 = vpow.pop %v4018
    %v4020 = vsel %vm1090, %v4003, 0.0
    %4021 = vadd.xlane.f32.xlu0 %v4020
    %v4022 = vpop.xlane.xlu0 %4021
    %v4023 = vsel %vm1090, %v4005, 0.0
    %4024 = vadd.xlane.f32.xlu0 %v4023
    %v4025 = vpop.xlane.xlu0 %4024
    %v4026 = vsel %vm1090, %v4007, 0.0
    %4027 = vadd.xlane.f32.xlu0 %v4026
    %v4028 = vpop.xlane.xlu0 %4027
    %v4029 = vsel %vm1090, %v4009, 0.0
    %4030 = vadd.xlane.f32.xlu0 %v4029
    %v4031 = vpop.xlane.xlu0 %4030
    %v4032 = vsel %vm1090, %v4011, 0.0
    %4033 = vadd.xlane.f32.xlu0 %v4032
    %v4034 = vpop.xlane.xlu0 %4033
    %v4035 = vsel %vm1090, %v4013, 0.0
    %4036 = vadd.xlane.f32.xlu0 %v4035
    %v4037 = vpop.xlane.xlu0 %4036
    %v4038 = vsel %vm1090, %v4015, 0.0
    %4039 = vadd.xlane.f32.xlu0 %v4038
    %v4040 = vpop.xlane.xlu0 %4039
    %v4041 = vsel %vm1090, %v4017, 0.0
    %4042 = vadd.xlane.f32.xlu0 %v4041
    %v4043 = vpop.xlane.xlu0 %4042
    %v4044 = vsel %vm1115, %v4019, 0.0
    %4045 = vadd.xlane.f32.xlu0 %v4044
    %v4046 = vpop.xlane.xlu0 %4045
    %v4047 = vrcp.pop %v4022
    %v4048 = vrcp.pop %v4025
    %v4049 = vrcp.pop %v4028
    %v4050 = vrcp.pop %v4031
    %v4051 = vrcp.pop %v4034
    %v4052 = vrcp.pop %v4037
    %v4053 = vrcp.pop %v4040
    %v4054 = vrcp.pop %v4043
    %v4055 = vrcp.pop %v4046
    %v4056 = vmul.f32 %v4003, %v4047
    %v4057 = vmul.f32 %v4005, %v4048
    %v4058 = vmul.f32 %v4007, %v4049
    %v4059 = vmul.f32 %v4009, %v4050
    %v4060 = vmul.f32 %v4011, %v4051
    %v4061 = vmul.f32 %v4013, %v4052
    %v4062 = vmul.f32 %v4015, %v4053
    %v4063 = vmul.f32 %v4017, %v4054
    %v4064 = vmul.f32 %v4019, %v4055
    %4065 = vrot.lane.b32.xlu0 %v2868, 48
    %v4066 = vpop.permute.xlu0 %4065
    %4067 = vrot.lane.b32.xlu0 %v2870, 48
    %v4068 = vpop.permute.xlu0 %4067
    %4069 = vrot.lane.b32.xlu0 %v2872, 48
    %v4070 = vpop.permute.xlu0 %4069
    %4071 = vrot.lane.b32.xlu0 %v2874, 48
    %v4072 = vpop.permute.xlu0 %4071
    %4073 = vrot.lane.b32.xlu0 %v2876, 48
    %v4074 = vpop.permute.xlu0 %4073
    %4075 = vrot.lane.b32.xlu0 %v2878, 48
    %v4076 = vpop.permute.xlu0 %4075
    %4077 = vrot.lane.b32.xlu0 %v2880, 48
    %v4078 = vpop.permute.xlu0 %4077
    %4079 = vrot.lane.b32.xlu0 %v2882, 48
    %v4080 = vpop.permute.xlu0 %4079
    %4081 = vrot.lane.b32.xlu0 %v2881, 48
    %v4082 = vpop.permute.xlu0 %4081
    %v4092 = vsel %vm1090, %v4056, 0
    %v4095 = vsel %vm1090, %v4057, 0
    %v4098 = vsel %vm1090, %v4058, 0
    %v4101 = vsel %vm1090, %v4059, 0
    %v4104 = vsel %vm1090, %v4060, 0
    %v4107 = vsel %vm1090, %v4061, 0
    %v4110 = vsel %vm1090, %v4062, 0
    %v4113 = vsel %vm1090, %v4063, 0
    %v4116 = vsel %vm1090, %v4064, 0
    %v4118 = vsel %vm362, %v4082, 0
    %4120 = vmatprep.subr.mxu0 0.0
    %4121 = vmatpush1.msra.mxu0 0.0
    %4122 = vmatprep.subr.mxu0 0.0
    %4123 = vmatpush1.msra.mxu0 0.0
    %4124 = vmatprep.subr.mxu0 0.0
    %4125 = vmatpush1.msra.mxu0 0.0
    %4126 = vmatprep.subr.mxu0 0.0
    %4127 = vmatpush1.msra.mxu0 0.0
    %4128 = vmatprep.subr.mxu0 0.0
    %4129 = vmatpush1.msra.mxu0 0.0
    %4130 = vmatprep.subr.mxu0 0.0
    %4131 = vmatpush1.msra.mxu0 0.0
    %4132 = vmatprep.subr.mxu0 0.0
    %4133 = vmatpush1.msra.mxu0 0.0
    %4134 = vmatprep.subr.mxu0 0.0
    %4135 = vmatpush1.msra.mxu0 %v4118
    %4136 = vmatprep.subr.mxu0 0.0
    %4137 = vmatpush1.msra.mxu0 %v4080
    %4138 = vmatprep.subr.mxu0 0.0
    %4139 = vmatpush1.msra.mxu0 %v4078
    %4140 = vmatprep.subr.mxu0 0.0
    %4141 = vmatpush1.msra.mxu0 %v4076
    %4142 = vmatprep.subr.mxu0 0.0
    %4143 = vmatpush1.msra.mxu0 %v4074
    %4144 = vmatprep.subr.mxu0 0.0
    %4145 = vmatpush1.msra.mxu0 %v4072
    %4146 = vmatprep.subr.mxu0 0.0
    %4147 = vmatpush1.msra.mxu0 %v4070
    %4148 = vmatprep.subr.mxu0 0.0
    %4149 = vmatpush1.msra.mxu0 %v4068
    %4150 = vmatprep.subr.mxu0 0.0
    %4151 = vmatpush1.msra.mxu0 %v4066
    %4152 = vmatprep.subr.mxu0 0.0
    %4153 = vmatpush2.msra.mxu0 0.0
    %4154 = vmatprep.subr.mxu0 0.0
    %4155 = vmatpush2.msra.mxu0 0.0
    %4156 = vmatprep.subr.mxu0 0.0
    %4157 = vmatpush2.msra.mxu0 0.0
    %4158 = vmatprep.subr.mxu0 0.0
    %4159 = vmatpush2.msra.mxu0 0.0
    %4160 = vmatprep.subr.mxu0 0.0
    %4161 = vmatpush2.msra.mxu0 0.0
    %4162 = vmatprep.subr.mxu0 0.0
    %4163 = vmatpush2.msra.mxu0 0.0
    %4164 = vmatprep.subr.mxu0 0.0
    %4165 = vmatpush2.msra.mxu0 0.0
    %4166 = vmatprep.subr.mxu0 0.0
    %4167 = vmatpush2.msra.mxu0 0.0
    %4168 = vmatprep.subr.mxu0 0.0
    %4169 = vmatpush2.msra.mxu0 0.0
    %4170 = vmatprep.subr.mxu0 0.0
    %4171 = vmatpush2.msra.mxu0 0.0
    %4172 = vmatprep.subr.mxu0 0.0
    %4173 = vmatpush2.msra.mxu0 0.0
    %4174 = vmatprep.subr.mxu0 0.0
    %4175 = vmatpush2.msra.mxu0 0.0
    %4176 = vmatprep.subr.mxu0 0.0
    %4177 = vmatpush2.msra.mxu0 0.0
    %4178 = vmatprep.subr.mxu0 0.0
    %4179 = vmatpush2.msra.mxu0 0.0
    %4180 = vmatprep.subr.mxu0 0.0
    %4181 = vmatpush2.msra.mxu0 0.0
    %4182 = vmatprep.subr.mxu0 0.0
    %4183 = vmatpush2.msra.mxu0 0.0
    %4184 = vmatprep.mubr.f32.mxu0 0.0
    %4185 = vmatmul.mubr.f32.gmra.mxu0 %v4092
    %v4186 = vpop.f32.mrf.mxu0
    %v4187 = vadd.f32 0.0, %v4186
    %v4188 = vpop.f32.mrf.mxu0
    %4189 = vmatprep.mubr.f32.mxu0 0.0
    %4190 = vmatmul.mubr.f32.gmra.mxu0 %v4095
    %v4191 = vpop.f32.mrf.mxu0
    %v4192 = vadd.f32 0.0, %v4191
    %v4193 = vpop.f32.mrf.mxu0
    %4194 = vmatprep.mubr.f32.mxu0 0.0
    %4195 = vmatmul.mubr.f32.gmra.mxu0 %v4098
    %v4196 = vpop.f32.mrf.mxu0
    %v4197 = vadd.f32 0.0, %v4196
    %v4198 = vpop.f32.mrf.mxu0
    %4199 = vmatprep.mubr.f32.mxu0 0.0
    %4200 = vmatmul.mubr.f32.gmra.mxu0 %v4101
    %v4201 = vpop.f32.mrf.mxu0
    %v4202 = vadd.f32 0.0, %v4201
    %v4203 = vpop.f32.mrf.mxu0
    %4204 = vmatprep.mubr.f32.mxu0 0.0
    %4205 = vmatmul.mubr.f32.gmra.mxu0 %v4104
    %v4206 = vpop.f32.mrf.mxu0
    %v4207 = vadd.f32 0.0, %v4206
    %v4208 = vpop.f32.mrf.mxu0
    %4209 = vmatprep.mubr.f32.mxu0 0.0
    %4210 = vmatmul.mubr.f32.gmra.mxu0 %v4107
    %v4211 = vpop.f32.mrf.mxu0
    %v4212 = vadd.f32 0.0, %v4211
    %v4213 = vpop.f32.mrf.mxu0
    %4214 = vmatprep.mubr.f32.mxu0 0.0
    %4215 = vmatmul.mubr.f32.gmra.mxu0 %v4110
    %v4216 = vpop.f32.mrf.mxu0
    %v4217 = vadd.f32 0.0, %v4216
    %v4218 = vpop.f32.mrf.mxu0
    %4219 = vmatprep.mubr.f32.mxu0 0.0
    %4220 = vmatmul.mubr.f32.gmra.mxu0 %v4113
    %v4221 = vpop.f32.mrf.mxu0
    %v4222 = vadd.f32 0.0, %v4221
    %v4223 = vpop.f32.mrf.mxu0
    %4224 = vmatprep.mubr.f32.mxu0 0.0
    %4225 = vmatmul.mubr.f32.gmra.mxu0 %v4116
    %v4226 = vpop.f32.mrf.mxu0
    %v4227 = vadd.f32 0.0, %v4226
    %v4228 = vpop.f32.mrf.mxu0
    %4229 = vdwg.mxu0
    %4230 = vrot.lane.b32.xlu0 %v2868, 104
    %v4231 = vpop.permute.xlu0 %4230
    %4232 = vrot.lane.b32.xlu0 %v2870, 104
    %v4233 = vpop.permute.xlu0 %4232
    %4234 = vrot.lane.b32.xlu0 %v2872, 104
    %v4235 = vpop.permute.xlu0 %4234
    %4236 = vrot.lane.b32.xlu0 %v2874, 104
    %v4237 = vpop.permute.xlu0 %4236
    %4238 = vrot.lane.b32.xlu0 %v2876, 104
    %v4239 = vpop.permute.xlu0 %4238
    %4240 = vrot.lane.b32.xlu0 %v2878, 104
    %v4241 = vpop.permute.xlu0 %4240
    %4242 = vrot.lane.b32.xlu0 %v2880, 104
    %v4243 = vpop.permute.xlu0 %4242
    %4244 = vrot.lane.b32.xlu0 %v2882, 104
    %v4245 = vpop.permute.xlu0 %4244
    %4246 = vrot.lane.b32.xlu0 %v2881, 104
    %v4247 = vpop.permute.xlu0 %4246
    %4248 = vrot.lane.b32.xlu0 %v2868, 72
    %v4249 = vpop.permute.xlu0 %4248
    %4250 = vrot.lane.b32.xlu0 %v2870, 72
    %v4251 = vpop.permute.xlu0 %4250
    %4252 = vrot.lane.b32.xlu0 %v2872, 72
    %v4253 = vpop.permute.xlu0 %4252
    %4254 = vrot.lane.b32.xlu0 %v2874, 72
    %v4255 = vpop.permute.xlu0 %4254
    %4256 = vrot.lane.b32.xlu0 %v2876, 72
    %v4257 = vpop.permute.xlu0 %4256
    %4258 = vrot.lane.b32.xlu0 %v2878, 72
    %v4259 = vpop.permute.xlu0 %4258
    %4260 = vrot.lane.b32.xlu0 %v2880, 72
    %v4261 = vpop.permute.xlu0 %4260
    %4262 = vrot.lane.b32.xlu0 %v2882, 72
    %v4263 = vpop.permute.xlu0 %4262
    %4264 = vrot.lane.b32.xlu0 %v2881, 72
    %v4265 = vpop.permute.xlu0 %4264
    %v4266 = vsel %vm934, %v4231, 0
    %v4268 = vsel %vm934, %v4233, 0
    %v4270 = vsel %vm934, %v4235, 0
    %v4272 = vsel %vm934, %v4237, 0
    %v4274 = vsel %vm934, %v4239, 0
    %v4276 = vsel %vm934, %v4241, 0
    %v4278 = vsel %vm934, %v4243, 0
    %v4280 = vsel %vm934, %v4245, 0
    %v4282 = vsel %vm934, %v4247, 0
    %v4284 = vsel %vm934, %v4249, 0
    %v4286 = vsel %vm934, %v4251, 0
    %v4288 = vsel %vm934, %v4253, 0
    %v4290 = vsel %vm934, %v4255, 0
    %v4292 = vsel %vm934, %v4257, 0
    %v4294 = vsel %vm934, %v4259, 0
    %v4296 = vsel %vm934, %v4261, 0
    %v4298 = vsel %vm934, %v4263, 0
    %v4300 = vsel %vm934, %v4265, 0
    %4302 = vmatprep.subr.mxu0 0.0
    %4303 = vmatpush1.xpose.msra.mxu0 0.0
    %4304 = vmatprep.subr.mxu0 0.0
    %4305 = vmatpush1.xpose.msra.mxu0 0.0
    %4306 = vmatprep.subr.mxu0 0.0
    %4307 = vmatpush1.xpose.msra.mxu0 0.0
    %4308 = vmatprep.subr.mxu0 0.0
    %4309 = vmatpush1.xpose.msra.mxu0 0.0
    %4310 = vmatprep.subr.mxu0 0.0
    %4311 = vmatpush1.xpose.msra.mxu0 0.0
    %4312 = vmatprep.subr.mxu0 0.0
    %4313 = vmatpush1.xpose.msra.mxu0 0.0
    %4314 = vmatprep.subr.mxu0 0.0
    %4315 = vmatpush1.xpose.msra.mxu0 0.0
    %4316 = vmatprep.subr.mxu0 0.0
    %4317 = vmatpush1.xpose.msra.mxu0 %v4300
    %4318 = vmatprep.subr.mxu0 0.0
    %4319 = vmatpush1.xpose.msra.mxu0 %v4298
    %4320 = vmatprep.subr.mxu0 0.0
    %4321 = vmatpush1.xpose.msra.mxu0 %v4296
    %4322 = vmatprep.subr.mxu0 0.0
    %4323 = vmatpush1.xpose.msra.mxu0 %v4294
    %4324 = vmatprep.subr.mxu0 0.0
    %4325 = vmatpush1.xpose.msra.mxu0 %v4292
    %4326 = vmatprep.subr.mxu0 0.0
    %4327 = vmatpush1.xpose.msra.mxu0 %v4290
    %4328 = vmatprep.subr.mxu0 0.0
    %4329 = vmatpush1.xpose.msra.mxu0 %v4288
    %4330 = vmatprep.subr.mxu0 0.0
    %4331 = vmatpush1.xpose.msra.mxu0 %v4286
    %4332 = vmatprep.subr.mxu0 0.0
    %4333 = vmatpush1.xpose.msra.mxu0 %v4284
    %4334 = vmatprep.subr.mxu0 0.0
    %4335 = vmatpush2.xpose.msra.mxu0 0.0
    %4336 = vmatprep.subr.mxu0 0.0
    %4337 = vmatpush2.xpose.msra.mxu0 0.0
    %4338 = vmatprep.subr.mxu0 0.0
    %4339 = vmatpush2.xpose.msra.mxu0 0.0
    %4340 = vmatprep.subr.mxu0 0.0
    %4341 = vmatpush2.xpose.msra.mxu0 0.0
    %4342 = vmatprep.subr.mxu0 0.0
    %4343 = vmatpush2.xpose.msra.mxu0 0.0
    %4344 = vmatprep.subr.mxu0 0.0
    %4345 = vmatpush2.xpose.msra.mxu0 0.0
    %4346 = vmatprep.subr.mxu0 0.0
    %4347 = vmatpush2.xpose.msra.mxu0 0.0
    %4348 = vmatprep.subr.mxu0 0.0
    %4349 = vmatpush2.xpose.msra.mxu0 0.0
    %4350 = vmatprep.subr.mxu0 0.0
    %4351 = vmatpush2.xpose.msra.mxu0 0.0
    %4352 = vmatprep.subr.mxu0 0.0
    %4353 = vmatpush2.xpose.msra.mxu0 0.0
    %4354 = vmatprep.subr.mxu0 0.0
    %4355 = vmatpush2.xpose.msra.mxu0 0.0
    %4356 = vmatprep.subr.mxu0 0.0
    %4357 = vmatpush2.xpose.msra.mxu0 0.0
    %4358 = vmatprep.subr.mxu0 0.0
    %4359 = vmatpush2.xpose.msra.mxu0 0.0
    %4360 = vmatprep.subr.mxu0 0.0
    %4361 = vmatpush2.xpose.msra.mxu0 0.0
    %4362 = vmatprep.subr.mxu0 0.0
    %4363 = vmatpush2.xpose.msra.mxu0 0.0
    %4364 = vmatprep.subr.mxu0 0.0
    %4365 = vmatpush2.xpose.msra.mxu0 0.0
    %4366 = vmatprep.mubr.f32.mxu0 0.0
    %4367 = vmatmul.mubr.f32.gmra.mxu0 %v4266
    %v4368 = vpop.f32.mrf.mxu0
    %v4369 = vadd.f32 0.0, %v4368
    %v4370 = vpop.f32.mrf.mxu0
    %4371 = vmatprep.mubr.f32.mxu0 0.0
    %4372 = vmatmul.mubr.f32.gmra.mxu0 %v4268
    %v4373 = vpop.f32.mrf.mxu0
    %v4374 = vadd.f32 0.0, %v4373
    %v4375 = vpop.f32.mrf.mxu0
    %4376 = vmatprep.mubr.f32.mxu0 0.0
    %4377 = vmatmul.mubr.f32.gmra.mxu0 %v4270
    %v4378 = vpop.f32.mrf.mxu0
    %v4379 = vadd.f32 0.0, %v4378
    %v4380 = vpop.f32.mrf.mxu0
    %4381 = vmatprep.mubr.f32.mxu0 0.0
    %4382 = vmatmul.mubr.f32.gmra.mxu0 %v4272
    %v4383 = vpop.f32.mrf.mxu0
    %v4384 = vadd.f32 0.0, %v4383
    %v4385 = vpop.f32.mrf.mxu0
    %4386 = vmatprep.mubr.f32.mxu0 0.0
    %4387 = vmatmul.mubr.f32.gmra.mxu0 %v4274
    %v4388 = vpop.f32.mrf.mxu0
    %v4389 = vadd.f32 0.0, %v4388
    %v4390 = vpop.f32.mrf.mxu0
    %4391 = vmatprep.mubr.f32.mxu0 0.0
    %4392 = vmatmul.mubr.f32.gmra.mxu0 %v4276
    %v4393 = vpop.f32.mrf.mxu0
    %v4394 = vadd.f32 0.0, %v4393
    %v4395 = vpop.f32.mrf.mxu0
    %4396 = vmatprep.mubr.f32.mxu0 0.0
    %4397 = vmatmul.mubr.f32.gmra.mxu0 %v4278
    %v4398 = vpop.f32.mrf.mxu0
    %v4399 = vadd.f32 0.0, %v4398
    %v4400 = vpop.f32.mrf.mxu0
    %4401 = vmatprep.mubr.f32.mxu0 0.0
    %4402 = vmatmul.mubr.f32.gmra.mxu0 %v4280
    %v4403 = vpop.f32.mrf.mxu0
    %v4404 = vadd.f32 0.0, %v4403
    %v4405 = vpop.f32.mrf.mxu0
    %4406 = vmatprep.mubr.f32.mxu0 0.0
    %4407 = vmatmul.mubr.f32.gmra.mxu0 %v4282
    %v4408 = vpop.f32.mrf.mxu0
    %v4409 = vadd.f32 0.0, %v4408
    %v4410 = vpop.f32.mrf.mxu0
    %4411 = vdwg.mxu0
    %v4412 = vmul.f32 %v4369, 0.35355338
    %v4413 = vmul.f32 %v4374, 0.35355338
    %v4414 = vmul.f32 %v4379, 0.35355338
    %v4415 = vmul.f32 %v4384, 0.35355338
    %v4416 = vmul.f32 %v4389, 0.35355338
    %v4417 = vmul.f32 %v4394, 0.35355338
    %v4418 = vmul.f32 %v4399, 0.35355338
    %v4419 = vmul.f32 %v4404, 0.35355338
    %v4420 = vmul.f32 %v4409, 0.35355338
    %v4421 = vsel %vm1090, %v4412, -inf
    %4422 = vmax.xlane.f32.xlu0 %v4421
    %v4423 = vpop.xlane.xlu0 %4422
    %v4424 = vsel %vm1090, %v4413, -inf
    %4425 = vmax.xlane.f32.xlu0 %v4424
    %v4426 = vpop.xlane.xlu0 %4425
    %v4427 = vsel %vm1090, %v4414, -inf
    %4428 = vmax.xlane.f32.xlu0 %v4427
    %v4429 = vpop.xlane.xlu0 %4428
    %v4430 = vsel %vm1090, %v4415, -inf
    %4431 = vmax.xlane.f32.xlu0 %v4430
    %v4432 = vpop.xlane.xlu0 %4431
    %v4433 = vsel %vm1090, %v4416, -inf
    %4434 = vmax.xlane.f32.xlu0 %v4433
    %v4435 = vpop.xlane.xlu0 %4434
    %v4436 = vsel %vm1090, %v4417, -inf
    %4437 = vmax.xlane.f32.xlu0 %v4436
    %v4438 = vpop.xlane.xlu0 %4437
    %v4439 = vsel %vm1090, %v4418, -inf
    %4440 = vmax.xlane.f32.xlu0 %v4439
    %v4441 = vpop.xlane.xlu0 %4440
    %v4442 = vsel %vm1090, %v4419, -inf
    %4443 = vmax.xlane.f32.xlu0 %v4442
    %v4444 = vpop.xlane.xlu0 %4443
    %v4445 = vsel %vm1115, %v4420, -inf
    %4446 = vmax.xlane.f32.xlu0 %v4445
    %v4447 = vpop.xlane.xlu0 %4446
    %v4448 = vsub.f32 %v4412, %v4423
    %v4449 = vsub.f32 %v4413, %v4426
    %v4450 = vsub.f32 %v4414, %v4429
    %v4451 = vsub.f32 %v4415, %v4432
    %v4452 = vsub.f32 %v4416, %v4435
    %v4453 = vsub.f32 %v4417, %v4438
    %v4454 = vsub.f32 %v4418, %v4441
    %v4455 = vsub.f32 %v4419, %v4444
    %v4456 = vsub.f32 %v4420, %v4447
    %v4457 = vmul.f32 %v4448, 1.442695
    %v4458 = vpow.pop %v4457
    %v4459 = vmul.f32 %v4449, 1.442695
    %v4460 = vpow.pop %v4459
    %v4461 = vmul.f32 %v4450, 1.442695
    %v4462 = vpow.pop %v4461
    %v4463 = vmul.f32 %v4451, 1.442695
    %v4464 = vpow.pop %v4463
    %v4465 = vmul.f32 %v4452, 1.442695
    %v4466 = vpow.pop %v4465
    %v4467 = vmul.f32 %v4453, 1.442695
    %v4468 = vpow.pop %v4467
    %v4469 = vmul.f32 %v4454, 1.442695
    %v4470 = vpow.pop %v4469
    %v4471 = vmul.f32 %v4455, 1.442695
    %v4472 = vpow.pop %v4471
    %v4473 = vmul.f32 %v4456, 1.442695
    %v4474 = vpow.pop %v4473
    %v4475 = vsel %vm1090, %v4458, 0.0
    %4476 = vadd.xlane.f32.xlu0 %v4475
    %v4477 = vpop.xlane.xlu0 %4476
    %v4478 = vsel %vm1090, %v4460, 0.0
    %4479 = vadd.xlane.f32.xlu0 %v4478
    %v4480 = vpop.xlane.xlu0 %4479
    %v4481 = vsel %vm1090, %v4462, 0.0
    %4482 = vadd.xlane.f32.xlu0 %v4481
    %v4483 = vpop.xlane.xlu0 %4482
    %v4484 = vsel %vm1090, %v4464, 0.0
    %4485 = vadd.xlane.f32.xlu0 %v4484
    %v4486 = vpop.xlane.xlu0 %4485
    %v4487 = vsel %vm1090, %v4466, 0.0
    %4488 = vadd.xlane.f32.xlu0 %v4487
    %v4489 = vpop.xlane.xlu0 %4488
    %v4490 = vsel %vm1090, %v4468, 0.0
    %4491 = vadd.xlane.f32.xlu0 %v4490
    %v4492 = vpop.xlane.xlu0 %4491
    %v4493 = vsel %vm1090, %v4470, 0.0
    %4494 = vadd.xlane.f32.xlu0 %v4493
    %v4495 = vpop.xlane.xlu0 %4494
    %v4496 = vsel %vm1090, %v4472, 0.0
    %4497 = vadd.xlane.f32.xlu0 %v4496
    %v4498 = vpop.xlane.xlu0 %4497
    %v4499 = vsel %vm1115, %v4474, 0.0
    %4500 = vadd.xlane.f32.xlu0 %v4499
    %v4501 = vpop.xlane.xlu0 %4500
    %v4502 = vrcp.pop %v4477
    %v4503 = vrcp.pop %v4480
    %v4504 = vrcp.pop %v4483
    %v4505 = vrcp.pop %v4486
    %v4506 = vrcp.pop %v4489
    %v4507 = vrcp.pop %v4492
    %v4508 = vrcp.pop %v4495
    %v4509 = vrcp.pop %v4498
    %v4510 = vrcp.pop %v4501
    %v4511 = vmul.f32 %v4458, %v4502
    %v4512 = vmul.f32 %v4460, %v4503
    %v4513 = vmul.f32 %v4462, %v4504
    %v4514 = vmul.f32 %v4464, %v4505
    %v4515 = vmul.f32 %v4466, %v4506
    %v4516 = vmul.f32 %v4468, %v4507
    %v4517 = vmul.f32 %v4470, %v4508
    %v4518 = vmul.f32 %v4472, %v4509
    %v4519 = vmul.f32 %v4474, %v4510
    %4520 = vrot.lane.b32.xlu0 %v2868, 40
    %v4521 = vpop.permute.xlu0 %4520
    %4522 = vrot.lane.b32.xlu0 %v2870, 40
    %v4523 = vpop.permute.xlu0 %4522
    %4524 = vrot.lane.b32.xlu0 %v2872, 40
    %v4525 = vpop.permute.xlu0 %4524
    %4526 = vrot.lane.b32.xlu0 %v2874, 40
    %v4527 = vpop.permute.xlu0 %4526
    %4528 = vrot.lane.b32.xlu0 %v2876, 40
    %v4529 = vpop.permute.xlu0 %4528
    %4530 = vrot.lane.b32.xlu0 %v2878, 40
    %v4531 = vpop.permute.xlu0 %4530
    %4532 = vrot.lane.b32.xlu0 %v2880, 40
    %v4533 = vpop.permute.xlu0 %4532
    %4534 = vrot.lane.b32.xlu0 %v2882, 40
    %v4535 = vpop.permute.xlu0 %4534
    %4536 = vrot.lane.b32.xlu0 %v2881, 40
    %v4537 = vpop.permute.xlu0 %4536
    %v4547 = vsel %vm1090, %v4511, 0
    %v4550 = vsel %vm1090, %v4512, 0
    %v4553 = vsel %vm1090, %v4513, 0
    %v4556 = vsel %vm1090, %v4514, 0
    %v4559 = vsel %vm1090, %v4515, 0
    %v4562 = vsel %vm1090, %v4516, 0
    %v4565 = vsel %vm1090, %v4517, 0
    %v4568 = vsel %vm1090, %v4518, 0
    %v4571 = vsel %vm1090, %v4519, 0
    %v4573 = vsel %vm362, %v4537, 0
    %4575 = vmatprep.subr.mxu0 0.0
    %4576 = vmatpush1.msra.mxu0 0.0
    %4577 = vmatprep.subr.mxu0 0.0
    %4578 = vmatpush1.msra.mxu0 0.0
    %4579 = vmatprep.subr.mxu0 0.0
    %4580 = vmatpush1.msra.mxu0 0.0
    %4581 = vmatprep.subr.mxu0 0.0
    %4582 = vmatpush1.msra.mxu0 0.0
    %4583 = vmatprep.subr.mxu0 0.0
    %4584 = vmatpush1.msra.mxu0 0.0
    %4585 = vmatprep.subr.mxu0 0.0
    %4586 = vmatpush1.msra.mxu0 0.0
    %4587 = vmatprep.subr.mxu0 0.0
    %4588 = vmatpush1.msra.mxu0 0.0
    %4589 = vmatprep.subr.mxu0 0.0
    %4590 = vmatpush1.msra.mxu0 %v4573
    %4591 = vmatprep.subr.mxu0 0.0
    %4592 = vmatpush1.msra.mxu0 %v4535
    %4593 = vmatprep.subr.mxu0 0.0
    %4594 = vmatpush1.msra.mxu0 %v4533
    %4595 = vmatprep.subr.mxu0 0.0
    %4596 = vmatpush1.msra.mxu0 %v4531
    %4597 = vmatprep.subr.mxu0 0.0
    %4598 = vmatpush1.msra.mxu0 %v4529
    %4599 = vmatprep.subr.mxu0 0.0
    %4600 = vmatpush1.msra.mxu0 %v4527
    %4601 = vmatprep.subr.mxu0 0.0
    %4602 = vmatpush1.msra.mxu0 %v4525
    %4603 = vmatprep.subr.mxu0 0.0
    %4604 = vmatpush1.msra.mxu0 %v4523
    %4605 = vmatprep.subr.mxu0 0.0
    %4606 = vmatpush1.msra.mxu0 %v4521
    %4607 = vmatprep.subr.mxu0 0.0
    %4608 = vmatpush2.msra.mxu0 0.0
    %4609 = vmatprep.subr.mxu0 0.0
    %4610 = vmatpush2.msra.mxu0 0.0
    %4611 = vmatprep.subr.mxu0 0.0
    %4612 = vmatpush2.msra.mxu0 0.0
    %4613 = vmatprep.subr.mxu0 0.0
    %4614 = vmatpush2.msra.mxu0 0.0
    %4615 = vmatprep.subr.mxu0 0.0
    %4616 = vmatpush2.msra.mxu0 0.0
    %4617 = vmatprep.subr.mxu0 0.0
    %4618 = vmatpush2.msra.mxu0 0.0
    %4619 = vmatprep.subr.mxu0 0.0
    %4620 = vmatpush2.msra.mxu0 0.0
    %4621 = vmatprep.subr.mxu0 0.0
    %4622 = vmatpush2.msra.mxu0 0.0
    %4623 = vmatprep.subr.mxu0 0.0
    %4624 = vmatpush2.msra.mxu0 0.0
    %4625 = vmatprep.subr.mxu0 0.0
    %4626 = vmatpush2.msra.mxu0 0.0
    %4627 = vmatprep.subr.mxu0 0.0
    %4628 = vmatpush2.msra.mxu0 0.0
    %4629 = vmatprep.subr.mxu0 0.0
    %4630 = vmatpush2.msra.mxu0 0.0
    %4631 = vmatprep.subr.mxu0 0.0
    %4632 = vmatpush2.msra.mxu0 0.0
    %4633 = vmatprep.subr.mxu0 0.0
    %4634 = vmatpush2.msra.mxu0 0.0
    %4635 = vmatprep.subr.mxu0 0.0
    %4636 = vmatpush2.msra.mxu0 0.0
    %4637 = vmatprep.subr.mxu0 0.0
    %4638 = vmatpush2.msra.mxu0 0.0
    %4639 = vmatprep.mubr.f32.mxu0 0.0
    %4640 = vmatmul.mubr.f32.gmra.mxu0 %v4547
    %v4641 = vpop.f32.mrf.mxu0
    %v4642 = vadd.f32 0.0, %v4641
    %v4643 = vpop.f32.mrf.mxu0
    %4644 = vmatprep.mubr.f32.mxu0 0.0
    %4645 = vmatmul.mubr.f32.gmra.mxu0 %v4550
    %v4646 = vpop.f32.mrf.mxu0
    %v4647 = vadd.f32 0.0, %v4646
    %v4648 = vpop.f32.mrf.mxu0
    %4649 = vmatprep.mubr.f32.mxu0 0.0
    %4650 = vmatmul.mubr.f32.gmra.mxu0 %v4553
    %v4651 = vpop.f32.mrf.mxu0
    %v4652 = vadd.f32 0.0, %v4651
    %v4653 = vpop.f32.mrf.mxu0
    %4654 = vmatprep.mubr.f32.mxu0 0.0
    %4655 = vmatmul.mubr.f32.gmra.mxu0 %v4556
    %v4656 = vpop.f32.mrf.mxu0
    %v4657 = vadd.f32 0.0, %v4656
    %v4658 = vpop.f32.mrf.mxu0
    %4659 = vmatprep.mubr.f32.mxu0 0.0
    %4660 = vmatmul.mubr.f32.gmra.mxu0 %v4559
    %v4661 = vpop.f32.mrf.mxu0
    %v4662 = vadd.f32 0.0, %v4661
    %v4663 = vpop.f32.mrf.mxu0
    %4664 = vmatprep.mubr.f32.mxu0 0.0
    %4665 = vmatmul.mubr.f32.gmra.mxu0 %v4562
    %v4666 = vpop.f32.mrf.mxu0
    %v4667 = vadd.f32 0.0, %v4666
    %v4668 = vpop.f32.mrf.mxu0
    %4669 = vmatprep.mubr.f32.mxu0 0.0
    %4670 = vmatmul.mubr.f32.gmra.mxu0 %v4565
    %v4671 = vpop.f32.mrf.mxu0
    %v4672 = vadd.f32 0.0, %v4671
    %v4673 = vpop.f32.mrf.mxu0
    %4674 = vmatprep.mubr.f32.mxu0 0.0
    %4675 = vmatmul.mubr.f32.gmra.mxu0 %v4568
    %v4676 = vpop.f32.mrf.mxu0
    %v4677 = vadd.f32 0.0, %v4676
    %v4678 = vpop.f32.mrf.mxu0
    %4679 = vmatprep.mubr.f32.mxu0 0.0
    %4680 = vmatmul.mubr.f32.gmra.mxu0 %v4571
    %v4681 = vpop.f32.mrf.mxu0
    %v4682 = vadd.f32 0.0, %v4681
    %v4683 = vpop.f32.mrf.mxu0
    %4684 = vdwg.mxu0
    %4694 = vrot.lane.b32.xlu0 %v3732, 8
    %v4695 = vpop.permute.xlu0 %4694
    %4696 = vrot.lane.b32.xlu0 %v3737, 8
    %v4697 = vpop.permute.xlu0 %4696
    %4698 = vrot.lane.b32.xlu0 %v3742, 8
    %v4699 = vpop.permute.xlu0 %4698
    %4700 = vrot.lane.b32.xlu0 %v3747, 8
    %v4701 = vpop.permute.xlu0 %4700
    %4702 = vrot.lane.b32.xlu0 %v3752, 8
    %v4703 = vpop.permute.xlu0 %4702
    %4704 = vrot.lane.b32.xlu0 %v3757, 8
    %v4705 = vpop.permute.xlu0 %4704
    %4706 = vrot.lane.b32.xlu0 %v3762, 8
    %v4707 = vpop.permute.xlu0 %4706
    %4708 = vrot.lane.b32.xlu0 %v3767, 8
    %v4709 = vpop.permute.xlu0 %4708
    %4710 = vrot.lane.b32.xlu0 %v3772, 8
    %v4711 = vpop.permute.xlu0 %4710
    %4730 = vrot.lane.b32.xlu0 %v4187, 16
    %v4731 = vpop.permute.xlu0 %4730
    %4732 = vrot.lane.b32.xlu0 %v4192, 16
    %v4733 = vpop.permute.xlu0 %4732
    %4734 = vrot.lane.b32.xlu0 %v4197, 16
    %v4735 = vpop.permute.xlu0 %4734
    %4736 = vrot.lane.b32.xlu0 %v4202, 16
    %v4737 = vpop.permute.xlu0 %4736
    %4738 = vrot.lane.b32.xlu0 %v4207, 16
    %v4739 = vpop.permute.xlu0 %4738
    %4740 = vrot.lane.b32.xlu0 %v4212, 16
    %v4741 = vpop.permute.xlu0 %4740
    %4742 = vrot.lane.b32.xlu0 %v4217, 16
    %v4743 = vpop.permute.xlu0 %4742
    %4744 = vrot.lane.b32.xlu0 %v4222, 16
    %v4745 = vpop.permute.xlu0 %4744
    %4746 = vrot.lane.b32.xlu0 %v4227, 16
    %v4747 = vpop.permute.xlu0 %4746
    %4766 = vrot.lane.b32.xlu0 %v4642, 24
    %v4767 = vpop.permute.xlu0 %4766
    %4768 = vrot.lane.b32.xlu0 %v4647, 24
    %v4769 = vpop.permute.xlu0 %4768
    %4770 = vrot.lane.b32.xlu0 %v4652, 24
    %v4771 = vpop.permute.xlu0 %4770
    %4772 = vrot.lane.b32.xlu0 %v4657, 24
    %v4773 = vpop.permute.xlu0 %4772
    %4774 = vrot.lane.b32.xlu0 %v4662, 24
    %v4775 = vpop.permute.xlu0 %4774
    %4776 = vrot.lane.b32.xlu0 %v4667, 24
    %v4777 = vpop.permute.xlu0 %4776
    %4778 = vrot.lane.b32.xlu0 %v4672, 24
    %v4779 = vpop.permute.xlu0 %4778
    %4780 = vrot.lane.b32.xlu0 %v4677, 24
    %v4781 = vpop.permute.xlu0 %4780
    %4782 = vrot.lane.b32.xlu0 %v4682, 24
    %v4783 = vpop.permute.xlu0 %4782
    %v4793 = vsel %vm934, %v3277, %v4695
    %v4794 = vsel %vm934, %v3282, %v4697
    %v4795 = vsel %vm934, %v3287, %v4699
    %v4796 = vsel %vm934, %v3292, %v4701
    %v4797 = vsel %vm934, %v3297, %v4703
    %v4798 = vsel %vm934, %v3302, %v4705
    %v4799 = vsel %vm934, %v3307, %v4707
    %v4800 = vsel %vm934, %v3312, %v4709
    %v4801 = vsel %vm934, %v3317, %v4711
    %v4802 = vsel %vm2838, %v4793, %v4731
    %v4803 = vsel %vm2838, %v4794, %v4733
    %v4804 = vsel %vm2838, %v4795, %v4735
    %v4805 = vsel %vm2838, %v4796, %v4737
    %v4806 = vsel %vm2838, %v4797, %v4739
    %v4807 = vsel %vm2838, %v4798, %v4741
    %v4808 = vsel %vm2838, %v4799, %v4743
    %v4809 = vsel %vm2838, %v4800, %v4745
    %v4810 = vsel %vm2838, %v4801, %v4747
    %v4811 = vsel %vm2848, %v4802, %v4767
    %v4812 = vsel %vm2848, %v4803, %v4769
    %v4813 = vsel %vm2848, %v4804, %v4771
    %v4814 = vsel %vm2848, %v4805, %v4773
    %v4815 = vsel %vm2848, %v4806, %v4775
    %v4816 = vsel %vm2848, %v4807, %v4777
    %v4817 = vsel %vm2848, %v4808, %v4779
    %v4818 = vsel %vm2848, %v4809, %v4781
    %v4819 = vsel %vm2848, %v4810, %v4783
    %v4829 = vrot.slane %v4811, 7
    %v4830 = vrot.slane %v4812, 7
    %v4831 = vsel %vm362, %v4829, %v4830
    %v4832 = vrot.slane %v4813, 7
    %v4833 = vsel %vm362, %v4830, %v4832
    %v4834 = vrot.slane %v4814, 7
    %v4835 = vsel %vm362, %v4832, %v4834
    %v4836 = vrot.slane %v4815, 7
    %v4837 = vsel %vm362, %v4834, %v4836
    %v4838 = vrot.slane %v4816, 7
    %v4839 = vsel %vm362, %v4836, %v4838
    %v4840 = vrot.slane %v4817, 7
    %v4841 = vsel %vm362, %v4838, %v4840
    %v4842 = vrot.slane %v4818, 7
    %v4843 = vsel %vm362, %v4840, %v4842
    %v4844 = vrot.slane %v4819, 7
    %v4845 = vsel %vm362, %v4842, %v4844
    %v4847 = vsel %vm362, %v2857, %v4829
    %v4848 = vld [vmem:[%s9] sm:$0xff]
    %v4849 = vld [vmem:[%s9 + $0x8] sm:$0xff]
    %v4850 = vld [vmem:[%s9 + $0x10] sm:$0xff]
    %v4851 = vld [vmem:[%s9 + $0x18] sm:$0xff]
    %v4852 = vld [vmem:[%s10] sm:$0x1]
    %v4853 = vlaneseq
    %v4854 = vshrl.u32 %v4853, 7
    %v4855 = vsub.s32 0, %v4854
    %v4856 = vrot.slane %v4852, %v4855
    %v4858 = vsel %vm431, %v2849, 0
    %v4861 = vsel %vm431, %v2850, 0
    %v4864 = vsel %vm431, %v2851, 0
    %v4867 = vsel %vm431, %v2852, 0
    %v4870 = vsel %vm431, %v2853, 0
    %v4873 = vsel %vm431, %v2854, 0
    %v4876 = vsel %vm431, %v2855, 0
    %v4879 = vsel %vm431, %v2856, 0
    %v4882 = vsel %vm431, %v4847, 0
    %v4884 = vsel %vm431, %v4831, 0
    %v4886 = vsel %vm431, %v4833, 0
    %v4888 = vsel %vm431, %v4835, 0
    %v4890 = vsel %vm431, %v4837, 0
    %v4892 = vsel %vm431, %v4839, 0
    %v4894 = vsel %vm431, %v4841, 0
    %v4896 = vsel %vm431, %v4843, 0
    %v4898 = vsel %vm431, %v4845, 0
    %4900 = vmatprep.subr.mxu0 0.0
    %4901 = vmatpush1.msra.mxu0 0.0
    %4902 = vmatprep.subr.mxu0 0.0
    %4903 = vmatpush1.msra.mxu0 0.0
    %4904 = vmatprep.subr.mxu0 0.0
    %4905 = vmatpush1.msra.mxu0 0.0
    %4906 = vmatprep.subr.mxu0 0.0
    %4907 = vmatpush1.msra.mxu0 0.0
    %4908 = vmatprep.subr.mxu0 0.0
    %4909 = vmatpush1.msra.mxu0 0.0
    %4910 = vmatprep.subr.mxu0 0.0
    %4911 = vmatpush1.msra.mxu0 0.0
    %4912 = vmatprep.subr.mxu0 0.0
    %4913 = vmatpush1.msra.mxu0 0.0
    %4914 = vmatprep.subr.mxu0 0.0
    %4915 = vmatpush1.msra.mxu0 0.0
    %4916 = vmatprep.subr.mxu0 0.0
    %4917 = vmatpush1.msra.mxu0 0.0
    %4918 = vmatprep.subr.mxu0 0.0
    %4919 = vmatpush1.msra.mxu0 0.0
    %4920 = vmatprep.subr.mxu0 0.0
    %4921 = vmatpush1.msra.mxu0 0.0
    %4922 = vmatprep.subr.mxu0 0.0
    %4923 = vmatpush1.msra.mxu0 0.0
    %4924 = vmatprep.subr.mxu0 0.0
    %4925 = vmatpush1.msra.mxu0 %v4851
    %4926 = vmatprep.subr.mxu0 0.0
    %4927 = vmatpush1.msra.mxu0 %v4850
    %4928 = vmatprep.subr.mxu0 0.0
    %4929 = vmatpush1.msra.mxu0 %v4849
    %4930 = vmatprep.subr.mxu0 0.0
    %4931 = vmatpush1.msra.mxu0 %v4848
    %4932 = vmatprep.subr.mxu0 0.0
    %4933 = vmatpush2.msra.mxu0 0.0
    %4934 = vmatprep.subr.mxu0 0.0
    %4935 = vmatpush2.msra.mxu0 0.0
    %4936 = vmatprep.subr.mxu0 0.0
    %4937 = vmatpush2.msra.mxu0 0.0
    %4938 = vmatprep.subr.mxu0 0.0
    %4939 = vmatpush2.msra.mxu0 0.0
    %4940 = vmatprep.subr.mxu0 0.0
    %4941 = vmatpush2.msra.mxu0 0.0
    %4942 = vmatprep.subr.mxu0 0.0
    %4943 = vmatpush2.msra.mxu0 0.0
    %4944 = vmatprep.subr.mxu0 0.0
    %4945 = vmatpush2.msra.mxu0 0.0
    %4946 = vmatprep.subr.mxu0 0.0
    %4947 = vmatpush2.msra.mxu0 0.0
    %4948 = vmatprep.subr.mxu0 0.0
    %4949 = vmatpush2.msra.mxu0 0.0
    %4950 = vmatprep.subr.mxu0 0.0
    %4951 = vmatpush2.msra.mxu0 0.0
    %4952 = vmatprep.subr.mxu0 0.0
    %4953 = vmatpush2.msra.mxu0 0.0
    %4954 = vmatprep.subr.mxu0 0.0
    %4955 = vmatpush2.msra.mxu0 0.0
    %4956 = vmatprep.subr.mxu0 0.0
    %4957 = vmatpush2.msra.mxu0 0.0
    %4958 = vmatprep.subr.mxu0 0.0
    %4959 = vmatpush2.msra.mxu0 0.0
    %4960 = vmatprep.subr.mxu0 0.0
    %4961 = vmatpush2.msra.mxu0 0.0
    %4962 = vmatprep.subr.mxu0 0.0
    %4963 = vmatpush2.msra.mxu0 0.0
    %4964 = vmatprep.mubr.f32.mxu0 0.0
    %4965 = vmatmul.mubr.f32.gmra.mxu0 %v4858
    %v4966 = vpop.f32.mrf.mxu0
    %v4967 = vadd.f32 %v4856, %v4966
    %v4968 = vpop.f32.mrf.mxu0
    %4969 = vmatprep.mubr.f32.mxu0 0.0
    %4970 = vmatmul.mubr.f32.gmra.mxu0 %v4861
    %v4971 = vpop.f32.mrf.mxu0
    %v4972 = vadd.f32 %v4856, %v4971
    %v4973 = vpop.f32.mrf.mxu0
    %4974 = vmatprep.mubr.f32.mxu0 0.0
    %4975 = vmatmul.mubr.f32.gmra.mxu0 %v4864
    %v4976 = vpop.f32.mrf.mxu0
    %v4977 = vadd.f32 %v4856, %v4976
    %v4978 = vpop.f32.mrf.mxu0
    %4979 = vmatprep.mubr.f32.mxu0 0.0
    %4980 = vmatmul.mubr.f32.gmra.mxu0 %v4867
    %v4981 = vpop.f32.mrf.mxu0
    %v4982 = vadd.f32 %v4856, %v4981
    %v4983 = vpop.f32.mrf.mxu0
    %4984 = vmatprep.mubr.f32.mxu0 0.0
    %4985 = vmatmul.mubr.f32.gmra.mxu0 %v4870
    %v4986 = vpop.f32.mrf.mxu0
    %v4987 = vadd.f32 %v4856, %v4986
    %v4988 = vpop.f32.mrf.mxu0
    %4989 = vmatprep.mubr.f32.mxu0 0.0
    %4990 = vmatmul.mubr.f32.gmra.mxu0 %v4873
    %v4991 = vpop.f32.mrf.mxu0
    %v4992 = vadd.f32 %v4856, %v4991
    %v4993 = vpop.f32.mrf.mxu0
    %4994 = vmatprep.mubr.f32.mxu0 0.0
    %4995 = vmatmul.mubr.f32.gmra.mxu0 %v4876
    %v4996 = vpop.f32.mrf.mxu0
    %v4997 = vadd.f32 %v4856, %v4996
    %v4998 = vpop.f32.mrf.mxu0
    %4999 = vmatprep.mubr.f32.mxu0 0.0
    %5000 = vmatmul.mubr.f32.gmra.mxu0 %v4879
    %v5001 = vpop.f32.mrf.mxu0
    %v5002 = vadd.f32 %v4856, %v5001
    %v5003 = vpop.f32.mrf.mxu0
    %5004 = vmatprep.mubr.f32.mxu0 0.0
    %5005 = vmatmul.mubr.f32.gmra.mxu0 %v4882
    %v5006 = vpop.f32.mrf.mxu0
    %v5007 = vadd.f32 %v4856, %v5006
    %v5008 = vpop.f32.mrf.mxu0
    %5009 = vmatprep.mubr.f32.mxu0 0.0
    %5010 = vmatmul.mubr.f32.gmra.mxu0 %v4884
    %v5011 = vpop.f32.mrf.mxu0
    %v5012 = vadd.f32 %v4856, %v5011
    %v5013 = vpop.f32.mrf.mxu0
    %5014 = vmatprep.mubr.f32.mxu0 0.0
    %5015 = vmatmul.mubr.f32.gmra.mxu0 %v4886
    %v5016 = vpop.f32.mrf.mxu0
    %v5017 = vadd.f32 %v4856, %v5016
    %v5018 = vpop.f32.mrf.mxu0
    %5019 = vmatprep.mubr.f32.mxu0 0.0
    %5020 = vmatmul.mubr.f32.gmra.mxu0 %v4888
    %v5021 = vpop.f32.mrf.mxu0
    %v5022 = vadd.f32 %v4856, %v5021
    %v5023 = vpop.f32.mrf.mxu0
    %5024 = vmatprep.mubr.f32.mxu0 0.0
    %5025 = vmatmul.mubr.f32.gmra.mxu0 %v4890
    %v5026 = vpop.f32.mrf.mxu0
    %v5027 = vadd.f32 %v4856, %v5026
    %v5028 = vpop.f32.mrf.mxu0
    %5029 = vmatprep.mubr.f32.mxu0 0.0
    %5030 = vmatmul.mubr.f32.gmra.mxu0 %v4892
    %v5031 = vpop.f32.mrf.mxu0
    %v5032 = vadd.f32 %v4856, %v5031
    %v5033 = vpop.f32.mrf.mxu0
    %5034 = vmatprep.mubr.f32.mxu0 0.0
    %5035 = vmatmul.mubr.f32.gmra.mxu0 %v4894
    %v5036 = vpop.f32.mrf.mxu0
    %v5037 = vadd.f32 %v4856, %v5036
    %v5038 = vpop.f32.mrf.mxu0
    %5039 = vmatprep.mubr.f32.mxu0 0.0
    %5040 = vmatmul.mubr.f32.gmra.mxu0 %v4896
    %v5041 = vpop.f32.mrf.mxu0
    %v5042 = vadd.f32 %v4856, %v5041
    %v5043 = vpop.f32.mrf.mxu0
    %5044 = vmatprep.mubr.f32.mxu0 0.0
    %5045 = vmatmul.mubr.f32.gmra.mxu0 %v4898
    %v5046 = vpop.f32.mrf.mxu0
    %v5047 = vadd.f32 %v4856, %v5046
    %v5048 = vpop.f32.mrf.mxu0
    %5049 = vdwg.mxu0
    %v5050 = vadd.f32 %v426, %v4967
    %v5051 = vadd.f32 %v365, %v4972
    %v5052 = vadd.f32 %v367, %v4977
    %v5053 = vadd.f32 %v369, %v4982
    %v5054 = vadd.f32 %v371, %v4987
    %v5055 = vadd.f32 %v373, %v4992
    %v5056 = vadd.f32 %v375, %v4997
    %v5057 = vadd.f32 %v377, %v5002
    %v5058 = vadd.f32 %v428, %v5007
    %v5059 = vadd.f32 %v404, %v5012
    %v5060 = vadd.f32 %v406, %v5017
    %v5061 = vadd.f32 %v408, %v5022
    %v5062 = vadd.f32 %v410, %v5027
    %v5063 = vadd.f32 %v412, %v5032
    %v5064 = vadd.f32 %v414, %v5037
    %v5065 = vadd.f32 %v416, %v5042
    %v5066 = vadd.f32 %v415, %v5047
    %v5067 = vld [vmem:[%s11] sm:$0x1]
    %v5068 = vld [vmem:[%s12] sm:$0x1]
    %v5069 = vsel %vm431, %v5050, 0.0
    %5070 = vadd.xlane.f32.xlu0 %v5069
    %v5071 = vpop.xlane.xlu0 %5070
    %v5072 = vsel %vm431, %v5051, 0.0
    %5073 = vadd.xlane.f32.xlu0 %v5072
    %v5074 = vpop.xlane.xlu0 %5073
    %v5075 = vsel %vm431, %v5052, 0.0
    %5076 = vadd.xlane.f32.xlu0 %v5075
    %v5077 = vpop.xlane.xlu0 %5076
    %v5078 = vsel %vm431, %v5053, 0.0
    %5079 = vadd.xlane.f32.xlu0 %v5078
    %v5080 = vpop.xlane.xlu0 %5079
    %v5081 = vsel %vm431, %v5054, 0.0
    %5082 = vadd.xlane.f32.xlu0 %v5081
    %v5083 = vpop.xlane.xlu0 %5082
    %v5084 = vsel %vm431, %v5055, 0.0
    %5085 = vadd.xlane.f32.xlu0 %v5084
    %v5086 = vpop.xlane.xlu0 %5085
    %v5087 = vsel %vm431, %v5056, 0.0
    %5088 = vadd.xlane.f32.xlu0 %v5087
    %v5089 = vpop.xlane.xlu0 %5088
    %v5090 = vsel %vm431, %v5057, 0.0
    %5091 = vadd.xlane.f32.xlu0 %v5090
    %v5092 = vpop.xlane.xlu0 %5091
    %v5093 = vsel %vm431, %v5058, 0.0
    %5094 = vadd.xlane.f32.xlu0 %v5093
    %v5095 = vpop.xlane.xlu0 %5094
    %v5096 = vsel %vm431, %v5059, 0.0
    %5097 = vadd.xlane.f32.xlu0 %v5096
    %v5098 = vpop.xlane.xlu0 %5097
    %v5099 = vsel %vm431, %v5060, 0.0
    %5100 = vadd.xlane.f32.xlu0 %v5099
    %v5101 = vpop.xlane.xlu0 %5100
    %v5102 = vsel %vm431, %v5061, 0.0
    %5103 = vadd.xlane.f32.xlu0 %v5102
    %v5104 = vpop.xlane.xlu0 %5103
    %v5105 = vsel %vm431, %v5062, 0.0
    %5106 = vadd.xlane.f32.xlu0 %v5105
    %v5107 = vpop.xlane.xlu0 %5106
    %v5108 = vsel %vm431, %v5063, 0.0
    %5109 = vadd.xlane.f32.xlu0 %v5108
    %v5110 = vpop.xlane.xlu0 %5109
    %v5111 = vsel %vm431, %v5064, 0.0
    %5112 = vadd.xlane.f32.xlu0 %v5111
    %v5113 = vpop.xlane.xlu0 %5112
    %v5114 = vsel %vm431, %v5065, 0.0
    %5115 = vadd.xlane.f32.xlu0 %v5114
    %v5116 = vpop.xlane.xlu0 %5115
    %v5117 = vsel %vm480, %v5066, 0.0
    %5118 = vadd.xlane.f32.xlu0 %v5117
    %v5119 = vpop.xlane.xlu0 %5118
    %v5120 = vmul.f32 %v5071, %v484
    %v5121 = vmul.f32 %v5074, %v484
    %v5122 = vmul.f32 %v5077, %v484
    %v5123 = vmul.f32 %v5080, %v484
    %v5124 = vmul.f32 %v5083, %v484
    %v5125 = vmul.f32 %v5086, %v484
    %v5126 = vmul.f32 %v5089, %v484
    %v5127 = vmul.f32 %v5092, %v484
    %v5128 = vmul.f32 %v5095, %v484
    %v5129 = vmul.f32 %v5098, %v484
    %v5130 = vmul.f32 %v5101, %v484
    %v5131 = vmul.f32 %v5104, %v484
    %v5132 = vmul.f32 %v5107, %v484
    %v5133 = vmul.f32 %v5110, %v484
    %v5134 = vmul.f32 %v5113, %v484
    %v5135 = vmul.f32 %v5116, %v484
    %v5136 = vmul.f32 %v5119, %v484
    %v5137 = vsub.f32 %v5050, %v5120
    %v5138 = vsub.f32 %v5051, %v5121
    %v5139 = vsub.f32 %v5052, %v5122
    %v5140 = vsub.f32 %v5053, %v5123
    %v5141 = vsub.f32 %v5054, %v5124
    %v5142 = vsub.f32 %v5055, %v5125
    %v5143 = vsub.f32 %v5056, %v5126
    %v5144 = vsub.f32 %v5057, %v5127
    %v5145 = vsub.f32 %v5058, %v5128
    %v5146 = vsub.f32 %v5059, %v5129
    %v5147 = vsub.f32 %v5060, %v5130
    %v5148 = vsub.f32 %v5061, %v5131
    %v5149 = vsub.f32 %v5062, %v5132
    %v5150 = vsub.f32 %v5063, %v5133
    %v5151 = vsub.f32 %v5064, %v5134
    %v5152 = vsub.f32 %v5065, %v5135
    %v5153 = vsub.f32 %v5066, %v5136
    %v5154 = vmul.f32 %v5137, %v5137
    %v5155 = vmul.f32 %v5138, %v5138
    %v5156 = vmul.f32 %v5139, %v5139
    %v5157 = vmul.f32 %v5140, %v5140
    %v5158 = vmul.f32 %v5141, %v5141
    %v5159 = vmul.f32 %v5142, %v5142
    %v5160 = vmul.f32 %v5143, %v5143
    %v5161 = vmul.f32 %v5144, %v5144
    %v5162 = vmul.f32 %v5145, %v5145
    %v5163 = vmul.f32 %v5146, %v5146
    %v5164 = vmul.f32 %v5147, %v5147
    %v5165 = vmul.f32 %v5148, %v5148
    %v5166 = vmul.f32 %v5149, %v5149
    %v5167 = vmul.f32 %v5150, %v5150
    %v5168 = vmul.f32 %v5151, %v5151
    %v5169 = vmul.f32 %v5152, %v5152
    %v5170 = vmul.f32 %v5153, %v5153
    %v5171 = vsel %vm431, %v5154, 0.0
    %5172 = vadd.xlane.f32.xlu0 %v5171
    %v5173 = vpop.xlane.xlu0 %5172
    %v5174 = vsel %vm431, %v5155, 0.0
    %5175 = vadd.xlane.f32.xlu0 %v5174
    %v5176 = vpop.xlane.xlu0 %5175
    %v5177 = vsel %vm431, %v5156, 0.0
    %5178 = vadd.xlane.f32.xlu0 %v5177
    %v5179 = vpop.xlane.xlu0 %5178
    %v5180 = vsel %vm431, %v5157, 0.0
    %5181 = vadd.xlane.f32.xlu0 %v5180
    %v5182 = vpop.xlane.xlu0 %5181
    %v5183 = vsel %vm431, %v5158, 0.0
    %5184 = vadd.xlane.f32.xlu0 %v5183
    %v5185 = vpop.xlane.xlu0 %5184
    %v5186 = vsel %vm431, %v5159, 0.0
    %5187 = vadd.xlane.f32.xlu0 %v5186
    %v5188 = vpop.xlane.xlu0 %5187
    %v5189 = vsel %vm431, %v5160, 0.0
    %5190 = vadd.xlane.f32.xlu0 %v5189
    %v5191 = vpop.xlane.xlu0 %5190
    %v5192 = vsel %vm431, %v5161, 0.0
    %5193 = vadd.xlane.f32.xlu0 %v5192
    %v5194 = vpop.xlane.xlu0 %5193
    %v5195 = vsel %vm431, %v5162, 0.0
    %5196 = vadd.xlane.f32.xlu0 %v5195
    %v5197 = vpop.xlane.xlu0 %5196
    %v5198 = vsel %vm431, %v5163, 0.0
    %5199 = vadd.xlane.f32.xlu0 %v5198
    %v5200 = vpop.xlane.xlu0 %5199
    %v5201 = vsel %vm431, %v5164, 0.0
    %5202 = vadd.xlane.f32.xlu0 %v5201
    %v5203 = vpop.xlane.xlu0 %5202
    %v5204 = vsel %vm431, %v5165, 0.0
    %5205 = vadd.xlane.f32.xlu0 %v5204
    %v5206 = vpop.xlane.xlu0 %5205
    %v5207 = vsel %vm431, %v5166, 0.0
    %5208 = vadd.xlane.f32.xlu0 %v5207
    %v5209 = vpop.xlane.xlu0 %5208
    %v5210 = vsel %vm431, %v5167, 0.0
    %5211 = vadd.xlane.f32.xlu0 %v5210
    %v5212 = vpop.xlane.xlu0 %5211
    %v5213 = vsel %vm431, %v5168, 0.0
    %5214 = vadd.xlane.f32.xlu0 %v5213
    %v5215 = vpop.xlane.xlu0 %5214
    %v5216 = vsel %vm431, %v5169, 0.0
    %5217 = vadd.xlane.f32.xlu0 %v5216
    %v5218 = vpop.xlane.xlu0 %5217
    %v5219 = vsel %vm480, %v5170, 0.0
    %5220 = vadd.xlane.f32.xlu0 %v5219
    %v5221 = vpop.xlane.xlu0 %5220
    %v5222 = vmul.f32 %v5173, %v484
    %v5223 = vmul.f32 %v5176, %v484
    %v5224 = vmul.f32 %v5179, %v484
    %v5225 = vmul.f32 %v5182, %v484
    %v5226 = vmul.f32 %v5185, %v484
    %v5227 = vmul.f32 %v5188, %v484
    %v5228 = vmul.f32 %v5191, %v484
    %v5229 = vmul.f32 %v5194, %v484
    %v5230 = vmul.f32 %v5197, %v484
    %v5231 = vmul.f32 %v5200, %v484
    %v5232 = vmul.f32 %v5203, %v484
    %v5233 = vmul.f32 %v5206, %v484
    %v5234 = vmul.f32 %v5209, %v484
    %v5235 = vmul.f32 %v5212, %v484
    %v5236 = vmul.f32 %v5215, %v484
    %v5237 = vmul.f32 %v5218, %v484
    %v5238 = vmul.f32 %v5221, %v484
    %v5239 = vadd.f32 %v5222, 1e-05
    %v5240 = vadd.f32 %v5223, 1e-05
    %v5241 = vadd.f32 %v5224, 1e-05
    %v5242 = vadd.f32 %v5225, 1e-05
    %v5243 = vadd.f32 %v5226, 1e-05
    %v5244 = vadd.f32 %v5227, 1e-05
    %v5245 = vadd.f32 %v5228, 1e-05
    %v5246 = vadd.f32 %v5229, 1e-05
    %v5247 = vadd.f32 %v5230, 1e-05
    %v5248 = vadd.f32 %v5231, 1e-05
    %v5249 = vadd.f32 %v5232, 1e-05
    %v5250 = vadd.f32 %v5233, 1e-05
    %v5251 = vadd.f32 %v5234, 1e-05
    %v5252 = vadd.f32 %v5235, 1e-05
    %v5253 = vadd.f32 %v5236, 1e-05
    %v5254 = vadd.f32 %v5237, 1e-05
    %v5255 = vadd.f32 %v5238, 1e-05
    %v5256 = vrsqrt.pop %v5239
    %v5257 = vrsqrt.pop %v5240
    %v5258 = vrsqrt.pop %v5241
    %v5259 = vrsqrt.pop %v5242
    %v5260 = vrsqrt.pop %v5243
    %v5261 = vrsqrt.pop %v5244
    %v5262 = vrsqrt.pop %v5245
    %v5263 = vrsqrt.pop %v5246
    %v5264 = vrsqrt.pop %v5247
    %v5265 = vrsqrt.pop %v5248
    %v5266 = vrsqrt.pop %v5249
    %v5267 = vrsqrt.pop %v5250
    %v5268 = vrsqrt.pop %v5251
    %v5269 = vrsqrt.pop %v5252
    %v5270 = vrsqrt.pop %v5253
    %v5271 = vrsqrt.pop %v5254
    %v5272 = vrsqrt.pop %v5255
    %v5273 = vmul.f32 %v5137, %v5256
    %v5274 = vmul.f32 %v5138, %v5257
    %v5275 = vmul.f32 %v5139, %v5258
    %v5276 = vmul.f32 %v5140, %v5259
    %v5277 = vmul.f32 %v5141, %v5260
    %v5278 = vmul.f32 %v5142, %v5261
    %v5279 = vmul.f32 %v5143, %v5262
    %v5280 = vmul.f32 %v5144, %v5263
    %v5281 = vmul.f32 %v5145, %v5264
    %v5282 = vmul.f32 %v5146, %v5265
    %v5283 = vmul.f32 %v5147, %v5266
    %v5284 = vmul.f32 %v5148, %v5267
    %v5285 = vmul.f32 %v5149, %v5268
    %v5286 = vmul.f32 %v5150, %v5269
    %v5287 = vmul.f32 %v5151, %v5270
    %v5288 = vmul.f32 %v5152, %v5271
    %v5289 = vmul.f32 %v5153, %v5272
    %v5290 = vlaneseq
    %v5291 = vshrl.u32 %v5290, 7
    %v5292 = vsub.s32 0, %v5291
    %v5293 = vrot.slane %v5067, %v5292
    %v5294 = vmul.f32 %v5273, %v5293
    %v5295 = vmul.f32 %v5274, %v5293
    %v5296 = vmul.f32 %v5275, %v5293
    %v5297 = vmul.f32 %v5276, %v5293
    %v5298 = vmul.f32 %v5277, %v5293
    %v5299 = vmul.f32 %v5278, %v5293
    %v5300 = vmul.f32 %v5279, %v5293
    %v5301 = vmul.f32 %v5280, %v5293
    %v5302 = vmul.f32 %v5281, %v5293
    %v5303 = vmul.f32 %v5282, %v5293
    %v5304 = vmul.f32 %v5283, %v5293
    %v5305 = vmul.f32 %v5284, %v5293
    %v5306 = vmul.f32 %v5285, %v5293
    %v5307 = vmul.f32 %v5286, %v5293
    %v5308 = vmul.f32 %v5287, %v5293
    %v5309 = vmul.f32 %v5288, %v5293
    %v5310 = vmul.f32 %v5289, %v5293
    %v5311 = vlaneseq
    %v5312 = vshrl.u32 %v5311, 7
    %v5313 = vsub.s32 0, %v5312
    %v5314 = vrot.slane %v5068, %v5313
    %v5315 = vadd.f32 %v5294, %v5314
    %v5316 = vadd.f32 %v5295, %v5314
    %v5317 = vadd.f32 %v5296, %v5314
    %v5318 = vadd.f32 %v5297, %v5314
    %v5319 = vadd.f32 %v5298, %v5314
    %v5320 = vadd.f32 %v5299, %v5314
    %v5321 = vadd.f32 %v5300, %v5314
    %v5322 = vadd.f32 %v5301, %v5314
    %v5323 = vadd.f32 %v5302, %v5314
    %v5324 = vadd.f32 %v5303, %v5314
    %v5325 = vadd.f32 %v5304, %v5314
    %v5326 = vadd.f32 %v5305, %v5314
    %v5327 = vadd.f32 %v5306, %v5314
    %v5328 = vadd.f32 %v5307, %v5314
    %v5329 = vadd.f32 %v5308, %v5314
    %v5330 = vadd.f32 %v5309, %v5314
    %v5331 = vadd.f32 %v5310, %v5314
    %v5332 = vld [vmem:[%s13] sm:$0xff]
    %v5333 = vld [vmem:[%s13 + $0x8] sm:$0xff]
    %v5334 = vld [vmem:[%s13 + $0x10] sm:$0xff]
    %v5335 = vld [vmem:[%s13 + $0x18] sm:$0xff]
    %v5336 = vld [vmem:[%s14] sm:$0x1]
    %v5337 = vlaneseq
    %v5338 = vshrl.u32 %v5337, 7
    %v5339 = vsub.s32 0, %v5338
    %v5340 = vrot.slane %v5336, %v5339
    %v5342 = vsel %vm431, %v5315, 0
    %v5345 = vsel %vm431, %v5316, 0
    %v5348 = vsel %vm431, %v5317, 0
    %v5351 = vsel %vm431, %v5318, 0
    %v5354 = vsel %vm431, %v5319, 0
    %v5357 = vsel %vm431, %v5320, 0
    %v5360 = vsel %vm431, %v5321, 0
    %v5363 = vsel %vm431, %v5322, 0
    %v5366 = vsel %vm431, %v5323, 0
    %v5369 = vsel %vm431, %v5324, 0
    %v5372 = vsel %vm431, %v5325, 0
    %v5375 = vsel %vm431, %v5326, 0
    %v5378 = vsel %vm431, %v5327, 0
    %v5381 = vsel %vm431, %v5328, 0
    %v5384 = vsel %vm431, %v5329, 0
    %v5387 = vsel %vm431, %v5330, 0
    %v5390 = vsel %vm431, %v5331, 0
    %5392 = vmatprep.subr.mxu0 0.0
    %5393 = vmatpush1.msra.mxu0 0.0
    %5394 = vmatprep.subr.mxu0 0.0
    %5395 = vmatpush1.msra.mxu0 0.0
    %5396 = vmatprep.subr.mxu0 0.0
    %5397 = vmatpush1.msra.mxu0 0.0
    %5398 = vmatprep.subr.mxu0 0.0
    %5399 = vmatpush1.msra.mxu0 0.0
    %5400 = vmatprep.subr.mxu0 0.0
    %5401 = vmatpush1.msra.mxu0 0.0
    %5402 = vmatprep.subr.mxu0 0.0
    %5403 = vmatpush1.msra.mxu0 0.0
    %5404 = vmatprep.subr.mxu0 0.0
    %5405 = vmatpush1.msra.mxu0 0.0
    %5406 = vmatprep.subr.mxu0 0.0
    %5407 = vmatpush1.msra.mxu0 0.0
    %5408 = vmatprep.subr.mxu0 0.0
    %5409 = vmatpush1.msra.mxu0 0.0
    %5410 = vmatprep.subr.mxu0 0.0
    %5411 = vmatpush1.msra.mxu0 0.0
    %5412 = vmatprep.subr.mxu0 0.0
    %5413 = vmatpush1.msra.mxu0 0.0
    %5414 = vmatprep.subr.mxu0 0.0
    %5415 = vmatpush1.msra.mxu0 0.0
    %5416 = vmatprep.subr.mxu0 0.0
    %5417 = vmatpush1.msra.mxu0 %v5335
    %5418 = vmatprep.subr.mxu0 0.0
    %5419 = vmatpush1.msra.mxu0 %v5334
    %5420 = vmatprep.subr.mxu0 0.0
    %5421 = vmatpush1.msra.mxu0 %v5333
    %5422 = vmatprep.subr.mxu0 0.0
    %5423 = vmatpush1.msra.mxu0 %v5332
    %5424 = vmatprep.subr.mxu0 0.0
    %5425 = vmatpush2.msra.mxu0 0.0
    %5426 = vmatprep.subr.mxu0 0.0
    %5427 = vmatpush2.msra.mxu0 0.0
    %5428 = vmatprep.subr.mxu0 0.0
    %5429 = vmatpush2.msra.mxu0 0.0
    %5430 = vmatprep.subr.mxu0 0.0
    %5431 = vmatpush2.msra.mxu0 0.0
    %5432 = vmatprep.subr.mxu0 0.0
    %5433 = vmatpush2.msra.mxu0 0.0
    %5434 = vmatprep.subr.mxu0 0.0
    %5435 = vmatpush2.msra.mxu0 0.0
    %5436 = vmatprep.subr.mxu0 0.0
    %5437 = vmatpush2.msra.mxu0 0.0
    %5438 = vmatprep.subr.mxu0 0.0
    %5439 = vmatpush2.msra.mxu0 0.0
    %5440 = vmatprep.subr.mxu0 0.0
    %5441 = vmatpush2.msra.mxu0 0.0
    %5442 = vmatprep.subr.mxu0 0.0
    %5443 = vmatpush2.msra.mxu0 0.0
    %5444 = vmatprep.subr.mxu0 0.0
    %5445 = vmatpush2.msra.mxu0 0.0
    %5446 = vmatprep.subr.mxu0 0.0
    %5447 = vmatpush2.msra.mxu0 0.0
    %5448 = vmatprep.subr.mxu0 0.0
    %5449 = vmatpush2.msra.mxu0 0.0
    %5450 = vmatprep.subr.mxu0 0.0
    %5451 = vmatpush2.msra.mxu0 0.0
    %5452 = vmatprep.subr.mxu0 0.0
    %5453 = vmatpush2.msra.mxu0 0.0
    %5454 = vmatprep.subr.mxu0 0.0
    %5455 = vmatpush2.msra.mxu0 0.0
    %5456 = vmatprep.mubr.f32.mxu0 0.0
    %5457 = vmatmul.mubr.f32.gmra.mxu0 %v5342
    %v5458 = vpop.f32.mrf.mxu0
    %v5459 = vadd.f32 %v5340, %v5458
    %v5460 = vpop.f32.mrf.mxu0
    %5461 = vmatprep.mubr.f32.mxu0 0.0
    %5462 = vmatmul.mubr.f32.gmra.mxu0 %v5345
    %v5463 = vpop.f32.mrf.mxu0
    %v5464 = vadd.f32 %v5340, %v5463
    %v5465 = vpop.f32.mrf.mxu0
    %5466 = vmatprep.mubr.f32.mxu0 0.0
    %5467 = vmatmul.mubr.f32.gmra.mxu0 %v5348
    %v5468 = vpop.f32.mrf.mxu0
    %v5469 = vadd.f32 %v5340, %v5468
    %v5470 = vpop.f32.mrf.mxu0
    %5471 = vmatprep.mubr.f32.mxu0 0.0
    %5472 = vmatmul.mubr.f32.gmra.mxu0 %v5351
    %v5473 = vpop.f32.mrf.mxu0
    %v5474 = vadd.f32 %v5340, %v5473
    %v5475 = vpop.f32.mrf.mxu0
    %5476 = vmatprep.mubr.f32.mxu0 0.0
    %5477 = vmatmul.mubr.f32.gmra.mxu0 %v5354
    %v5478 = vpop.f32.mrf.mxu0
    %v5479 = vadd.f32 %v5340, %v5478
    %v5480 = vpop.f32.mrf.mxu0
    %5481 = vmatprep.mubr.f32.mxu0 0.0
    %5482 = vmatmul.mubr.f32.gmra.mxu0 %v5357
    %v5483 = vpop.f32.mrf.mxu0
    %v5484 = vadd.f32 %v5340, %v5483
    %v5485 = vpop.f32.mrf.mxu0
    %5486 = vmatprep.mubr.f32.mxu0 0.0
    %5487 = vmatmul.mubr.f32.gmra.mxu0 %v5360
    %v5488 = vpop.f32.mrf.mxu0
    %v5489 = vadd.f32 %v5340, %v5488
    %v5490 = vpop.f32.mrf.mxu0
    %5491 = vmatprep.mubr.f32.mxu0 0.0
    %5492 = vmatmul.mubr.f32.gmra.mxu0 %v5363
    %v5493 = vpop.f32.mrf.mxu0
    %v5494 = vadd.f32 %v5340, %v5493
    %v5495 = vpop.f32.mrf.mxu0
    %5496 = vmatprep.mubr.f32.mxu0 0.0
    %5497 = vmatmul.mubr.f32.gmra.mxu0 %v5366
    %v5498 = vpop.f32.mrf.mxu0
    %v5499 = vadd.f32 %v5340, %v5498
    %v5500 = vpop.f32.mrf.mxu0
    %5501 = vmatprep.mubr.f32.mxu0 0.0
    %5502 = vmatmul.mubr.f32.gmra.mxu0 %v5369
    %v5503 = vpop.f32.mrf.mxu0
    %v5504 = vadd.f32 %v5340, %v5503
    %v5505 = vpop.f32.mrf.mxu0
    %5506 = vmatprep.mubr.f32.mxu0 0.0
    %5507 = vmatmul.mubr.f32.gmra.mxu0 %v5372
    %v5508 = vpop.f32.mrf.mxu0
    %v5509 = vadd.f32 %v5340, %v5508
    %v5510 = vpop.f32.mrf.mxu0
    %5511 = vmatprep.mubr.f32.mxu0 0.0
    %5512 = vmatmul.mubr.f32.gmra.mxu0 %v5375
    %v5513 = vpop.f32.mrf.mxu0
    %v5514 = vadd.f32 %v5340, %v5513
    %v5515 = vpop.f32.mrf.mxu0
    %5516 = vmatprep.mubr.f32.mxu0 0.0
    %5517 = vmatmul.mubr.f32.gmra.mxu0 %v5378
    %v5518 = vpop.f32.mrf.mxu0
    %v5519 = vadd.f32 %v5340, %v5518
    %v5520 = vpop.f32.mrf.mxu0
    %5521 = vmatprep.mubr.f32.mxu0 0.0
    %5522 = vmatmul.mubr.f32.gmra.mxu0 %v5381
    %v5523 = vpop.f32.mrf.mxu0
    %v5524 = vadd.f32 %v5340, %v5523
    %v5525 = vpop.f32.mrf.mxu0
    %5526 = vmatprep.mubr.f32.mxu0 0.0
    %5527 = vmatmul.mubr.f32.gmra.mxu0 %v5384
    %v5528 = vpop.f32.mrf.mxu0
    %v5529 = vadd.f32 %v5340, %v5528
    %v5530 = vpop.f32.mrf.mxu0
    %5531 = vmatprep.mubr.f32.mxu0 0.0
    %5532 = vmatmul.mubr.f32.gmra.mxu0 %v5387
    %v5533 = vpop.f32.mrf.mxu0
    %v5534 = vadd.f32 %v5340, %v5533
    %v5535 = vpop.f32.mrf.mxu0
    %5536 = vmatprep.mubr.f32.mxu0 0.0
    %5537 = vmatmul.mubr.f32.gmra.mxu0 %v5390
    %v5538 = vpop.f32.mrf.mxu0
    %v5539 = vadd.f32 %v5340, %v5538
    %v5540 = vpop.f32.mrf.mxu0
    %5541 = vdwg.mxu0
    %v5542 = vmul.f32 %v5459, 0.5
    %v5543 = vmul.f32 %v5464, 0.5
    %v5544 = vmul.f32 %v5469, 0.5
    %v5545 = vmul.f32 %v5474, 0.5
    %v5546 = vmul.f32 %v5479, 0.5
    %v5547 = vmul.f32 %v5484, 0.5
    %v5548 = vmul.f32 %v5489, 0.5
    %v5549 = vmul.f32 %v5494, 0.5
    %v5550 = vmul.f32 %v5499, 0.5
    %v5551 = vmul.f32 %v5504, 0.5
    %v5552 = vmul.f32 %v5509, 0.5
    %v5553 = vmul.f32 %v5514, 0.5
    %v5554 = vmul.f32 %v5519, 0.5
    %v5555 = vmul.f32 %v5524, 0.5
    %v5556 = vmul.f32 %v5529, 0.5
    %v5557 = vmul.f32 %v5534, 0.5
    %v5558 = vmul.f32 %v5539, 0.5
    %v5559 = vmul.f32 %v5459, 0.70710677
    %v5560 = vmul.f32 %v5464, 0.70710677
    %v5561 = vmul.f32 %v5469, 0.70710677
    %v5562 = vmul.f32 %v5474, 0.70710677
    %v5563 = vmul.f32 %v5479, 0.70710677
    %v5564 = vmul.f32 %v5484, 0.70710677
    %v5565 = vmul.f32 %v5489, 0.70710677
    %v5566 = vmul.f32 %v5494, 0.70710677
    %v5567 = vmul.f32 %v5499, 0.70710677
    %v5568 = vmul.f32 %v5504, 0.70710677
    %v5569 = vmul.f32 %v5509, 0.70710677
    %v5570 = vmul.f32 %v5514, 0.70710677
    %v5571 = vmul.f32 %v5519, 0.70710677
    %v5572 = vmul.f32 %v5524, 0.70710677
    %v5573 = vmul.f32 %v5529, 0.70710677
    %v5574 = vmul.f32 %v5534, 0.70710677
    %v5575 = vmul.f32 %v5539, 0.70710677
    %v5576 = vand.u32 2147483647, %v5559
    %v5577 = vand.u32 2147483647, %v5560
    %v5578 = vand.u32 2147483647, %v5561
    %v5579 = vand.u32 2147483647, %v5562
    %v5580 = vand.u32 2147483647, %v5563
    %v5581 = vand.u32 2147483647, %v5564
    %v5582 = vand.u32 2147483647, %v5565
    %v5583 = vand.u32 2147483647, %v5566
    %v5584 = vand.u32 2147483647, %v5567
    %v5585 = vand.u32 2147483647, %v5568
    %v5586 = vand.u32 2147483647, %v5569
    %v5587 = vand.u32 2147483647, %v5570
    %v5588 = vand.u32 2147483647, %v5571
    %v5589 = vand.u32 2147483647, %v5572
    %v5590 = vand.u32 2147483647, %v5573
    %v5591 = vand.u32 2147483647, %v5574
    %v5592 = vand.u32 2147483647, %v5575
    %v5593 = vmul.f32 %v5576, 0.3275911
    %v5594 = vmul.f32 %v5577, 0.3275911
    %v5595 = vmul.f32 %v5578, 0.3275911
    %v5596 = vmul.f32 %v5579, 0.3275911
    %v5597 = vmul.f32 %v5580, 0.3275911
    %v5598 = vmul.f32 %v5581, 0.3275911
    %v5599 = vmul.f32 %v5582, 0.3275911
    %v5600 = vmul.f32 %v5583, 0.3275911
    %v5601 = vmul.f32 %v5584, 0.3275911
    %v5602 = vmul.f32 %v5585, 0.3275911
    %v5603 = vmul.f32 %v5586, 0.3275911
    %v5604 = vmul.f32 %v5587, 0.3275911
    %v5605 = vmul.f32 %v5588, 0.3275911
    %v5606 = vmul.f32 %v5589, 0.3275911
    %v5607 = vmul.f32 %v5590, 0.3275911
    %v5608 = vmul.f32 %v5591, 0.3275911
    %v5609 = vmul.f32 %v5592, 0.3275911
    %v5610 = vadd.f32 %v5593, 1.0
    %v5611 = vadd.f32 %v5594, 1.0
    %v5612 = vadd.f32 %v5595, 1.0
    %v5613 = vadd.f32 %v5596, 1.0
    %v5614 = vadd.f32 %v5597, 1.0
    %v5615 = vadd.f32 %v5598, 1.0
    %v5616 = vadd.f32 %v5599, 1.0
    %v5617 = vadd.f32 %v5600, 1.0
    %v5618 = vadd.f32 %v5601, 1.0
    %v5619 = vadd.f32 %v5602, 1.0
    %v5620 = vadd.f32 %v5603, 1.0
    %v5621 = vadd.f32 %v5604, 1.0
    %v5622 = vadd.f32 %v5605, 1.0
    %v5623 = vadd.f32 %v5606, 1.0
    %v5624 = vadd.f32 %v5607, 1.0
    %v5625 = vadd.f32 %v5608, 1.0
    %v5626 = vadd.f32 %v5609, 1.0
    %v5627 = vrcp.pop %v5610
    %v5628 = vmul.f32 1.0, %v5627
    %v5629 = vrcp.pop %v5611
    %v5630 = vmul.f32 1.0, %v5629
    %v5631 = vrcp.pop %v5612
    %v5632 = vmul.f32 1.0, %v5631
    %v5633 = vrcp.pop %v5613
    %v5634 = vmul.f32 1.0, %v5633
    %v5635 = vrcp.pop %v5614
    %v5636 = vmul.f32 1.0, %v5635
    %v5637 = vrcp.pop %v5615
    %v5638 = vmul.f32 1.0, %v5637
    %v5639 = vrcp.pop %v5616
    %v5640 = vmul.f32 1.0, %v5639
    %v5641 = vrcp.pop %v5617
    %v5642 = vmul.f32 1.0, %v5641
    %v5643 = vrcp.pop %v5618
    %v5644 = vmul.f32 1.0, %v5643
    %v5645 = vrcp.pop %v5619
    %v5646 = vmul.f32 1.0, %v5645
    %v5647 = vrcp.pop %v5620
    %v5648 = vmul.f32 1.0, %v5647
    %v5649 = vrcp.pop %v5621
    %v5650 = vmul.f32 1.0, %v5649
    %v5651 = vrcp.pop %v5622
    %v5652 = vmul.f32 1.0, %v5651
    %v5653 = vrcp.pop %v5623
    %v5654 = vmul.f32 1.0, %v5653
    %v5655 = vrcp.pop %v5624
    %v5656 = vmul.f32 1.0, %v5655
    %v5657 = vrcp.pop %v5625
    %v5658 = vmul.f32 1.0, %v5657
    %v5659 = vrcp.pop %v5626
    %v5660 = vmul.f32 1.0, %v5659
    %v5661 = vmul.f32 %v5628, 1.0614054
    %v5662 = vmul.f32 %v5630, 1.0614054
    %v5663 = vmul.f32 %v5632, 1.0614054
    %v5664 = vmul.f32 %v5634, 1.0614054
    %v5665 = vmul.f32 %v5636, 1.0614054
    %v5666 = vmul.f32 %v5638, 1.0614054
    %v5667 = vmul.f32 %v5640, 1.0614054
    %v5668 = vmul.f32 %v5642, 1.0614054
    %v5669 = vmul.f32 %v5644, 1.0614054
    %v5670 = vmul.f32 %v5646, 1.0614054
    %v5671 = vmul.f32 %v5648, 1.0614054
    %v5672 = vmul.f32 %v5650, 1.0614054
    %v5673 = vmul.f32 %v5652, 1.0614054
    %v5674 = vmul.f32 %v5654, 1.0614054
    %v5675 = vmul.f32 %v5656, 1.0614054
    %v5676 = vmul.f32 %v5658, 1.0614054
    %v5677 = vmul.f32 %v5660, 1.0614054
    %v5678 = vadd.f32 %v5661, -1.4531521
    %v5679 = vadd.f32 %v5662, -1.4531521
    %v5680 = vadd.f32 %v5663, -1.4531521
    %v5681 = vadd.f32 %v5664, -1.4531521
    %v5682 = vadd.f32 %v5665, -1.4531521
    %v5683 = vadd.f32 %v5666, -1.4531521
    %v5684 = vadd.f32 %v5667, -1.4531521
    %v5685 = vadd.f32 %v5668, -1.4531521
    %v5686 = vadd.f32 %v5669, -1.4531521
    %v5687 = vadd.f32 %v5670, -1.4531521
    %v5688 = vadd.f32 %v5671, -1.4531521
    %v5689 = vadd.f32 %v5672, -1.4531521
    %v5690 = vadd.f32 %v5673, -1.4531521
    %v5691 = vadd.f32 %v5674, -1.4531521
    %v5692 = vadd.f32 %v5675, -1.4531521
    %v5693 = vadd.f32 %v5676, -1.4531521
    %v5694 = vadd.f32 %v5677, -1.4531521
    %v5695 = vmul.f32 %v5678, %v5628
    %v5696 = vmul.f32 %v5679, %v5630
    %v5697 = vmul.f32 %v5680, %v5632
    %v5698 = vmul.f32 %v5681, %v5634
    %v5699 = vmul.f32 %v5682, %v5636
    %v5700 = vmul.f32 %v5683, %v5638
    %v5701 = vmul.f32 %v5684, %v5640
    %v5702 = vmul.f32 %v5685, %v5642
    %v5703 = vmul.f32 %v5686, %v5644
    %v5704 = vmul.f32 %v5687, %v5646
    %v5705 = vmul.f32 %v5688, %v5648
    %v5706 = vmul.f32 %v5689, %v5650
    %v5707 = vmul.f32 %v5690, %v5652
    %v5708 = vmul.f32 %v5691, %v5654
    %v5709 = vmul.f32 %v5692, %v5656
    %v5710 = vmul.f32 %v5693, %v5658
    %v5711 = vmul.f32 %v5694, %v5660
    %v5712 = vadd.f32 %v5695, 1.4214138
    %v5713 = vadd.f32 %v5696, 1.4214138
    %v5714 = vadd.f32 %v5697, 1.4214138
    %v5715 = vadd.f32 %v5698, 1.4214138
    %v5716 = vadd.f32 %v5699, 1.4214138
    %v5717 = vadd.f32 %v5700, 1.4214138
    %v5718 = vadd.f32 %v5701, 1.4214138
    %v5719 = vadd.f32 %v5702, 1.4214138
    %v5720 = vadd.f32 %v5703, 1.4214138
    %v5721 = vadd.f32 %v5704, 1.4214138
    %v5722 = vadd.f32 %v5705, 1.4214138
    %v5723 = vadd.f32 %v5706, 1.4214138
    %v5724 = vadd.f32 %v5707, 1.4214138
    %v5725 = vadd.f32 %v5708, 1.4214138
    %v5726 = vadd.f32 %v5709, 1.4214138
    %v5727 = vadd.f32 %v5710, 1.4214138
    %v5728 = vadd.f32 %v5711, 1.4214138
    %v5729 = vmul.f32 %v5712, %v5628
    %v5730 = vmul.f32 %v5713, %v5630
    %v5731 = vmul.f32 %v5714, %v5632
    %v5732 = vmul.f32 %v5715, %v5634
    %v5733 = vmul.f32 %v5716, %v5636
    %v5734 = vmul.f32 %v5717, %v5638
    %v5735 = vmul.f32 %v5718, %v5640
    %v5736 = vmul.f32 %v5719, %v5642
    %v5737 = vmul.f32 %v5720, %v5644
    %v5738 = vmul.f32 %v5721, %v5646
    %v5739 = vmul.f32 %v5722, %v5648
    %v5740 = vmul.f32 %v5723, %v5650
    %v5741 = vmul.f32 %v5724, %v5652
    %v5742 = vmul.f32 %v5725, %v5654
    %v5743 = vmul.f32 %v5726, %v5656
    %v5744 = vmul.f32 %v5727, %v5658
    %v5745 = vmul.f32 %v5728, %v5660
    %v5746 = vadd.f32 %v5729, -0.28449672
    %v5747 = vadd.f32 %v5730, -0.28449672
    %v5748 = vadd.f32 %v5731, -0.28449672
    %v5749 = vadd.f32 %v5732, -0.28449672
    %v5750 = vadd.f32 %v5733, -0.28449672
    %v5751 = vadd.f32 %v5734, -0.28449672
    %v5752 = vadd.f32 %v5735, -0.28449672
    %v5753 = vadd.f32 %v5736, -0.28449672
    %v5754 = vadd.f32 %v5737, -0.28449672
    %v5755 = vadd.f32 %v5738, -0.28449672
    %v5756 = vadd.f32 %v5739, -0.28449672
    %v5757 = vadd.f32 %v5740, -0.28449672
    %v5758 = vadd.f32 %v5741, -0.28449672
    %v5759 = vadd.f32 %v5742, -0.28449672
    %v5760 = vadd.f32 %v5743, -0.28449672
    %v5761 = vadd.f32 %v5744, -0.28449672
    %v5762 = vadd.f32 %v5745, -0.28449672
    %v5763 = vmul.f32 %v5746, %v5628
    %v5764 = vmul.f32 %v5747, %v5630
    %v5765 = vmul.f32 %v5748, %v5632
    %v5766 = vmul.f32 %v5749, %v5634
    %v5767 = vmul.f32 %v5750, %v5636
    %v5768 = vmul.f32 %v5751, %v5638
    %v5769 = vmul.f32 %v5752, %v5640
    %v5770 = vmul.f32 %v5753, %v5642
    %v5771 = vmul.f32 %v5754, %v5644
    %v5772 = vmul.f32 %v5755, %v5646
    %v5773 = vmul.f32 %v5756, %v5648
    %v5774 = vmul.f32 %v5757, %v5650
    %v5775 = vmul.f32 %v5758, %v5652
    %v5776 = vmul.f32 %v5759, %v5654
    %v5777 = vmul.f32 %v5760, %v5656
    %v5778 = vmul.f32 %v5761, %v5658
    %v5779 = vmul.f32 %v5762, %v5660
    %v5780 = vadd.f32 %v5763, 0.2548296
    %v5781 = vadd.f32 %v5764, 0.2548296
    %v5782 = vadd.f32 %v5765, 0.2548296
    %v5783 = vadd.f32 %v5766, 0.2548296
    %v5784 = vadd.f32 %v5767, 0.2548296
    %v5785 = vadd.f32 %v5768, 0.2548296
    %v5786 = vadd.f32 %v5769, 0.2548296
    %v5787 = vadd.f32 %v5770, 0.2548296
    %v5788 = vadd.f32 %v5771, 0.2548296
    %v5789 = vadd.f32 %v5772, 0.2548296
    %v5790 = vadd.f32 %v5773, 0.2548296
    %v5791 = vadd.f32 %v5774, 0.2548296
    %v5792 = vadd.f32 %v5775, 0.2548296
    %v5793 = vadd.f32 %v5776, 0.2548296
    %v5794 = vadd.f32 %v5777, 0.2548296
    %v5795 = vadd.f32 %v5778, 0.2548296
    %v5796 = vadd.f32 %v5779, 0.2548296
    %v5797 = vmul.f32 %v5780, %v5628
    %v5798 = vmul.f32 %v5781, %v5630
    %v5799 = vmul.f32 %v5782, %v5632
    %v5800 = vmul.f32 %v5783, %v5634
    %v5801 = vmul.f32 %v5784, %v5636
    %v5802 = vmul.f32 %v5785, %v5638
    %v5803 = vmul.f32 %v5786, %v5640
    %v5804 = vmul.f32 %v5787, %v5642
    %v5805 = vmul.f32 %v5788, %v5644
    %v5806 = vmul.f32 %v5789, %v5646
    %v5807 = vmul.f32 %v5790, %v5648
    %v5808 = vmul.f32 %v5791, %v5650
    %v5809 = vmul.f32 %v5792, %v5652
    %v5810 = vmul.f32 %v5793, %v5654
    %v5811 = vmul.f32 %v5794, %v5656
    %v5812 = vmul.f32 %v5795, %v5658
    %v5813 = vmul.f32 %v5796, %v5660
    %v5814 = vsub.f32 0.0, %v5576
    %v5815 = vsub.f32 0.0, %v5577
    %v5816 = vsub.f32 0.0, %v5578
    %v5817 = vsub.f32 0.0, %v5579
    %v5818 = vsub.f32 0.0, %v5580
    %v5819 = vsub.f32 0.0, %v5581
    %v5820 = vsub.f32 0.0, %v5582
    %v5821 = vsub.f32 0.0, %v5583
    %v5822 = vsub.f32 0.0, %v5584
    %v5823 = vsub.f32 0.0, %v5585
    %v5824 = vsub.f32 0.0, %v5586
    %v5825 = vsub.f32 0.0, %v5587
    %v5826 = vsub.f32 0.0, %v5588
    %v5827 = vsub.f32 0.0, %v5589
    %v5828 = vsub.f32 0.0, %v5590
    %v5829 = vsub.f32 0.0, %v5591
    %v5830 = vsub.f32 0.0, %v5592
    %v5831 = vmul.f32 %v5814, %v5576
    %v5832 = vmul.f32 %v5815, %v5577
    %v5833 = vmul.f32 %v5816, %v5578
    %v5834 = vmul.f32 %v5817, %v5579
    %v5835 = vmul.f32 %v5818, %v5580
    %v5836 = vmul.f32 %v5819, %v5581
    %v5837 = vmul.f32 %v5820, %v5582
    %v5838 = vmul.f32 %v5821, %v5583
    %v5839 = vmul.f32 %v5822, %v5584
    %v5840 = vmul.f32 %v5823, %v5585
    %v5841 = vmul.f32 %v5824, %v5586
    %v5842 = vmul.f32 %v5825, %v5587
    %v5843 = vmul.f32 %v5826, %v5588
    %v5844 = vmul.f32 %v5827, %v5589
    %v5845 = vmul.f32 %v5828, %v5590
    %v5846 = vmul.f32 %v5829, %v5591
    %v5847 = vmul.f32 %v5830, %v5592
    %v5848 = vmul.f32 %v5831, 1.442695
    %v5849 = vpow.pop %v5848
    %v5850 = vmul.f32 %v5832, 1.442695
    %v5851 = vpow.pop %v5850
    %v5852 = vmul.f32 %v5833, 1.442695
    %v5853 = vpow.pop %v5852
    %v5854 = vmul.f32 %v5834, 1.442695
    %v5855 = vpow.pop %v5854
    %v5856 = vmul.f32 %v5835, 1.442695
    %v5857 = vpow.pop %v5856
    %v5858 = vmul.f32 %v5836, 1.442695
    %v5859 = vpow.pop %v5858
    %v5860 = vmul.f32 %v5837, 1.442695
    %v5861 = vpow.pop %v5860
    %v5862 = vmul.f32 %v5838, 1.442695
    %v5863 = vpow.pop %v5862
    %v5864 = vmul.f32 %v5839, 1.442695
    %v5865 = vpow.pop %v5864
    %v5866 = vmul.f32 %v5840, 1.442695
    %v5867 = vpow.pop %v5866
    %v5868 = vmul.f32 %v5841, 1.442695
    %v5869 = vpow.pop %v5868
    %v5870 = vmul.f32 %v5842, 1.442695
    %v5871 = vpow.pop %v5870
    %v5872 = vmul.f32 %v5843, 1.442695
    %v5873 = vpow.pop %v5872
    %v5874 = vmul.f32 %v5844, 1.442695
    %v5875 = vpow.pop %v5874
    %v5876 = vmul.f32 %v5845, 1.442695
    %v5877 = vpow.pop %v5876
    %v5878 = vmul.f32 %v5846, 1.442695
    %v5879 = vpow.pop %v5878
    %v5880 = vmul.f32 %v5847, 1.442695
    %v5881 = vpow.pop %v5880
    %v5882 = vmul.f32 %v5797, %v5849
    %v5883 = vmul.f32 %v5798, %v5851
    %v5884 = vmul.f32 %v5799, %v5853
    %v5885 = vmul.f32 %v5800, %v5855
    %v5886 = vmul.f32 %v5801, %v5857
    %v5887 = vmul.f32 %v5802, %v5859
    %v5888 = vmul.f32 %v5803, %v5861
    %v5889 = vmul.f32 %v5804, %v5863
    %v5890 = vmul.f32 %v5805, %v5865
    %v5891 = vmul.f32 %v5806, %v5867
    %v5892 = vmul.f32 %v5807, %v5869
    %v5893 = vmul.f32 %v5808, %v5871
    %v5894 = vmul.f32 %v5809, %v5873
    %v5895 = vmul.f32 %v5810, %v5875
    %v5896 = vmul.f32 %v5811, %v5877
    %v5897 = vmul.f32 %v5812, %v5879
    %v5898 = vmul.f32 %v5813, %v5881
    %v5899 = vsub.f32 1.0, %v5882
    %v5900 = vsub.f32 1.0, %v5883
    %v5901 = vsub.f32 1.0, %v5884
    %v5902 = vsub.f32 1.0, %v5885
    %v5903 = vsub.f32 1.0, %v5886
    %v5904 = vsub.f32 1.0, %v5887
    %v5905 = vsub.f32 1.0, %v5888
    %v5906 = vsub.f32 1.0, %v5889
    %v5907 = vsub.f32 1.0, %v5890
    %v5908 = vsub.f32 1.0, %v5891
    %v5909 = vsub.f32 1.0, %v5892
    %v5910 = vsub.f32 1.0, %v5893
    %v5911 = vsub.f32 1.0, %v5894
    %v5912 = vsub.f32 1.0, %v5895
    %v5913 = vsub.f32 1.0, %v5896
    %v5914 = vsub.f32 1.0, %v5897
    %v5915 = vsub.f32 1.0, %v5898
    %vm5916 = vcmp.ge.f32.partialorder %v5559, 0.0
    %vm5917 = vcmp.ge.f32.partialorder %v5560, 0.0
    %vm5918 = vcmp.ge.f32.partialorder %v5561, 0.0
    %vm5919 = vcmp.ge.f32.partialorder %v5562, 0.0
    %vm5920 = vcmp.ge.f32.partialorder %v5563, 0.0
    %vm5921 = vcmp.ge.f32.partialorder %v5564, 0.0
    %vm5922 = vcmp.ge.f32.partialorder %v5565, 0.0
    %vm5923 = vcmp.ge.f32.partialorder %v5566, 0.0
    %vm5924 = vcmp.ge.f32.partialorder %v5567, 0.0
    %vm5925 = vcmp.ge.f32.partialorder %v5568, 0.0
    %vm5926 = vcmp.ge.f32.partialorder %v5569, 0.0
    %vm5927 = vcmp.ge.f32.partialorder %v5570, 0.0
    %vm5928 = vcmp.ge.f32.partialorder %v5571, 0.0
    %vm5929 = vcmp.ge.f32.partialorder %v5572, 0.0
    %vm5930 = vcmp.ge.f32.partialorder %v5573, 0.0
    %vm5931 = vcmp.ge.f32.partialorder %v5574, 0.0
    %vm5932 = vcmp.ge.f32.partialorder %v5575, 0.0
    %v5933 = vsub.f32 0.0, %v5899
    %v5934 = vsub.f32 0.0, %v5900
    %v5935 = vsub.f32 0.0, %v5901
    %v5936 = vsub.f32 0.0, %v5902
    %v5937 = vsub.f32 0.0, %v5903
    %v5938 = vsub.f32 0.0, %v5904
    %v5939 = vsub.f32 0.0, %v5905
    %v5940 = vsub.f32 0.0, %v5906
    %v5941 = vsub.f32 0.0, %v5907
    %v5942 = vsub.f32 0.0, %v5908
    %v5943 = vsub.f32 0.0, %v5909
    %v5944 = vsub.f32 0.0, %v5910
    %v5945 = vsub.f32 0.0, %v5911
    %v5946 = vsub.f32 0.0, %v5912
    %v5947 = vsub.f32 0.0, %v5913
    %v5948 = vsub.f32 0.0, %v5914
    %v5949 = vsub.f32 0.0, %v5915
    %v5950 = vsel %vm5916, %v5899, %v5933
    %v5951 = vsel %vm5917, %v5900, %v5934
    %v5952 = vsel %vm5918, %v5901, %v5935
    %v5953 = vsel %vm5919, %v5902, %v5936
    %v5954 = vsel %vm5920, %v5903, %v5937
    %v5955 = vsel %vm5921, %v5904, %v5938
    %v5956 = vsel %vm5922, %v5905, %v5939
    %v5957 = vsel %vm5923, %v5906, %v5940
    %v5958 = vsel %vm5924, %v5907, %v5941
    %v5959 = vsel %vm5925, %v5908, %v5942
    %v5960 = vsel %vm5926, %v5909, %v5943
    %v5961 = vsel %vm5927, %v5910, %v5944
    %v5962 = vsel %vm5928, %v5911, %v5945
    %v5963 = vsel %vm5929, %v5912, %v5946
    %v5964 = vsel %vm5930, %v5913, %v5947
    %v5965 = vsel %vm5931, %v5914, %v5948
    %v5966 = vsel %vm5932, %v5915, %v5949
    %v5967 = vadd.f32 %v5950, 1.0
    %v5968 = vadd.f32 %v5951, 1.0
    %v5969 = vadd.f32 %v5952, 1.0
    %v5970 = vadd.f32 %v5953, 1.0
    %v5971 = vadd.f32 %v5954, 1.0
    %v5972 = vadd.f32 %v5955, 1.0
    %v5973 = vadd.f32 %v5956, 1.0
    %v5974 = vadd.f32 %v5957, 1.0
    %v5975 = vadd.f32 %v5958, 1.0
    %v5976 = vadd.f32 %v5959, 1.0
    %v5977 = vadd.f32 %v5960, 1.0
    %v5978 = vadd.f32 %v5961, 1.0
    %v5979 = vadd.f32 %v5962, 1.0
    %v5980 = vadd.f32 %v5963, 1.0
    %v5981 = vadd.f32 %v5964, 1.0
    %v5982 = vadd.f32 %v5965, 1.0
    %v5983 = vadd.f32 %v5966, 1.0
    %v5984 = vmul.f32 %v5542, %v5967
    %v5985 = vmul.f32 %v5543, %v5968
    %v5986 = vmul.f32 %v5544, %v5969
    %v5987 = vmul.f32 %v5545, %v5970
    %v5988 = vmul.f32 %v5546, %v5971
    %v5989 = vmul.f32 %v5547, %v5972
    %v5990 = vmul.f32 %v5548, %v5973
    %v5991 = vmul.f32 %v5549, %v5974
    %v5992 = vmul.f32 %v5550, %v5975
    %v5993 = vmul.f32 %v5551, %v5976
    %v5994 = vmul.f32 %v5552, %v5977
    %v5995 = vmul.f32 %v5553, %v5978
    %v5996 = vmul.f32 %v5554, %v5979
    %v5997 = vmul.f32 %v5555, %v5980
    %v5998 = vmul.f32 %v5556, %v5981
    %v5999 = vmul.f32 %v5557, %v5982
    %v6000 = vmul.f32 %v5558, %v5983
    %v6001 = vld [vmem:[%s15] sm:$0xff]
    %v6002 = vld [vmem:[%s15 + $0x8] sm:$0xff]
    %v6003 = vld [vmem:[%s15 + $0x10] sm:$0xff]
    %v6004 = vld [vmem:[%s15 + $0x18] sm:$0xff]
    %v6005 = vld [vmem:[%s15 + $0x20] sm:$0xff]
    %v6006 = vld [vmem:[%s15 + $0x28] sm:$0xff]
    %v6007 = vld [vmem:[%s15 + $0x30] sm:$0xff]
    %v6008 = vld [vmem:[%s15 + $0x38] sm:$0xff]
    %v6009 = vld [vmem:[%s16] sm:$0x1]
    %v6010 = vlaneseq
    %v6011 = vshrl.u32 %v6010, 7
    %v6012 = vsub.s32 0, %v6011
    %v6013 = vrot.slane %v6009, %v6012
    %vm6014 = vcmask 523264
    %v6016 = vsel %vm6014, %v5984, 0
    %v6019 = vsel %vm6014, %v5985, 0
    %v6022 = vsel %vm6014, %v5986, 0
    %v6025 = vsel %vm6014, %v5987, 0
    %v6028 = vsel %vm6014, %v5988, 0
    %v6031 = vsel %vm6014, %v5989, 0
    %v6034 = vsel %vm6014, %v5990, 0
    %v6037 = vsel %vm6014, %v5991, 0
    %v6040 = vsel %vm6014, %v5992, 0
    %v6043 = vsel %vm6014, %v5993, 0
    %v6046 = vsel %vm6014, %v5994, 0
    %v6049 = vsel %vm6014, %v5995, 0
    %v6052 = vsel %vm6014, %v5996, 0
    %v6055 = vsel %vm6014, %v5997, 0
    %v6058 = vsel %vm6014, %v5998, 0
    %v6061 = vsel %vm6014, %v5999, 0
    %v6064 = vsel %vm6014, %v6000, 0
    %6066 = vmatprep.subr.mxu0 0.0
    %6067 = vmatpush1.msra.mxu0 0.0
    %6068 = vmatprep.subr.mxu0 0.0
    %6069 = vmatpush1.msra.mxu0 0.0
    %6070 = vmatprep.subr.mxu0 0.0
    %6071 = vmatpush1.msra.mxu0 0.0
    %6072 = vmatprep.subr.mxu0 0.0
    %6073 = vmatpush1.msra.mxu0 0.0
    %6074 = vmatprep.subr.mxu0 0.0
    %6075 = vmatpush1.msra.mxu0 0.0
    %6076 = vmatprep.subr.mxu0 0.0
    %6077 = vmatpush1.msra.mxu0 0.0
    %6078 = vmatprep.subr.mxu0 0.0
    %6079 = vmatpush1.msra.mxu0 0.0
    %6080 = vmatprep.subr.mxu0 0.0
    %6081 = vmatpush1.msra.mxu0 0.0
    %6082 = vmatprep.subr.mxu0 0.0
    %6083 = vmatpush1.msra.mxu0 %v6008
    %6084 = vmatprep.subr.mxu0 0.0
    %6085 = vmatpush1.msra.mxu0 %v6007
    %6086 = vmatprep.subr.mxu0 0.0
    %6087 = vmatpush1.msra.mxu0 %v6006
    %6088 = vmatprep.subr.mxu0 0.0
    %6089 = vmatpush1.msra.mxu0 %v6005
    %6090 = vmatprep.subr.mxu0 0.0
    %6091 = vmatpush1.msra.mxu0 %v6004
    %6092 = vmatprep.subr.mxu0 0.0
    %6093 = vmatpush1.msra.mxu0 %v6003
    %6094 = vmatprep.subr.mxu0 0.0
    %6095 = vmatpush1.msra.mxu0 %v6002
    %6096 = vmatprep.subr.mxu0 0.0
    %6097 = vmatpush1.msra.mxu0 %v6001
    %6098 = vmatprep.subr.mxu0 0.0
    %6099 = vmatpush2.msra.mxu0 0.0
    %6100 = vmatprep.subr.mxu0 0.0
    %6101 = vmatpush2.msra.mxu0 0.0
    %6102 = vmatprep.subr.mxu0 0.0
    %6103 = vmatpush2.msra.mxu0 0.0
    %6104 = vmatprep.subr.mxu0 0.0
    %6105 = vmatpush2.msra.mxu0 0.0
    %6106 = vmatprep.subr.mxu0 0.0
    %6107 = vmatpush2.msra.mxu0 0.0
    %6108 = vmatprep.subr.mxu0 0.0
    %6109 = vmatpush2.msra.mxu0 0.0
    %6110 = vmatprep.subr.mxu0 0.0
    %6111 = vmatpush2.msra.mxu0 0.0
    %6112 = vmatprep.subr.mxu0 0.0
    %6113 = vmatpush2.msra.mxu0 0.0
    %6114 = vmatprep.subr.mxu0 0.0
    %6115 = vmatpush2.msra.mxu0 0.0
    %6116 = vmatprep.subr.mxu0 0.0
    %6117 = vmatpush2.msra.mxu0 0.0
    %6118 = vmatprep.subr.mxu0 0.0
    %6119 = vmatpush2.msra.mxu0 0.0
    %6120 = vmatprep.subr.mxu0 0.0
    %6121 = vmatpush2.msra.mxu0 0.0
    %6122 = vmatprep.subr.mxu0 0.0
    %6123 = vmatpush2.msra.mxu0 0.0
    %6124 = vmatprep.subr.mxu0 0.0
    %6125 = vmatpush2.msra.mxu0 0.0
    %6126 = vmatprep.subr.mxu0 0.0
    %6127 = vmatpush2.msra.mxu0 0.0
    %6128 = vmatprep.subr.mxu0 0.0
    %6129 = vmatpush2.msra.mxu0 0.0
    %6130 = vmatprep.mubr.f32.mxu0 0.0
    %6131 = vmatmul.mubr.f32.gmra.mxu0 %v6016
    %v6132 = vpop.f32.mrf.mxu0
    %v6133 = vadd.f32 %v6013, %v6132
    %v6134 = vpop.f32.mrf.mxu0
    %6135 = vmatprep.mubr.f32.mxu0 0.0
    %6136 = vmatmul.mubr.f32.gmra.mxu0 %v6019
    %v6137 = vpop.f32.mrf.mxu0
    %v6138 = vadd.f32 %v6013, %v6137
    %v6139 = vpop.f32.mrf.mxu0
    %6140 = vmatprep.mubr.f32.mxu0 0.0
    %6141 = vmatmul.mubr.f32.gmra.mxu0 %v6022
    %v6142 = vpop.f32.mrf.mxu0
    %v6143 = vadd.f32 %v6013, %v6142
    %v6144 = vpop.f32.mrf.mxu0
    %6145 = vmatprep.mubr.f32.mxu0 0.0
    %6146 = vmatmul.mubr.f32.gmra.mxu0 %v6025
    %v6147 = vpop.f32.mrf.mxu0
    %v6148 = vadd.f32 %v6013, %v6147
    %v6149 = vpop.f32.mrf.mxu0
    %6150 = vmatprep.mubr.f32.mxu0 0.0
    %6151 = vmatmul.mubr.f32.gmra.mxu0 %v6028
    %v6152 = vpop.f32.mrf.mxu0
    %v6153 = vadd.f32 %v6013, %v6152
    %v6154 = vpop.f32.mrf.mxu0
    %6155 = vmatprep.mubr.f32.mxu0 0.0
    %6156 = vmatmul.mubr.f32.gmra.mxu0 %v6031
    %v6157 = vpop.f32.mrf.mxu0
    %v6158 = vadd.f32 %v6013, %v6157
    %v6159 = vpop.f32.mrf.mxu0
    %6160 = vmatprep.mubr.f32.mxu0 0.0
    %6161 = vmatmul.mubr.f32.gmra.mxu0 %v6034
    %v6162 = vpop.f32.mrf.mxu0
    %v6163 = vadd.f32 %v6013, %v6162
    %v6164 = vpop.f32.mrf.mxu0
    %6165 = vmatprep.mubr.f32.mxu0 0.0
    %6166 = vmatmul.mubr.f32.gmra.mxu0 %v6037
    %v6167 = vpop.f32.mrf.mxu0
    %v6168 = vadd.f32 %v6013, %v6167
    %v6169 = vpop.f32.mrf.mxu0
    %6170 = vmatprep.mubr.f32.mxu0 0.0
    %6171 = vmatmul.mubr.f32.gmra.mxu0 %v6040
    %v6172 = vpop.f32.mrf.mxu0
    %v6173 = vadd.f32 %v6013, %v6172
    %v6174 = vpop.f32.mrf.mxu0
    %6175 = vmatprep.mubr.f32.mxu0 0.0
    %6176 = vmatmul.mubr.f32.gmra.mxu0 %v6043
    %v6177 = vpop.f32.mrf.mxu0
    %v6178 = vadd.f32 %v6013, %v6177
    %v6179 = vpop.f32.mrf.mxu0
    %6180 = vmatprep.mubr.f32.mxu0 0.0
    %6181 = vmatmul.mubr.f32.gmra.mxu0 %v6046
    %v6182 = vpop.f32.mrf.mxu0
    %v6183 = vadd.f32 %v6013, %v6182
    %v6184 = vpop.f32.mrf.mxu0
    %6185 = vmatprep.mubr.f32.mxu0 0.0
    %6186 = vmatmul.mubr.f32.gmra.mxu0 %v6049
    %v6187 = vpop.f32.mrf.mxu0
    %v6188 = vadd.f32 %v6013, %v6187
    %v6189 = vpop.f32.mrf.mxu0
    %6190 = vmatprep.mubr.f32.mxu0 0.0
    %6191 = vmatmul.mubr.f32.gmra.mxu0 %v6052
    %v6192 = vpop.f32.mrf.mxu0
    %v6193 = vadd.f32 %v6013, %v6192
    %v6194 = vpop.f32.mrf.mxu0
    %6195 = vmatprep.mubr.f32.mxu0 0.0
    %6196 = vmatmul.mubr.f32.gmra.mxu0 %v6055
    %v6197 = vpop.f32.mrf.mxu0
    %v6198 = vadd.f32 %v6013, %v6197
    %v6199 = vpop.f32.mrf.mxu0
    %6200 = vmatprep.mubr.f32.mxu0 0.0
    %6201 = vmatmul.mubr.f32.gmra.mxu0 %v6058
    %v6202 = vpop.f32.mrf.mxu0
    %v6203 = vadd.f32 %v6013, %v6202
    %v6204 = vpop.f32.mrf.mxu0
    %6205 = vmatprep.mubr.f32.mxu0 0.0
    %6206 = vmatmul.mubr.f32.gmra.mxu0 %v6061
    %v6207 = vpop.f32.mrf.mxu0
    %v6208 = vadd.f32 %v6013, %v6207
    %v6209 = vpop.f32.mrf.mxu0
    %6210 = vmatprep.mubr.f32.mxu0 0.0
    %6211 = vmatmul.mubr.f32.gmra.mxu0 %v6064
    %v6212 = vpop.f32.mrf.mxu0
    %v6213 = vadd.f32 %v6013, %v6212
    %v6214 = vpop.f32.mrf.mxu0
    %6215 = vdwg.mxu0
    %v6216 = vadd.f32 %v5050, %v6133
    %v6217 = vadd.f32 %v5051, %v6138
    %v6218 = vadd.f32 %v5052, %v6143
    %v6219 = vadd.f32 %v5053, %v6148
    %v6220 = vadd.f32 %v5054, %v6153
    %v6221 = vadd.f32 %v5055, %v6158
    %v6222 = vadd.f32 %v5056, %v6163
    %v6223 = vadd.f32 %v5057, %v6168
    %v6224 = vadd.f32 %v5058, %v6173
    %v6225 = vadd.f32 %v5059, %v6178
    %v6226 = vadd.f32 %v5060, %v6183
    %v6227 = vadd.f32 %v5061, %v6188
    %v6228 = vadd.f32 %v5062, %v6193
    %v6229 = vadd.f32 %v5063, %v6198
    %v6230 = vadd.f32 %v5064, %v6203
    %v6231 = vadd.f32 %v5065, %v6208
    %v6232 = vadd.f32 %v5066, %v6213
    %v6233 = vld [vmem:[%s5 + $0x1] sm:$0x1]
    %v6234 = vld [vmem:[%s6 + $0x1] sm:$0x1]
    %v6235 = vsel %vm431, %v6216, 0.0
    %6236 = vadd.xlane.f32.xlu0 %v6235
    %v6237 = vpop.xlane.xlu0 %6236
    %v6238 = vsel %vm431, %v6217, 0.0
    %6239 = vadd.xlane.f32.xlu0 %v6238
    %v6240 = vpop.xlane.xlu0 %6239
    %v6241 = vsel %vm431, %v6218, 0.0
    %6242 = vadd.xlane.f32.xlu0 %v6241
    %v6243 = vpop.xlane.xlu0 %6242
    %v6244 = vsel %vm431, %v6219, 0.0
    %6245 = vadd.xlane.f32.xlu0 %v6244
    %v6246 = vpop.xlane.xlu0 %6245
    %v6247 = vsel %vm431, %v6220, 0.0
    %6248 = vadd.xlane.f32.xlu0 %v6247
    %v6249 = vpop.xlane.xlu0 %6248
    %v6250 = vsel %vm431, %v6221, 0.0
    %6251 = vadd.xlane.f32.xlu0 %v6250
    %v6252 = vpop.xlane.xlu0 %6251
    %v6253 = vsel %vm431, %v6222, 0.0
    %6254 = vadd.xlane.f32.xlu0 %v6253
    %v6255 = vpop.xlane.xlu0 %6254
    %v6256 = vsel %vm431, %v6223, 0.0
    %6257 = vadd.xlane.f32.xlu0 %v6256
    %v6258 = vpop.xlane.xlu0 %6257
    %v6259 = vsel %vm431, %v6224, 0.0
    %6260 = vadd.xlane.f32.xlu0 %v6259
    %v6261 = vpop.xlane.xlu0 %6260
    %v6262 = vsel %vm431, %v6225, 0.0
    %6263 = vadd.xlane.f32.xlu0 %v6262
    %v6264 = vpop.xlane.xlu0 %6263
    %v6265 = vsel %vm431, %v6226, 0.0
    %6266 = vadd.xlane.f32.xlu0 %v6265
    %v6267 = vpop.xlane.xlu0 %6266
    %v6268 = vsel %vm431, %v6227, 0.0
    %6269 = vadd.xlane.f32.xlu0 %v6268
    %v6270 = vpop.xlane.xlu0 %6269
    %v6271 = vsel %vm431, %v6228, 0.0
    %6272 = vadd.xlane.f32.xlu0 %v6271
    %v6273 = vpop.xlane.xlu0 %6272
    %v6274 = vsel %vm431, %v6229, 0.0
    %6275 = vadd.xlane.f32.xlu0 %v6274
    %v6276 = vpop.xlane.xlu0 %6275
    %v6277 = vsel %vm431, %v6230, 0.0
    %6278 = vadd.xlane.f32.xlu0 %v6277
    %v6279 = vpop.xlane.xlu0 %6278
    %v6280 = vsel %vm431, %v6231, 0.0
    %6281 = vadd.xlane.f32.xlu0 %v6280
    %v6282 = vpop.xlane.xlu0 %6281
    %v6283 = vsel %vm480, %v6232, 0.0
    %6284 = vadd.xlane.f32.xlu0 %v6283
    %v6285 = vpop.xlane.xlu0 %6284
    %v6286 = vmul.f32 %v6237, %v484
    %v6287 = vmul.f32 %v6240, %v484
    %v6288 = vmul.f32 %v6243, %v484
    %v6289 = vmul.f32 %v6246, %v484
    %v6290 = vmul.f32 %v6249, %v484
    %v6291 = vmul.f32 %v6252, %v484
    %v6292 = vmul.f32 %v6255, %v484
    %v6293 = vmul.f32 %v6258, %v484
    %v6294 = vmul.f32 %v6261, %v484
    %v6295 = vmul.f32 %v6264, %v484
    %v6296 = vmul.f32 %v6267, %v484
    %v6297 = vmul.f32 %v6270, %v484
    %v6298 = vmul.f32 %v6273, %v484
    %v6299 = vmul.f32 %v6276, %v484
    %v6300 = vmul.f32 %v6279, %v484
    %v6301 = vmul.f32 %v6282, %v484
    %v6302 = vmul.f32 %v6285, %v484
    %v6303 = vsub.f32 %v6216, %v6286
    %v6304 = vsub.f32 %v6217, %v6287
    %v6305 = vsub.f32 %v6218, %v6288
    %v6306 = vsub.f32 %v6219, %v6289
    %v6307 = vsub.f32 %v6220, %v6290
    %v6308 = vsub.f32 %v6221, %v6291
    %v6309 = vsub.f32 %v6222, %v6292
    %v6310 = vsub.f32 %v6223, %v6293
    %v6311 = vsub.f32 %v6224, %v6294
    %v6312 = vsub.f32 %v6225, %v6295
    %v6313 = vsub.f32 %v6226, %v6296
    %v6314 = vsub.f32 %v6227, %v6297
    %v6315 = vsub.f32 %v6228, %v6298
    %v6316 = vsub.f32 %v6229, %v6299
    %v6317 = vsub.f32 %v6230, %v6300
    %v6318 = vsub.f32 %v6231, %v6301
    %v6319 = vsub.f32 %v6232, %v6302
    %v6320 = vmul.f32 %v6303, %v6303
    %v6321 = vmul.f32 %v6304, %v6304
    %v6322 = vmul.f32 %v6305, %v6305
    %v6323 = vmul.f32 %v6306, %v6306
    %v6324 = vmul.f32 %v6307, %v6307
    %v6325 = vmul.f32 %v6308, %v6308
    %v6326 = vmul.f32 %v6309, %v6309
    %v6327 = vmul.f32 %v6310, %v6310
    %v6328 = vmul.f32 %v6311, %v6311
    %v6329 = vmul.f32 %v6312, %v6312
    %v6330 = vmul.f32 %v6313, %v6313
    %v6331 = vmul.f32 %v6314, %v6314
    %v6332 = vmul.f32 %v6315, %v6315
    %v6333 = vmul.f32 %v6316, %v6316
    %v6334 = vmul.f32 %v6317, %v6317
    %v6335 = vmul.f32 %v6318, %v6318
    %v6336 = vmul.f32 %v6319, %v6319
    %v6337 = vsel %vm431, %v6320, 0.0
    %6338 = vadd.xlane.f32.xlu0 %v6337
    %v6339 = vpop.xlane.xlu0 %6338
    %v6340 = vsel %vm431, %v6321, 0.0
    %6341 = vadd.xlane.f32.xlu0 %v6340
    %v6342 = vpop.xlane.xlu0 %6341
    %v6343 = vsel %vm431, %v6322, 0.0
    %6344 = vadd.xlane.f32.xlu0 %v6343
    %v6345 = vpop.xlane.xlu0 %6344
    %v6346 = vsel %vm431, %v6323, 0.0
    %6347 = vadd.xlane.f32.xlu0 %v6346
    %v6348 = vpop.xlane.xlu0 %6347
    %v6349 = vsel %vm431, %v6324, 0.0
    %6350 = vadd.xlane.f32.xlu0 %v6349
    %v6351 = vpop.xlane.xlu0 %6350
    %v6352 = vsel %vm431, %v6325, 0.0
    %6353 = vadd.xlane.f32.xlu0 %v6352
    %v6354 = vpop.xlane.xlu0 %6353
    %v6355 = vsel %vm431, %v6326, 0.0
    %6356 = vadd.xlane.f32.xlu0 %v6355
    %v6357 = vpop.xlane.xlu0 %6356
    %v6358 = vsel %vm431, %v6327, 0.0
    %6359 = vadd.xlane.f32.xlu0 %v6358
    %v6360 = vpop.xlane.xlu0 %6359
    %v6361 = vsel %vm431, %v6328, 0.0
    %6362 = vadd.xlane.f32.xlu0 %v6361
    %v6363 = vpop.xlane.xlu0 %6362
    %v6364 = vsel %vm431, %v6329, 0.0
    %6365 = vadd.xlane.f32.xlu0 %v6364
    %v6366 = vpop.xlane.xlu0 %6365
    %v6367 = vsel %vm431, %v6330, 0.0
    %6368 = vadd.xlane.f32.xlu0 %v6367
    %v6369 = vpop.xlane.xlu0 %6368
    %v6370 = vsel %vm431, %v6331, 0.0
    %6371 = vadd.xlane.f32.xlu0 %v6370
    %v6372 = vpop.xlane.xlu0 %6371
    %v6373 = vsel %vm431, %v6332, 0.0
    %6374 = vadd.xlane.f32.xlu0 %v6373
    %v6375 = vpop.xlane.xlu0 %6374
    %v6376 = vsel %vm431, %v6333, 0.0
    %6377 = vadd.xlane.f32.xlu0 %v6376
    %v6378 = vpop.xlane.xlu0 %6377
    %v6379 = vsel %vm431, %v6334, 0.0
    %6380 = vadd.xlane.f32.xlu0 %v6379
    %v6381 = vpop.xlane.xlu0 %6380
    %v6382 = vsel %vm431, %v6335, 0.0
    %6383 = vadd.xlane.f32.xlu0 %v6382
    %v6384 = vpop.xlane.xlu0 %6383
    %v6385 = vsel %vm480, %v6336, 0.0
    %6386 = vadd.xlane.f32.xlu0 %v6385
    %v6387 = vpop.xlane.xlu0 %6386
    %v6388 = vmul.f32 %v6339, %v484
    %v6389 = vmul.f32 %v6342, %v484
    %v6390 = vmul.f32 %v6345, %v484
    %v6391 = vmul.f32 %v6348, %v484
    %v6392 = vmul.f32 %v6351, %v484
    %v6393 = vmul.f32 %v6354, %v484
    %v6394 = vmul.f32 %v6357, %v484
    %v6395 = vmul.f32 %v6360, %v484
    %v6396 = vmul.f32 %v6363, %v484
    %v6397 = vmul.f32 %v6366, %v484
    %v6398 = vmul.f32 %v6369, %v484
    %v6399 = vmul.f32 %v6372, %v484
    %v6400 = vmul.f32 %v6375, %v484
    %v6401 = vmul.f32 %v6378, %v484
    %v6402 = vmul.f32 %v6381, %v484
    %v6403 = vmul.f32 %v6384, %v484
    %v6404 = vmul.f32 %v6387, %v484
    %v6405 = vadd.f32 %v6388, 1e-05
    %v6406 = vadd.f32 %v6389, 1e-05
    %v6407 = vadd.f32 %v6390, 1e-05
    %v6408 = vadd.f32 %v6391, 1e-05
    %v6409 = vadd.f32 %v6392, 1e-05
    %v6410 = vadd.f32 %v6393, 1e-05
    %v6411 = vadd.f32 %v6394, 1e-05
    %v6412 = vadd.f32 %v6395, 1e-05
    %v6413 = vadd.f32 %v6396, 1e-05
    %v6414 = vadd.f32 %v6397, 1e-05
    %v6415 = vadd.f32 %v6398, 1e-05
    %v6416 = vadd.f32 %v6399, 1e-05
    %v6417 = vadd.f32 %v6400, 1e-05
    %v6418 = vadd.f32 %v6401, 1e-05
    %v6419 = vadd.f32 %v6402, 1e-05
    %v6420 = vadd.f32 %v6403, 1e-05
    %v6421 = vadd.f32 %v6404, 1e-05
    %v6422 = vrsqrt.pop %v6405
    %v6423 = vrsqrt.pop %v6406
    %v6424 = vrsqrt.pop %v6407
    %v6425 = vrsqrt.pop %v6408
    %v6426 = vrsqrt.pop %v6409
    %v6427 = vrsqrt.pop %v6410
    %v6428 = vrsqrt.pop %v6411
    %v6429 = vrsqrt.pop %v6412
    %v6430 = vrsqrt.pop %v6413
    %v6431 = vrsqrt.pop %v6414
    %v6432 = vrsqrt.pop %v6415
    %v6433 = vrsqrt.pop %v6416
    %v6434 = vrsqrt.pop %v6417
    %v6435 = vrsqrt.pop %v6418
    %v6436 = vrsqrt.pop %v6419
    %v6437 = vrsqrt.pop %v6420
    %v6438 = vrsqrt.pop %v6421
    %v6439 = vmul.f32 %v6303, %v6422
    %v6440 = vmul.f32 %v6304, %v6423
    %v6441 = vmul.f32 %v6305, %v6424
    %v6442 = vmul.f32 %v6306, %v6425
    %v6443 = vmul.f32 %v6307, %v6426
    %v6444 = vmul.f32 %v6308, %v6427
    %v6445 = vmul.f32 %v6309, %v6428
    %v6446 = vmul.f32 %v6310, %v6429
    %v6447 = vmul.f32 %v6311, %v6430
    %v6448 = vmul.f32 %v6312, %v6431
    %v6449 = vmul.f32 %v6313, %v6432
    %v6450 = vmul.f32 %v6314, %v6433
    %v6451 = vmul.f32 %v6315, %v6434
    %v6452 = vmul.f32 %v6316, %v6435
    %v6453 = vmul.f32 %v6317, %v6436
    %v6454 = vmul.f32 %v6318, %v6437
    %v6455 = vmul.f32 %v6319, %v6438
    %v6456 = vlaneseq
    %v6457 = vshrl.u32 %v6456, 7
    %v6458 = vsub.s32 0, %v6457
    %v6459 = vrot.slane %v6233, %v6458
    %v6460 = vmul.f32 %v6439, %v6459
    %v6461 = vmul.f32 %v6440, %v6459
    %v6462 = vmul.f32 %v6441, %v6459
    %v6463 = vmul.f32 %v6442, %v6459
    %v6464 = vmul.f32 %v6443, %v6459
    %v6465 = vmul.f32 %v6444, %v6459
    %v6466 = vmul.f32 %v6445, %v6459
    %v6467 = vmul.f32 %v6446, %v6459
    %v6468 = vmul.f32 %v6447, %v6459
    %v6469 = vmul.f32 %v6448, %v6459
    %v6470 = vmul.f32 %v6449, %v6459
    %v6471 = vmul.f32 %v6450, %v6459
    %v6472 = vmul.f32 %v6451, %v6459
    %v6473 = vmul.f32 %v6452, %v6459
    %v6474 = vmul.f32 %v6453, %v6459
    %v6475 = vmul.f32 %v6454, %v6459
    %v6476 = vmul.f32 %v6455, %v6459
    %v6477 = vlaneseq
    %v6478 = vshrl.u32 %v6477, 7
    %v6479 = vsub.s32 0, %v6478
    %v6480 = vrot.slane %v6234, %v6479
    %v6481 = vadd.f32 %v6460, %v6480
    %v6482 = vadd.f32 %v6461, %v6480
    %v6483 = vadd.f32 %v6462, %v6480
    %v6484 = vadd.f32 %v6463, %v6480
    %v6485 = vadd.f32 %v6464, %v6480
    %v6486 = vadd.f32 %v6465, %v6480
    %v6487 = vadd.f32 %v6466, %v6480
    %v6488 = vadd.f32 %v6467, %v6480
    %v6489 = vadd.f32 %v6468, %v6480
    %v6490 = vadd.f32 %v6469, %v6480
    %v6491 = vadd.f32 %v6470, %v6480
    %v6492 = vadd.f32 %v6471, %v6480
    %v6493 = vadd.f32 %v6472, %v6480
    %v6494 = vadd.f32 %v6473, %v6480
    %v6495 = vadd.f32 %v6474, %v6480
    %v6496 = vadd.f32 %v6475, %v6480
    %v6497 = vadd.f32 %v6476, %v6480
    %s6498 = scalar_lea.vmem %s7, 32
    %v6499 = vld [vmem:[%s6498] sm:$0xff]
    %v6500 = vld [vmem:[%s6498 + $0x8] sm:$0xff]
    %v6501 = vld [vmem:[%s6498 + $0x10] sm:$0xff]
    %v6502 = vld [vmem:[%s6498 + $0x18] sm:$0xff]
    %v6503 = vld [vmem:[%s8 + $0x1] sm:$0x1]
    %v6504 = vlaneseq
    %v6505 = vshrl.u32 %v6504, 7
    %v6506 = vsub.s32 0, %v6505
    %v6507 = vrot.slane %v6503, %v6506
    %v6509 = vsel %vm431, %v6481, 0
    %v6512 = vsel %vm431, %v6482, 0
    %v6515 = vsel %vm431, %v6483, 0
    %v6518 = vsel %vm431, %v6484, 0
    %v6521 = vsel %vm431, %v6485, 0
    %v6524 = vsel %vm431, %v6486, 0
    %v6527 = vsel %vm431, %v6487, 0
    %v6530 = vsel %vm431, %v6488, 0
    %v6533 = vsel %vm431, %v6489, 0
    %v6536 = vsel %vm431, %v6490, 0
    %v6539 = vsel %vm431, %v6491, 0
    %v6542 = vsel %vm431, %v6492, 0
    %v6545 = vsel %vm431, %v6493, 0
    %v6548 = vsel %vm431, %v6494, 0
    %v6551 = vsel %vm431, %v6495, 0
    %v6554 = vsel %vm431, %v6496, 0
    %v6557 = vsel %vm431, %v6497, 0
    %6559 = vmatprep.subr.mxu0 0.0
    %6560 = vmatpush1.msra.mxu0 0.0
    %6561 = vmatprep.subr.mxu0 0.0
    %6562 = vmatpush1.msra.mxu0 0.0
    %6563 = vmatprep.subr.mxu0 0.0
    %6564 = vmatpush1.msra.mxu0 0.0
    %6565 = vmatprep.subr.mxu0 0.0
    %6566 = vmatpush1.msra.mxu0 0.0
    %6567 = vmatprep.subr.mxu0 0.0
    %6568 = vmatpush1.msra.mxu0 0.0
    %6569 = vmatprep.subr.mxu0 0.0
    %6570 = vmatpush1.msra.mxu0 0.0
    %6571 = vmatprep.subr.mxu0 0.0
    %6572 = vmatpush1.msra.mxu0 0.0
    %6573 = vmatprep.subr.mxu0 0.0
    %6574 = vmatpush1.msra.mxu0 0.0
    %6575 = vmatprep.subr.mxu0 0.0
    %6576 = vmatpush1.msra.mxu0 0.0
    %6577 = vmatprep.subr.mxu0 0.0
    %6578 = vmatpush1.msra.mxu0 0.0
    %6579 = vmatprep.subr.mxu0 0.0
    %6580 = vmatpush1.msra.mxu0 0.0
    %6581 = vmatprep.subr.mxu0 0.0
    %6582 = vmatpush1.msra.mxu0 0.0
    %6583 = vmatprep.subr.mxu0 0.0
    %6584 = vmatpush1.msra.mxu0 %v6502
    %6585 = vmatprep.subr.mxu0 0.0
    %6586 = vmatpush1.msra.mxu0 %v6501
    %6587 = vmatprep.subr.mxu0 0.0
    %6588 = vmatpush1.msra.mxu0 %v6500
    %6589 = vmatprep.subr.mxu0 0.0
    %6590 = vmatpush1.msra.mxu0 %v6499
    %6591 = vmatprep.subr.mxu0 0.0
    %6592 = vmatpush2.msra.mxu0 0.0
    %6593 = vmatprep.subr.mxu0 0.0
    %6594 = vmatpush2.msra.mxu0 0.0
    %6595 = vmatprep.subr.mxu0 0.0
    %6596 = vmatpush2.msra.mxu0 0.0
    %6597 = vmatprep.subr.mxu0 0.0
    %6598 = vmatpush2.msra.mxu0 0.0
    %6599 = vmatprep.subr.mxu0 0.0
    %6600 = vmatpush2.msra.mxu0 0.0
    %6601 = vmatprep.subr.mxu0 0.0
    %6602 = vmatpush2.msra.mxu0 0.0
    %6603 = vmatprep.subr.mxu0 0.0
    %6604 = vmatpush2.msra.mxu0 0.0
    %6605 = vmatprep.subr.mxu0 0.0
    %6606 = vmatpush2.msra.mxu0 0.0
    %6607 = vmatprep.subr.mxu0 0.0
    %6608 = vmatpush2.msra.mxu0 0.0
    %6609 = vmatprep.subr.mxu0 0.0
    %6610 = vmatpush2.msra.mxu0 0.0
    %6611 = vmatprep.subr.mxu0 0.0
    %6612 = vmatpush2.msra.mxu0 0.0
    %6613 = vmatprep.subr.mxu0 0.0
    %6614 = vmatpush2.msra.mxu0 0.0
    %6615 = vmatprep.subr.mxu0 0.0
    %6616 = vmatpush2.msra.mxu0 0.0
    %6617 = vmatprep.subr.mxu0 0.0
    %6618 = vmatpush2.msra.mxu0 0.0
    %6619 = vmatprep.subr.mxu0 0.0
    %6620 = vmatpush2.msra.mxu0 0.0
    %6621 = vmatprep.subr.mxu0 0.0
    %6622 = vmatpush2.msra.mxu0 0.0
    %6623 = vmatprep.mubr.f32.mxu0 0.0
    %6624 = vmatmul.mubr.f32.gmra.mxu0 %v6509
    %v6625 = vpop.f32.mrf.mxu0
    %v6626 = vadd.f32 %v6507, %v6625
    %v6627 = vpop.f32.mrf.mxu0
    %6628 = vmatprep.mubr.f32.mxu0 0.0
    %6629 = vmatmul.mubr.f32.gmra.mxu0 %v6512
    %v6630 = vpop.f32.mrf.mxu0
    %v6631 = vadd.f32 %v6507, %v6630
    %v6632 = vpop.f32.mrf.mxu0
    %6633 = vmatprep.mubr.f32.mxu0 0.0
    %6634 = vmatmul.mubr.f32.gmra.mxu0 %v6515
    %v6635 = vpop.f32.mrf.mxu0
    %v6636 = vadd.f32 %v6507, %v6635
    %v6637 = vpop.f32.mrf.mxu0
    %6638 = vmatprep.mubr.f32.mxu0 0.0
    %6639 = vmatmul.mubr.f32.gmra.mxu0 %v6518
    %v6640 = vpop.f32.mrf.mxu0
    %v6641 = vadd.f32 %v6507, %v6640
    %v6642 = vpop.f32.mrf.mxu0
    %6643 = vmatprep.mubr.f32.mxu0 0.0
    %6644 = vmatmul.mubr.f32.gmra.mxu0 %v6521
    %v6645 = vpop.f32.mrf.mxu0
    %v6646 = vadd.f32 %v6507, %v6645
    %v6647 = vpop.f32.mrf.mxu0
    %6648 = vmatprep.mubr.f32.mxu0 0.0
    %6649 = vmatmul.mubr.f32.gmra.mxu0 %v6524
    %v6650 = vpop.f32.mrf.mxu0
    %v6651 = vadd.f32 %v6507, %v6650
    %v6652 = vpop.f32.mrf.mxu0
    %6653 = vmatprep.mubr.f32.mxu0 0.0
    %6654 = vmatmul.mubr.f32.gmra.mxu0 %v6527
    %v6655 = vpop.f32.mrf.mxu0
    %v6656 = vadd.f32 %v6507, %v6655
    %v6657 = vpop.f32.mrf.mxu0
    %6658 = vmatprep.mubr.f32.mxu0 0.0
    %6659 = vmatmul.mubr.f32.gmra.mxu0 %v6530
    %v6660 = vpop.f32.mrf.mxu0
    %v6661 = vadd.f32 %v6507, %v6660
    %v6662 = vpop.f32.mrf.mxu0
    %6663 = vmatprep.mubr.f32.mxu0 0.0
    %6664 = vmatmul.mubr.f32.gmra.mxu0 %v6533
    %v6665 = vpop.f32.mrf.mxu0
    %v6666 = vadd.f32 %v6507, %v6665
    %v6667 = vpop.f32.mrf.mxu0
    %6668 = vmatprep.mubr.f32.mxu0 0.0
    %6669 = vmatmul.mubr.f32.gmra.mxu0 %v6536
    %v6670 = vpop.f32.mrf.mxu0
    %v6671 = vadd.f32 %v6507, %v6670
    %v6672 = vpop.f32.mrf.mxu0
    %6673 = vmatprep.mubr.f32.mxu0 0.0
    %6674 = vmatmul.mubr.f32.gmra.mxu0 %v6539
    %v6675 = vpop.f32.mrf.mxu0
    %v6676 = vadd.f32 %v6507, %v6675
    %v6677 = vpop.f32.mrf.mxu0
    %6678 = vmatprep.mubr.f32.mxu0 0.0
    %6679 = vmatmul.mubr.f32.gmra.mxu0 %v6542
    %v6680 = vpop.f32.mrf.mxu0
    %v6681 = vadd.f32 %v6507, %v6680
    %v6682 = vpop.f32.mrf.mxu0
    %6683 = vmatprep.mubr.f32.mxu0 0.0
    %6684 = vmatmul.mubr.f32.gmra.mxu0 %v6545
    %v6685 = vpop.f32.mrf.mxu0
    %v6686 = vadd.f32 %v6507, %v6685
    %v6687 = vpop.f32.mrf.mxu0
    %6688 = vmatprep.mubr.f32.mxu0 0.0
    %6689 = vmatmul.mubr.f32.gmra.mxu0 %v6548
    %v6690 = vpop.f32.mrf.mxu0
    %v6691 = vadd.f32 %v6507, %v6690
    %v6692 = vpop.f32.mrf.mxu0
    %6693 = vmatprep.mubr.f32.mxu0 0.0
    %6694 = vmatmul.mubr.f32.gmra.mxu0 %v6551
    %v6695 = vpop.f32.mrf.mxu0
    %v6696 = vadd.f32 %v6507, %v6695
    %v6697 = vpop.f32.mrf.mxu0
    %6698 = vmatprep.mubr.f32.mxu0 0.0
    %6699 = vmatmul.mubr.f32.gmra.mxu0 %v6554
    %v6700 = vpop.f32.mrf.mxu0
    %v6701 = vadd.f32 %v6507, %v6700
    %v6702 = vpop.f32.mrf.mxu0
    %6703 = vmatprep.mubr.f32.mxu0 0.0
    %6704 = vmatmul.mubr.f32.gmra.mxu0 %v6557
    %v6705 = vpop.f32.mrf.mxu0
    %v6706 = vadd.f32 %v6507, %v6705
    %v6707 = vpop.f32.mrf.mxu0
    %6708 = vdwg.mxu0
    %6718 = vrot.lane.b32.xlu0 %v6626, 96
    %v6719 = vpop.permute.xlu0 %6718
    %6720 = vrot.lane.b32.xlu0 %v6631, 96
    %v6721 = vpop.permute.xlu0 %6720
    %6722 = vrot.lane.b32.xlu0 %v6636, 96
    %v6723 = vpop.permute.xlu0 %6722
    %6724 = vrot.lane.b32.xlu0 %v6641, 96
    %v6725 = vpop.permute.xlu0 %6724
    %6726 = vrot.lane.b32.xlu0 %v6646, 96
    %v6727 = vpop.permute.xlu0 %6726
    %6728 = vrot.lane.b32.xlu0 %v6651, 96
    %v6729 = vpop.permute.xlu0 %6728
    %6730 = vrot.lane.b32.xlu0 %v6656, 96
    %v6731 = vpop.permute.xlu0 %6730
    %6732 = vrot.lane.b32.xlu0 %v6661, 96
    %v6733 = vpop.permute.xlu0 %6732
    %6734 = vrot.lane.b32.xlu0 %v6666, 96
    %v6735 = vpop.permute.xlu0 %6734
    %v6736 = vsel %vm934, %v6626, 0
    %v6738 = vsel %vm934, %v6631, 0
    %v6740 = vsel %vm934, %v6636, 0
    %v6742 = vsel %vm934, %v6641, 0
    %v6744 = vsel %vm934, %v6646, 0
    %v6746 = vsel %vm934, %v6651, 0
    %v6748 = vsel %vm934, %v6656, 0
    %v6750 = vsel %vm934, %v6661, 0
    %v6752 = vsel %vm934, %v6666, 0
    %v6754 = vsel %vm934, %v6719, 0
    %v6756 = vsel %vm934, %v6721, 0
    %v6758 = vsel %vm934, %v6723, 0
    %v6760 = vsel %vm934, %v6725, 0
    %v6762 = vsel %vm934, %v6727, 0
    %v6764 = vsel %vm934, %v6729, 0
    %v6766 = vsel %vm934, %v6731, 0
    %v6768 = vsel %vm934, %v6733, 0
    %v6770 = vsel %vm934, %v6735, 0
    %6772 = vmatprep.subr.mxu0 0.0
    %6773 = vmatpush1.xpose.msra.mxu0 0.0
    %6774 = vmatprep.subr.mxu0 0.0
    %6775 = vmatpush1.xpose.msra.mxu0 0.0
    %6776 = vmatprep.subr.mxu0 0.0
    %6777 = vmatpush1.xpose.msra.mxu0 0.0
    %6778 = vmatprep.subr.mxu0 0.0
    %6779 = vmatpush1.xpose.msra.mxu0 0.0
    %6780 = vmatprep.subr.mxu0 0.0
    %6781 = vmatpush1.xpose.msra.mxu0 0.0
    %6782 = vmatprep.subr.mxu0 0.0
    %6783 = vmatpush1.xpose.msra.mxu0 0.0
    %6784 = vmatprep.subr.mxu0 0.0
    %6785 = vmatpush1.xpose.msra.mxu0 0.0
    %6786 = vmatprep.subr.mxu0 0.0
    %6787 = vmatpush1.xpose.msra.mxu0 %v6770
    %6788 = vmatprep.subr.mxu0 0.0
    %6789 = vmatpush1.xpose.msra.mxu0 %v6768
    %6790 = vmatprep.subr.mxu0 0.0
    %6791 = vmatpush1.xpose.msra.mxu0 %v6766
    %6792 = vmatprep.subr.mxu0 0.0
    %6793 = vmatpush1.xpose.msra.mxu0 %v6764
    %6794 = vmatprep.subr.mxu0 0.0
    %6795 = vmatpush1.xpose.msra.mxu0 %v6762
    %6796 = vmatprep.subr.mxu0 0.0
    %6797 = vmatpush1.xpose.msra.mxu0 %v6760
    %6798 = vmatprep.subr.mxu0 0.0
    %6799 = vmatpush1.xpose.msra.mxu0 %v6758
    %6800 = vmatprep.subr.mxu0 0.0
    %6801 = vmatpush1.xpose.msra.mxu0 %v6756
    %6802 = vmatprep.subr.mxu0 0.0
    %6803 = vmatpush1.xpose.msra.mxu0 %v6754
    %6804 = vmatprep.subr.mxu0 0.0
    %6805 = vmatpush2.xpose.msra.mxu0 0.0
    %6806 = vmatprep.subr.mxu0 0.0
    %6807 = vmatpush2.xpose.msra.mxu0 0.0
    %6808 = vmatprep.subr.mxu0 0.0
    %6809 = vmatpush2.xpose.msra.mxu0 0.0
    %6810 = vmatprep.subr.mxu0 0.0
    %6811 = vmatpush2.xpose.msra.mxu0 0.0
    %6812 = vmatprep.subr.mxu0 0.0
    %6813 = vmatpush2.xpose.msra.mxu0 0.0
    %6814 = vmatprep.subr.mxu0 0.0
    %6815 = vmatpush2.xpose.msra.mxu0 0.0
    %6816 = vmatprep.subr.mxu0 0.0
    %6817 = vmatpush2.xpose.msra.mxu0 0.0
    %6818 = vmatprep.subr.mxu0 0.0
    %6819 = vmatpush2.xpose.msra.mxu0 0.0
    %6820 = vmatprep.subr.mxu0 0.0
    %6821 = vmatpush2.xpose.msra.mxu0 0.0
    %6822 = vmatprep.subr.mxu0 0.0
    %6823 = vmatpush2.xpose.msra.mxu0 0.0
    %6824 = vmatprep.subr.mxu0 0.0
    %6825 = vmatpush2.xpose.msra.mxu0 0.0
    %6826 = vmatprep.subr.mxu0 0.0
    %6827 = vmatpush2.xpose.msra.mxu0 0.0
    %6828 = vmatprep.subr.mxu0 0.0
    %6829 = vmatpush2.xpose.msra.mxu0 0.0
    %6830 = vmatprep.subr.mxu0 0.0
    %6831 = vmatpush2.xpose.msra.mxu0 0.0
    %6832 = vmatprep.subr.mxu0 0.0
    %6833 = vmatpush2.xpose.msra.mxu0 0.0
    %6834 = vmatprep.subr.mxu0 0.0
    %6835 = vmatpush2.xpose.msra.mxu0 0.0
    %6836 = vmatprep.mubr.f32.mxu0 0.0
    %6837 = vmatmul.mubr.f32.gmra.mxu0 %v6736
    %v6838 = vpop.f32.mrf.mxu0
    %v6839 = vadd.f32 0.0, %v6838
    %v6840 = vpop.f32.mrf.mxu0
    %6841 = vmatprep.mubr.f32.mxu0 0.0
    %6842 = vmatmul.mubr.f32.gmra.mxu0 %v6738
    %v6843 = vpop.f32.mrf.mxu0
    %v6844 = vadd.f32 0.0, %v6843
    %v6845 = vpop.f32.mrf.mxu0
    %6846 = vmatprep.mubr.f32.mxu0 0.0
    %6847 = vmatmul.mubr.f32.gmra.mxu0 %v6740
    %v6848 = vpop.f32.mrf.mxu0
    %v6849 = vadd.f32 0.0, %v6848
    %v6850 = vpop.f32.mrf.mxu0
    %6851 = vmatprep.mubr.f32.mxu0 0.0
    %6852 = vmatmul.mubr.f32.gmra.mxu0 %v6742
    %v6853 = vpop.f32.mrf.mxu0
    %v6854 = vadd.f32 0.0, %v6853
    %v6855 = vpop.f32.mrf.mxu0
    %6856 = vmatprep.mubr.f32.mxu0 0.0
    %6857 = vmatmul.mubr.f32.gmra.mxu0 %v6744
    %v6858 = vpop.f32.mrf.mxu0
    %v6859 = vadd.f32 0.0, %v6858
    %v6860 = vpop.f32.mrf.mxu0
    %6861 = vmatprep.mubr.f32.mxu0 0.0
    %6862 = vmatmul.mubr.f32.gmra.mxu0 %v6746
    %v6863 = vpop.f32.mrf.mxu0
    %v6864 = vadd.f32 0.0, %v6863
    %v6865 = vpop.f32.mrf.mxu0
    %6866 = vmatprep.mubr.f32.mxu0 0.0
    %6867 = vmatmul.mubr.f32.gmra.mxu0 %v6748
    %v6868 = vpop.f32.mrf.mxu0
    %v6869 = vadd.f32 0.0, %v6868
    %v6870 = vpop.f32.mrf.mxu0
    %6871 = vmatprep.mubr.f32.mxu0 0.0
    %6872 = vmatmul.mubr.f32.gmra.mxu0 %v6750
    %v6873 = vpop.f32.mrf.mxu0
    %v6874 = vadd.f32 0.0, %v6873
    %v6875 = vpop.f32.mrf.mxu0
    %6876 = vmatprep.mubr.f32.mxu0 0.0
    %6877 = vmatmul.mubr.f32.gmra.mxu0 %v6752
    %v6878 = vpop.f32.mrf.mxu0
    %v6879 = vadd.f32 0.0, %v6878
    %v6880 = vpop.f32.mrf.mxu0
    %6881 = vdwg.mxu0
    %v6882 = vmul.f32 %v6839, 0.35355338
    %v6883 = vmul.f32 %v6844, 0.35355338
    %v6884 = vmul.f32 %v6849, 0.35355338
    %v6885 = vmul.f32 %v6854, 0.35355338
    %v6886 = vmul.f32 %v6859, 0.35355338
    %v6887 = vmul.f32 %v6864, 0.35355338
    %v6888 = vmul.f32 %v6869, 0.35355338
    %v6889 = vmul.f32 %v6874, 0.35355338
    %v6890 = vmul.f32 %v6879, 0.35355338
    %v6891 = vsel %vm1090, %v6882, -inf
    %6892 = vmax.xlane.f32.xlu0 %v6891
    %v6893 = vpop.xlane.xlu0 %6892
    %v6894 = vsel %vm1090, %v6883, -inf
    %6895 = vmax.xlane.f32.xlu0 %v6894
    %v6896 = vpop.xlane.xlu0 %6895
    %v6897 = vsel %vm1090, %v6884, -inf
    %6898 = vmax.xlane.f32.xlu0 %v6897
    %v6899 = vpop.xlane.xlu0 %6898
    %v6900 = vsel %vm1090, %v6885, -inf
    %6901 = vmax.xlane.f32.xlu0 %v6900
    %v6902 = vpop.xlane.xlu0 %6901
    %v6903 = vsel %vm1090, %v6886, -inf
    %6904 = vmax.xlane.f32.xlu0 %v6903
    %v6905 = vpop.xlane.xlu0 %6904
    %v6906 = vsel %vm1090, %v6887, -inf
    %6907 = vmax.xlane.f32.xlu0 %v6906
    %v6908 = vpop.xlane.xlu0 %6907
    %v6909 = vsel %vm1090, %v6888, -inf
    %6910 = vmax.xlane.f32.xlu0 %v6909
    %v6911 = vpop.xlane.xlu0 %6910
    %v6912 = vsel %vm1090, %v6889, -inf
    %6913 = vmax.xlane.f32.xlu0 %v6912
    %v6914 = vpop.xlane.xlu0 %6913
    %v6915 = vsel %vm1115, %v6890, -inf
    %6916 = vmax.xlane.f32.xlu0 %v6915
    %v6917 = vpop.xlane.xlu0 %6916
    %v6918 = vsub.f32 %v6882, %v6893
    %v6919 = vsub.f32 %v6883, %v6896
    %v6920 = vsub.f32 %v6884, %v6899
    %v6921 = vsub.f32 %v6885, %v6902
    %v6922 = vsub.f32 %v6886, %v6905
    %v6923 = vsub.f32 %v6887, %v6908
    %v6924 = vsub.f32 %v6888, %v6911
    %v6925 = vsub.f32 %v6889, %v6914
    %v6926 = vsub.f32 %v6890, %v6917
    %v6927 = vmul.f32 %v6918, 1.442695
    %v6928 = vpow.pop %v6927
    %v6929 = vmul.f32 %v6919, 1.442695
    %v6930 = vpow.pop %v6929
    %v6931 = vmul.f32 %v6920, 1.442695
    %v6932 = vpow.pop %v6931
    %v6933 = vmul.f32 %v6921, 1.442695
    %v6934 = vpow.pop %v6933
    %v6935 = vmul.f32 %v6922, 1.442695
    %v6936 = vpow.pop %v6935
    %v6937 = vmul.f32 %v6923, 1.442695
    %v6938 = vpow.pop %v6937
    %v6939 = vmul.f32 %v6924, 1.442695
    %v6940 = vpow.pop %v6939
    %v6941 = vmul.f32 %v6925, 1.442695
    %v6942 = vpow.pop %v6941
    %v6943 = vmul.f32 %v6926, 1.442695
    %v6944 = vpow.pop %v6943
    %v6945 = vsel %vm1090, %v6928, 0.0
    %6946 = vadd.xlane.f32.xlu0 %v6945
    %v6947 = vpop.xlane.xlu0 %6946
    %v6948 = vsel %vm1090, %v6930, 0.0
    %6949 = vadd.xlane.f32.xlu0 %v6948
    %v6950 = vpop.xlane.xlu0 %6949
    %v6951 = vsel %vm1090, %v6932, 0.0
    %6952 = vadd.xlane.f32.xlu0 %v6951
    %v6953 = vpop.xlane.xlu0 %6952
    %v6954 = vsel %vm1090, %v6934, 0.0
    %6955 = vadd.xlane.f32.xlu0 %v6954
    %v6956 = vpop.xlane.xlu0 %6955
    %v6957 = vsel %vm1090, %v6936, 0.0
    %6958 = vadd.xlane.f32.xlu0 %v6957
    %v6959 = vpop.xlane.xlu0 %6958
    %v6960 = vsel %vm1090, %v6938, 0.0
    %6961 = vadd.xlane.f32.xlu0 %v6960
    %v6962 = vpop.xlane.xlu0 %6961
    %v6963 = vsel %vm1090, %v6940, 0.0
    %6964 = vadd.xlane.f32.xlu0 %v6963
    %v6965 = vpop.xlane.xlu0 %6964
    %v6966 = vsel %vm1090, %v6942, 0.0
    %6967 = vadd.xlane.f32.xlu0 %v6966
    %v6968 = vpop.xlane.xlu0 %6967
    %v6969 = vsel %vm1115, %v6944, 0.0
    %6970 = vadd.xlane.f32.xlu0 %v6969
    %v6971 = vpop.xlane.xlu0 %6970
    %v6972 = vrcp.pop %v6947
    %v6973 = vrcp.pop %v6950
    %v6974 = vrcp.pop %v6953
    %v6975 = vrcp.pop %v6956
    %v6976 = vrcp.pop %v6959
    %v6977 = vrcp.pop %v6962
    %v6978 = vrcp.pop %v6965
    %v6979 = vrcp.pop %v6968
    %v6980 = vrcp.pop %v6971
    %v6981 = vmul.f32 %v6928, %v6972
    %v6982 = vmul.f32 %v6930, %v6973
    %v6983 = vmul.f32 %v6932, %v6974
    %v6984 = vmul.f32 %v6934, %v6975
    %v6985 = vmul.f32 %v6936, %v6976
    %v6986 = vmul.f32 %v6938, %v6977
    %v6987 = vmul.f32 %v6940, %v6978
    %v6988 = vmul.f32 %v6942, %v6979
    %v6989 = vmul.f32 %v6944, %v6980
    %6990 = vrot.lane.b32.xlu0 %v6626, 64
    %v6991 = vpop.permute.xlu0 %6990
    %6992 = vrot.lane.b32.xlu0 %v6631, 64
    %v6993 = vpop.permute.xlu0 %6992
    %6994 = vrot.lane.b32.xlu0 %v6636, 64
    %v6995 = vpop.permute.xlu0 %6994
    %6996 = vrot.lane.b32.xlu0 %v6641, 64
    %v6997 = vpop.permute.xlu0 %6996
    %6998 = vrot.lane.b32.xlu0 %v6646, 64
    %v6999 = vpop.permute.xlu0 %6998
    %7000 = vrot.lane.b32.xlu0 %v6651, 64
    %v7001 = vpop.permute.xlu0 %7000
    %7002 = vrot.lane.b32.xlu0 %v6656, 64
    %v7003 = vpop.permute.xlu0 %7002
    %7004 = vrot.lane.b32.xlu0 %v6661, 64
    %v7005 = vpop.permute.xlu0 %7004
    %7006 = vrot.lane.b32.xlu0 %v6666, 64
    %v7007 = vpop.permute.xlu0 %7006
    %v7017 = vsel %vm1090, %v6981, 0
    %v7020 = vsel %vm1090, %v6982, 0
    %v7023 = vsel %vm1090, %v6983, 0
    %v7026 = vsel %vm1090, %v6984, 0
    %v7029 = vsel %vm1090, %v6985, 0
    %v7032 = vsel %vm1090, %v6986, 0
    %v7035 = vsel %vm1090, %v6987, 0
    %v7038 = vsel %vm1090, %v6988, 0
    %v7041 = vsel %vm1090, %v6989, 0
    %v7043 = vsel %vm362, %v7007, 0
    %7045 = vmatprep.subr.mxu0 0.0
    %7046 = vmatpush1.msra.mxu0 0.0
    %7047 = vmatprep.subr.mxu0 0.0
    %7048 = vmatpush1.msra.mxu0 0.0
    %7049 = vmatprep.subr.mxu0 0.0
    %7050 = vmatpush1.msra.mxu0 0.0
    %7051 = vmatprep.subr.mxu0 0.0
    %7052 = vmatpush1.msra.mxu0 0.0
    %7053 = vmatprep.subr.mxu0 0.0
    %7054 = vmatpush1.msra.mxu0 0.0
    %7055 = vmatprep.subr.mxu0 0.0
    %7056 = vmatpush1.msra.mxu0 0.0
    %7057 = vmatprep.subr.mxu0 0.0
    %7058 = vmatpush1.msra.mxu0 0.0
    %7059 = vmatprep.subr.mxu0 0.0
    %7060 = vmatpush1.msra.mxu0 %v7043
    %7061 = vmatprep.subr.mxu0 0.0
    %7062 = vmatpush1.msra.mxu0 %v7005
    %7063 = vmatprep.subr.mxu0 0.0
    %7064 = vmatpush1.msra.mxu0 %v7003
    %7065 = vmatprep.subr.mxu0 0.0
    %7066 = vmatpush1.msra.mxu0 %v7001
    %7067 = vmatprep.subr.mxu0 0.0
    %7068 = vmatpush1.msra.mxu0 %v6999
    %7069 = vmatprep.subr.mxu0 0.0
    %7070 = vmatpush1.msra.mxu0 %v6997
    %7071 = vmatprep.subr.mxu0 0.0
    %7072 = vmatpush1.msra.mxu0 %v6995
    %7073 = vmatprep.subr.mxu0 0.0
    %7074 = vmatpush1.msra.mxu0 %v6993
    %7075 = vmatprep.subr.mxu0 0.0
    %7076 = vmatpush1.msra.mxu0 %v6991
    %7077 = vmatprep.subr.mxu0 0.0
    %7078 = vmatpush2.msra.mxu0 0.0
    %7079 = vmatprep.subr.mxu0 0.0
    %7080 = vmatpush2.msra.mxu0 0.0
    %7081 = vmatprep.subr.mxu0 0.0
    %7082 = vmatpush2.msra.mxu0 0.0
    %7083 = vmatprep.subr.mxu0 0.0
    %7084 = vmatpush2.msra.mxu0 0.0
    %7085 = vmatprep.subr.mxu0 0.0
    %7086 = vmatpush2.msra.mxu0 0.0
    %7087 = vmatprep.subr.mxu0 0.0
    %7088 = vmatpush2.msra.mxu0 0.0
    %7089 = vmatprep.subr.mxu0 0.0
    %7090 = vmatpush2.msra.mxu0 0.0
    %7091 = vmatprep.subr.mxu0 0.0
    %7092 = vmatpush2.msra.mxu0 0.0
    %7093 = vmatprep.subr.mxu0 0.0
    %7094 = vmatpush2.msra.mxu0 0.0
    %7095 = vmatprep.subr.mxu0 0.0
    %7096 = vmatpush2.msra.mxu0 0.0
    %7097 = vmatprep.subr.mxu0 0.0
    %7098 = vmatpush2.msra.mxu0 0.0
    %7099 = vmatprep.subr.mxu0 0.0
    %7100 = vmatpush2.msra.mxu0 0.0
    %7101 = vmatprep.subr.mxu0 0.0
    %7102 = vmatpush2.msra.mxu0 0.0
    %7103 = vmatprep.subr.mxu0 0.0
    %7104 = vmatpush2.msra.mxu0 0.0
    %7105 = vmatprep.subr.mxu0 0.0
    %7106 = vmatpush2.msra.mxu0 0.0
    %7107 = vmatprep.subr.mxu0 0.0
    %7108 = vmatpush2.msra.mxu0 0.0
    %7109 = vmatprep.mubr.f32.mxu0 0.0
    %7110 = vmatmul.mubr.f32.gmra.mxu0 %v7017
    %v7111 = vpop.f32.mrf.mxu0
    %v7112 = vadd.f32 0.0, %v7111
    %v7113 = vpop.f32.mrf.mxu0
    %7114 = vmatprep.mubr.f32.mxu0 0.0
    %7115 = vmatmul.mubr.f32.gmra.mxu0 %v7020
    %v7116 = vpop.f32.mrf.mxu0
    %v7117 = vadd.f32 0.0, %v7116
    %v7118 = vpop.f32.mrf.mxu0
    %7119 = vmatprep.mubr.f32.mxu0 0.0
    %7120 = vmatmul.mubr.f32.gmra.mxu0 %v7023
    %v7121 = vpop.f32.mrf.mxu0
    %v7122 = vadd.f32 0.0, %v7121
    %v7123 = vpop.f32.mrf.mxu0
    %7124 = vmatprep.mubr.f32.mxu0 0.0
    %7125 = vmatmul.mubr.f32.gmra.mxu0 %v7026
    %v7126 = vpop.f32.mrf.mxu0
    %v7127 = vadd.f32 0.0, %v7126
    %v7128 = vpop.f32.mrf.mxu0
    %7129 = vmatprep.mubr.f32.mxu0 0.0
    %7130 = vmatmul.mubr.f32.gmra.mxu0 %v7029
    %v7131 = vpop.f32.mrf.mxu0
    %v7132 = vadd.f32 0.0, %v7131
    %v7133 = vpop.f32.mrf.mxu0
    %7134 = vmatprep.mubr.f32.mxu0 0.0
    %7135 = vmatmul.mubr.f32.gmra.mxu0 %v7032
    %v7136 = vpop.f32.mrf.mxu0
    %v7137 = vadd.f32 0.0, %v7136
    %v7138 = vpop.f32.mrf.mxu0
    %7139 = vmatprep.mubr.f32.mxu0 0.0
    %7140 = vmatmul.mubr.f32.gmra.mxu0 %v7035
    %v7141 = vpop.f32.mrf.mxu0
    %v7142 = vadd.f32 0.0, %v7141
    %v7143 = vpop.f32.mrf.mxu0
    %7144 = vmatprep.mubr.f32.mxu0 0.0
    %7145 = vmatmul.mubr.f32.gmra.mxu0 %v7038
    %v7146 = vpop.f32.mrf.mxu0
    %v7147 = vadd.f32 0.0, %v7146
    %v7148 = vpop.f32.mrf.mxu0
    %7149 = vmatprep.mubr.f32.mxu0 0.0
    %7150 = vmatmul.mubr.f32.gmra.mxu0 %v7041
    %v7151 = vpop.f32.mrf.mxu0
    %v7152 = vadd.f32 0.0, %v7151
    %v7153 = vpop.f32.mrf.mxu0
    %7154 = vdwg.mxu0
    %7155 = vrot.lane.b32.xlu0 %v6626, 120
    %v7156 = vpop.permute.xlu0 %7155
    %7157 = vrot.lane.b32.xlu0 %v6631, 120
    %v7158 = vpop.permute.xlu0 %7157
    %7159 = vrot.lane.b32.xlu0 %v6636, 120
    %v7160 = vpop.permute.xlu0 %7159
    %7161 = vrot.lane.b32.xlu0 %v6641, 120
    %v7162 = vpop.permute.xlu0 %7161
    %7163 = vrot.lane.b32.xlu0 %v6646, 120
    %v7164 = vpop.permute.xlu0 %7163
    %7165 = vrot.lane.b32.xlu0 %v6651, 120
    %v7166 = vpop.permute.xlu0 %7165
    %7167 = vrot.lane.b32.xlu0 %v6656, 120
    %v7168 = vpop.permute.xlu0 %7167
    %7169 = vrot.lane.b32.xlu0 %v6661, 120
    %v7170 = vpop.permute.xlu0 %7169
    %7171 = vrot.lane.b32.xlu0 %v6666, 120
    %v7172 = vpop.permute.xlu0 %7171
    %7173 = vrot.lane.b32.xlu0 %v6626, 88
    %v7174 = vpop.permute.xlu0 %7173
    %7175 = vrot.lane.b32.xlu0 %v6631, 88
    %v7176 = vpop.permute.xlu0 %7175
    %7177 = vrot.lane.b32.xlu0 %v6636, 88
    %v7178 = vpop.permute.xlu0 %7177
    %7179 = vrot.lane.b32.xlu0 %v6641, 88
    %v7180 = vpop.permute.xlu0 %7179
    %7181 = vrot.lane.b32.xlu0 %v6646, 88
    %v7182 = vpop.permute.xlu0 %7181
    %7183 = vrot.lane.b32.xlu0 %v6651, 88
    %v7184 = vpop.permute.xlu0 %7183
    %7185 = vrot.lane.b32.xlu0 %v6656, 88
    %v7186 = vpop.permute.xlu0 %7185
    %7187 = vrot.lane.b32.xlu0 %v6661, 88
    %v7188 = vpop.permute.xlu0 %7187
    %7189 = vrot.lane.b32.xlu0 %v6666, 88
    %v7190 = vpop.permute.xlu0 %7189
    %v7191 = vsel %vm934, %v7156, 0
    %v7193 = vsel %vm934, %v7158, 0
    %v7195 = vsel %vm934, %v7160, 0
    %v7197 = vsel %vm934, %v7162, 0
    %v7199 = vsel %vm934, %v7164, 0
    %v7201 = vsel %vm934, %v7166, 0
    %v7203 = vsel %vm934, %v7168, 0
    %v7205 = vsel %vm934, %v7170, 0
    %v7207 = vsel %vm934, %v7172, 0
    %v7209 = vsel %vm934, %v7174, 0
    %v7211 = vsel %vm934, %v7176, 0
    %v7213 = vsel %vm934, %v7178, 0
    %v7215 = vsel %vm934, %v7180, 0
    %v7217 = vsel %vm934, %v7182, 0
    %v7219 = vsel %vm934, %v7184, 0
    %v7221 = vsel %vm934, %v7186, 0
    %v7223 = vsel %vm934, %v7188, 0
    %v7225 = vsel %vm934, %v7190, 0
    %7227 = vmatprep.subr.mxu0 0.0
    %7228 = vmatpush1.xpose.msra.mxu0 0.0
    %7229 = vmatprep.subr.mxu0 0.0
    %7230 = vmatpush1.xpose.msra.mxu0 0.0
    %7231 = vmatprep.subr.mxu0 0.0
    %7232 = vmatpush1.xpose.msra.mxu0 0.0
    %7233 = vmatprep.subr.mxu0 0.0
    %7234 = vmatpush1.xpose.msra.mxu0 0.0
    %7235 = vmatprep.subr.mxu0 0.0
    %7236 = vmatpush1.xpose.msra.mxu0 0.0
    %7237 = vmatprep.subr.mxu0 0.0
    %7238 = vmatpush1.xpose.msra.mxu0 0.0
    %7239 = vmatprep.subr.mxu0 0.0
    %7240 = vmatpush1.xpose.msra.mxu0 0.0
    %7241 = vmatprep.subr.mxu0 0.0
    %7242 = vmatpush1.xpose.msra.mxu0 %v7225
    %7243 = vmatprep.subr.mxu0 0.0
    %7244 = vmatpush1.xpose.msra.mxu0 %v7223
    %7245 = vmatprep.subr.mxu0 0.0
    %7246 = vmatpush1.xpose.msra.mxu0 %v7221
    %7247 = vmatprep.subr.mxu0 0.0
    %7248 = vmatpush1.xpose.msra.mxu0 %v7219
    %7249 = vmatprep.subr.mxu0 0.0
    %7250 = vmatpush1.xpose.msra.mxu0 %v7217
    %7251 = vmatprep.subr.mxu0 0.0
    %7252 = vmatpush1.xpose.msra.mxu0 %v7215
    %7253 = vmatprep.subr.mxu0 0.0
    %7254 = vmatpush1.xpose.msra.mxu0 %v7213
    %7255 = vmatprep.subr.mxu0 0.0
    %7256 = vmatpush1.xpose.msra.mxu0 %v7211
    %7257 = vmatprep.subr.mxu0 0.0
    %7258 = vmatpush1.xpose.msra.mxu0 %v7209
    %7259 = vmatprep.subr.mxu0 0.0
    %7260 = vmatpush2.xpose.msra.mxu0 0.0
    %7261 = vmatprep.subr.mxu0 0.0
    %7262 = vmatpush2.xpose.msra.mxu0 0.0
    %7263 = vmatprep.subr.mxu0 0.0
    %7264 = vmatpush2.xpose.msra.mxu0 0.0
    %7265 = vmatprep.subr.mxu0 0.0
    %7266 = vmatpush2.xpose.msra.mxu0 0.0
    %7267 = vmatprep.subr.mxu0 0.0
    %7268 = vmatpush2.xpose.msra.mxu0 0.0
    %7269 = vmatprep.subr.mxu0 0.0
    %7270 = vmatpush2.xpose.msra.mxu0 0.0
    %7271 = vmatprep.subr.mxu0 0.0
    %7272 = vmatpush2.xpose.msra.mxu0 0.0
    %7273 = vmatprep.subr.mxu0 0.0
    %7274 = vmatpush2.xpose.msra.mxu0 0.0
    %7275 = vmatprep.subr.mxu0 0.0
    %7276 = vmatpush2.xpose.msra.mxu0 0.0
    %7277 = vmatprep.subr.mxu0 0.0
    %7278 = vmatpush2.xpose.msra.mxu0 0.0
    %7279 = vmatprep.subr.mxu0 0.0
    %7280 = vmatpush2.xpose.msra.mxu0 0.0
    %7281 = vmatprep.subr.mxu0 0.0
    %7282 = vmatpush2.xpose.msra.mxu0 0.0
    %7283 = vmatprep.subr.mxu0 0.0
    %7284 = vmatpush2.xpose.msra.mxu0 0.0
    %7285 = vmatprep.subr.mxu0 0.0
    %7286 = vmatpush2.xpose.msra.mxu0 0.0
    %7287 = vmatprep.subr.mxu0 0.0
    %7288 = vmatpush2.xpose.msra.mxu0 0.0
    %7289 = vmatprep.subr.mxu0 0.0
    %7290 = vmatpush2.xpose.msra.mxu0 0.0
    %7291 = vmatprep.mubr.f32.mxu0 0.0
    %7292 = vmatmul.mubr.f32.gmra.mxu0 %v7191
    %v7293 = vpop.f32.mrf.mxu0
    %v7294 = vadd.f32 0.0, %v7293
    %v7295 = vpop.f32.mrf.mxu0
    %7296 = vmatprep.mubr.f32.mxu0 0.0
    %7297 = vmatmul.mubr.f32.gmra.mxu0 %v7193
    %v7298 = vpop.f32.mrf.mxu0
    %v7299 = vadd.f32 0.0, %v7298
    %v7300 = vpop.f32.mrf.mxu0
    %7301 = vmatprep.mubr.f32.mxu0 0.0
    %7302 = vmatmul.mubr.f32.gmra.mxu0 %v7195
    %v7303 = vpop.f32.mrf.mxu0
    %v7304 = vadd.f32 0.0, %v7303
    %v7305 = vpop.f32.mrf.mxu0
    %7306 = vmatprep.mubr.f32.mxu0 0.0
    %7307 = vmatmul.mubr.f32.gmra.mxu0 %v7197
    %v7308 = vpop.f32.mrf.mxu0
    %v7309 = vadd.f32 0.0, %v7308
    %v7310 = vpop.f32.mrf.mxu0
    %7311 = vmatprep.mubr.f32.mxu0 0.0
    %7312 = vmatmul.mubr.f32.gmra.mxu0 %v7199
    %v7313 = vpop.f32.mrf.mxu0
    %v7314 = vadd.f32 0.0, %v7313
    %v7315 = vpop.f32.mrf.mxu0
    %7316 = vmatprep.mubr.f32.mxu0 0.0
    %7317 = vmatmul.mubr.f32.gmra.mxu0 %v7201
    %v7318 = vpop.f32.mrf.mxu0
    %v7319 = vadd.f32 0.0, %v7318
    %v7320 = vpop.f32.mrf.mxu0
    %7321 = vmatprep.mubr.f32.mxu0 0.0
    %7322 = vmatmul.mubr.f32.gmra.mxu0 %v7203
    %v7323 = vpop.f32.mrf.mxu0
    %v7324 = vadd.f32 0.0, %v7323
    %v7325 = vpop.f32.mrf.mxu0
    %7326 = vmatprep.mubr.f32.mxu0 0.0
    %7327 = vmatmul.mubr.f32.gmra.mxu0 %v7205
    %v7328 = vpop.f32.mrf.mxu0
    %v7329 = vadd.f32 0.0, %v7328
    %v7330 = vpop.f32.mrf.mxu0
    %7331 = vmatprep.mubr.f32.mxu0 0.0
    %7332 = vmatmul.mubr.f32.gmra.mxu0 %v7207
    %v7333 = vpop.f32.mrf.mxu0
    %v7334 = vadd.f32 0.0, %v7333
    %v7335 = vpop.f32.mrf.mxu0
    %7336 = vdwg.mxu0
    %v7337 = vmul.f32 %v7294, 0.35355338
    %v7338 = vmul.f32 %v7299, 0.35355338
    %v7339 = vmul.f32 %v7304, 0.35355338
    %v7340 = vmul.f32 %v7309, 0.35355338
    %v7341 = vmul.f32 %v7314, 0.35355338
    %v7342 = vmul.f32 %v7319, 0.35355338
    %v7343 = vmul.f32 %v7324, 0.35355338
    %v7344 = vmul.f32 %v7329, 0.35355338
    %v7345 = vmul.f32 %v7334, 0.35355338
    %v7346 = vsel %vm1090, %v7337, -inf
    %7347 = vmax.xlane.f32.xlu0 %v7346
    %v7348 = vpop.xlane.xlu0 %7347
    %v7349 = vsel %vm1090, %v7338, -inf
    %7350 = vmax.xlane.f32.xlu0 %v7349
    %v7351 = vpop.xlane.xlu0 %7350
    %v7352 = vsel %vm1090, %v7339, -inf
    %7353 = vmax.xlane.f32.xlu0 %v7352
    %v7354 = vpop.xlane.xlu0 %7353
    %v7355 = vsel %vm1090, %v7340, -inf
    %7356 = vmax.xlane.f32.xlu0 %v7355
    %v7357 = vpop.xlane.xlu0 %7356
    %v7358 = vsel %vm1090, %v7341, -inf
    %7359 = vmax.xlane.f32.xlu0 %v7358
    %v7360 = vpop.xlane.xlu0 %7359
    %v7361 = vsel %vm1090, %v7342, -inf
    %7362 = vmax.xlane.f32.xlu0 %v7361
    %v7363 = vpop.xlane.xlu0 %7362
    %v7364 = vsel %vm1090, %v7343, -inf
    %7365 = vmax.xlane.f32.xlu0 %v7364
    %v7366 = vpop.xlane.xlu0 %7365
    %v7367 = vsel %vm1090, %v7344, -inf
    %7368 = vmax.xlane.f32.xlu0 %v7367
    %v7369 = vpop.xlane.xlu0 %7368
    %v7370 = vsel %vm1115, %v7345, -inf
    %7371 = vmax.xlane.f32.xlu0 %v7370
    %v7372 = vpop.xlane.xlu0 %7371
    %v7373 = vsub.f32 %v7337, %v7348
    %v7374 = vsub.f32 %v7338, %v7351
    %v7375 = vsub.f32 %v7339, %v7354
    %v7376 = vsub.f32 %v7340, %v7357
    %v7377 = vsub.f32 %v7341, %v7360
    %v7378 = vsub.f32 %v7342, %v7363
    %v7379 = vsub.f32 %v7343, %v7366
    %v7380 = vsub.f32 %v7344, %v7369
    %v7381 = vsub.f32 %v7345, %v7372
    %v7382 = vmul.f32 %v7373, 1.442695
    %v7383 = vpow.pop %v7382
    %v7384 = vmul.f32 %v7374, 1.442695
    %v7385 = vpow.pop %v7384
    %v7386 = vmul.f32 %v7375, 1.442695
    %v7387 = vpow.pop %v7386
    %v7388 = vmul.f32 %v7376, 1.442695
    %v7389 = vpow.pop %v7388
    %v7390 = vmul.f32 %v7377, 1.442695
    %v7391 = vpow.pop %v7390
    %v7392 = vmul.f32 %v7378, 1.442695
    %v7393 = vpow.pop %v7392
    %v7394 = vmul.f32 %v7379, 1.442695
    %v7395 = vpow.pop %v7394
    %v7396 = vmul.f32 %v7380, 1.442695
    %v7397 = vpow.pop %v7396
    %v7398 = vmul.f32 %v7381, 1.442695
    %v7399 = vpow.pop %v7398
    %v7400 = vsel %vm1090, %v7383, 0.0
    %7401 = vadd.xlane.f32.xlu0 %v7400
    %v7402 = vpop.xlane.xlu0 %7401
    %v7403 = vsel %vm1090, %v7385, 0.0
    %7404 = vadd.xlane.f32.xlu0 %v7403
    %v7405 = vpop.xlane.xlu0 %7404
    %v7406 = vsel %vm1090, %v7387, 0.0
    %7407 = vadd.xlane.f32.xlu0 %v7406
    %v7408 = vpop.xlane.xlu0 %7407
    %v7409 = vsel %vm1090, %v7389, 0.0
    %7410 = vadd.xlane.f32.xlu0 %v7409
    %v7411 = vpop.xlane.xlu0 %7410
    %v7412 = vsel %vm1090, %v7391, 0.0
    %7413 = vadd.xlane.f32.xlu0 %v7412
    %v7414 = vpop.xlane.xlu0 %7413
    %v7415 = vsel %vm1090, %v7393, 0.0
    %7416 = vadd.xlane.f32.xlu0 %v7415
    %v7417 = vpop.xlane.xlu0 %7416
    %v7418 = vsel %vm1090, %v7395, 0.0
    %7419 = vadd.xlane.f32.xlu0 %v7418
    %v7420 = vpop.xlane.xlu0 %7419
    %v7421 = vsel %vm1090, %v7397, 0.0
    %7422 = vadd.xlane.f32.xlu0 %v7421
    %v7423 = vpop.xlane.xlu0 %7422
    %v7424 = vsel %vm1115, %v7399, 0.0
    %7425 = vadd.xlane.f32.xlu0 %v7424
    %v7426 = vpop.xlane.xlu0 %7425
    %v7427 = vrcp.pop %v7402
    %v7428 = vrcp.pop %v7405
    %v7429 = vrcp.pop %v7408
    %v7430 = vrcp.pop %v7411
    %v7431 = vrcp.pop %v7414
    %v7432 = vrcp.pop %v7417
    %v7433 = vrcp.pop %v7420
    %v7434 = vrcp.pop %v7423
    %v7435 = vrcp.pop %v7426
    %v7436 = vmul.f32 %v7383, %v7427
    %v7437 = vmul.f32 %v7385, %v7428
    %v7438 = vmul.f32 %v7387, %v7429
    %v7439 = vmul.f32 %v7389, %v7430
    %v7440 = vmul.f32 %v7391, %v7431
    %v7441 = vmul.f32 %v7393, %v7432
    %v7442 = vmul.f32 %v7395, %v7433
    %v7443 = vmul.f32 %v7397, %v7434
    %v7444 = vmul.f32 %v7399, %v7435
    %7445 = vrot.lane.b32.xlu0 %v6626, 56
    %v7446 = vpop.permute.xlu0 %7445
    %7447 = vrot.lane.b32.xlu0 %v6631, 56
    %v7448 = vpop.permute.xlu0 %7447
    %7449 = vrot.lane.b32.xlu0 %v6636, 56
    %v7450 = vpop.permute.xlu0 %7449
    %7451 = vrot.lane.b32.xlu0 %v6641, 56
    %v7452 = vpop.permute.xlu0 %7451
    %7453 = vrot.lane.b32.xlu0 %v6646, 56
    %v7454 = vpop.permute.xlu0 %7453
    %7455 = vrot.lane.b32.xlu0 %v6651, 56
    %v7456 = vpop.permute.xlu0 %7455
    %7457 = vrot.lane.b32.xlu0 %v6656, 56
    %v7458 = vpop.permute.xlu0 %7457
    %7459 = vrot.lane.b32.xlu0 %v6661, 56
    %v7460 = vpop.permute.xlu0 %7459
    %7461 = vrot.lane.b32.xlu0 %v6666, 56
    %v7462 = vpop.permute.xlu0 %7461
    %v7472 = vsel %vm1090, %v7436, 0
    %v7475 = vsel %vm1090, %v7437, 0
    %v7478 = vsel %vm1090, %v7438, 0
    %v7481 = vsel %vm1090, %v7439, 0
    %v7484 = vsel %vm1090, %v7440, 0
    %v7487 = vsel %vm1090, %v7441, 0
    %v7490 = vsel %vm1090, %v7442, 0
    %v7493 = vsel %vm1090, %v7443, 0
    %v7496 = vsel %vm1090, %v7444, 0
    %v7498 = vsel %vm362, %v7462, 0
    %7500 = vmatprep.subr.mxu0 0.0
    %7501 = vmatpush1.msra.mxu0 0.0
    %7502 = vmatprep.subr.mxu0 0.0
    %7503 = vmatpush1.msra.mxu0 0.0
    %7504 = vmatprep.subr.mxu0 0.0
    %7505 = vmatpush1.msra.mxu0 0.0
    %7506 = vmatprep.subr.mxu0 0.0
    %7507 = vmatpush1.msra.mxu0 0.0
    %7508 = vmatprep.subr.mxu0 0.0
    %7509 = vmatpush1.msra.mxu0 0.0
    %7510 = vmatprep.subr.mxu0 0.0
    %7511 = vmatpush1.msra.mxu0 0.0
    %7512 = vmatprep.subr.mxu0 0.0
    %7513 = vmatpush1.msra.mxu0 0.0
    %7514 = vmatprep.subr.mxu0 0.0
    %7515 = vmatpush1.msra.mxu0 %v7498
    %7516 = vmatprep.subr.mxu0 0.0
    %7517 = vmatpush1.msra.mxu0 %v7460
    %7518 = vmatprep.subr.mxu0 0.0
    %7519 = vmatpush1.msra.mxu0 %v7458
    %7520 = vmatprep.subr.mxu0 0.0
    %7521 = vmatpush1.msra.mxu0 %v7456
    %7522 = vmatprep.subr.mxu0 0.0
    %7523 = vmatpush1.msra.mxu0 %v7454
    %7524 = vmatprep.subr.mxu0 0.0
    %7525 = vmatpush1.msra.mxu0 %v7452
    %7526 = vmatprep.subr.mxu0 0.0
    %7527 = vmatpush1.msra.mxu0 %v7450
    %7528 = vmatprep.subr.mxu0 0.0
    %7529 = vmatpush1.msra.mxu0 %v7448
    %7530 = vmatprep.subr.mxu0 0.0
    %7531 = vmatpush1.msra.mxu0 %v7446
    %7532 = vmatprep.subr.mxu0 0.0
    %7533 = vmatpush2.msra.mxu0 0.0
    %7534 = vmatprep.subr.mxu0 0.0
    %7535 = vmatpush2.msra.mxu0 0.0
    %7536 = vmatprep.subr.mxu0 0.0
    %7537 = vmatpush2.msra.mxu0 0.0
    %7538 = vmatprep.subr.mxu0 0.0
    %7539 = vmatpush2.msra.mxu0 0.0
    %7540 = vmatprep.subr.mxu0 0.0
    %7541 = vmatpush2.msra.mxu0 0.0
    %7542 = vmatprep.subr.mxu0 0.0
    %7543 = vmatpush2.msra.mxu0 0.0
    %7544 = vmatprep.subr.mxu0 0.0
    %7545 = vmatpush2.msra.mxu0 0.0
    %7546 = vmatprep.subr.mxu0 0.0
    %7547 = vmatpush2.msra.mxu0 0.0
    %7548 = vmatprep.subr.mxu0 0.0
    %7549 = vmatpush2.msra.mxu0 0.0
    %7550 = vmatprep.subr.mxu0 0.0
    %7551 = vmatpush2.msra.mxu0 0.0
    %7552 = vmatprep.subr.mxu0 0.0
    %7553 = vmatpush2.msra.mxu0 0.0
    %7554 = vmatprep.subr.mxu0 0.0
    %7555 = vmatpush2.msra.mxu0 0.0
    %7556 = vmatprep.subr.mxu0 0.0
    %7557 = vmatpush2.msra.mxu0 0.0
    %7558 = vmatprep.subr.mxu0 0.0
    %7559 = vmatpush2.msra.mxu0 0.0
    %7560 = vmatprep.subr.mxu0 0.0
    %7561 = vmatpush2.msra.mxu0 0.0
    %7562 = vmatprep.subr.mxu0 0.0
    %7563 = vmatpush2.msra.mxu0 0.0
    %7564 = vmatprep.mubr.f32.mxu0 0.0
    %7565 = vmatmul.mubr.f32.gmra.mxu0 %v7472
    %v7566 = vpop.f32.mrf.mxu0
    %v7567 = vadd.f32 0.0, %v7566
    %v7568 = vpop.f32.mrf.mxu0
    %7569 = vmatprep.mubr.f32.mxu0 0.0
    %7570 = vmatmul.mubr.f32.gmra.mxu0 %v7475
    %v7571 = vpop.f32.mrf.mxu0
    %v7572 = vadd.f32 0.0, %v7571
    %v7573 = vpop.f32.mrf.mxu0
    %7574 = vmatprep.mubr.f32.mxu0 0.0
    %7575 = vmatmul.mubr.f32.gmra.mxu0 %v7478
    %v7576 = vpop.f32.mrf.mxu0
    %v7577 = vadd.f32 0.0, %v7576
    %v7578 = vpop.f32.mrf.mxu0
    %7579 = vmatprep.mubr.f32.mxu0 0.0
    %7580 = vmatmul.mubr.f32.gmra.mxu0 %v7481
    %v7581 = vpop.f32.mrf.mxu0
    %v7582 = vadd.f32 0.0, %v7581
    %v7583 = vpop.f32.mrf.mxu0
    %7584 = vmatprep.mubr.f32.mxu0 0.0
    %7585 = vmatmul.mubr.f32.gmra.mxu0 %v7484
    %v7586 = vpop.f32.mrf.mxu0
    %v7587 = vadd.f32 0.0, %v7586
    %v7588 = vpop.f32.mrf.mxu0
    %7589 = vmatprep.mubr.f32.mxu0 0.0
    %7590 = vmatmul.mubr.f32.gmra.mxu0 %v7487
    %v7591 = vpop.f32.mrf.mxu0
    %v7592 = vadd.f32 0.0, %v7591
    %v7593 = vpop.f32.mrf.mxu0
    %7594 = vmatprep.mubr.f32.mxu0 0.0
    %7595 = vmatmul.mubr.f32.gmra.mxu0 %v7490
    %v7596 = vpop.f32.mrf.mxu0
    %v7597 = vadd.f32 0.0, %v7596
    %v7598 = vpop.f32.mrf.mxu0
    %7599 = vmatprep.mubr.f32.mxu0 0.0
    %7600 = vmatmul.mubr.f32.gmra.mxu0 %v7493
    %v7601 = vpop.f32.mrf.mxu0
    %v7602 = vadd.f32 0.0, %v7601
    %v7603 = vpop.f32.mrf.mxu0
    %7604 = vmatprep.mubr.f32.mxu0 0.0
    %7605 = vmatmul.mubr.f32.gmra.mxu0 %v7496
    %v7606 = vpop.f32.mrf.mxu0
    %v7607 = vadd.f32 0.0, %v7606
    %v7608 = vpop.f32.mrf.mxu0
    %7609 = vdwg.mxu0
    %7610 = vrot.lane.b32.xlu0 %v6626, 112
    %v7611 = vpop.permute.xlu0 %7610
    %7612 = vrot.lane.b32.xlu0 %v6631, 112
    %v7613 = vpop.permute.xlu0 %7612
    %7614 = vrot.lane.b32.xlu0 %v6636, 112
    %v7615 = vpop.permute.xlu0 %7614
    %7616 = vrot.lane.b32.xlu0 %v6641, 112
    %v7617 = vpop.permute.xlu0 %7616
    %7618 = vrot.lane.b32.xlu0 %v6646, 112
    %v7619 = vpop.permute.xlu0 %7618
    %7620 = vrot.lane.b32.xlu0 %v6651, 112
    %v7621 = vpop.permute.xlu0 %7620
    %7622 = vrot.lane.b32.xlu0 %v6656, 112
    %v7623 = vpop.permute.xlu0 %7622
    %7624 = vrot.lane.b32.xlu0 %v6661, 112
    %v7625 = vpop.permute.xlu0 %7624
    %7626 = vrot.lane.b32.xlu0 %v6666, 112
    %v7627 = vpop.permute.xlu0 %7626
    %7628 = vrot.lane.b32.xlu0 %v6626, 80
    %v7629 = vpop.permute.xlu0 %7628
    %7630 = vrot.lane.b32.xlu0 %v6631, 80
    %v7631 = vpop.permute.xlu0 %7630
    %7632 = vrot.lane.b32.xlu0 %v6636, 80
    %v7633 = vpop.permute.xlu0 %7632
    %7634 = vrot.lane.b32.xlu0 %v6641, 80
    %v7635 = vpop.permute.xlu0 %7634
    %7636 = vrot.lane.b32.xlu0 %v6646, 80
    %v7637 = vpop.permute.xlu0 %7636
    %7638 = vrot.lane.b32.xlu0 %v6651, 80
    %v7639 = vpop.permute.xlu0 %7638
    %7640 = vrot.lane.b32.xlu0 %v6656, 80
    %v7641 = vpop.permute.xlu0 %7640
    %7642 = vrot.lane.b32.xlu0 %v6661, 80
    %v7643 = vpop.permute.xlu0 %7642
    %7644 = vrot.lane.b32.xlu0 %v6666, 80
    %v7645 = vpop.permute.xlu0 %7644
    %v7646 = vsel %vm934, %v7611, 0
    %v7648 = vsel %vm934, %v7613, 0
    %v7650 = vsel %vm934, %v7615, 0
    %v7652 = vsel %vm934, %v7617, 0
    %v7654 = vsel %vm934, %v7619, 0
    %v7656 = vsel %vm934, %v7621, 0
    %v7658 = vsel %vm934, %v7623, 0
    %v7660 = vsel %vm934, %v7625, 0
    %v7662 = vsel %vm934, %v7627, 0
    %v7664 = vsel %vm934, %v7629, 0
    %v7666 = vsel %vm934, %v7631, 0
    %v7668 = vsel %vm934, %v7633, 0
    %v7670 = vsel %vm934, %v7635, 0
    %v7672 = vsel %vm934, %v7637, 0
    %v7674 = vsel %vm934, %v7639, 0
    %v7676 = vsel %vm934, %v7641, 0
    %v7678 = vsel %vm934, %v7643, 0
    %v7680 = vsel %vm934, %v7645, 0
    %7682 = vmatprep.subr.mxu0 0.0
    %7683 = vmatpush1.xpose.msra.mxu0 0.0
    %7684 = vmatprep.subr.mxu0 0.0
    %7685 = vmatpush1.xpose.msra.mxu0 0.0
    %7686 = vmatprep.subr.mxu0 0.0
    %7687 = vmatpush1.xpose.msra.mxu0 0.0
    %7688 = vmatprep.subr.mxu0 0.0
    %7689 = vmatpush1.xpose.msra.mxu0 0.0
    %7690 = vmatprep.subr.mxu0 0.0
    %7691 = vmatpush1.xpose.msra.mxu0 0.0
    %7692 = vmatprep.subr.mxu0 0.0
    %7693 = vmatpush1.xpose.msra.mxu0 0.0
    %7694 = vmatprep.subr.mxu0 0.0
    %7695 = vmatpush1.xpose.msra.mxu0 0.0
    %7696 = vmatprep.subr.mxu0 0.0
    %7697 = vmatpush1.xpose.msra.mxu0 %v7680
    %7698 = vmatprep.subr.mxu0 0.0
    %7699 = vmatpush1.xpose.msra.mxu0 %v7678
    %7700 = vmatprep.subr.mxu0 0.0
    %7701 = vmatpush1.xpose.msra.mxu0 %v7676
    %7702 = vmatprep.subr.mxu0 0.0
    %7703 = vmatpush1.xpose.msra.mxu0 %v7674
    %7704 = vmatprep.subr.mxu0 0.0
    %7705 = vmatpush1.xpose.msra.mxu0 %v7672
    %7706 = vmatprep.subr.mxu0 0.0
    %7707 = vmatpush1.xpose.msra.mxu0 %v7670
    %7708 = vmatprep.subr.mxu0 0.0
    %7709 = vmatpush1.xpose.msra.mxu0 %v7668
    %7710 = vmatprep.subr.mxu0 0.0
    %7711 = vmatpush1.xpose.msra.mxu0 %v7666
    %7712 = vmatprep.subr.mxu0 0.0
    %7713 = vmatpush1.xpose.msra.mxu0 %v7664
    %7714 = vmatprep.subr.mxu0 0.0
    %7715 = vmatpush2.xpose.msra.mxu0 0.0
    %7716 = vmatprep.subr.mxu0 0.0
    %7717 = vmatpush2.xpose.msra.mxu0 0.0
    %7718 = vmatprep.subr.mxu0 0.0
    %7719 = vmatpush2.xpose.msra.mxu0 0.0
    %7720 = vmatprep.subr.mxu0 0.0
    %7721 = vmatpush2.xpose.msra.mxu0 0.0
    %7722 = vmatprep.subr.mxu0 0.0
    %7723 = vmatpush2.xpose.msra.mxu0 0.0
    %7724 = vmatprep.subr.mxu0 0.0
    %7725 = vmatpush2.xpose.msra.mxu0 0.0
    %7726 = vmatprep.subr.mxu0 0.0
    %7727 = vmatpush2.xpose.msra.mxu0 0.0
    %7728 = vmatprep.subr.mxu0 0.0
    %7729 = vmatpush2.xpose.msra.mxu0 0.0
    %7730 = vmatprep.subr.mxu0 0.0
    %7731 = vmatpush2.xpose.msra.mxu0 0.0
    %7732 = vmatprep.subr.mxu0 0.0
    %7733 = vmatpush2.xpose.msra.mxu0 0.0
    %7734 = vmatprep.subr.mxu0 0.0
    %7735 = vmatpush2.xpose.msra.mxu0 0.0
    %7736 = vmatprep.subr.mxu0 0.0
    %7737 = vmatpush2.xpose.msra.mxu0 0.0
    %7738 = vmatprep.subr.mxu0 0.0
    %7739 = vmatpush2.xpose.msra.mxu0 0.0
    %7740 = vmatprep.subr.mxu0 0.0
    %7741 = vmatpush2.xpose.msra.mxu0 0.0
    %7742 = vmatprep.subr.mxu0 0.0
    %7743 = vmatpush2.xpose.msra.mxu0 0.0
    %7744 = vmatprep.subr.mxu0 0.0
    %7745 = vmatpush2.xpose.msra.mxu0 0.0
    %7746 = vmatprep.mubr.f32.mxu0 0.0
    %7747 = vmatmul.mubr.f32.gmra.mxu0 %v7646
    %v7748 = vpop.f32.mrf.mxu0
    %v7749 = vadd.f32 0.0, %v7748
    %v7750 = vpop.f32.mrf.mxu0
    %7751 = vmatprep.mubr.f32.mxu0 0.0
    %7752 = vmatmul.mubr.f32.gmra.mxu0 %v7648
    %v7753 = vpop.f32.mrf.mxu0
    %v7754 = vadd.f32 0.0, %v7753
    %v7755 = vpop.f32.mrf.mxu0
    %7756 = vmatprep.mubr.f32.mxu0 0.0
    %7757 = vmatmul.mubr.f32.gmra.mxu0 %v7650
    %v7758 = vpop.f32.mrf.mxu0
    %v7759 = vadd.f32 0.0, %v7758
    %v7760 = vpop.f32.mrf.mxu0
    %7761 = vmatprep.mubr.f32.mxu0 0.0
    %7762 = vmatmul.mubr.f32.gmra.mxu0 %v7652
    %v7763 = vpop.f32.mrf.mxu0
    %v7764 = vadd.f32 0.0, %v7763
    %v7765 = vpop.f32.mrf.mxu0
    %7766 = vmatprep.mubr.f32.mxu0 0.0
    %7767 = vmatmul.mubr.f32.gmra.mxu0 %v7654
    %v7768 = vpop.f32.mrf.mxu0
    %v7769 = vadd.f32 0.0, %v7768
    %v7770 = vpop.f32.mrf.mxu0
    %7771 = vmatprep.mubr.f32.mxu0 0.0
    %7772 = vmatmul.mubr.f32.gmra.mxu0 %v7656
    %v7773 = vpop.f32.mrf.mxu0
    %v7774 = vadd.f32 0.0, %v7773
    %v7775 = vpop.f32.mrf.mxu0
    %7776 = vmatprep.mubr.f32.mxu0 0.0
    %7777 = vmatmul.mubr.f32.gmra.mxu0 %v7658
    %v7778 = vpop.f32.mrf.mxu0
    %v7779 = vadd.f32 0.0, %v7778
    %v7780 = vpop.f32.mrf.mxu0
    %7781 = vmatprep.mubr.f32.mxu0 0.0
    %7782 = vmatmul.mubr.f32.gmra.mxu0 %v7660
    %v7783 = vpop.f32.mrf.mxu0
    %v7784 = vadd.f32 0.0, %v7783
    %v7785 = vpop.f32.mrf.mxu0
    %7786 = vmatprep.mubr.f32.mxu0 0.0
    %7787 = vmatmul.mubr.f32.gmra.mxu0 %v7662
    %v7788 = vpop.f32.mrf.mxu0
    %v7789 = vadd.f32 0.0, %v7788
    %v7790 = vpop.f32.mrf.mxu0
    %7791 = vdwg.mxu0
    %v7792 = vmul.f32 %v7749, 0.35355338
    %v7793 = vmul.f32 %v7754, 0.35355338
    %v7794 = vmul.f32 %v7759, 0.35355338
    %v7795 = vmul.f32 %v7764, 0.35355338
    %v7796 = vmul.f32 %v7769, 0.35355338
    %v7797 = vmul.f32 %v7774, 0.35355338
    %v7798 = vmul.f32 %v7779, 0.35355338
    %v7799 = vmul.f32 %v7784, 0.35355338
    %v7800 = vmul.f32 %v7789, 0.35355338
    %v7801 = vsel %vm1090, %v7792, -inf
    %7802 = vmax.xlane.f32.xlu0 %v7801
    %v7803 = vpop.xlane.xlu0 %7802
    %v7804 = vsel %vm1090, %v7793, -inf
    %7805 = vmax.xlane.f32.xlu0 %v7804
    %v7806 = vpop.xlane.xlu0 %7805
    %v7807 = vsel %vm1090, %v7794, -inf
    %7808 = vmax.xlane.f32.xlu0 %v7807
    %v7809 = vpop.xlane.xlu0 %7808
    %v7810 = vsel %vm1090, %v7795, -inf
    %7811 = vmax.xlane.f32.xlu0 %v7810
    %v7812 = vpop.xlane.xlu0 %7811
    %v7813 = vsel %vm1090, %v7796, -inf
    %7814 = vmax.xlane.f32.xlu0 %v7813
    %v7815 = vpop.xlane.xlu0 %7814
    %v7816 = vsel %vm1090, %v7797, -inf
    %7817 = vmax.xlane.f32.xlu0 %v7816
    %v7818 = vpop.xlane.xlu0 %7817
    %v7819 = vsel %vm1090, %v7798, -inf
    %7820 = vmax.xlane.f32.xlu0 %v7819
    %v7821 = vpop.xlane.xlu0 %7820
    %v7822 = vsel %vm1090, %v7799, -inf
    %7823 = vmax.xlane.f32.xlu0 %v7822
    %v7824 = vpop.xlane.xlu0 %7823
    %v7825 = vsel %vm1115, %v7800, -inf
    %7826 = vmax.xlane.f32.xlu0 %v7825
    %v7827 = vpop.xlane.xlu0 %7826
    %v7828 = vsub.f32 %v7792, %v7803
    %v7829 = vsub.f32 %v7793, %v7806
    %v7830 = vsub.f32 %v7794, %v7809
    %v7831 = vsub.f32 %v7795, %v7812
    %v7832 = vsub.f32 %v7796, %v7815
    %v7833 = vsub.f32 %v7797, %v7818
    %v7834 = vsub.f32 %v7798, %v7821
    %v7835 = vsub.f32 %v7799, %v7824
    %v7836 = vsub.f32 %v7800, %v7827
    %v7837 = vmul.f32 %v7828, 1.442695
    %v7838 = vpow.pop %v7837
    %v7839 = vmul.f32 %v7829, 1.442695
    %v7840 = vpow.pop %v7839
    %v7841 = vmul.f32 %v7830, 1.442695
    %v7842 = vpow.pop %v7841
    %v7843 = vmul.f32 %v7831, 1.442695
    %v7844 = vpow.pop %v7843
    %v7845 = vmul.f32 %v7832, 1.442695
    %v7846 = vpow.pop %v7845
    %v7847 = vmul.f32 %v7833, 1.442695
    %v7848 = vpow.pop %v7847
    %v7849 = vmul.f32 %v7834, 1.442695
    %v7850 = vpow.pop %v7849
    %v7851 = vmul.f32 %v7835, 1.442695
    %v7852 = vpow.pop %v7851
    %v7853 = vmul.f32 %v7836, 1.442695
    %v7854 = vpow.pop %v7853
    %v7855 = vsel %vm1090, %v7838, 0.0
    %7856 = vadd.xlane.f32.xlu0 %v7855
    %v7857 = vpop.xlane.xlu0 %7856
    %v7858 = vsel %vm1090, %v7840, 0.0
    %7859 = vadd.xlane.f32.xlu0 %v7858
    %v7860 = vpop.xlane.xlu0 %7859
    %v7861 = vsel %vm1090, %v7842, 0.0
    %7862 = vadd.xlane.f32.xlu0 %v7861
    %v7863 = vpop.xlane.xlu0 %7862
    %v7864 = vsel %vm1090, %v7844, 0.0
    %7865 = vadd.xlane.f32.xlu0 %v7864
    %v7866 = vpop.xlane.xlu0 %7865
    %v7867 = vsel %vm1090, %v7846, 0.0
    %7868 = vadd.xlane.f32.xlu0 %v7867
    %v7869 = vpop.xlane.xlu0 %7868
    %v7870 = vsel %vm1090, %v7848, 0.0
    %7871 = vadd.xlane.f32.xlu0 %v7870
    %v7872 = vpop.xlane.xlu0 %7871
    %v7873 = vsel %vm1090, %v7850, 0.0
    %7874 = vadd.xlane.f32.xlu0 %v7873
    %v7875 = vpop.xlane.xlu0 %7874
    %v7876 = vsel %vm1090, %v7852, 0.0
    %7877 = vadd.xlane.f32.xlu0 %v7876
    %v7878 = vpop.xlane.xlu0 %7877
    %v7879 = vsel %vm1115, %v7854, 0.0
    %7880 = vadd.xlane.f32.xlu0 %v7879
    %v7881 = vpop.xlane.xlu0 %7880
    %v7882 = vrcp.pop %v7857
    %v7883 = vrcp.pop %v7860
    %v7884 = vrcp.pop %v7863
    %v7885 = vrcp.pop %v7866
    %v7886 = vrcp.pop %v7869
    %v7887 = vrcp.pop %v7872
    %v7888 = vrcp.pop %v7875
    %v7889 = vrcp.pop %v7878
    %v7890 = vrcp.pop %v7881
    %v7891 = vmul.f32 %v7838, %v7882
    %v7892 = vmul.f32 %v7840, %v7883
    %v7893 = vmul.f32 %v7842, %v7884
    %v7894 = vmul.f32 %v7844, %v7885
    %v7895 = vmul.f32 %v7846, %v7886
    %v7896 = vmul.f32 %v7848, %v7887
    %v7897 = vmul.f32 %v7850, %v7888
    %v7898 = vmul.f32 %v7852, %v7889
    %v7899 = vmul.f32 %v7854, %v7890
    %7900 = vrot.lane.b32.xlu0 %v6626, 48
    %v7901 = vpop.permute.xlu0 %7900
    %7902 = vrot.lane.b32.xlu0 %v6631, 48
    %v7903 = vpop.permute.xlu0 %7902
    %7904 = vrot.lane.b32.xlu0 %v6636, 48
    %v7905 = vpop.permute.xlu0 %7904
    %7906 = vrot.lane.b32.xlu0 %v6641, 48
    %v7907 = vpop.permute.xlu0 %7906
    %7908 = vrot.lane.b32.xlu0 %v6646, 48
    %v7909 = vpop.permute.xlu0 %7908
    %7910 = vrot.lane.b32.xlu0 %v6651, 48
    %v7911 = vpop.permute.xlu0 %7910
    %7912 = vrot.lane.b32.xlu0 %v6656, 48
    %v7913 = vpop.permute.xlu0 %7912
    %7914 = vrot.lane.b32.xlu0 %v6661, 48
    %v7915 = vpop.permute.xlu0 %7914
    %7916 = vrot.lane.b32.xlu0 %v6666, 48
    %v7917 = vpop.permute.xlu0 %7916
    %v7927 = vsel %vm1090, %v7891, 0
    %v7930 = vsel %vm1090, %v7892, 0
    %v7933 = vsel %vm1090, %v7893, 0
    %v7936 = vsel %vm1090, %v7894, 0
    %v7939 = vsel %vm1090, %v7895, 0
    %v7942 = vsel %vm1090, %v7896, 0
    %v7945 = vsel %vm1090, %v7897, 0
    %v7948 = vsel %vm1090, %v7898, 0
    %v7951 = vsel %vm1090, %v7899, 0
    %v7953 = vsel %vm362, %v7917, 0
    %7955 = vmatprep.subr.mxu0 0.0
    %7956 = vmatpush1.msra.mxu0 0.0
    %7957 = vmatprep.subr.mxu0 0.0
    %7958 = vmatpush1.msra.mxu0 0.0
    %7959 = vmatprep.subr.mxu0 0.0
    %7960 = vmatpush1.msra.mxu0 0.0
    %7961 = vmatprep.subr.mxu0 0.0
    %7962 = vmatpush1.msra.mxu0 0.0
    %7963 = vmatprep.subr.mxu0 0.0
    %7964 = vmatpush1.msra.mxu0 0.0
    %7965 = vmatprep.subr.mxu0 0.0
    %7966 = vmatpush1.msra.mxu0 0.0
    %7967 = vmatprep.subr.mxu0 0.0
    %7968 = vmatpush1.msra.mxu0 0.0
    %7969 = vmatprep.subr.mxu0 0.0
    %7970 = vmatpush1.msra.mxu0 %v7953
    %7971 = vmatprep.subr.mxu0 0.0
    %7972 = vmatpush1.msra.mxu0 %v7915
    %7973 = vmatprep.subr.mxu0 0.0
    %7974 = vmatpush1.msra.mxu0 %v7913
    %7975 = vmatprep.subr.mxu0 0.0
    %7976 = vmatpush1.msra.mxu0 %v7911
    %7977 = vmatprep.subr.mxu0 0.0
    %7978 = vmatpush1.msra.mxu0 %v7909
    %7979 = vmatprep.subr.mxu0 0.0
    %7980 = vmatpush1.msra.mxu0 %v7907
    %7981 = vmatprep.subr.mxu0 0.0
    %7982 = vmatpush1.msra.mxu0 %v7905
    %7983 = vmatprep.subr.mxu0 0.0
    %7984 = vmatpush1.msra.mxu0 %v7903
    %7985 = vmatprep.subr.mxu0 0.0
    %7986 = vmatpush1.msra.mxu0 %v7901
    %7987 = vmatprep.subr.mxu0 0.0
    %7988 = vmatpush2.msra.mxu0 0.0
    %7989 = vmatprep.subr.mxu0 0.0
    %7990 = vmatpush2.msra.mxu0 0.0
    %7991 = vmatprep.subr.mxu0 0.0
    %7992 = vmatpush2.msra.mxu0 0.0
    %7993 = vmatprep.subr.mxu0 0.0
    %7994 = vmatpush2.msra.mxu0 0.0
    %7995 = vmatprep.subr.mxu0 0.0
    %7996 = vmatpush2.msra.mxu0 0.0
    %7997 = vmatprep.subr.mxu0 0.0
    %7998 = vmatpush2.msra.mxu0 0.0
    %7999 = vmatprep.subr.mxu0 0.0
    %8000 = vmatpush2.msra.mxu0 0.0
    %8001 = vmatprep.subr.mxu0 0.0
    %8002 = vmatpush2.msra.mxu0 0.0
    %8003 = vmatprep.subr.mxu0 0.0
    %8004 = vmatpush2.msra.mxu0 0.0
    %8005 = vmatprep.subr.mxu0 0.0
    %8006 = vmatpush2.msra.mxu0 0.0
    %8007 = vmatprep.subr.mxu0 0.0
    %8008 = vmatpush2.msra.mxu0 0.0
    %8009 = vmatprep.subr.mxu0 0.0
    %8010 = vmatpush2.msra.mxu0 0.0
    %8011 = vmatprep.subr.mxu0 0.0
    %8012 = vmatpush2.msra.mxu0 0.0
    %8013 = vmatprep.subr.mxu0 0.0
    %8014 = vmatpush2.msra.mxu0 0.0
    %8015 = vmatprep.subr.mxu0 0.0
    %8016 = vmatpush2.msra.mxu0 0.0
    %8017 = vmatprep.subr.mxu0 0.0
    %8018 = vmatpush2.msra.mxu0 0.0
    %8019 = vmatprep.mubr.f32.mxu0 0.0
    %8020 = vmatmul.mubr.f32.gmra.mxu0 %v7927
    %v8021 = vpop.f32.mrf.mxu0
    %v8022 = vadd.f32 0.0, %v8021
    %v8023 = vpop.f32.mrf.mxu0
    %8024 = vmatprep.mubr.f32.mxu0 0.0
    %8025 = vmatmul.mubr.f32.gmra.mxu0 %v7930
    %v8026 = vpop.f32.mrf.mxu0
    %v8027 = vadd.f32 0.0, %v8026
    %v8028 = vpop.f32.mrf.mxu0
    %8029 = vmatprep.mubr.f32.mxu0 0.0
    %8030 = vmatmul.mubr.f32.gmra.mxu0 %v7933
    %v8031 = vpop.f32.mrf.mxu0
    %v8032 = vadd.f32 0.0, %v8031
    %v8033 = vpop.f32.mrf.mxu0
    %8034 = vmatprep.mubr.f32.mxu0 0.0
    %8035 = vmatmul.mubr.f32.gmra.mxu0 %v7936
    %v8036 = vpop.f32.mrf.mxu0
    %v8037 = vadd.f32 0.0, %v8036
    %v8038 = vpop.f32.mrf.mxu0
    %8039 = vmatprep.mubr.f32.mxu0 0.0
    %8040 = vmatmul.mubr.f32.gmra.mxu0 %v7939
    %v8041 = vpop.f32.mrf.mxu0
    %v8042 = vadd.f32 0.0, %v8041
    %v8043 = vpop.f32.mrf.mxu0
    %8044 = vmatprep.mubr.f32.mxu0 0.0
    %8045 = vmatmul.mubr.f32.gmra.mxu0 %v7942
    %v8046 = vpop.f32.mrf.mxu0
    %v8047 = vadd.f32 0.0, %v8046
    %v8048 = vpop.f32.mrf.mxu0
    %8049 = vmatprep.mubr.f32.mxu0 0.0
    %8050 = vmatmul.mubr.f32.gmra.mxu0 %v7945
    %v8051 = vpop.f32.mrf.mxu0
    %v8052 = vadd.f32 0.0, %v8051
    %v8053 = vpop.f32.mrf.mxu0
    %8054 = vmatprep.mubr.f32.mxu0 0.0
    %8055 = vmatmul.mubr.f32.gmra.mxu0 %v7948
    %v8056 = vpop.f32.mrf.mxu0
    %v8057 = vadd.f32 0.0, %v8056
    %v8058 = vpop.f32.mrf.mxu0
    %8059 = vmatprep.mubr.f32.mxu0 0.0
    %8060 = vmatmul.mubr.f32.gmra.mxu0 %v7951
    %v8061 = vpop.f32.mrf.mxu0
    %v8062 = vadd.f32 0.0, %v8061
    %v8063 = vpop.f32.mrf.mxu0
    %8064 = vdwg.mxu0
    %8065 = vrot.lane.b32.xlu0 %v6626, 104
    %v8066 = vpop.permute.xlu0 %8065
    %8067 = vrot.lane.b32.xlu0 %v6631, 104
    %v8068 = vpop.permute.xlu0 %8067
    %8069 = vrot.lane.b32.xlu0 %v6636, 104
    %v8070 = vpop.permute.xlu0 %8069
    %8071 = vrot.lane.b32.xlu0 %v6641, 104
    %v8072 = vpop.permute.xlu0 %8071
    %8073 = vrot.lane.b32.xlu0 %v6646, 104
    %v8074 = vpop.permute.xlu0 %8073
    %8075 = vrot.lane.b32.xlu0 %v6651, 104
    %v8076 = vpop.permute.xlu0 %8075
    %8077 = vrot.lane.b32.xlu0 %v6656, 104
    %v8078 = vpop.permute.xlu0 %8077
    %8079 = vrot.lane.b32.xlu0 %v6661, 104
    %v8080 = vpop.permute.xlu0 %8079
    %8081 = vrot.lane.b32.xlu0 %v6666, 104
    %v8082 = vpop.permute.xlu0 %8081
    %8083 = vrot.lane.b32.xlu0 %v6626, 72
    %v8084 = vpop.permute.xlu0 %8083
    %8085 = vrot.lane.b32.xlu0 %v6631, 72
    %v8086 = vpop.permute.xlu0 %8085
    %8087 = vrot.lane.b32.xlu0 %v6636, 72
    %v8088 = vpop.permute.xlu0 %8087
    %8089 = vrot.lane.b32.xlu0 %v6641, 72
    %v8090 = vpop.permute.xlu0 %8089
    %8091 = vrot.lane.b32.xlu0 %v6646, 72
    %v8092 = vpop.permute.xlu0 %8091
    %8093 = vrot.lane.b32.xlu0 %v6651, 72
    %v8094 = vpop.permute.xlu0 %8093
    %8095 = vrot.lane.b32.xlu0 %v6656, 72
    %v8096 = vpop.permute.xlu0 %8095
    %8097 = vrot.lane.b32.xlu0 %v6661, 72
    %v8098 = vpop.permute.xlu0 %8097
    %8099 = vrot.lane.b32.xlu0 %v6666, 72
    %v8100 = vpop.permute.xlu0 %8099
    %v8101 = vsel %vm934, %v8066, 0
    %v8103 = vsel %vm934, %v8068, 0
    %v8105 = vsel %vm934, %v8070, 0
    %v8107 = vsel %vm934, %v8072, 0
    %v8109 = vsel %vm934, %v8074, 0
    %v8111 = vsel %vm934, %v8076, 0
    %v8113 = vsel %vm934, %v8078, 0
    %v8115 = vsel %vm934, %v8080, 0
    %v8117 = vsel %vm934, %v8082, 0
    %v8119 = vsel %vm934, %v8084, 0
    %v8121 = vsel %vm934, %v8086, 0
    %v8123 = vsel %vm934, %v8088, 0
    %v8125 = vsel %vm934, %v8090, 0
    %v8127 = vsel %vm934, %v8092, 0
    %v8129 = vsel %vm934, %v8094, 0
    %v8131 = vsel %vm934, %v8096, 0
    %v8133 = vsel %vm934, %v8098, 0
    %v8135 = vsel %vm934, %v8100, 0
    %8137 = vmatprep.subr.mxu0 0.0
    %8138 = vmatpush1.xpose.msra.mxu0 0.0
    %8139 = vmatprep.subr.mxu0 0.0
    %8140 = vmatpush1.xpose.msra.mxu0 0.0
    %8141 = vmatprep.subr.mxu0 0.0
    %8142 = vmatpush1.xpose.msra.mxu0 0.0
    %8143 = vmatprep.subr.mxu0 0.0
    %8144 = vmatpush1.xpose.msra.mxu0 0.0
    %8145 = vmatprep.subr.mxu0 0.0
    %8146 = vmatpush1.xpose.msra.mxu0 0.0
    %8147 = vmatprep.subr.mxu0 0.0
    %8148 = vmatpush1.xpose.msra.mxu0 0.0
    %8149 = vmatprep.subr.mxu0 0.0
    %8150 = vmatpush1.xpose.msra.mxu0 0.0
    %8151 = vmatprep.subr.mxu0 0.0
    %8152 = vmatpush1.xpose.msra.mxu0 %v8135
    %8153 = vmatprep.subr.mxu0 0.0
    %8154 = vmatpush1.xpose.msra.mxu0 %v8133
    %8155 = vmatprep.subr.mxu0 0.0
    %8156 = vmatpush1.xpose.msra.mxu0 %v8131
    %8157 = vmatprep.subr.mxu0 0.0
    %8158 = vmatpush1.xpose.msra.mxu0 %v8129
    %8159 = vmatprep.subr.mxu0 0.0
    %8160 = vmatpush1.xpose.msra.mxu0 %v8127
    %8161 = vmatprep.subr.mxu0 0.0
    %8162 = vmatpush1.xpose.msra.mxu0 %v8125
    %8163 = vmatprep.subr.mxu0 0.0
    %8164 = vmatpush1.xpose.msra.mxu0 %v8123
    %8165 = vmatprep.subr.mxu0 0.0
    %8166 = vmatpush1.xpose.msra.mxu0 %v8121
    %8167 = vmatprep.subr.mxu0 0.0
    %8168 = vmatpush1.xpose.msra.mxu0 %v8119
    %8169 = vmatprep.subr.mxu0 0.0
    %8170 = vmatpush2.xpose.msra.mxu0 0.0
    %8171 = vmatprep.subr.mxu0 0.0
    %8172 = vmatpush2.xpose.msra.mxu0 0.0
    %8173 = vmatprep.subr.mxu0 0.0
    %8174 = vmatpush2.xpose.msra.mxu0 0.0
    %8175 = vmatprep.subr.mxu0 0.0
    %8176 = vmatpush2.xpose.msra.mxu0 0.0
    %8177 = vmatprep.subr.mxu0 0.0
    %8178 = vmatpush2.xpose.msra.mxu0 0.0
    %8179 = vmatprep.subr.mxu0 0.0
    %8180 = vmatpush2.xpose.msra.mxu0 0.0
    %8181 = vmatprep.subr.mxu0 0.0
    %8182 = vmatpush2.xpose.msra.mxu0 0.0
    %8183 = vmatprep.subr.mxu0 0.0
    %8184 = vmatpush2.xpose.msra.mxu0 0.0
    %8185 = vmatprep.subr.mxu0 0.0
    %8186 = vmatpush2.xpose.msra.mxu0 0.0
    %8187 = vmatprep.subr.mxu0 0.0
    %8188 = vmatpush2.xpose.msra.mxu0 0.0
    %8189 = vmatprep.subr.mxu0 0.0
    %8190 = vmatpush2.xpose.msra.mxu0 0.0
    %8191 = vmatprep.subr.mxu0 0.0
    %8192 = vmatpush2.xpose.msra.mxu0 0.0
    %8193 = vmatprep.subr.mxu0 0.0
    %8194 = vmatpush2.xpose.msra.mxu0 0.0
    %8195 = vmatprep.subr.mxu0 0.0
    %8196 = vmatpush2.xpose.msra.mxu0 0.0
    %8197 = vmatprep.subr.mxu0 0.0
    %8198 = vmatpush2.xpose.msra.mxu0 0.0
    %8199 = vmatprep.subr.mxu0 0.0
    %8200 = vmatpush2.xpose.msra.mxu0 0.0
    %8201 = vmatprep.mubr.f32.mxu0 0.0
    %8202 = vmatmul.mubr.f32.gmra.mxu0 %v8101
    %v8203 = vpop.f32.mrf.mxu0
    %v8204 = vadd.f32 0.0, %v8203
    %v8205 = vpop.f32.mrf.mxu0
    %8206 = vmatprep.mubr.f32.mxu0 0.0
    %8207 = vmatmul.mubr.f32.gmra.mxu0 %v8103
    %v8208 = vpop.f32.mrf.mxu0
    %v8209 = vadd.f32 0.0, %v8208
    %v8210 = vpop.f32.mrf.mxu0
    %8211 = vmatprep.mubr.f32.mxu0 0.0
    %8212 = vmatmul.mubr.f32.gmra.mxu0 %v8105
    %v8213 = vpop.f32.mrf.mxu0
    %v8214 = vadd.f32 0.0, %v8213
    %v8215 = vpop.f32.mrf.mxu0
    %8216 = vmatprep.mubr.f32.mxu0 0.0
    %8217 = vmatmul.mubr.f32.gmra.mxu0 %v8107
    %v8218 = vpop.f32.mrf.mxu0
    %v8219 = vadd.f32 0.0, %v8218
    %v8220 = vpop.f32.mrf.mxu0
    %8221 = vmatprep.mubr.f32.mxu0 0.0
    %8222 = vmatmul.mubr.f32.gmra.mxu0 %v8109
    %v8223 = vpop.f32.mrf.mxu0
    %v8224 = vadd.f32 0.0, %v8223
    %v8225 = vpop.f32.mrf.mxu0
    %8226 = vmatprep.mubr.f32.mxu0 0.0
    %8227 = vmatmul.mubr.f32.gmra.mxu0 %v8111
    %v8228 = vpop.f32.mrf.mxu0
    %v8229 = vadd.f32 0.0, %v8228
    %v8230 = vpop.f32.mrf.mxu0
    %8231 = vmatprep.mubr.f32.mxu0 0.0
    %8232 = vmatmul.mubr.f32.gmra.mxu0 %v8113
    %v8233 = vpop.f32.mrf.mxu0
    %v8234 = vadd.f32 0.0, %v8233
    %v8235 = vpop.f32.mrf.mxu0
    %8236 = vmatprep.mubr.f32.mxu0 0.0
    %8237 = vmatmul.mubr.f32.gmra.mxu0 %v8115
    %v8238 = vpop.f32.mrf.mxu0
    %v8239 = vadd.f32 0.0, %v8238
    %v8240 = vpop.f32.mrf.mxu0
    %8241 = vmatprep.mubr.f32.mxu0 0.0
    %8242 = vmatmul.mubr.f32.gmra.mxu0 %v8117
    %v8243 = vpop.f32.mrf.mxu0
    %v8244 = vadd.f32 0.0, %v8243
    %v8245 = vpop.f32.mrf.mxu0
    %8246 = vdwg.mxu0
    %v8247 = vmul.f32 %v8204, 0.35355338
    %v8248 = vmul.f32 %v8209, 0.35355338
    %v8249 = vmul.f32 %v8214, 0.35355338
    %v8250 = vmul.f32 %v8219, 0.35355338
    %v8251 = vmul.f32 %v8224, 0.35355338
    %v8252 = vmul.f32 %v8229, 0.35355338
    %v8253 = vmul.f32 %v8234, 0.35355338
    %v8254 = vmul.f32 %v8239, 0.35355338
    %v8255 = vmul.f32 %v8244, 0.35355338
    %v8256 = vsel %vm1090, %v8247, -inf
    %8257 = vmax.xlane.f32.xlu0 %v8256
    %v8258 = vpop.xlane.xlu0 %8257
    %v8259 = vsel %vm1090, %v8248, -inf
    %8260 = vmax.xlane.f32.xlu0 %v8259
    %v8261 = vpop.xlane.xlu0 %8260
    %v8262 = vsel %vm1090, %v8249, -inf
    %8263 = vmax.xlane.f32.xlu0 %v8262
    %v8264 = vpop.xlane.xlu0 %8263
    %v8265 = vsel %vm1090, %v8250, -inf
    %8266 = vmax.xlane.f32.xlu0 %v8265
    %v8267 = vpop.xlane.xlu0 %8266
    %v8268 = vsel %vm1090, %v8251, -inf
    %8269 = vmax.xlane.f32.xlu0 %v8268
    %v8270 = vpop.xlane.xlu0 %8269
    %v8271 = vsel %vm1090, %v8252, -inf
    %8272 = vmax.xlane.f32.xlu0 %v8271
    %v8273 = vpop.xlane.xlu0 %8272
    %v8274 = vsel %vm1090, %v8253, -inf
    %8275 = vmax.xlane.f32.xlu0 %v8274
    %v8276 = vpop.xlane.xlu0 %8275
    %v8277 = vsel %vm1090, %v8254, -inf
    %8278 = vmax.xlane.f32.xlu0 %v8277
    %v8279 = vpop.xlane.xlu0 %8278
    %v8280 = vsel %vm1115, %v8255, -inf
    %8281 = vmax.xlane.f32.xlu0 %v8280
    %v8282 = vpop.xlane.xlu0 %8281
    %v8283 = vsub.f32 %v8247, %v8258
    %v8284 = vsub.f32 %v8248, %v8261
    %v8285 = vsub.f32 %v8249, %v8264
    %v8286 = vsub.f32 %v8250, %v8267
    %v8287 = vsub.f32 %v8251, %v8270
    %v8288 = vsub.f32 %v8252, %v8273
    %v8289 = vsub.f32 %v8253, %v8276
    %v8290 = vsub.f32 %v8254, %v8279
    %v8291 = vsub.f32 %v8255, %v8282
    %v8292 = vmul.f32 %v8283, 1.442695
    %v8293 = vpow.pop %v8292
    %v8294 = vmul.f32 %v8284, 1.442695
    %v8295 = vpow.pop %v8294
    %v8296 = vmul.f32 %v8285, 1.442695
    %v8297 = vpow.pop %v8296
    %v8298 = vmul.f32 %v8286, 1.442695
    %v8299 = vpow.pop %v8298
    %v8300 = vmul.f32 %v8287, 1.442695
    %v8301 = vpow.pop %v8300
    %v8302 = vmul.f32 %v8288, 1.442695
    %v8303 = vpow.pop %v8302
    %v8304 = vmul.f32 %v8289, 1.442695
    %v8305 = vpow.pop %v8304
    %v8306 = vmul.f32 %v8290, 1.442695
    %v8307 = vpow.pop %v8306
    %v8308 = vmul.f32 %v8291, 1.442695
    %v8309 = vpow.pop %v8308
    %v8310 = vsel %vm1090, %v8293, 0.0
    %8311 = vadd.xlane.f32.xlu0 %v8310
    %v8312 = vpop.xlane.xlu0 %8311
    %v8313 = vsel %vm1090, %v8295, 0.0
    %8314 = vadd.xlane.f32.xlu0 %v8313
    %v8315 = vpop.xlane.xlu0 %8314
    %v8316 = vsel %vm1090, %v8297, 0.0
    %8317 = vadd.xlane.f32.xlu0 %v8316
    %v8318 = vpop.xlane.xlu0 %8317
    %v8319 = vsel %vm1090, %v8299, 0.0
    %8320 = vadd.xlane.f32.xlu0 %v8319
    %v8321 = vpop.xlane.xlu0 %8320
    %v8322 = vsel %vm1090, %v8301, 0.0
    %8323 = vadd.xlane.f32.xlu0 %v8322
    %v8324 = vpop.xlane.xlu0 %8323
    %v8325 = vsel %vm1090, %v8303, 0.0
    %8326 = vadd.xlane.f32.xlu0 %v8325
    %v8327 = vpop.xlane.xlu0 %8326
    %v8328 = vsel %vm1090, %v8305, 0.0
    %8329 = vadd.xlane.f32.xlu0 %v8328
    %v8330 = vpop.xlane.xlu0 %8329
    %v8331 = vsel %vm1090, %v8307, 0.0
    %8332 = vadd.xlane.f32.xlu0 %v8331
    %v8333 = vpop.xlane.xlu0 %8332
    %v8334 = vsel %vm1115, %v8309, 0.0
    %8335 = vadd.xlane.f32.xlu0 %v8334
    %v8336 = vpop.xlane.xlu0 %8335
    %v8337 = vrcp.pop %v8312
    %v8338 = vrcp.pop %v8315
    %v8339 = vrcp.pop %v8318
    %v8340 = vrcp.pop %v8321
    %v8341 = vrcp.pop %v8324
    %v8342 = vrcp.pop %v8327
    %v8343 = vrcp.pop %v8330
    %v8344 = vrcp.pop %v8333
    %v8345 = vrcp.pop %v8336
    %v8346 = vmul.f32 %v8293, %v8337
    %v8347 = vmul.f32 %v8295, %v8338
    %v8348 = vmul.f32 %v8297, %v8339
    %v8349 = vmul.f32 %v8299, %v8340
    %v8350 = vmul.f32 %v8301, %v8341
    %v8351 = vmul.f32 %v8303, %v8342
    %v8352 = vmul.f32 %v8305, %v8343
    %v8353 = vmul.f32 %v8307, %v8344
    %v8354 = vmul.f32 %v8309, %v8345
    %8355 = vrot.lane.b32.xlu0 %v6626, 40
    %v8356 = vpop.permute.xlu0 %8355
    %8357 = vrot.lane.b32.xlu0 %v6631, 40
    %v8358 = vpop.permute.xlu0 %8357
    %8359 = vrot.lane.b32.xlu0 %v6636, 40
    %v8360 = vpop.permute.xlu0 %8359
    %8361 = vrot.lane.b32.xlu0 %v6641, 40
    %v8362 = vpop.permute.xlu0 %8361
    %8363 = vrot.lane.b32.xlu0 %v6646, 40
    %v8364 = vpop.permute.xlu0 %8363
    %8365 = vrot.lane.b32.xlu0 %v6651, 40
    %v8366 = vpop.permute.xlu0 %8365
    %8367 = vrot.lane.b32.xlu0 %v6656, 40
    %v8368 = vpop.permute.xlu0 %8367
    %8369 = vrot.lane.b32.xlu0 %v6661, 40
    %v8370 = vpop.permute.xlu0 %8369
    %8371 = vrot.lane.b32.xlu0 %v6666, 40
    %v8372 = vpop.permute.xlu0 %8371
    %v8382 = vsel %vm1090, %v8346, 0
    %v8385 = vsel %vm1090, %v8347, 0
    %v8388 = vsel %vm1090, %v8348, 0
    %v8391 = vsel %vm1090, %v8349, 0
    %v8394 = vsel %vm1090, %v8350, 0
    %v8397 = vsel %vm1090, %v8351, 0
    %v8400 = vsel %vm1090, %v8352, 0
    %v8403 = vsel %vm1090, %v8353, 0
    %v8406 = vsel %vm1090, %v8354, 0
    %v8408 = vsel %vm362, %v8372, 0
    %8410 = vmatprep.subr.mxu0 0.0
    %8411 = vmatpush1.msra.mxu0 0.0
    %8412 = vmatprep.subr.mxu0 0.0
    %8413 = vmatpush1.msra.mxu0 0.0
    %8414 = vmatprep.subr.mxu0 0.0
    %8415 = vmatpush1.msra.mxu0 0.0
    %8416 = vmatprep.subr.mxu0 0.0
    %8417 = vmatpush1.msra.mxu0 0.0
    %8418 = vmatprep.subr.mxu0 0.0
    %8419 = vmatpush1.msra.mxu0 0.0
    %8420 = vmatprep.subr.mxu0 0.0
    %8421 = vmatpush1.msra.mxu0 0.0
    %8422 = vmatprep.subr.mxu0 0.0
    %8423 = vmatpush1.msra.mxu0 0.0
    %8424 = vmatprep.subr.mxu0 0.0
    %8425 = vmatpush1.msra.mxu0 %v8408
    %8426 = vmatprep.subr.mxu0 0.0
    %8427 = vmatpush1.msra.mxu0 %v8370
    %8428 = vmatprep.subr.mxu0 0.0
    %8429 = vmatpush1.msra.mxu0 %v8368
    %8430 = vmatprep.subr.mxu0 0.0
    %8431 = vmatpush1.msra.mxu0 %v8366
    %8432 = vmatprep.subr.mxu0 0.0
    %8433 = vmatpush1.msra.mxu0 %v8364
    %8434 = vmatprep.subr.mxu0 0.0
    %8435 = vmatpush1.msra.mxu0 %v8362
    %8436 = vmatprep.subr.mxu0 0.0
    %8437 = vmatpush1.msra.mxu0 %v8360
    %8438 = vmatprep.subr.mxu0 0.0
    %8439 = vmatpush1.msra.mxu0 %v8358
    %8440 = vmatprep.subr.mxu0 0.0
    %8441 = vmatpush1.msra.mxu0 %v8356
    %8442 = vmatprep.subr.mxu0 0.0
    %8443 = vmatpush2.msra.mxu0 0.0
    %8444 = vmatprep.subr.mxu0 0.0
    %8445 = vmatpush2.msra.mxu0 0.0
    %8446 = vmatprep.subr.mxu0 0.0
    %8447 = vmatpush2.msra.mxu0 0.0
    %8448 = vmatprep.subr.mxu0 0.0
    %8449 = vmatpush2.msra.mxu0 0.0
    %8450 = vmatprep.subr.mxu0 0.0
    %8451 = vmatpush2.msra.mxu0 0.0
    %8452 = vmatprep.subr.mxu0 0.0
    %8453 = vmatpush2.msra.mxu0 0.0
    %8454 = vmatprep.subr.mxu0 0.0
    %8455 = vmatpush2.msra.mxu0 0.0
    %8456 = vmatprep.subr.mxu0 0.0
    %8457 = vmatpush2.msra.mxu0 0.0
    %8458 = vmatprep.subr.mxu0 0.0
    %8459 = vmatpush2.msra.mxu0 0.0
    %8460 = vmatprep.subr.mxu0 0.0
    %8461 = vmatpush2.msra.mxu0 0.0
    %8462 = vmatprep.subr.mxu0 0.0
    %8463 = vmatpush2.msra.mxu0 0.0
    %8464 = vmatprep.subr.mxu0 0.0
    %8465 = vmatpush2.msra.mxu0 0.0
    %8466 = vmatprep.subr.mxu0 0.0
    %8467 = vmatpush2.msra.mxu0 0.0
    %8468 = vmatprep.subr.mxu0 0.0
    %8469 = vmatpush2.msra.mxu0 0.0
    %8470 = vmatprep.subr.mxu0 0.0
    %8471 = vmatpush2.msra.mxu0 0.0
    %8472 = vmatprep.subr.mxu0 0.0
    %8473 = vmatpush2.msra.mxu0 0.0
    %8474 = vmatprep.mubr.f32.mxu0 0.0
    %8475 = vmatmul.mubr.f32.gmra.mxu0 %v8382
    %v8476 = vpop.f32.mrf.mxu0
    %v8477 = vadd.f32 0.0, %v8476
    %v8478 = vpop.f32.mrf.mxu0
    %8479 = vmatprep.mubr.f32.mxu0 0.0
    %8480 = vmatmul.mubr.f32.gmra.mxu0 %v8385
    %v8481 = vpop.f32.mrf.mxu0
    %v8482 = vadd.f32 0.0, %v8481
    %v8483 = vpop.f32.mrf.mxu0
    %8484 = vmatprep.mubr.f32.mxu0 0.0
    %8485 = vmatmul.mubr.f32.gmra.mxu0 %v8388
    %v8486 = vpop.f32.mrf.mxu0
    %v8487 = vadd.f32 0.0, %v8486
    %v8488 = vpop.f32.mrf.mxu0
    %8489 = vmatprep.mubr.f32.mxu0 0.0
    %8490 = vmatmul.mubr.f32.gmra.mxu0 %v8391
    %v8491 = vpop.f32.mrf.mxu0
    %v8492 = vadd.f32 0.0, %v8491
    %v8493 = vpop.f32.mrf.mxu0
    %8494 = vmatprep.mubr.f32.mxu0 0.0
    %8495 = vmatmul.mubr.f32.gmra.mxu0 %v8394
    %v8496 = vpop.f32.mrf.mxu0
    %v8497 = vadd.f32 0.0, %v8496
    %v8498 = vpop.f32.mrf.mxu0
    %8499 = vmatprep.mubr.f32.mxu0 0.0
    %8500 = vmatmul.mubr.f32.gmra.mxu0 %v8397
    %v8501 = vpop.f32.mrf.mxu0
    %v8502 = vadd.f32 0.0, %v8501
    %v8503 = vpop.f32.mrf.mxu0
    %8504 = vmatprep.mubr.f32.mxu0 0.0
    %8505 = vmatmul.mubr.f32.gmra.mxu0 %v8400
    %v8506 = vpop.f32.mrf.mxu0
    %v8507 = vadd.f32 0.0, %v8506
    %v8508 = vpop.f32.mrf.mxu0
    %8509 = vmatprep.mubr.f32.mxu0 0.0
    %8510 = vmatmul.mubr.f32.gmra.mxu0 %v8403
    %v8511 = vpop.f32.mrf.mxu0
    %v8512 = vadd.f32 0.0, %v8511
    %v8513 = vpop.f32.mrf.mxu0
    %8514 = vmatprep.mubr.f32.mxu0 0.0
    %8515 = vmatmul.mubr.f32.gmra.mxu0 %v8406
    %v8516 = vpop.f32.mrf.mxu0
    %v8517 = vadd.f32 0.0, %v8516
    %v8518 = vpop.f32.mrf.mxu0
    %8519 = vdwg.mxu0
    %8529 = vrot.lane.b32.xlu0 %v7567, 8
    %v8530 = vpop.permute.xlu0 %8529
    %8531 = vrot.lane.b32.xlu0 %v7572, 8
    %v8532 = vpop.permute.xlu0 %8531
    %8533 = vrot.lane.b32.xlu0 %v7577, 8
    %v8534 = vpop.permute.xlu0 %8533
    %8535 = vrot.lane.b32.xlu0 %v7582, 8
    %v8536 = vpop.permute.xlu0 %8535
    %8537 = vrot.lane.b32.xlu0 %v7587, 8
    %v8538 = vpop.permute.xlu0 %8537
    %8539 = vrot.lane.b32.xlu0 %v7592, 8
    %v8540 = vpop.permute.xlu0 %8539
    %8541 = vrot.lane.b32.xlu0 %v7597, 8
    %v8542 = vpop.permute.xlu0 %8541
    %8543 = vrot.lane.b32.xlu0 %v7602, 8
    %v8544 = vpop.permute.xlu0 %8543
    %8545 = vrot.lane.b32.xlu0 %v7607, 8
    %v8546 = vpop.permute.xlu0 %8545
    %8565 = vrot.lane.b32.xlu0 %v8022, 16
    %v8566 = vpop.permute.xlu0 %8565
    %8567 = vrot.lane.b32.xlu0 %v8027, 16
    %v8568 = vpop.permute.xlu0 %8567
    %8569 = vrot.lane.b32.xlu0 %v8032, 16
    %v8570 = vpop.permute.xlu0 %8569
    %8571 = vrot.lane.b32.xlu0 %v8037, 16
    %v8572 = vpop.permute.xlu0 %8571
    %8573 = vrot.lane.b32.xlu0 %v8042, 16
    %v8574 = vpop.permute.xlu0 %8573
    %8575 = vrot.lane.b32.xlu0 %v8047, 16
    %v8576 = vpop.permute.xlu0 %8575
    %8577 = vrot.lane.b32.xlu0 %v8052, 16
    %v8578 = vpop.permute.xlu0 %8577
    %8579 = vrot.lane.b32.xlu0 %v8057, 16
    %v8580 = vpop.permute.xlu0 %8579
    %8581 = vrot.lane.b32.xlu0 %v8062, 16
    %v8582 = vpop.permute.xlu0 %8581
    %8601 = vrot.lane.b32.xlu0 %v8477, 24
    %v8602 = vpop.permute.xlu0 %8601
    %8603 = vrot.lane.b32.xlu0 %v8482, 24
    %v8604 = vpop.permute.xlu0 %8603
    %8605 = vrot.lane.b32.xlu0 %v8487, 24
    %v8606 = vpop.permute.xlu0 %8605
    %8607 = vrot.lane.b32.xlu0 %v8492, 24
    %v8608 = vpop.permute.xlu0 %8607
    %8609 = vrot.lane.b32.xlu0 %v8497, 24
    %v8610 = vpop.permute.xlu0 %8609
    %8611 = vrot.lane.b32.xlu0 %v8502, 24
    %v8612 = vpop.permute.xlu0 %8611
    %8613 = vrot.lane.b32.xlu0 %v8507, 24
    %v8614 = vpop.permute.xlu0 %8613
    %8615 = vrot.lane.b32.xlu0 %v8512, 24
    %v8616 = vpop.permute.xlu0 %8615
    %8617 = vrot.lane.b32.xlu0 %v8517, 24
    %v8618 = vpop.permute.xlu0 %8617
    %v8628 = vsel %vm934, %v7112, %v8530
    %v8629 = vsel %vm934, %v7117, %v8532
    %v8630 = vsel %vm934, %v7122, %v8534
    %v8631 = vsel %vm934, %v7127, %v8536
    %v8632 = vsel %vm934, %v7132, %v8538
    %v8633 = vsel %vm934, %v7137, %v8540
    %v8634 = vsel %vm934, %v7142, %v8542
    %v8635 = vsel %vm934, %v7147, %v8544
    %v8636 = vsel %vm934, %v7152, %v8546
    %v8637 = vsel %vm2838, %v8628, %v8566
    %v8638 = vsel %vm2838, %v8629, %v8568
    %v8639 = vsel %vm2838, %v8630, %v8570
    %v8640 = vsel %vm2838, %v8631, %v8572
    %v8641 = vsel %vm2838, %v8632, %v8574
    %v8642 = vsel %vm2838, %v8633, %v8576
    %v8643 = vsel %vm2838, %v8634, %v8578
    %v8644 = vsel %vm2838, %v8635, %v8580
    %v8645 = vsel %vm2838, %v8636, %v8582
    %v8646 = vsel %vm2848, %v8637, %v8602
    %v8647 = vsel %vm2848, %v8638, %v8604
    %v8648 = vsel %vm2848, %v8639, %v8606
    %v8649 = vsel %vm2848, %v8640, %v8608
    %v8650 = vsel %vm2848, %v8641, %v8610
    %v8651 = vsel %vm2848, %v8642, %v8612
    %v8652 = vsel %vm2848, %v8643, %v8614
    %v8653 = vsel %vm2848, %v8644, %v8616
    %v8654 = vsel %vm2848, %v8645, %v8618
    %v8663 = vrot.slane %v6666, 1
    %v8664 = vrot.slane %v6671, 1
    %v8665 = vsel %vm312, %v8663, %v8664
    %v8666 = vrot.slane %v6676, 1
    %v8667 = vsel %vm312, %v8664, %v8666
    %v8668 = vrot.slane %v6681, 1
    %v8669 = vsel %vm312, %v8666, %v8668
    %v8670 = vrot.slane %v6686, 1
    %v8671 = vsel %vm312, %v8668, %v8670
    %v8672 = vrot.slane %v6691, 1
    %v8673 = vsel %vm312, %v8670, %v8672
    %v8674 = vrot.slane %v6696, 1
    %v8675 = vsel %vm312, %v8672, %v8674
    %v8676 = vrot.slane %v6701, 1
    %v8677 = vsel %vm312, %v8674, %v8676
    %v8678 = vrot.slane %v6706, 1
    %v8679 = vsel %vm312, %v8676, %v8678
    %8680 = vrot.lane.b32.xlu0 %v8665, 96
    %v8681 = vpop.permute.xlu0 %8680
    %8682 = vrot.lane.b32.xlu0 %v8667, 96
    %v8683 = vpop.permute.xlu0 %8682
    %8684 = vrot.lane.b32.xlu0 %v8669, 96
    %v8685 = vpop.permute.xlu0 %8684
    %8686 = vrot.lane.b32.xlu0 %v8671, 96
    %v8687 = vpop.permute.xlu0 %8686
    %8688 = vrot.lane.b32.xlu0 %v8673, 96
    %v8689 = vpop.permute.xlu0 %8688
    %8690 = vrot.lane.b32.xlu0 %v8675, 96
    %v8691 = vpop.permute.xlu0 %8690
    %8692 = vrot.lane.b32.xlu0 %v8677, 96
    %v8693 = vpop.permute.xlu0 %8692
    %8694 = vrot.lane.b32.xlu0 %v8679, 96
    %v8695 = vpop.permute.xlu0 %8694
    %8696 = vrot.lane.b32.xlu0 %v8678, 96
    %v8697 = vpop.permute.xlu0 %8696
    %v8698 = vsel %vm934, %v8665, 0
    %v8700 = vsel %vm934, %v8667, 0
    %v8702 = vsel %vm934, %v8669, 0
    %v8704 = vsel %vm934, %v8671, 0
    %v8706 = vsel %vm934, %v8673, 0
    %v8708 = vsel %vm934, %v8675, 0
    %v8710 = vsel %vm934, %v8677, 0
    %v8712 = vsel %vm934, %v8679, 0
    %v8714 = vsel %vm934, %v8678, 0
    %v8716 = vsel %vm934, %v8681, 0
    %v8718 = vsel %vm934, %v8683, 0
    %v8720 = vsel %vm934, %v8685, 0
    %v8722 = vsel %vm934, %v8687, 0
    %v8724 = vsel %vm934, %v8689, 0
    %v8726 = vsel %vm934, %v8691, 0
    %v8728 = vsel %vm934, %v8693, 0
    %v8730 = vsel %vm934, %v8695, 0
    %v8732 = vsel %vm934, %v8697, 0
    %8734 = vmatprep.subr.mxu0 0.0
    %8735 = vmatpush1.xpose.msra.mxu0 0.0
    %8736 = vmatprep.subr.mxu0 0.0
    %8737 = vmatpush1.xpose.msra.mxu0 0.0
    %8738 = vmatprep.subr.mxu0 0.0
    %8739 = vmatpush1.xpose.msra.mxu0 0.0
    %8740 = vmatprep.subr.mxu0 0.0
    %8741 = vmatpush1.xpose.msra.mxu0 0.0
    %8742 = vmatprep.subr.mxu0 0.0
    %8743 = vmatpush1.xpose.msra.mxu0 0.0
    %8744 = vmatprep.subr.mxu0 0.0
    %8745 = vmatpush1.xpose.msra.mxu0 0.0
    %8746 = vmatprep.subr.mxu0 0.0
    %8747 = vmatpush1.xpose.msra.mxu0 0.0
    %8748 = vmatprep.subr.mxu0 0.0
    %8749 = vmatpush1.xpose.msra.mxu0 %v8732
    %8750 = vmatprep.subr.mxu0 0.0
    %8751 = vmatpush1.xpose.msra.mxu0 %v8730
    %8752 = vmatprep.subr.mxu0 0.0
    %8753 = vmatpush1.xpose.msra.mxu0 %v8728
    %8754 = vmatprep.subr.mxu0 0.0
    %8755 = vmatpush1.xpose.msra.mxu0 %v8726
    %8756 = vmatprep.subr.mxu0 0.0
    %8757 = vmatpush1.xpose.msra.mxu0 %v8724
    %8758 = vmatprep.subr.mxu0 0.0
    %8759 = vmatpush1.xpose.msra.mxu0 %v8722
    %8760 = vmatprep.subr.mxu0 0.0
    %8761 = vmatpush1.xpose.msra.mxu0 %v8720
    %8762 = vmatprep.subr.mxu0 0.0
    %8763 = vmatpush1.xpose.msra.mxu0 %v8718
    %8764 = vmatprep.subr.mxu0 0.0
    %8765 = vmatpush1.xpose.msra.mxu0 %v8716
    %8766 = vmatprep.subr.mxu0 0.0
    %8767 = vmatpush2.xpose.msra.mxu0 0.0
    %8768 = vmatprep.subr.mxu0 0.0
    %8769 = vmatpush2.xpose.msra.mxu0 0.0
    %8770 = vmatprep.subr.mxu0 0.0
    %8771 = vmatpush2.xpose.msra.mxu0 0.0
    %8772 = vmatprep.subr.mxu0 0.0
    %8773 = vmatpush2.xpose.msra.mxu0 0.0
    %8774 = vmatprep.subr.mxu0 0.0
    %8775 = vmatpush2.xpose.msra.mxu0 0.0
    %8776 = vmatprep.subr.mxu0 0.0
    %8777 = vmatpush2.xpose.msra.mxu0 0.0
    %8778 = vmatprep.subr.mxu0 0.0
    %8779 = vmatpush2.xpose.msra.mxu0 0.0
    %8780 = vmatprep.subr.mxu0 0.0
    %8781 = vmatpush2.xpose.msra.mxu0 0.0
    %8782 = vmatprep.subr.mxu0 0.0
    %8783 = vmatpush2.xpose.msra.mxu0 0.0
    %8784 = vmatprep.subr.mxu0 0.0
    %8785 = vmatpush2.xpose.msra.mxu0 0.0
    %8786 = vmatprep.subr.mxu0 0.0
    %8787 = vmatpush2.xpose.msra.mxu0 0.0
    %8788 = vmatprep.subr.mxu0 0.0
    %8789 = vmatpush2.xpose.msra.mxu0 0.0
    %8790 = vmatprep.subr.mxu0 0.0
    %8791 = vmatpush2.xpose.msra.mxu0 0.0
    %8792 = vmatprep.subr.mxu0 0.0
    %8793 = vmatpush2.xpose.msra.mxu0 0.0
    %8794 = vmatprep.subr.mxu0 0.0
    %8795 = vmatpush2.xpose.msra.mxu0 0.0
    %8796 = vmatprep.subr.mxu0 0.0
    %8797 = vmatpush2.xpose.msra.mxu0 0.0
    %8798 = vmatprep.mubr.f32.mxu0 0.0
    %8799 = vmatmul.mubr.f32.gmra.mxu0 %v8698
    %v8800 = vpop.f32.mrf.mxu0
    %v8801 = vadd.f32 0.0, %v8800
    %v8802 = vpop.f32.mrf.mxu0
    %8803 = vmatprep.mubr.f32.mxu0 0.0
    %8804 = vmatmul.mubr.f32.gmra.mxu0 %v8700
    %v8805 = vpop.f32.mrf.mxu0
    %v8806 = vadd.f32 0.0, %v8805
    %v8807 = vpop.f32.mrf.mxu0
    %8808 = vmatprep.mubr.f32.mxu0 0.0
    %8809 = vmatmul.mubr.f32.gmra.mxu0 %v8702
    %v8810 = vpop.f32.mrf.mxu0
    %v8811 = vadd.f32 0.0, %v8810
    %v8812 = vpop.f32.mrf.mxu0
    %8813 = vmatprep.mubr.f32.mxu0 0.0
    %8814 = vmatmul.mubr.f32.gmra.mxu0 %v8704
    %v8815 = vpop.f32.mrf.mxu0
    %v8816 = vadd.f32 0.0, %v8815
    %v8817 = vpop.f32.mrf.mxu0
    %8818 = vmatprep.mubr.f32.mxu0 0.0
    %8819 = vmatmul.mubr.f32.gmra.mxu0 %v8706
    %v8820 = vpop.f32.mrf.mxu0
    %v8821 = vadd.f32 0.0, %v8820
    %v8822 = vpop.f32.mrf.mxu0
    %8823 = vmatprep.mubr.f32.mxu0 0.0
    %8824 = vmatmul.mubr.f32.gmra.mxu0 %v8708
    %v8825 = vpop.f32.mrf.mxu0
    %v8826 = vadd.f32 0.0, %v8825
    %v8827 = vpop.f32.mrf.mxu0
    %8828 = vmatprep.mubr.f32.mxu0 0.0
    %8829 = vmatmul.mubr.f32.gmra.mxu0 %v8710
    %v8830 = vpop.f32.mrf.mxu0
    %v8831 = vadd.f32 0.0, %v8830
    %v8832 = vpop.f32.mrf.mxu0
    %8833 = vmatprep.mubr.f32.mxu0 0.0
    %8834 = vmatmul.mubr.f32.gmra.mxu0 %v8712
    %v8835 = vpop.f32.mrf.mxu0
    %v8836 = vadd.f32 0.0, %v8835
    %v8837 = vpop.f32.mrf.mxu0
    %8838 = vmatprep.mubr.f32.mxu0 0.0
    %8839 = vmatmul.mubr.f32.gmra.mxu0 %v8714
    %v8840 = vpop.f32.mrf.mxu0
    %v8841 = vadd.f32 0.0, %v8840
    %v8842 = vpop.f32.mrf.mxu0
    %8843 = vdwg.mxu0
    %v8844 = vmul.f32 %v8801, 0.35355338
    %v8845 = vmul.f32 %v8806, 0.35355338
    %v8846 = vmul.f32 %v8811, 0.35355338
    %v8847 = vmul.f32 %v8816, 0.35355338
    %v8848 = vmul.f32 %v8821, 0.35355338
    %v8849 = vmul.f32 %v8826, 0.35355338
    %v8850 = vmul.f32 %v8831, 0.35355338
    %v8851 = vmul.f32 %v8836, 0.35355338
    %v8852 = vmul.f32 %v8841, 0.35355338
    %v8853 = vsel %vm1090, %v8844, -inf
    %8854 = vmax.xlane.f32.xlu0 %v8853
    %v8855 = vpop.xlane.xlu0 %8854
    %v8856 = vsel %vm1090, %v8845, -inf
    %8857 = vmax.xlane.f32.xlu0 %v8856
    %v8858 = vpop.xlane.xlu0 %8857
    %v8859 = vsel %vm1090, %v8846, -inf
    %8860 = vmax.xlane.f32.xlu0 %v8859
    %v8861 = vpop.xlane.xlu0 %8860
    %v8862 = vsel %vm1090, %v8847, -inf
    %8863 = vmax.xlane.f32.xlu0 %v8862
    %v8864 = vpop.xlane.xlu0 %8863
    %v8865 = vsel %vm1090, %v8848, -inf
    %8866 = vmax.xlane.f32.xlu0 %v8865
    %v8867 = vpop.xlane.xlu0 %8866
    %v8868 = vsel %vm1090, %v8849, -inf
    %8869 = vmax.xlane.f32.xlu0 %v8868
    %v8870 = vpop.xlane.xlu0 %8869
    %v8871 = vsel %vm1090, %v8850, -inf
    %8872 = vmax.xlane.f32.xlu0 %v8871
    %v8873 = vpop.xlane.xlu0 %8872
    %v8874 = vsel %vm1090, %v8851, -inf
    %8875 = vmax.xlane.f32.xlu0 %v8874
    %v8876 = vpop.xlane.xlu0 %8875
    %v8877 = vsel %vm1115, %v8852, -inf
    %8878 = vmax.xlane.f32.xlu0 %v8877
    %v8879 = vpop.xlane.xlu0 %8878
    %v8880 = vsub.f32 %v8844, %v8855
    %v8881 = vsub.f32 %v8845, %v8858
    %v8882 = vsub.f32 %v8846, %v8861
    %v8883 = vsub.f32 %v8847, %v8864
    %v8884 = vsub.f32 %v8848, %v8867
    %v8885 = vsub.f32 %v8849, %v8870
    %v8886 = vsub.f32 %v8850, %v8873
    %v8887 = vsub.f32 %v8851, %v8876
    %v8888 = vsub.f32 %v8852, %v8879
    %v8889 = vmul.f32 %v8880, 1.442695
    %v8890 = vpow.pop %v8889
    %v8891 = vmul.f32 %v8881, 1.442695
    %v8892 = vpow.pop %v8891
    %v8893 = vmul.f32 %v8882, 1.442695
    %v8894 = vpow.pop %v8893
    %v8895 = vmul.f32 %v8883, 1.442695
    %v8896 = vpow.pop %v8895
    %v8897 = vmul.f32 %v8884, 1.442695
    %v8898 = vpow.pop %v8897
    %v8899 = vmul.f32 %v8885, 1.442695
    %v8900 = vpow.pop %v8899
    %v8901 = vmul.f32 %v8886, 1.442695
    %v8902 = vpow.pop %v8901
    %v8903 = vmul.f32 %v8887, 1.442695
    %v8904 = vpow.pop %v8903
    %v8905 = vmul.f32 %v8888, 1.442695
    %v8906 = vpow.pop %v8905
    %v8907 = vsel %vm1090, %v8890, 0.0
    %8908 = vadd.xlane.f32.xlu0 %v8907
    %v8909 = vpop.xlane.xlu0 %8908
    %v8910 = vsel %vm1090, %v8892, 0.0
    %8911 = vadd.xlane.f32.xlu0 %v8910
    %v8912 = vpop.xlane.xlu0 %8911
    %v8913 = vsel %vm1090, %v8894, 0.0
    %8914 = vadd.xlane.f32.xlu0 %v8913
    %v8915 = vpop.xlane.xlu0 %8914
    %v8916 = vsel %vm1090, %v8896, 0.0
    %8917 = vadd.xlane.f32.xlu0 %v8916
    %v8918 = vpop.xlane.xlu0 %8917
    %v8919 = vsel %vm1090, %v8898, 0.0
    %8920 = vadd.xlane.f32.xlu0 %v8919
    %v8921 = vpop.xlane.xlu0 %8920
    %v8922 = vsel %vm1090, %v8900, 0.0
    %8923 = vadd.xlane.f32.xlu0 %v8922
    %v8924 = vpop.xlane.xlu0 %8923
    %v8925 = vsel %vm1090, %v8902, 0.0
    %8926 = vadd.xlane.f32.xlu0 %v8925
    %v8927 = vpop.xlane.xlu0 %8926
    %v8928 = vsel %vm1090, %v8904, 0.0
    %8929 = vadd.xlane.f32.xlu0 %v8928
    %v8930 = vpop.xlane.xlu0 %8929
    %v8931 = vsel %vm1115, %v8906, 0.0
    %8932 = vadd.xlane.f32.xlu0 %v8931
    %v8933 = vpop.xlane.xlu0 %8932
    %v8934 = vrcp.pop %v8909
    %v8935 = vrcp.pop %v8912
    %v8936 = vrcp.pop %v8915
    %v8937 = vrcp.pop %v8918
    %v8938 = vrcp.pop %v8921
    %v8939 = vrcp.pop %v8924
    %v8940 = vrcp.pop %v8927
    %v8941 = vrcp.pop %v8930
    %v8942 = vrcp.pop %v8933
    %v8943 = vmul.f32 %v8890, %v8934
    %v8944 = vmul.f32 %v8892, %v8935
    %v8945 = vmul.f32 %v8894, %v8936
    %v8946 = vmul.f32 %v8896, %v8937
    %v8947 = vmul.f32 %v8898, %v8938
    %v8948 = vmul.f32 %v8900, %v8939
    %v8949 = vmul.f32 %v8902, %v8940
    %v8950 = vmul.f32 %v8904, %v8941
    %v8951 = vmul.f32 %v8906, %v8942
    %8952 = vrot.lane.b32.xlu0 %v8665, 64
    %v8953 = vpop.permute.xlu0 %8952
    %8954 = vrot.lane.b32.xlu0 %v8667, 64
    %v8955 = vpop.permute.xlu0 %8954
    %8956 = vrot.lane.b32.xlu0 %v8669, 64
    %v8957 = vpop.permute.xlu0 %8956
    %8958 = vrot.lane.b32.xlu0 %v8671, 64
    %v8959 = vpop.permute.xlu0 %8958
    %8960 = vrot.lane.b32.xlu0 %v8673, 64
    %v8961 = vpop.permute.xlu0 %8960
    %8962 = vrot.lane.b32.xlu0 %v8675, 64
    %v8963 = vpop.permute.xlu0 %8962
    %8964 = vrot.lane.b32.xlu0 %v8677, 64
    %v8965 = vpop.permute.xlu0 %8964
    %8966 = vrot.lane.b32.xlu0 %v8679, 64
    %v8967 = vpop.permute.xlu0 %8966
    %8968 = vrot.lane.b32.xlu0 %v8678, 64
    %v8969 = vpop.permute.xlu0 %8968
    %v8979 = vsel %vm1090, %v8943, 0
    %v8982 = vsel %vm1090, %v8944, 0
    %v8985 = vsel %vm1090, %v8945, 0
    %v8988 = vsel %vm1090, %v8946, 0
    %v8991 = vsel %vm1090, %v8947, 0
    %v8994 = vsel %vm1090, %v8948, 0
    %v8997 = vsel %vm1090, %v8949, 0
    %v9000 = vsel %vm1090, %v8950, 0
    %v9003 = vsel %vm1090, %v8951, 0
    %v9005 = vsel %vm362, %v8969, 0
    %9007 = vmatprep.subr.mxu0 0.0
    %9008 = vmatpush1.msra.mxu0 0.0
    %9009 = vmatprep.subr.mxu0 0.0
    %9010 = vmatpush1.msra.mxu0 0.0
    %9011 = vmatprep.subr.mxu0 0.0
    %9012 = vmatpush1.msra.mxu0 0.0
    %9013 = vmatprep.subr.mxu0 0.0
    %9014 = vmatpush1.msra.mxu0 0.0
    %9015 = vmatprep.subr.mxu0 0.0
    %9016 = vmatpush1.msra.mxu0 0.0
    %9017 = vmatprep.subr.mxu0 0.0
    %9018 = vmatpush1.msra.mxu0 0.0
    %9019 = vmatprep.subr.mxu0 0.0
    %9020 = vmatpush1.msra.mxu0 0.0
    %9021 = vmatprep.subr.mxu0 0.0
    %9022 = vmatpush1.msra.mxu0 %v9005
    %9023 = vmatprep.subr.mxu0 0.0
    %9024 = vmatpush1.msra.mxu0 %v8967
    %9025 = vmatprep.subr.mxu0 0.0
    %9026 = vmatpush1.msra.mxu0 %v8965
    %9027 = vmatprep.subr.mxu0 0.0
    %9028 = vmatpush1.msra.mxu0 %v8963
    %9029 = vmatprep.subr.mxu0 0.0
    %9030 = vmatpush1.msra.mxu0 %v8961
    %9031 = vmatprep.subr.mxu0 0.0
    %9032 = vmatpush1.msra.mxu0 %v8959
    %9033 = vmatprep.subr.mxu0 0.0
    %9034 = vmatpush1.msra.mxu0 %v8957
    %9035 = vmatprep.subr.mxu0 0.0
    %9036 = vmatpush1.msra.mxu0 %v8955
    %9037 = vmatprep.subr.mxu0 0.0
    %9038 = vmatpush1.msra.mxu0 %v8953
    %9039 = vmatprep.subr.mxu0 0.0
    %9040 = vmatpush2.msra.mxu0 0.0
    %9041 = vmatprep.subr.mxu0 0.0
    %9042 = vmatpush2.msra.mxu0 0.0
    %9043 = vmatprep.subr.mxu0 0.0
    %9044 = vmatpush2.msra.mxu0 0.0
    %9045 = vmatprep.subr.mxu0 0.0
    %9046 = vmatpush2.msra.mxu0 0.0
    %9047 = vmatprep.subr.mxu0 0.0
    %9048 = vmatpush2.msra.mxu0 0.0
    %9049 = vmatprep.subr.mxu0 0.0
    %9050 = vmatpush2.msra.mxu0 0.0
    %9051 = vmatprep.subr.mxu0 0.0
    %9052 = vmatpush2.msra.mxu0 0.0
    %9053 = vmatprep.subr.mxu0 0.0
    %9054 = vmatpush2.msra.mxu0 0.0
    %9055 = vmatprep.subr.mxu0 0.0
    %9056 = vmatpush2.msra.mxu0 0.0
    %9057 = vmatprep.subr.mxu0 0.0
    %9058 = vmatpush2.msra.mxu0 0.0
    %9059 = vmatprep.subr.mxu0 0.0
    %9060 = vmatpush2.msra.mxu0 0.0
    %9061 = vmatprep.subr.mxu0 0.0
    %9062 = vmatpush2.msra.mxu0 0.0
    %9063 = vmatprep.subr.mxu0 0.0
    %9064 = vmatpush2.msra.mxu0 0.0
    %9065 = vmatprep.subr.mxu0 0.0
    %9066 = vmatpush2.msra.mxu0 0.0
    %9067 = vmatprep.subr.mxu0 0.0
    %9068 = vmatpush2.msra.mxu0 0.0
    %9069 = vmatprep.subr.mxu0 0.0
    %9070 = vmatpush2.msra.mxu0 0.0
    %9071 = vmatprep.mubr.f32.mxu0 0.0
    %9072 = vmatmul.mubr.f32.gmra.mxu0 %v8979
    %v9073 = vpop.f32.mrf.mxu0
    %v9074 = vadd.f32 0.0, %v9073
    %v9075 = vpop.f32.mrf.mxu0
    %9076 = vmatprep.mubr.f32.mxu0 0.0
    %9077 = vmatmul.mubr.f32.gmra.mxu0 %v8982
    %v9078 = vpop.f32.mrf.mxu0
    %v9079 = vadd.f32 0.0, %v9078
    %v9080 = vpop.f32.mrf.mxu0
    %9081 = vmatprep.mubr.f32.mxu0 0.0
    %9082 = vmatmul.mubr.f32.gmra.mxu0 %v8985
    %v9083 = vpop.f32.mrf.mxu0
    %v9084 = vadd.f32 0.0, %v9083
    %v9085 = vpop.f32.mrf.mxu0
    %9086 = vmatprep.mubr.f32.mxu0 0.0
    %9087 = vmatmul.mubr.f32.gmra.mxu0 %v8988
    %v9088 = vpop.f32.mrf.mxu0
    %v9089 = vadd.f32 0.0, %v9088
    %v9090 = vpop.f32.mrf.mxu0
    %9091 = vmatprep.mubr.f32.mxu0 0.0
    %9092 = vmatmul.mubr.f32.gmra.mxu0 %v8991
    %v9093 = vpop.f32.mrf.mxu0
    %v9094 = vadd.f32 0.0, %v9093
    %v9095 = vpop.f32.mrf.mxu0
    %9096 = vmatprep.mubr.f32.mxu0 0.0
    %9097 = vmatmul.mubr.f32.gmra.mxu0 %v8994
    %v9098 = vpop.f32.mrf.mxu0
    %v9099 = vadd.f32 0.0, %v9098
    %v9100 = vpop.f32.mrf.mxu0
    %9101 = vmatprep.mubr.f32.mxu0 0.0
    %9102 = vmatmul.mubr.f32.gmra.mxu0 %v8997
    %v9103 = vpop.f32.mrf.mxu0
    %v9104 = vadd.f32 0.0, %v9103
    %v9105 = vpop.f32.mrf.mxu0
    %9106 = vmatprep.mubr.f32.mxu0 0.0
    %9107 = vmatmul.mubr.f32.gmra.mxu0 %v9000
    %v9108 = vpop.f32.mrf.mxu0
    %v9109 = vadd.f32 0.0, %v9108
    %v9110 = vpop.f32.mrf.mxu0
    %9111 = vmatprep.mubr.f32.mxu0 0.0
    %9112 = vmatmul.mubr.f32.gmra.mxu0 %v9003
    %v9113 = vpop.f32.mrf.mxu0
    %v9114 = vadd.f32 0.0, %v9113
    %v9115 = vpop.f32.mrf.mxu0
    %9116 = vdwg.mxu0
    %9117 = vrot.lane.b32.xlu0 %v8665, 120
    %v9118 = vpop.permute.xlu0 %9117
    %9119 = vrot.lane.b32.xlu0 %v8667, 120
    %v9120 = vpop.permute.xlu0 %9119
    %9121 = vrot.lane.b32.xlu0 %v8669, 120
    %v9122 = vpop.permute.xlu0 %9121
    %9123 = vrot.lane.b32.xlu0 %v8671, 120
    %v9124 = vpop.permute.xlu0 %9123
    %9125 = vrot.lane.b32.xlu0 %v8673, 120
    %v9126 = vpop.permute.xlu0 %9125
    %9127 = vrot.lane.b32.xlu0 %v8675, 120
    %v9128 = vpop.permute.xlu0 %9127
    %9129 = vrot.lane.b32.xlu0 %v8677, 120
    %v9130 = vpop.permute.xlu0 %9129
    %9131 = vrot.lane.b32.xlu0 %v8679, 120
    %v9132 = vpop.permute.xlu0 %9131
    %9133 = vrot.lane.b32.xlu0 %v8678, 120
    %v9134 = vpop.permute.xlu0 %9133
    %9135 = vrot.lane.b32.xlu0 %v8665, 88
    %v9136 = vpop.permute.xlu0 %9135
    %9137 = vrot.lane.b32.xlu0 %v8667, 88
    %v9138 = vpop.permute.xlu0 %9137
    %9139 = vrot.lane.b32.xlu0 %v8669, 88
    %v9140 = vpop.permute.xlu0 %9139
    %9141 = vrot.lane.b32.xlu0 %v8671, 88
    %v9142 = vpop.permute.xlu0 %9141
    %9143 = vrot.lane.b32.xlu0 %v8673, 88
    %v9144 = vpop.permute.xlu0 %9143
    %9145 = vrot.lane.b32.xlu0 %v8675, 88
    %v9146 = vpop.permute.xlu0 %9145
    %9147 = vrot.lane.b32.xlu0 %v8677, 88
    %v9148 = vpop.permute.xlu0 %9147
    %9149 = vrot.lane.b32.xlu0 %v8679, 88
    %v9150 = vpop.permute.xlu0 %9149
    %9151 = vrot.lane.b32.xlu0 %v8678, 88
    %v9152 = vpop.permute.xlu0 %9151
    %v9153 = vsel %vm934, %v9118, 0
    %v9155 = vsel %vm934, %v9120, 0
    %v9157 = vsel %vm934, %v9122, 0
    %v9159 = vsel %vm934, %v9124, 0
    %v9161 = vsel %vm934, %v9126, 0
    %v9163 = vsel %vm934, %v9128, 0
    %v9165 = vsel %vm934, %v9130, 0
    %v9167 = vsel %vm934, %v9132, 0
    %v9169 = vsel %vm934, %v9134, 0
    %v9171 = vsel %vm934, %v9136, 0
    %v9173 = vsel %vm934, %v9138, 0
    %v9175 = vsel %vm934, %v9140, 0
    %v9177 = vsel %vm934, %v9142, 0
    %v9179 = vsel %vm934, %v9144, 0
    %v9181 = vsel %vm934, %v9146, 0
    %v9183 = vsel %vm934, %v9148, 0
    %v9185 = vsel %vm934, %v9150, 0
    %v9187 = vsel %vm934, %v9152, 0
    %9189 = vmatprep.subr.mxu0 0.0
    %9190 = vmatpush1.xpose.msra.mxu0 0.0
    %9191 = vmatprep.subr.mxu0 0.0
    %9192 = vmatpush1.xpose.msra.mxu0 0.0
    %9193 = vmatprep.subr.mxu0 0.0
    %9194 = vmatpush1.xpose.msra.mxu0 0.0
    %9195 = vmatprep.subr.mxu0 0.0
    %9196 = vmatpush1.xpose.msra.mxu0 0.0
    %9197 = vmatprep.subr.mxu0 0.0
    %9198 = vmatpush1.xpose.msra.mxu0 0.0
    %9199 = vmatprep.subr.mxu0 0.0
    %9200 = vmatpush1.xpose.msra.mxu0 0.0
    %9201 = vmatprep.subr.mxu0 0.0
    %9202 = vmatpush1.xpose.msra.mxu0 0.0
    %9203 = vmatprep.subr.mxu0 0.0
    %9204 = vmatpush1.xpose.msra.mxu0 %v9187
    %9205 = vmatprep.subr.mxu0 0.0
    %9206 = vmatpush1.xpose.msra.mxu0 %v9185
    %9207 = vmatprep.subr.mxu0 0.0
    %9208 = vmatpush1.xpose.msra.mxu0 %v9183
    %9209 = vmatprep.subr.mxu0 0.0
    %9210 = vmatpush1.xpose.msra.mxu0 %v9181
    %9211 = vmatprep.subr.mxu0 0.0
    %9212 = vmatpush1.xpose.msra.mxu0 %v9179
    %9213 = vmatprep.subr.mxu0 0.0
    %9214 = vmatpush1.xpose.msra.mxu0 %v9177
    %9215 = vmatprep.subr.mxu0 0.0
    %9216 = vmatpush1.xpose.msra.mxu0 %v9175
    %9217 = vmatprep.subr.mxu0 0.0
    %9218 = vmatpush1.xpose.msra.mxu0 %v9173
    %9219 = vmatprep.subr.mxu0 0.0
    %9220 = vmatpush1.xpose.msra.mxu0 %v9171
    %9221 = vmatprep.subr.mxu0 0.0
    %9222 = vmatpush2.xpose.msra.mxu0 0.0
    %9223 = vmatprep.subr.mxu0 0.0
    %9224 = vmatpush2.xpose.msra.mxu0 0.0
    %9225 = vmatprep.subr.mxu0 0.0
    %9226 = vmatpush2.xpose.msra.mxu0 0.0
    %9227 = vmatprep.subr.mxu0 0.0
    %9228 = vmatpush2.xpose.msra.mxu0 0.0
    %9229 = vmatprep.subr.mxu0 0.0
    %9230 = vmatpush2.xpose.msra.mxu0 0.0
    %9231 = vmatprep.subr.mxu0 0.0
    %9232 = vmatpush2.xpose.msra.mxu0 0.0
    %9233 = vmatprep.subr.mxu0 0.0
    %9234 = vmatpush2.xpose.msra.mxu0 0.0
    %9235 = vmatprep.subr.mxu0 0.0
    %9236 = vmatpush2.xpose.msra.mxu0 0.0
    %9237 = vmatprep.subr.mxu0 0.0
    %9238 = vmatpush2.xpose.msra.mxu0 0.0
    %9239 = vmatprep.subr.mxu0 0.0
    %9240 = vmatpush2.xpose.msra.mxu0 0.0
    %9241 = vmatprep.subr.mxu0 0.0
    %9242 = vmatpush2.xpose.msra.mxu0 0.0
    %9243 = vmatprep.subr.mxu0 0.0
    %9244 = vmatpush2.xpose.msra.mxu0 0.0
    %9245 = vmatprep.subr.mxu0 0.0
    %9246 = vmatpush2.xpose.msra.mxu0 0.0
    %9247 = vmatprep.subr.mxu0 0.0
    %9248 = vmatpush2.xpose.msra.mxu0 0.0
    %9249 = vmatprep.subr.mxu0 0.0
    %9250 = vmatpush2.xpose.msra.mxu0 0.0
    %9251 = vmatprep.subr.mxu0 0.0
    %9252 = vmatpush2.xpose.msra.mxu0 0.0
    %9253 = vmatprep.mubr.f32.mxu0 0.0
    %9254 = vmatmul.mubr.f32.gmra.mxu0 %v9153
    %v9255 = vpop.f32.mrf.mxu0
    %v9256 = vadd.f32 0.0, %v9255
    %v9257 = vpop.f32.mrf.mxu0
    %9258 = vmatprep.mubr.f32.mxu0 0.0
    %9259 = vmatmul.mubr.f32.gmra.mxu0 %v9155
    %v9260 = vpop.f32.mrf.mxu0
    %v9261 = vadd.f32 0.0, %v9260
    %v9262 = vpop.f32.mrf.mxu0
    %9263 = vmatprep.mubr.f32.mxu0 0.0
    %9264 = vmatmul.mubr.f32.gmra.mxu0 %v9157
    %v9265 = vpop.f32.mrf.mxu0
    %v9266 = vadd.f32 0.0, %v9265
    %v9267 = vpop.f32.mrf.mxu0
    %9268 = vmatprep.mubr.f32.mxu0 0.0
    %9269 = vmatmul.mubr.f32.gmra.mxu0 %v9159
    %v9270 = vpop.f32.mrf.mxu0
    %v9271 = vadd.f32 0.0, %v9270
    %v9272 = vpop.f32.mrf.mxu0
    %9273 = vmatprep.mubr.f32.mxu0 0.0
    %9274 = vmatmul.mubr.f32.gmra.mxu0 %v9161
    %v9275 = vpop.f32.mrf.mxu0
    %v9276 = vadd.f32 0.0, %v9275
    %v9277 = vpop.f32.mrf.mxu0
    %9278 = vmatprep.mubr.f32.mxu0 0.0
    %9279 = vmatmul.mubr.f32.gmra.mxu0 %v9163
    %v9280 = vpop.f32.mrf.mxu0
    %v9281 = vadd.f32 0.0, %v9280
    %v9282 = vpop.f32.mrf.mxu0
    %9283 = vmatprep.mubr.f32.mxu0 0.0
    %9284 = vmatmul.mubr.f32.gmra.mxu0 %v9165
    %v9285 = vpop.f32.mrf.mxu0
    %v9286 = vadd.f32 0.0, %v9285
    %v9287 = vpop.f32.mrf.mxu0
    %9288 = vmatprep.mubr.f32.mxu0 0.0
    %9289 = vmatmul.mubr.f32.gmra.mxu0 %v9167
    %v9290 = vpop.f32.mrf.mxu0
    %v9291 = vadd.f32 0.0, %v9290
    %v9292 = vpop.f32.mrf.mxu0
    %9293 = vmatprep.mubr.f32.mxu0 0.0
    %9294 = vmatmul.mubr.f32.gmra.mxu0 %v9169
    %v9295 = vpop.f32.mrf.mxu0
    %v9296 = vadd.f32 0.0, %v9295
    %v9297 = vpop.f32.mrf.mxu0
    %9298 = vdwg.mxu0
    %v9299 = vmul.f32 %v9256, 0.35355338
    %v9300 = vmul.f32 %v9261, 0.35355338
    %v9301 = vmul.f32 %v9266, 0.35355338
    %v9302 = vmul.f32 %v9271, 0.35355338
    %v9303 = vmul.f32 %v9276, 0.35355338
    %v9304 = vmul.f32 %v9281, 0.35355338
    %v9305 = vmul.f32 %v9286, 0.35355338
    %v9306 = vmul.f32 %v9291, 0.35355338
    %v9307 = vmul.f32 %v9296, 0.35355338
    %v9308 = vsel %vm1090, %v9299, -inf
    %9309 = vmax.xlane.f32.xlu0 %v9308
    %v9310 = vpop.xlane.xlu0 %9309
    %v9311 = vsel %vm1090, %v9300, -inf
    %9312 = vmax.xlane.f32.xlu0 %v9311
    %v9313 = vpop.xlane.xlu0 %9312
    %v9314 = vsel %vm1090, %v9301, -inf
    %9315 = vmax.xlane.f32.xlu0 %v9314
    %v9316 = vpop.xlane.xlu0 %9315
    %v9317 = vsel %vm1090, %v9302, -inf
    %9318 = vmax.xlane.f32.xlu0 %v9317
    %v9319 = vpop.xlane.xlu0 %9318
    %v9320 = vsel %vm1090, %v9303, -inf
    %9321 = vmax.xlane.f32.xlu0 %v9320
    %v9322 = vpop.xlane.xlu0 %9321
    %v9323 = vsel %vm1090, %v9304, -inf
    %9324 = vmax.xlane.f32.xlu0 %v9323
    %v9325 = vpop.xlane.xlu0 %9324
    %v9326 = vsel %vm1090, %v9305, -inf
    %9327 = vmax.xlane.f32.xlu0 %v9326
    %v9328 = vpop.xlane.xlu0 %9327
    %v9329 = vsel %vm1090, %v9306, -inf
    %9330 = vmax.xlane.f32.xlu0 %v9329
    %v9331 = vpop.xlane.xlu0 %9330
    %v9332 = vsel %vm1115, %v9307, -inf
    %9333 = vmax.xlane.f32.xlu0 %v9332
    %v9334 = vpop.xlane.xlu0 %9333
    %v9335 = vsub.f32 %v9299, %v9310
    %v9336 = vsub.f32 %v9300, %v9313
    %v9337 = vsub.f32 %v9301, %v9316
    %v9338 = vsub.f32 %v9302, %v9319
    %v9339 = vsub.f32 %v9303, %v9322
    %v9340 = vsub.f32 %v9304, %v9325
    %v9341 = vsub.f32 %v9305, %v9328
    %v9342 = vsub.f32 %v9306, %v9331
    %v9343 = vsub.f32 %v9307, %v9334
    %v9344 = vmul.f32 %v9335, 1.442695
    %v9345 = vpow.pop %v9344
    %v9346 = vmul.f32 %v9336, 1.442695
    %v9347 = vpow.pop %v9346
    %v9348 = vmul.f32 %v9337, 1.442695
    %v9349 = vpow.pop %v9348
    %v9350 = vmul.f32 %v9338, 1.442695
    %v9351 = vpow.pop %v9350
    %v9352 = vmul.f32 %v9339, 1.442695
    %v9353 = vpow.pop %v9352
    %v9354 = vmul.f32 %v9340, 1.442695
    %v9355 = vpow.pop %v9354
    %v9356 = vmul.f32 %v9341, 1.442695
    %v9357 = vpow.pop %v9356
    %v9358 = vmul.f32 %v9342, 1.442695
    %v9359 = vpow.pop %v9358
    %v9360 = vmul.f32 %v9343, 1.442695
    %v9361 = vpow.pop %v9360
    %v9362 = vsel %vm1090, %v9345, 0.0
    %9363 = vadd.xlane.f32.xlu0 %v9362
    %v9364 = vpop.xlane.xlu0 %9363
    %v9365 = vsel %vm1090, %v9347, 0.0
    %9366 = vadd.xlane.f32.xlu0 %v9365
    %v9367 = vpop.xlane.xlu0 %9366
    %v9368 = vsel %vm1090, %v9349, 0.0
    %9369 = vadd.xlane.f32.xlu0 %v9368
    %v9370 = vpop.xlane.xlu0 %9369
    %v9371 = vsel %vm1090, %v9351, 0.0
    %9372 = vadd.xlane.f32.xlu0 %v9371
    %v9373 = vpop.xlane.xlu0 %9372
    %v9374 = vsel %vm1090, %v9353, 0.0
    %9375 = vadd.xlane.f32.xlu0 %v9374
    %v9376 = vpop.xlane.xlu0 %9375
    %v9377 = vsel %vm1090, %v9355, 0.0
    %9378 = vadd.xlane.f32.xlu0 %v9377
    %v9379 = vpop.xlane.xlu0 %9378
    %v9380 = vsel %vm1090, %v9357, 0.0
    %9381 = vadd.xlane.f32.xlu0 %v9380
    %v9382 = vpop.xlane.xlu0 %9381
    %v9383 = vsel %vm1090, %v9359, 0.0
    %9384 = vadd.xlane.f32.xlu0 %v9383
    %v9385 = vpop.xlane.xlu0 %9384
    %v9386 = vsel %vm1115, %v9361, 0.0
    %9387 = vadd.xlane.f32.xlu0 %v9386
    %v9388 = vpop.xlane.xlu0 %9387
    %v9389 = vrcp.pop %v9364
    %v9390 = vrcp.pop %v9367
    %v9391 = vrcp.pop %v9370
    %v9392 = vrcp.pop %v9373
    %v9393 = vrcp.pop %v9376
    %v9394 = vrcp.pop %v9379
    %v9395 = vrcp.pop %v9382
    %v9396 = vrcp.pop %v9385
    %v9397 = vrcp.pop %v9388
    %v9398 = vmul.f32 %v9345, %v9389
    %v9399 = vmul.f32 %v9347, %v9390
    %v9400 = vmul.f32 %v9349, %v9391
    %v9401 = vmul.f32 %v9351, %v9392
    %v9402 = vmul.f32 %v9353, %v9393
    %v9403 = vmul.f32 %v9355, %v9394
    %v9404 = vmul.f32 %v9357, %v9395
    %v9405 = vmul.f32 %v9359, %v9396
    %v9406 = vmul.f32 %v9361, %v9397
    %9407 = vrot.lane.b32.xlu0 %v8665, 56
    %v9408 = vpop.permute.xlu0 %9407
    %9409 = vrot.lane.b32.xlu0 %v8667, 56
    %v9410 = vpop.permute.xlu0 %9409
    %9411 = vrot.lane.b32.xlu0 %v8669, 56
    %v9412 = vpop.permute.xlu0 %9411
    %9413 = vrot.lane.b32.xlu0 %v8671, 56
    %v9414 = vpop.permute.xlu0 %9413
    %9415 = vrot.lane.b32.xlu0 %v8673, 56
    %v9416 = vpop.permute.xlu0 %9415
    %9417 = vrot.lane.b32.xlu0 %v8675, 56
    %v9418 = vpop.permute.xlu0 %9417
    %9419 = vrot.lane.b32.xlu0 %v8677, 56
    %v9420 = vpop.permute.xlu0 %9419
    %9421 = vrot.lane.b32.xlu0 %v8679, 56
    %v9422 = vpop.permute.xlu0 %9421
    %9423 = vrot.lane.b32.xlu0 %v8678, 56
    %v9424 = vpop.permute.xlu0 %9423
    %v9434 = vsel %vm1090, %v9398, 0
    %v9437 = vsel %vm1090, %v9399, 0
    %v9440 = vsel %vm1090, %v9400, 0
    %v9443 = vsel %vm1090, %v9401, 0
    %v9446 = vsel %vm1090, %v9402, 0
    %v9449 = vsel %vm1090, %v9403, 0
    %v9452 = vsel %vm1090, %v9404, 0
    %v9455 = vsel %vm1090, %v9405, 0
    %v9458 = vsel %vm1090, %v9406, 0
    %v9460 = vsel %vm362, %v9424, 0
    %9462 = vmatprep.subr.mxu0 0.0
    %9463 = vmatpush1.msra.mxu0 0.0
    %9464 = vmatprep.subr.mxu0 0.0
    %9465 = vmatpush1.msra.mxu0 0.0
    %9466 = vmatprep.subr.mxu0 0.0
    %9467 = vmatpush1.msra.mxu0 0.0
    %9468 = vmatprep.subr.mxu0 0.0
    %9469 = vmatpush1.msra.mxu0 0.0
    %9470 = vmatprep.subr.mxu0 0.0
    %9471 = vmatpush1.msra.mxu0 0.0
    %9472 = vmatprep.subr.mxu0 0.0
    %9473 = vmatpush1.msra.mxu0 0.0
    %9474 = vmatprep.subr.mxu0 0.0
    %9475 = vmatpush1.msra.mxu0 0.0
    %9476 = vmatprep.subr.mxu0 0.0
    %9477 = vmatpush1.msra.mxu0 %v9460
    %9478 = vmatprep.subr.mxu0 0.0
    %9479 = vmatpush1.msra.mxu0 %v9422
    %9480 = vmatprep.subr.mxu0 0.0
    %9481 = vmatpush1.msra.mxu0 %v9420
    %9482 = vmatprep.subr.mxu0 0.0
    %9483 = vmatpush1.msra.mxu0 %v9418
    %9484 = vmatprep.subr.mxu0 0.0
    %9485 = vmatpush1.msra.mxu0 %v9416
    %9486 = vmatprep.subr.mxu0 0.0
    %9487 = vmatpush1.msra.mxu0 %v9414
    %9488 = vmatprep.subr.mxu0 0.0
    %9489 = vmatpush1.msra.mxu0 %v9412
    %9490 = vmatprep.subr.mxu0 0.0
    %9491 = vmatpush1.msra.mxu0 %v9410
    %9492 = vmatprep.subr.mxu0 0.0
    %9493 = vmatpush1.msra.mxu0 %v9408
    %9494 = vmatprep.subr.mxu0 0.0
    %9495 = vmatpush2.msra.mxu0 0.0
    %9496 = vmatprep.subr.mxu0 0.0
    %9497 = vmatpush2.msra.mxu0 0.0
    %9498 = vmatprep.subr.mxu0 0.0
    %9499 = vmatpush2.msra.mxu0 0.0
    %9500 = vmatprep.subr.mxu0 0.0
    %9501 = vmatpush2.msra.mxu0 0.0
    %9502 = vmatprep.subr.mxu0 0.0
    %9503 = vmatpush2.msra.mxu0 0.0
    %9504 = vmatprep.subr.mxu0 0.0
    %9505 = vmatpush2.msra.mxu0 0.0
    %9506 = vmatprep.subr.mxu0 0.0
    %9507 = vmatpush2.msra.mxu0 0.0
    %9508 = vmatprep.subr.mxu0 0.0
    %9509 = vmatpush2.msra.mxu0 0.0
    %9510 = vmatprep.subr.mxu0 0.0
    %9511 = vmatpush2.msra.mxu0 0.0
    %9512 = vmatprep.subr.mxu0 0.0
    %9513 = vmatpush2.msra.mxu0 0.0
    %9514 = vmatprep.subr.mxu0 0.0
    %9515 = vmatpush2.msra.mxu0 0.0
    %9516 = vmatprep.subr.mxu0 0.0
    %9517 = vmatpush2.msra.mxu0 0.0
    %9518 = vmatprep.subr.mxu0 0.0
    %9519 = vmatpush2.msra.mxu0 0.0
    %9520 = vmatprep.subr.mxu0 0.0
    %9521 = vmatpush2.msra.mxu0 0.0
    %9522 = vmatprep.subr.mxu0 0.0
    %9523 = vmatpush2.msra.mxu0 0.0
    %9524 = vmatprep.subr.mxu0 0.0
    %9525 = vmatpush2.msra.mxu0 0.0
    %9526 = vmatprep.mubr.f32.mxu0 0.0
    %9527 = vmatmul.mubr.f32.gmra.mxu0 %v9434
    %v9528 = vpop.f32.mrf.mxu0
    %v9529 = vadd.f32 0.0, %v9528
    %v9530 = vpop.f32.mrf.mxu0
    %9531 = vmatprep.mubr.f32.mxu0 0.0
    %9532 = vmatmul.mubr.f32.gmra.mxu0 %v9437
    %v9533 = vpop.f32.mrf.mxu0
    %v9534 = vadd.f32 0.0, %v9533
    %v9535 = vpop.f32.mrf.mxu0
    %9536 = vmatprep.mubr.f32.mxu0 0.0
    %9537 = vmatmul.mubr.f32.gmra.mxu0 %v9440
    %v9538 = vpop.f32.mrf.mxu0
    %v9539 = vadd.f32 0.0, %v9538
    %v9540 = vpop.f32.mrf.mxu0
    %9541 = vmatprep.mubr.f32.mxu0 0.0
    %9542 = vmatmul.mubr.f32.gmra.mxu0 %v9443
    %v9543 = vpop.f32.mrf.mxu0
    %v9544 = vadd.f32 0.0, %v9543
    %v9545 = vpop.f32.mrf.mxu0
    %9546 = vmatprep.mubr.f32.mxu0 0.0
    %9547 = vmatmul.mubr.f32.gmra.mxu0 %v9446
    %v9548 = vpop.f32.mrf.mxu0
    %v9549 = vadd.f32 0.0, %v9548
    %v9550 = vpop.f32.mrf.mxu0
    %9551 = vmatprep.mubr.f32.mxu0 0.0
    %9552 = vmatmul.mubr.f32.gmra.mxu0 %v9449
    %v9553 = vpop.f32.mrf.mxu0
    %v9554 = vadd.f32 0.0, %v9553
    %v9555 = vpop.f32.mrf.mxu0
    %9556 = vmatprep.mubr.f32.mxu0 0.0
    %9557 = vmatmul.mubr.f32.gmra.mxu0 %v9452
    %v9558 = vpop.f32.mrf.mxu0
    %v9559 = vadd.f32 0.0, %v9558
    %v9560 = vpop.f32.mrf.mxu0
    %9561 = vmatprep.mubr.f32.mxu0 0.0
    %9562 = vmatmul.mubr.f32.gmra.mxu0 %v9455
    %v9563 = vpop.f32.mrf.mxu0
    %v9564 = vadd.f32 0.0, %v9563
    %v9565 = vpop.f32.mrf.mxu0
    %9566 = vmatprep.mubr.f32.mxu0 0.0
    %9567 = vmatmul.mubr.f32.gmra.mxu0 %v9458
    %v9568 = vpop.f32.mrf.mxu0
    %v9569 = vadd.f32 0.0, %v9568
    %v9570 = vpop.f32.mrf.mxu0
    %9571 = vdwg.mxu0
    %9572 = vrot.lane.b32.xlu0 %v8665, 112
    %v9573 = vpop.permute.xlu0 %9572
    %9574 = vrot.lane.b32.xlu0 %v8667, 112
    %v9575 = vpop.permute.xlu0 %9574
    %9576 = vrot.lane.b32.xlu0 %v8669, 112
    %v9577 = vpop.permute.xlu0 %9576
    %9578 = vrot.lane.b32.xlu0 %v8671, 112
    %v9579 = vpop.permute.xlu0 %9578
    %9580 = vrot.lane.b32.xlu0 %v8673, 112
    %v9581 = vpop.permute.xlu0 %9580
    %9582 = vrot.lane.b32.xlu0 %v8675, 112
    %v9583 = vpop.permute.xlu0 %9582
    %9584 = vrot.lane.b32.xlu0 %v8677, 112
    %v9585 = vpop.permute.xlu0 %9584
    %9586 = vrot.lane.b32.xlu0 %v8679, 112
    %v9587 = vpop.permute.xlu0 %9586
    %9588 = vrot.lane.b32.xlu0 %v8678, 112
    %v9589 = vpop.permute.xlu0 %9588
    %9590 = vrot.lane.b32.xlu0 %v8665, 80
    %v9591 = vpop.permute.xlu0 %9590
    %9592 = vrot.lane.b32.xlu0 %v8667, 80
    %v9593 = vpop.permute.xlu0 %9592
    %9594 = vrot.lane.b32.xlu0 %v8669, 80
    %v9595 = vpop.permute.xlu0 %9594
    %9596 = vrot.lane.b32.xlu0 %v8671, 80
    %v9597 = vpop.permute.xlu0 %9596
    %9598 = vrot.lane.b32.xlu0 %v8673, 80
    %v9599 = vpop.permute.xlu0 %9598
    %9600 = vrot.lane.b32.xlu0 %v8675, 80
    %v9601 = vpop.permute.xlu0 %9600
    %9602 = vrot.lane.b32.xlu0 %v8677, 80
    %v9603 = vpop.permute.xlu0 %9602
    %9604 = vrot.lane.b32.xlu0 %v8679, 80
    %v9605 = vpop.permute.xlu0 %9604
    %9606 = vrot.lane.b32.xlu0 %v8678, 80
    %v9607 = vpop.permute.xlu0 %9606
    %v9608 = vsel %vm934, %v9573, 0
    %v9610 = vsel %vm934, %v9575, 0
    %v9612 = vsel %vm934, %v9577, 0
    %v9614 = vsel %vm934, %v9579, 0
    %v9616 = vsel %vm934, %v9581, 0
    %v9618 = vsel %vm934, %v9583, 0
    %v9620 = vsel %vm934, %v9585, 0
    %v9622 = vsel %vm934, %v9587, 0
    %v9624 = vsel %vm934, %v9589, 0
    %v9626 = vsel %vm934, %v9591, 0
    %v9628 = vsel %vm934, %v9593, 0
    %v9630 = vsel %vm934, %v9595, 0
    %v9632 = vsel %vm934, %v9597, 0
    %v9634 = vsel %vm934, %v9599, 0
    %v9636 = vsel %vm934, %v9601, 0
    %v9638 = vsel %vm934, %v9603, 0
    %v9640 = vsel %vm934, %v9605, 0
    %v9642 = vsel %vm934, %v9607, 0
    %9644 = vmatprep.subr.mxu0 0.0
    %9645 = vmatpush1.xpose.msra.mxu0 0.0
    %9646 = vmatprep.subr.mxu0 0.0
    %9647 = vmatpush1.xpose.msra.mxu0 0.0
    %9648 = vmatprep.subr.mxu0 0.0
    %9649 = vmatpush1.xpose.msra.mxu0 0.0
    %9650 = vmatprep.subr.mxu0 0.0
    %9651 = vmatpush1.xpose.msra.mxu0 0.0
    %9652 = vmatprep.subr.mxu0 0.0
    %9653 = vmatpush1.xpose.msra.mxu0 0.0
    %9654 = vmatprep.subr.mxu0 0.0
    %9655 = vmatpush1.xpose.msra.mxu0 0.0
    %9656 = vmatprep.subr.mxu0 0.0
    %9657 = vmatpush1.xpose.msra.mxu0 0.0
    %9658 = vmatprep.subr.mxu0 0.0
    %9659 = vmatpush1.xpose.msra.mxu0 %v9642
    %9660 = vmatprep.subr.mxu0 0.0
    %9661 = vmatpush1.xpose.msra.mxu0 %v9640
    %9662 = vmatprep.subr.mxu0 0.0
    %9663 = vmatpush1.xpose.msra.mxu0 %v9638
    %9664 = vmatprep.subr.mxu0 0.0
    %9665 = vmatpush1.xpose.msra.mxu0 %v9636
    %9666 = vmatprep.subr.mxu0 0.0
    %9667 = vmatpush1.xpose.msra.mxu0 %v9634
    %9668 = vmatprep.subr.mxu0 0.0
    %9669 = vmatpush1.xpose.msra.mxu0 %v9632
    %9670 = vmatprep.subr.mxu0 0.0
    %9671 = vmatpush1.xpose.msra.mxu0 %v9630
    %9672 = vmatprep.subr.mxu0 0.0
    %9673 = vmatpush1.xpose.msra.mxu0 %v9628
    %9674 = vmatprep.subr.mxu0 0.0
    %9675 = vmatpush1.xpose.msra.mxu0 %v9626
    %9676 = vmatprep.subr.mxu0 0.0
    %9677 = vmatpush2.xpose.msra.mxu0 0.0
    %9678 = vmatprep.subr.mxu0 0.0
    %9679 = vmatpush2.xpose.msra.mxu0 0.0
    %9680 = vmatprep.subr.mxu0 0.0
    %9681 = vmatpush2.xpose.msra.mxu0 0.0
    %9682 = vmatprep.subr.mxu0 0.0
    %9683 = vmatpush2.xpose.msra.mxu0 0.0
    %9684 = vmatprep.subr.mxu0 0.0
    %9685 = vmatpush2.xpose.msra.mxu0 0.0
    %9686 = vmatprep.subr.mxu0 0.0
    %9687 = vmatpush2.xpose.msra.mxu0 0.0
    %9688 = vmatprep.subr.mxu0 0.0
    %9689 = vmatpush2.xpose.msra.mxu0 0.0
    %9690 = vmatprep.subr.mxu0 0.0
    %9691 = vmatpush2.xpose.msra.mxu0 0.0
    %9692 = vmatprep.subr.mxu0 0.0
    %9693 = vmatpush2.xpose.msra.mxu0 0.0
    %9694 = vmatprep.subr.mxu0 0.0
    %9695 = vmatpush2.xpose.msra.mxu0 0.0
    %9696 = vmatprep.subr.mxu0 0.0
    %9697 = vmatpush2.xpose.msra.mxu0 0.0
    %9698 = vmatprep.subr.mxu0 0.0
    %9699 = vmatpush2.xpose.msra.mxu0 0.0
    %9700 = vmatprep.subr.mxu0 0.0
    %9701 = vmatpush2.xpose.msra.mxu0 0.0
    %9702 = vmatprep.subr.mxu0 0.0
    %9703 = vmatpush2.xpose.msra.mxu0 0.0
    %9704 = vmatprep.subr.mxu0 0.0
    %9705 = vmatpush2.xpose.msra.mxu0 0.0
    %9706 = vmatprep.subr.mxu0 0.0
    %9707 = vmatpush2.xpose.msra.mxu0 0.0
    %9708 = vmatprep.mubr.f32.mxu0 0.0
    %9709 = vmatmul.mubr.f32.gmra.mxu0 %v9608
    %v9710 = vpop.f32.mrf.mxu0
    %v9711 = vadd.f32 0.0, %v9710
    %v9712 = vpop.f32.mrf.mxu0
    %9713 = vmatprep.mubr.f32.mxu0 0.0
    %9714 = vmatmul.mubr.f32.gmra.mxu0 %v9610
    %v9715 = vpop.f32.mrf.mxu0
    %v9716 = vadd.f32 0.0, %v9715
    %v9717 = vpop.f32.mrf.mxu0
    %9718 = vmatprep.mubr.f32.mxu0 0.0
    %9719 = vmatmul.mubr.f32.gmra.mxu0 %v9612
    %v9720 = vpop.f32.mrf.mxu0
    %v9721 = vadd.f32 0.0, %v9720
    %v9722 = vpop.f32.mrf.mxu0
    %9723 = vmatprep.mubr.f32.mxu0 0.0
    %9724 = vmatmul.mubr.f32.gmra.mxu0 %v9614
    %v9725 = vpop.f32.mrf.mxu0
    %v9726 = vadd.f32 0.0, %v9725
    %v9727 = vpop.f32.mrf.mxu0
    %9728 = vmatprep.mubr.f32.mxu0 0.0
    %9729 = vmatmul.mubr.f32.gmra.mxu0 %v9616
    %v9730 = vpop.f32.mrf.mxu0
    %v9731 = vadd.f32 0.0, %v9730
    %v9732 = vpop.f32.mrf.mxu0
    %9733 = vmatprep.mubr.f32.mxu0 0.0
    %9734 = vmatmul.mubr.f32.gmra.mxu0 %v9618
    %v9735 = vpop.f32.mrf.mxu0
    %v9736 = vadd.f32 0.0, %v9735
    %v9737 = vpop.f32.mrf.mxu0
    %9738 = vmatprep.mubr.f32.mxu0 0.0
    %9739 = vmatmul.mubr.f32.gmra.mxu0 %v9620
    %v9740 = vpop.f32.mrf.mxu0
    %v9741 = vadd.f32 0.0, %v9740
    %v9742 = vpop.f32.mrf.mxu0
    %9743 = vmatprep.mubr.f32.mxu0 0.0
    %9744 = vmatmul.mubr.f32.gmra.mxu0 %v9622
    %v9745 = vpop.f32.mrf.mxu0
    %v9746 = vadd.f32 0.0, %v9745
    %v9747 = vpop.f32.mrf.mxu0
    %9748 = vmatprep.mubr.f32.mxu0 0.0
    %9749 = vmatmul.mubr.f32.gmra.mxu0 %v9624
    %v9750 = vpop.f32.mrf.mxu0
    %v9751 = vadd.f32 0.0, %v9750
    %v9752 = vpop.f32.mrf.mxu0
    %9753 = vdwg.mxu0
    %v9754 = vmul.f32 %v9711, 0.35355338
    %v9755 = vmul.f32 %v9716, 0.35355338
    %v9756 = vmul.f32 %v9721, 0.35355338
    %v9757 = vmul.f32 %v9726, 0.35355338
    %v9758 = vmul.f32 %v9731, 0.35355338
    %v9759 = vmul.f32 %v9736, 0.35355338
    %v9760 = vmul.f32 %v9741, 0.35355338
    %v9761 = vmul.f32 %v9746, 0.35355338
    %v9762 = vmul.f32 %v9751, 0.35355338
    %v9763 = vsel %vm1090, %v9754, -inf
    %9764 = vmax.xlane.f32.xlu0 %v9763
    %v9765 = vpop.xlane.xlu0 %9764
    %v9766 = vsel %vm1090, %v9755, -inf
    %9767 = vmax.xlane.f32.xlu0 %v9766
    %v9768 = vpop.xlane.xlu0 %9767
    %v9769 = vsel %vm1090, %v9756, -inf
    %9770 = vmax.xlane.f32.xlu0 %v9769
    %v9771 = vpop.xlane.xlu0 %9770
    %v9772 = vsel %vm1090, %v9757, -inf
    %9773 = vmax.xlane.f32.xlu0 %v9772
    %v9774 = vpop.xlane.xlu0 %9773
    %v9775 = vsel %vm1090, %v9758, -inf
    %9776 = vmax.xlane.f32.xlu0 %v9775
    %v9777 = vpop.xlane.xlu0 %9776
    %v9778 = vsel %vm1090, %v9759, -inf
    %9779 = vmax.xlane.f32.xlu0 %v9778
    %v9780 = vpop.xlane.xlu0 %9779
    %v9781 = vsel %vm1090, %v9760, -inf
    %9782 = vmax.xlane.f32.xlu0 %v9781
    %v9783 = vpop.xlane.xlu0 %9782
    %v9784 = vsel %vm1090, %v9761, -inf
    %9785 = vmax.xlane.f32.xlu0 %v9784
    %v9786 = vpop.xlane.xlu0 %9785
    %v9787 = vsel %vm1115, %v9762, -inf
    %9788 = vmax.xlane.f32.xlu0 %v9787
    %v9789 = vpop.xlane.xlu0 %9788
    %v9790 = vsub.f32 %v9754, %v9765
    %v9791 = vsub.f32 %v9755, %v9768
    %v9792 = vsub.f32 %v9756, %v9771
    %v9793 = vsub.f32 %v9757, %v9774
    %v9794 = vsub.f32 %v9758, %v9777
    %v9795 = vsub.f32 %v9759, %v9780
    %v9796 = vsub.f32 %v9760, %v9783
    %v9797 = vsub.f32 %v9761, %v9786
    %v9798 = vsub.f32 %v9762, %v9789
    %v9799 = vmul.f32 %v9790, 1.442695
    %v9800 = vpow.pop %v9799
    %v9801 = vmul.f32 %v9791, 1.442695
    %v9802 = vpow.pop %v9801
    %v9803 = vmul.f32 %v9792, 1.442695
    %v9804 = vpow.pop %v9803
    %v9805 = vmul.f32 %v9793, 1.442695
    %v9806 = vpow.pop %v9805
    %v9807 = vmul.f32 %v9794, 1.442695
    %v9808 = vpow.pop %v9807
    %v9809 = vmul.f32 %v9795, 1.442695
    %v9810 = vpow.pop %v9809
    %v9811 = vmul.f32 %v9796, 1.442695
    %v9812 = vpow.pop %v9811
    %v9813 = vmul.f32 %v9797, 1.442695
    %v9814 = vpow.pop %v9813
    %v9815 = vmul.f32 %v9798, 1.442695
    %v9816 = vpow.pop %v9815
    %v9817 = vsel %vm1090, %v9800, 0.0
    %9818 = vadd.xlane.f32.xlu0 %v9817
    %v9819 = vpop.xlane.xlu0 %9818
    %v9820 = vsel %vm1090, %v9802, 0.0
    %9821 = vadd.xlane.f32.xlu0 %v9820
    %v9822 = vpop.xlane.xlu0 %9821
    %v9823 = vsel %vm1090, %v9804, 0.0
    %9824 = vadd.xlane.f32.xlu0 %v9823
    %v9825 = vpop.xlane.xlu0 %9824
    %v9826 = vsel %vm1090, %v9806, 0.0
    %9827 = vadd.xlane.f32.xlu0 %v9826
    %v9828 = vpop.xlane.xlu0 %9827
    %v9829 = vsel %vm1090, %v9808, 0.0
    %9830 = vadd.xlane.f32.xlu0 %v9829
    %v9831 = vpop.xlane.xlu0 %9830
    %v9832 = vsel %vm1090, %v9810, 0.0
    %9833 = vadd.xlane.f32.xlu0 %v9832
    %v9834 = vpop.xlane.xlu0 %9833
    %v9835 = vsel %vm1090, %v9812, 0.0
    %9836 = vadd.xlane.f32.xlu0 %v9835
    %v9837 = vpop.xlane.xlu0 %9836
    %v9838 = vsel %vm1090, %v9814, 0.0
    %9839 = vadd.xlane.f32.xlu0 %v9838
    %v9840 = vpop.xlane.xlu0 %9839
    %v9841 = vsel %vm1115, %v9816, 0.0
    %9842 = vadd.xlane.f32.xlu0 %v9841
    %v9843 = vpop.xlane.xlu0 %9842
    %v9844 = vrcp.pop %v9819
    %v9845 = vrcp.pop %v9822
    %v9846 = vrcp.pop %v9825
    %v9847 = vrcp.pop %v9828
    %v9848 = vrcp.pop %v9831
    %v9849 = vrcp.pop %v9834
    %v9850 = vrcp.pop %v9837
    %v9851 = vrcp.pop %v9840
    %v9852 = vrcp.pop %v9843
    %v9853 = vmul.f32 %v9800, %v9844
    %v9854 = vmul.f32 %v9802, %v9845
    %v9855 = vmul.f32 %v9804, %v9846
    %v9856 = vmul.f32 %v9806, %v9847
    %v9857 = vmul.f32 %v9808, %v9848
    %v9858 = vmul.f32 %v9810, %v9849
    %v9859 = vmul.f32 %v9812, %v9850
    %v9860 = vmul.f32 %v9814, %v9851
    %v9861 = vmul.f32 %v9816, %v9852
    %9862 = vrot.lane.b32.xlu0 %v8665, 48
    %v9863 = vpop.permute.xlu0 %9862
    %9864 = vrot.lane.b32.xlu0 %v8667, 48
    %v9865 = vpop.permute.xlu0 %9864
    %9866 = vrot.lane.b32.xlu0 %v8669, 48
    %v9867 = vpop.permute.xlu0 %9866
    %9868 = vrot.lane.b32.xlu0 %v8671, 48
    %v9869 = vpop.permute.xlu0 %9868
    %9870 = vrot.lane.b32.xlu0 %v8673, 48
    %v9871 = vpop.permute.xlu0 %9870
    %9872 = vrot.lane.b32.xlu0 %v8675, 48
    %v9873 = vpop.permute.xlu0 %9872
    %9874 = vrot.lane.b32.xlu0 %v8677, 48
    %v9875 = vpop.permute.xlu0 %9874
    %9876 = vrot.lane.b32.xlu0 %v8679, 48
    %v9877 = vpop.permute.xlu0 %9876
    %9878 = vrot.lane.b32.xlu0 %v8678, 48
    %v9879 = vpop.permute.xlu0 %9878
    %v9889 = vsel %vm1090, %v9853, 0
    %v9892 = vsel %vm1090, %v9854, 0
    %v9895 = vsel %vm1090, %v9855, 0
    %v9898 = vsel %vm1090, %v9856, 0
    %v9901 = vsel %vm1090, %v9857, 0
    %v9904 = vsel %vm1090, %v9858, 0
    %v9907 = vsel %vm1090, %v9859, 0
    %v9910 = vsel %vm1090, %v9860, 0
    %v9913 = vsel %vm1090, %v9861, 0
    %v9915 = vsel %vm362, %v9879, 0
    %9917 = vmatprep.subr.mxu0 0.0
    %9918 = vmatpush1.msra.mxu0 0.0
    %9919 = vmatprep.subr.mxu0 0.0
    %9920 = vmatpush1.msra.mxu0 0.0
    %9921 = vmatprep.subr.mxu0 0.0
    %9922 = vmatpush1.msra.mxu0 0.0
    %9923 = vmatprep.subr.mxu0 0.0
    %9924 = vmatpush1.msra.mxu0 0.0
    %9925 = vmatprep.subr.mxu0 0.0
    %9926 = vmatpush1.msra.mxu0 0.0
    %9927 = vmatprep.subr.mxu0 0.0
    %9928 = vmatpush1.msra.mxu0 0.0
    %9929 = vmatprep.subr.mxu0 0.0
    %9930 = vmatpush1.msra.mxu0 0.0
    %9931 = vmatprep.subr.mxu0 0.0
    %9932 = vmatpush1.msra.mxu0 %v9915
    %9933 = vmatprep.subr.mxu0 0.0
    %9934 = vmatpush1.msra.mxu0 %v9877
    %9935 = vmatprep.subr.mxu0 0.0
    %9936 = vmatpush1.msra.mxu0 %v9875
    %9937 = vmatprep.subr.mxu0 0.0
    %9938 = vmatpush1.msra.mxu0 %v9873
    %9939 = vmatprep.subr.mxu0 0.0
    %9940 = vmatpush1.msra.mxu0 %v9871
    %9941 = vmatprep.subr.mxu0 0.0
    %9942 = vmatpush1.msra.mxu0 %v9869
    %9943 = vmatprep.subr.mxu0 0.0
    %9944 = vmatpush1.msra.mxu0 %v9867
    %9945 = vmatprep.subr.mxu0 0.0
    %9946 = vmatpush1.msra.mxu0 %v9865
    %9947 = vmatprep.subr.mxu0 0.0
    %9948 = vmatpush1.msra.mxu0 %v9863
    %9949 = vmatprep.subr.mxu0 0.0
    %9950 = vmatpush2.msra.mxu0 0.0
    %9951 = vmatprep.subr.mxu0 0.0
    %9952 = vmatpush2.msra.mxu0 0.0
    %9953 = vmatprep.subr.mxu0 0.0
    %9954 = vmatpush2.msra.mxu0 0.0
    %9955 = vmatprep.subr.mxu0 0.0
    %9956 = vmatpush2.msra.mxu0 0.0
    %9957 = vmatprep.subr.mxu0 0.0
    %9958 = vmatpush2.msra.mxu0 0.0
    %9959 = vmatprep.subr.mxu0 0.0
    %9960 = vmatpush2.msra.mxu0 0.0
    %9961 = vmatprep.subr.mxu0 0.0
    %9962 = vmatpush2.msra.mxu0 0.0
    %9963 = vmatprep.subr.mxu0 0.0
    %9964 = vmatpush2.msra.mxu0 0.0
    %9965 = vmatprep.subr.mxu0 0.0
    %9966 = vmatpush2.msra.mxu0 0.0
    %9967 = vmatprep.subr.mxu0 0.0
    %9968 = vmatpush2.msra.mxu0 0.0
    %9969 = vmatprep.subr.mxu0 0.0
    %9970 = vmatpush2.msra.mxu0 0.0
    %9971 = vmatprep.subr.mxu0 0.0
    %9972 = vmatpush2.msra.mxu0 0.0
    %9973 = vmatprep.subr.mxu0 0.0
    %9974 = vmatpush2.msra.mxu0 0.0
    %9975 = vmatprep.subr.mxu0 0.0
    %9976 = vmatpush2.msra.mxu0 0.0
    %9977 = vmatprep.subr.mxu0 0.0
    %9978 = vmatpush2.msra.mxu0 0.0
    %9979 = vmatprep.subr.mxu0 0.0
    %9980 = vmatpush2.msra.mxu0 0.0
    %9981 = vmatprep.mubr.f32.mxu0 0.0
    %9982 = vmatmul.mubr.f32.gmra.mxu0 %v9889
    %v9983 = vpop.f32.mrf.mxu0
    %v9984 = vadd.f32 0.0, %v9983
    %v9985 = vpop.f32.mrf.mxu0
    %9986 = vmatprep.mubr.f32.mxu0 0.0
    %9987 = vmatmul.mubr.f32.gmra.mxu0 %v9892
    %v9988 = vpop.f32.mrf.mxu0
    %v9989 = vadd.f32 0.0, %v9988
    %v9990 = vpop.f32.mrf.mxu0
    %9991 = vmatprep.mubr.f32.mxu0 0.0
    %9992 = vmatmul.mubr.f32.gmra.mxu0 %v9895
    %v9993 = vpop.f32.mrf.mxu0
    %v9994 = vadd.f32 0.0, %v9993
    %v9995 = vpop.f32.mrf.mxu0
    %9996 = vmatprep.mubr.f32.mxu0 0.0
    %9997 = vmatmul.mubr.f32.gmra.mxu0 %v9898
    %v9998 = vpop.f32.mrf.mxu0
    %v9999 = vadd.f32 0.0, %v9998
    %v10000 = vpop.f32.mrf.mxu0
    %10001 = vmatprep.mubr.f32.mxu0 0.0
    %10002 = vmatmul.mubr.f32.gmra.mxu0 %v9901
    %v10003 = vpop.f32.mrf.mxu0
    %v10004 = vadd.f32 0.0, %v10003
    %v10005 = vpop.f32.mrf.mxu0
    %10006 = vmatprep.mubr.f32.mxu0 0.0
    %10007 = vmatmul.mubr.f32.gmra.mxu0 %v9904
    %v10008 = vpop.f32.mrf.mxu0
    %v10009 = vadd.f32 0.0, %v10008
    %v10010 = vpop.f32.mrf.mxu0
    %10011 = vmatprep.mubr.f32.mxu0 0.0
    %10012 = vmatmul.mubr.f32.gmra.mxu0 %v9907
    %v10013 = vpop.f32.mrf.mxu0
    %v10014 = vadd.f32 0.0, %v10013
    %v10015 = vpop.f32.mrf.mxu0
    %10016 = vmatprep.mubr.f32.mxu0 0.0
    %10017 = vmatmul.mubr.f32.gmra.mxu0 %v9910
    %v10018 = vpop.f32.mrf.mxu0
    %v10019 = vadd.f32 0.0, %v10018
    %v10020 = vpop.f32.mrf.mxu0
    %10021 = vmatprep.mubr.f32.mxu0 0.0
    %10022 = vmatmul.mubr.f32.gmra.mxu0 %v9913
    %v10023 = vpop.f32.mrf.mxu0
    %v10024 = vadd.f32 0.0, %v10023
    %v10025 = vpop.f32.mrf.mxu0
    %10026 = vdwg.mxu0
    %10027 = vrot.lane.b32.xlu0 %v8665, 104
    %v10028 = vpop.permute.xlu0 %10027
    %10029 = vrot.lane.b32.xlu0 %v8667, 104
    %v10030 = vpop.permute.xlu0 %10029
    %10031 = vrot.lane.b32.xlu0 %v8669, 104
    %v10032 = vpop.permute.xlu0 %10031
    %10033 = vrot.lane.b32.xlu0 %v8671, 104
    %v10034 = vpop.permute.xlu0 %10033
    %10035 = vrot.lane.b32.xlu0 %v8673, 104
    %v10036 = vpop.permute.xlu0 %10035
    %10037 = vrot.lane.b32.xlu0 %v8675, 104
    %v10038 = vpop.permute.xlu0 %10037
    %10039 = vrot.lane.b32.xlu0 %v8677, 104
    %v10040 = vpop.permute.xlu0 %10039
    %10041 = vrot.lane.b32.xlu0 %v8679, 104
    %v10042 = vpop.permute.xlu0 %10041
    %10043 = vrot.lane.b32.xlu0 %v8678, 104
    %v10044 = vpop.permute.xlu0 %10043
    %10045 = vrot.lane.b32.xlu0 %v8665, 72
    %v10046 = vpop.permute.xlu0 %10045
    %10047 = vrot.lane.b32.xlu0 %v8667, 72
    %v10048 = vpop.permute.xlu0 %10047
    %10049 = vrot.lane.b32.xlu0 %v8669, 72
    %v10050 = vpop.permute.xlu0 %10049
    %10051 = vrot.lane.b32.xlu0 %v8671, 72
    %v10052 = vpop.permute.xlu0 %10051
    %10053 = vrot.lane.b32.xlu0 %v8673, 72
    %v10054 = vpop.permute.xlu0 %10053
    %10055 = vrot.lane.b32.xlu0 %v8675, 72
    %v10056 = vpop.permute.xlu0 %10055
    %10057 = vrot.lane.b32.xlu0 %v8677, 72
    %v10058 = vpop.permute.xlu0 %10057
    %10059 = vrot.lane.b32.xlu0 %v8679, 72
    %v10060 = vpop.permute.xlu0 %10059
    %10061 = vrot.lane.b32.xlu0 %v8678, 72
    %v10062 = vpop.permute.xlu0 %10061
    %v10063 = vsel %vm934, %v10028, 0
    %v10065 = vsel %vm934, %v10030, 0
    %v10067 = vsel %vm934, %v10032, 0
    %v10069 = vsel %vm934, %v10034, 0
    %v10071 = vsel %vm934, %v10036, 0
    %v10073 = vsel %vm934, %v10038, 0
    %v10075 = vsel %vm934, %v10040, 0
    %v10077 = vsel %vm934, %v10042, 0
    %v10079 = vsel %vm934, %v10044, 0
    %v10081 = vsel %vm934, %v10046, 0
    %v10083 = vsel %vm934, %v10048, 0
    %v10085 = vsel %vm934, %v10050, 0
    %v10087 = vsel %vm934, %v10052, 0
    %v10089 = vsel %vm934, %v10054, 0
    %v10091 = vsel %vm934, %v10056, 0
    %v10093 = vsel %vm934, %v10058, 0
    %v10095 = vsel %vm934, %v10060, 0
    %v10097 = vsel %vm934, %v10062, 0
    %10099 = vmatprep.subr.mxu0 0.0
    %10100 = vmatpush1.xpose.msra.mxu0 0.0
    %10101 = vmatprep.subr.mxu0 0.0
    %10102 = vmatpush1.xpose.msra.mxu0 0.0
    %10103 = vmatprep.subr.mxu0 0.0
    %10104 = vmatpush1.xpose.msra.mxu0 0.0
    %10105 = vmatprep.subr.mxu0 0.0
    %10106 = vmatpush1.xpose.msra.mxu0 0.0
    %10107 = vmatprep.subr.mxu0 0.0
    %10108 = vmatpush1.xpose.msra.mxu0 0.0
    %10109 = vmatprep.subr.mxu0 0.0
    %10110 = vmatpush1.xpose.msra.mxu0 0.0
    %10111 = vmatprep.subr.mxu0 0.0
    %10112 = vmatpush1.xpose.msra.mxu0 0.0
    %10113 = vmatprep.subr.mxu0 0.0
    %10114 = vmatpush1.xpose.msra.mxu0 %v10097
    %10115 = vmatprep.subr.mxu0 0.0
    %10116 = vmatpush1.xpose.msra.mxu0 %v10095
    %10117 = vmatprep.subr.mxu0 0.0
    %10118 = vmatpush1.xpose.msra.mxu0 %v10093
    %10119 = vmatprep.subr.mxu0 0.0
    %10120 = vmatpush1.xpose.msra.mxu0 %v10091
    %10121 = vmatprep.subr.mxu0 0.0
    %10122 = vmatpush1.xpose.msra.mxu0 %v10089
    %10123 = vmatprep.subr.mxu0 0.0
    %10124 = vmatpush1.xpose.msra.mxu0 %v10087
    %10125 = vmatprep.subr.mxu0 0.0
    %10126 = vmatpush1.xpose.msra.mxu0 %v10085
    %10127 = vmatprep.subr.mxu0 0.0
    %10128 = vmatpush1.xpose.msra.mxu0 %v10083
    %10129 = vmatprep.subr.mxu0 0.0
    %10130 = vmatpush1.xpose.msra.mxu0 %v10081
    %10131 = vmatprep.subr.mxu0 0.0
    %10132 = vmatpush2.xpose.msra.mxu0 0.0
    %10133 = vmatprep.subr.mxu0 0.0
    %10134 = vmatpush2.xpose.msra.mxu0 0.0
    %10135 = vmatprep.subr.mxu0 0.0
    %10136 = vmatpush2.xpose.msra.mxu0 0.0
    %10137 = vmatprep.subr.mxu0 0.0
    %10138 = vmatpush2.xpose.msra.mxu0 0.0
    %10139 = vmatprep.subr.mxu0 0.0
    %10140 = vmatpush2.xpose.msra.mxu0 0.0
    %10141 = vmatprep.subr.mxu0 0.0
    %10142 = vmatpush2.xpose.msra.mxu0 0.0
    %10143 = vmatprep.subr.mxu0 0.0
    %10144 = vmatpush2.xpose.msra.mxu0 0.0
    %10145 = vmatprep.subr.mxu0 0.0
    %10146 = vmatpush2.xpose.msra.mxu0 0.0
    %10147 = vmatprep.subr.mxu0 0.0
    %10148 = vmatpush2.xpose.msra.mxu0 0.0
    %10149 = vmatprep.subr.mxu0 0.0
    %10150 = vmatpush2.xpose.msra.mxu0 0.0
    %10151 = vmatprep.subr.mxu0 0.0
    %10152 = vmatpush2.xpose.msra.mxu0 0.0
    %10153 = vmatprep.subr.mxu0 0.0
    %10154 = vmatpush2.xpose.msra.mxu0 0.0
    %10155 = vmatprep.subr.mxu0 0.0
    %10156 = vmatpush2.xpose.msra.mxu0 0.0
    %10157 = vmatprep.subr.mxu0 0.0
    %10158 = vmatpush2.xpose.msra.mxu0 0.0
    %10159 = vmatprep.subr.mxu0 0.0
    %10160 = vmatpush2.xpose.msra.mxu0 0.0
    %10161 = vmatprep.subr.mxu0 0.0
    %10162 = vmatpush2.xpose.msra.mxu0 0.0
    %10163 = vmatprep.mubr.f32.mxu0 0.0
    %10164 = vmatmul.mubr.f32.gmra.mxu0 %v10063
    %v10165 = vpop.f32.mrf.mxu0
    %v10166 = vadd.f32 0.0, %v10165
    %v10167 = vpop.f32.mrf.mxu0
    %10168 = vmatprep.mubr.f32.mxu0 0.0
    %10169 = vmatmul.mubr.f32.gmra.mxu0 %v10065
    %v10170 = vpop.f32.mrf.mxu0
    %v10171 = vadd.f32 0.0, %v10170
    %v10172 = vpop.f32.mrf.mxu0
    %10173 = vmatprep.mubr.f32.mxu0 0.0
    %10174 = vmatmul.mubr.f32.gmra.mxu0 %v10067
    %v10175 = vpop.f32.mrf.mxu0
    %v10176 = vadd.f32 0.0, %v10175
    %v10177 = vpop.f32.mrf.mxu0
    %10178 = vmatprep.mubr.f32.mxu0 0.0
    %10179 = vmatmul.mubr.f32.gmra.mxu0 %v10069
    %v10180 = vpop.f32.mrf.mxu0
    %v10181 = vadd.f32 0.0, %v10180
    %v10182 = vpop.f32.mrf.mxu0
    %10183 = vmatprep.mubr.f32.mxu0 0.0
    %10184 = vmatmul.mubr.f32.gmra.mxu0 %v10071
    %v10185 = vpop.f32.mrf.mxu0
    %v10186 = vadd.f32 0.0, %v10185
    %v10187 = vpop.f32.mrf.mxu0
    %10188 = vmatprep.mubr.f32.mxu0 0.0
    %10189 = vmatmul.mubr.f32.gmra.mxu0 %v10073
    %v10190 = vpop.f32.mrf.mxu0
    %v10191 = vadd.f32 0.0, %v10190
    %v10192 = vpop.f32.mrf.mxu0
    %10193 = vmatprep.mubr.f32.mxu0 0.0
    %10194 = vmatmul.mubr.f32.gmra.mxu0 %v10075
    %v10195 = vpop.f32.mrf.mxu0
    %v10196 = vadd.f32 0.0, %v10195
    %v10197 = vpop.f32.mrf.mxu0
    %10198 = vmatprep.mubr.f32.mxu0 0.0
    %10199 = vmatmul.mubr.f32.gmra.mxu0 %v10077
    %v10200 = vpop.f32.mrf.mxu0
    %v10201 = vadd.f32 0.0, %v10200
    %v10202 = vpop.f32.mrf.mxu0
    %10203 = vmatprep.mubr.f32.mxu0 0.0
    %10204 = vmatmul.mubr.f32.gmra.mxu0 %v10079
    %v10205 = vpop.f32.mrf.mxu0
    %v10206 = vadd.f32 0.0, %v10205
    %v10207 = vpop.f32.mrf.mxu0
    %10208 = vdwg.mxu0
    %v10209 = vmul.f32 %v10166, 0.35355338
    %v10210 = vmul.f32 %v10171, 0.35355338
    %v10211 = vmul.f32 %v10176, 0.35355338
    %v10212 = vmul.f32 %v10181, 0.35355338
    %v10213 = vmul.f32 %v10186, 0.35355338
    %v10214 = vmul.f32 %v10191, 0.35355338
    %v10215 = vmul.f32 %v10196, 0.35355338
    %v10216 = vmul.f32 %v10201, 0.35355338
    %v10217 = vmul.f32 %v10206, 0.35355338
    %v10218 = vsel %vm1090, %v10209, -inf
    %10219 = vmax.xlane.f32.xlu0 %v10218
    %v10220 = vpop.xlane.xlu0 %10219
    %v10221 = vsel %vm1090, %v10210, -inf
    %10222 = vmax.xlane.f32.xlu0 %v10221
    %v10223 = vpop.xlane.xlu0 %10222
    %v10224 = vsel %vm1090, %v10211, -inf
    %10225 = vmax.xlane.f32.xlu0 %v10224
    %v10226 = vpop.xlane.xlu0 %10225
    %v10227 = vsel %vm1090, %v10212, -inf
    %10228 = vmax.xlane.f32.xlu0 %v10227
    %v10229 = vpop.xlane.xlu0 %10228
    %v10230 = vsel %vm1090, %v10213, -inf
    %10231 = vmax.xlane.f32.xlu0 %v10230
    %v10232 = vpop.xlane.xlu0 %10231
    %v10233 = vsel %vm1090, %v10214, -inf
    %10234 = vmax.xlane.f32.xlu0 %v10233
    %v10235 = vpop.xlane.xlu0 %10234
    %v10236 = vsel %vm1090, %v10215, -inf
    %10237 = vmax.xlane.f32.xlu0 %v10236
    %v10238 = vpop.xlane.xlu0 %10237
    %v10239 = vsel %vm1090, %v10216, -inf
    %10240 = vmax.xlane.f32.xlu0 %v10239
    %v10241 = vpop.xlane.xlu0 %10240
    %v10242 = vsel %vm1115, %v10217, -inf
    %10243 = vmax.xlane.f32.xlu0 %v10242
    %v10244 = vpop.xlane.xlu0 %10243
    %v10245 = vsub.f32 %v10209, %v10220
    %v10246 = vsub.f32 %v10210, %v10223
    %v10247 = vsub.f32 %v10211, %v10226
    %v10248 = vsub.f32 %v10212, %v10229
    %v10249 = vsub.f32 %v10213, %v10232
    %v10250 = vsub.f32 %v10214, %v10235
    %v10251 = vsub.f32 %v10215, %v10238
    %v10252 = vsub.f32 %v10216, %v10241
    %v10253 = vsub.f32 %v10217, %v10244
    %v10254 = vmul.f32 %v10245, 1.442695
    %v10255 = vpow.pop %v10254
    %v10256 = vmul.f32 %v10246, 1.442695
    %v10257 = vpow.pop %v10256
    %v10258 = vmul.f32 %v10247, 1.442695
    %v10259 = vpow.pop %v10258
    %v10260 = vmul.f32 %v10248, 1.442695
    %v10261 = vpow.pop %v10260
    %v10262 = vmul.f32 %v10249, 1.442695
    %v10263 = vpow.pop %v10262
    %v10264 = vmul.f32 %v10250, 1.442695
    %v10265 = vpow.pop %v10264
    %v10266 = vmul.f32 %v10251, 1.442695
    %v10267 = vpow.pop %v10266
    %v10268 = vmul.f32 %v10252, 1.442695
    %v10269 = vpow.pop %v10268
    %v10270 = vmul.f32 %v10253, 1.442695
    %v10271 = vpow.pop %v10270
    %v10272 = vsel %vm1090, %v10255, 0.0
    %10273 = vadd.xlane.f32.xlu0 %v10272
    %v10274 = vpop.xlane.xlu0 %10273
    %v10275 = vsel %vm1090, %v10257, 0.0
    %10276 = vadd.xlane.f32.xlu0 %v10275
    %v10277 = vpop.xlane.xlu0 %10276
    %v10278 = vsel %vm1090, %v10259, 0.0
    %10279 = vadd.xlane.f32.xlu0 %v10278
    %v10280 = vpop.xlane.xlu0 %10279
    %v10281 = vsel %vm1090, %v10261, 0.0
    %10282 = vadd.xlane.f32.xlu0 %v10281
    %v10283 = vpop.xlane.xlu0 %10282
    %v10284 = vsel %vm1090, %v10263, 0.0
    %10285 = vadd.xlane.f32.xlu0 %v10284
    %v10286 = vpop.xlane.xlu0 %10285
    %v10287 = vsel %vm1090, %v10265, 0.0
    %10288 = vadd.xlane.f32.xlu0 %v10287
    %v10289 = vpop.xlane.xlu0 %10288
    %v10290 = vsel %vm1090, %v10267, 0.0
    %10291 = vadd.xlane.f32.xlu0 %v10290
    %v10292 = vpop.xlane.xlu0 %10291
    %v10293 = vsel %vm1090, %v10269, 0.0
    %10294 = vadd.xlane.f32.xlu0 %v10293
    %v10295 = vpop.xlane.xlu0 %10294
    %v10296 = vsel %vm1115, %v10271, 0.0
    %10297 = vadd.xlane.f32.xlu0 %v10296
    %v10298 = vpop.xlane.xlu0 %10297
    %v10299 = vrcp.pop %v10274
    %v10300 = vrcp.pop %v10277
    %v10301 = vrcp.pop %v10280
    %v10302 = vrcp.pop %v10283
    %v10303 = vrcp.pop %v10286
    %v10304 = vrcp.pop %v10289
    %v10305 = vrcp.pop %v10292
    %v10306 = vrcp.pop %v10295
    %v10307 = vrcp.pop %v10298
    %v10308 = vmul.f32 %v10255, %v10299
    %v10309 = vmul.f32 %v10257, %v10300
    %v10310 = vmul.f32 %v10259, %v10301
    %v10311 = vmul.f32 %v10261, %v10302
    %v10312 = vmul.f32 %v10263, %v10303
    %v10313 = vmul.f32 %v10265, %v10304
    %v10314 = vmul.f32 %v10267, %v10305
    %v10315 = vmul.f32 %v10269, %v10306
    %v10316 = vmul.f32 %v10271, %v10307
    %10317 = vrot.lane.b32.xlu0 %v8665, 40
    %v10318 = vpop.permute.xlu0 %10317
    %10319 = vrot.lane.b32.xlu0 %v8667, 40
    %v10320 = vpop.permute.xlu0 %10319
    %10321 = vrot.lane.b32.xlu0 %v8669, 40
    %v10322 = vpop.permute.xlu0 %10321
    %10323 = vrot.lane.b32.xlu0 %v8671, 40
    %v10324 = vpop.permute.xlu0 %10323
    %10325 = vrot.lane.b32.xlu0 %v8673, 40
    %v10326 = vpop.permute.xlu0 %10325
    %10327 = vrot.lane.b32.xlu0 %v8675, 40
    %v10328 = vpop.permute.xlu0 %10327
    %10329 = vrot.lane.b32.xlu0 %v8677, 40
    %v10330 = vpop.permute.xlu0 %10329
    %10331 = vrot.lane.b32.xlu0 %v8679, 40
    %v10332 = vpop.permute.xlu0 %10331
    %10333 = vrot.lane.b32.xlu0 %v8678, 40
    %v10334 = vpop.permute.xlu0 %10333
    %v10344 = vsel %vm1090, %v10308, 0
    %v10347 = vsel %vm1090, %v10309, 0
    %v10350 = vsel %vm1090, %v10310, 0
    %v10353 = vsel %vm1090, %v10311, 0
    %v10356 = vsel %vm1090, %v10312, 0
    %v10359 = vsel %vm1090, %v10313, 0
    %v10362 = vsel %vm1090, %v10314, 0
    %v10365 = vsel %vm1090, %v10315, 0
    %v10368 = vsel %vm1090, %v10316, 0
    %v10370 = vsel %vm362, %v10334, 0
    %10372 = vmatprep.subr.mxu0 0.0
    %10373 = vmatpush1.msra.mxu0 0.0
    %10374 = vmatprep.subr.mxu0 0.0
    %10375 = vmatpush1.msra.mxu0 0.0
    %10376 = vmatprep.subr.mxu0 0.0
    %10377 = vmatpush1.msra.mxu0 0.0
    %10378 = vmatprep.subr.mxu0 0.0
    %10379 = vmatpush1.msra.mxu0 0.0
    %10380 = vmatprep.subr.mxu0 0.0
    %10381 = vmatpush1.msra.mxu0 0.0
    %10382 = vmatprep.subr.mxu0 0.0
    %10383 = vmatpush1.msra.mxu0 0.0
    %10384 = vmatprep.subr.mxu0 0.0
    %10385 = vmatpush1.msra.mxu0 0.0
    %10386 = vmatprep.subr.mxu0 0.0
    %10387 = vmatpush1.msra.mxu0 %v10370
    %10388 = vmatprep.subr.mxu0 0.0
    %10389 = vmatpush1.msra.mxu0 %v10332
    %10390 = vmatprep.subr.mxu0 0.0
    %10391 = vmatpush1.msra.mxu0 %v10330
    %10392 = vmatprep.subr.mxu0 0.0
    %10393 = vmatpush1.msra.mxu0 %v10328
    %10394 = vmatprep.subr.mxu0 0.0
    %10395 = vmatpush1.msra.mxu0 %v10326
    %10396 = vmatprep.subr.mxu0 0.0
    %10397 = vmatpush1.msra.mxu0 %v10324
    %10398 = vmatprep.subr.mxu0 0.0
    %10399 = vmatpush1.msra.mxu0 %v10322
    %10400 = vmatprep.subr.mxu0 0.0
    %10401 = vmatpush1.msra.mxu0 %v10320
    %10402 = vmatprep.subr.mxu0 0.0
    %10403 = vmatpush1.msra.mxu0 %v10318
    %10404 = vmatprep.subr.mxu0 0.0
    %10405 = vmatpush2.msra.mxu0 0.0
    %10406 = vmatprep.subr.mxu0 0.0
    %10407 = vmatpush2.msra.mxu0 0.0
    %10408 = vmatprep.subr.mxu0 0.0
    %10409 = vmatpush2.msra.mxu0 0.0
    %10410 = vmatprep.subr.mxu0 0.0
    %10411 = vmatpush2.msra.mxu0 0.0
    %10412 = vmatprep.subr.mxu0 0.0
    %10413 = vmatpush2.msra.mxu0 0.0
    %10414 = vmatprep.subr.mxu0 0.0
    %10415 = vmatpush2.msra.mxu0 0.0
    %10416 = vmatprep.subr.mxu0 0.0
    %10417 = vmatpush2.msra.mxu0 0.0
    %10418 = vmatprep.subr.mxu0 0.0
    %10419 = vmatpush2.msra.mxu0 0.0
    %10420 = vmatprep.subr.mxu0 0.0
    %10421 = vmatpush2.msra.mxu0 0.0
    %10422 = vmatprep.subr.mxu0 0.0
    %10423 = vmatpush2.msra.mxu0 0.0
    %10424 = vmatprep.subr.mxu0 0.0
    %10425 = vmatpush2.msra.mxu0 0.0
    %10426 = vmatprep.subr.mxu0 0.0
    %10427 = vmatpush2.msra.mxu0 0.0
    %10428 = vmatprep.subr.mxu0 0.0
    %10429 = vmatpush2.msra.mxu0 0.0
    %10430 = vmatprep.subr.mxu0 0.0
    %10431 = vmatpush2.msra.mxu0 0.0
    %10432 = vmatprep.subr.mxu0 0.0
    %10433 = vmatpush2.msra.mxu0 0.0
    %10434 = vmatprep.subr.mxu0 0.0
    %10435 = vmatpush2.msra.mxu0 0.0
    %10436 = vmatprep.mubr.f32.mxu0 0.0
    %10437 = vmatmul.mubr.f32.gmra.mxu0 %v10344
    %v10438 = vpop.f32.mrf.mxu0
    %v10439 = vadd.f32 0.0, %v10438
    %v10440 = vpop.f32.mrf.mxu0
    %10441 = vmatprep.mubr.f32.mxu0 0.0
    %10442 = vmatmul.mubr.f32.gmra.mxu0 %v10347
    %v10443 = vpop.f32.mrf.mxu0
    %v10444 = vadd.f32 0.0, %v10443
    %v10445 = vpop.f32.mrf.mxu0
    %10446 = vmatprep.mubr.f32.mxu0 0.0
    %10447 = vmatmul.mubr.f32.gmra.mxu0 %v10350
    %v10448 = vpop.f32.mrf.mxu0
    %v10449 = vadd.f32 0.0, %v10448
    %v10450 = vpop.f32.mrf.mxu0
    %10451 = vmatprep.mubr.f32.mxu0 0.0
    %10452 = vmatmul.mubr.f32.gmra.mxu0 %v10353
    %v10453 = vpop.f32.mrf.mxu0
    %v10454 = vadd.f32 0.0, %v10453
    %v10455 = vpop.f32.mrf.mxu0
    %10456 = vmatprep.mubr.f32.mxu0 0.0
    %10457 = vmatmul.mubr.f32.gmra.mxu0 %v10356
    %v10458 = vpop.f32.mrf.mxu0
    %v10459 = vadd.f32 0.0, %v10458
    %v10460 = vpop.f32.mrf.mxu0
    %10461 = vmatprep.mubr.f32.mxu0 0.0
    %10462 = vmatmul.mubr.f32.gmra.mxu0 %v10359
    %v10463 = vpop.f32.mrf.mxu0
    %v10464 = vadd.f32 0.0, %v10463
    %v10465 = vpop.f32.mrf.mxu0
    %10466 = vmatprep.mubr.f32.mxu0 0.0
    %10467 = vmatmul.mubr.f32.gmra.mxu0 %v10362
    %v10468 = vpop.f32.mrf.mxu0
    %v10469 = vadd.f32 0.0, %v10468
    %v10470 = vpop.f32.mrf.mxu0
    %10471 = vmatprep.mubr.f32.mxu0 0.0
    %10472 = vmatmul.mubr.f32.gmra.mxu0 %v10365
    %v10473 = vpop.f32.mrf.mxu0
    %v10474 = vadd.f32 0.0, %v10473
    %v10475 = vpop.f32.mrf.mxu0
    %10476 = vmatprep.mubr.f32.mxu0 0.0
    %10477 = vmatmul.mubr.f32.gmra.mxu0 %v10368
    %v10478 = vpop.f32.mrf.mxu0
    %v10479 = vadd.f32 0.0, %v10478
    %v10480 = vpop.f32.mrf.mxu0
    %10481 = vdwg.mxu0
    %10491 = vrot.lane.b32.xlu0 %v9529, 8
    %v10492 = vpop.permute.xlu0 %10491
    %10493 = vrot.lane.b32.xlu0 %v9534, 8
    %v10494 = vpop.permute.xlu0 %10493
    %10495 = vrot.lane.b32.xlu0 %v9539, 8
    %v10496 = vpop.permute.xlu0 %10495
    %10497 = vrot.lane.b32.xlu0 %v9544, 8
    %v10498 = vpop.permute.xlu0 %10497
    %10499 = vrot.lane.b32.xlu0 %v9549, 8
    %v10500 = vpop.permute.xlu0 %10499
    %10501 = vrot.lane.b32.xlu0 %v9554, 8
    %v10502 = vpop.permute.xlu0 %10501
    %10503 = vrot.lane.b32.xlu0 %v9559, 8
    %v10504 = vpop.permute.xlu0 %10503
    %10505 = vrot.lane.b32.xlu0 %v9564, 8
    %v10506 = vpop.permute.xlu0 %10505
    %10507 = vrot.lane.b32.xlu0 %v9569, 8
    %v10508 = vpop.permute.xlu0 %10507
    %10527 = vrot.lane.b32.xlu0 %v9984, 16
    %v10528 = vpop.permute.xlu0 %10527
    %10529 = vrot.lane.b32.xlu0 %v9989, 16
    %v10530 = vpop.permute.xlu0 %10529
    %10531 = vrot.lane.b32.xlu0 %v9994, 16
    %v10532 = vpop.permute.xlu0 %10531
    %10533 = vrot.lane.b32.xlu0 %v9999, 16
    %v10534 = vpop.permute.xlu0 %10533
    %10535 = vrot.lane.b32.xlu0 %v10004, 16
    %v10536 = vpop.permute.xlu0 %10535
    %10537 = vrot.lane.b32.xlu0 %v10009, 16
    %v10538 = vpop.permute.xlu0 %10537
    %10539 = vrot.lane.b32.xlu0 %v10014, 16
    %v10540 = vpop.permute.xlu0 %10539
    %10541 = vrot.lane.b32.xlu0 %v10019, 16
    %v10542 = vpop.permute.xlu0 %10541
    %10543 = vrot.lane.b32.xlu0 %v10024, 16
    %v10544 = vpop.permute.xlu0 %10543
    %10563 = vrot.lane.b32.xlu0 %v10439, 24
    %v10564 = vpop.permute.xlu0 %10563
    %10565 = vrot.lane.b32.xlu0 %v10444, 24
    %v10566 = vpop.permute.xlu0 %10565
    %10567 = vrot.lane.b32.xlu0 %v10449, 24
    %v10568 = vpop.permute.xlu0 %10567
    %10569 = vrot.lane.b32.xlu0 %v10454, 24
    %v10570 = vpop.permute.xlu0 %10569
    %10571 = vrot.lane.b32.xlu0 %v10459, 24
    %v10572 = vpop.permute.xlu0 %10571
    %10573 = vrot.lane.b32.xlu0 %v10464, 24
    %v10574 = vpop.permute.xlu0 %10573
    %10575 = vrot.lane.b32.xlu0 %v10469, 24
    %v10576 = vpop.permute.xlu0 %10575
    %10577 = vrot.lane.b32.xlu0 %v10474, 24
    %v10578 = vpop.permute.xlu0 %10577
    %10579 = vrot.lane.b32.xlu0 %v10479, 24
    %v10580 = vpop.permute.xlu0 %10579
    %v10590 = vsel %vm934, %v9074, %v10492
    %v10591 = vsel %vm934, %v9079, %v10494
    %v10592 = vsel %vm934, %v9084, %v10496
    %v10593 = vsel %vm934, %v9089, %v10498
    %v10594 = vsel %vm934, %v9094, %v10500
    %v10595 = vsel %vm934, %v9099, %v10502
    %v10596 = vsel %vm934, %v9104, %v10504
    %v10597 = vsel %vm934, %v9109, %v10506
    %v10598 = vsel %vm934, %v9114, %v10508
    %v10599 = vsel %vm2838, %v10590, %v10528
    %v10600 = vsel %vm2838, %v10591, %v10530
    %v10601 = vsel %vm2838, %v10592, %v10532
    %v10602 = vsel %vm2838, %v10593, %v10534
    %v10603 = vsel %vm2838, %v10594, %v10536
    %v10604 = vsel %vm2838, %v10595, %v10538
    %v10605 = vsel %vm2838, %v10596, %v10540
    %v10606 = vsel %vm2838, %v10597, %v10542
    %v10607 = vsel %vm2838, %v10598, %v10544
    %v10608 = vsel %vm2848, %v10599, %v10564
    %v10609 = vsel %vm2848, %v10600, %v10566
    %v10610 = vsel %vm2848, %v10601, %v10568
    %v10611 = vsel %vm2848, %v10602, %v10570
    %v10612 = vsel %vm2848, %v10603, %v10572
    %v10613 = vsel %vm2848, %v10604, %v10574
    %v10614 = vsel %vm2848, %v10605, %v10576
    %v10615 = vsel %vm2848, %v10606, %v10578
    %v10616 = vsel %vm2848, %v10607, %v10580
    %v10626 = vrot.slane %v10608, 7
    %v10627 = vrot.slane %v10609, 7
    %v10628 = vsel %vm362, %v10626, %v10627
    %v10629 = vrot.slane %v10610, 7
    %v10630 = vsel %vm362, %v10627, %v10629
    %v10631 = vrot.slane %v10611, 7
    %v10632 = vsel %vm362, %v10629, %v10631
    %v10633 = vrot.slane %v10612, 7
    %v10634 = vsel %vm362, %v10631, %v10633
    %v10635 = vrot.slane %v10613, 7
    %v10636 = vsel %vm362, %v10633, %v10635
    %v10637 = vrot.slane %v10614, 7
    %v10638 = vsel %vm362, %v10635, %v10637
    %v10639 = vrot.slane %v10615, 7
    %v10640 = vsel %vm362, %v10637, %v10639
    %v10641 = vrot.slane %v10616, 7
    %v10642 = vsel %vm362, %v10639, %v10641
    %v10644 = vsel %vm362, %v8654, %v10626
    %s10645 = scalar_lea.vmem %s9, 32
    %v10646 = vld [vmem:[%s10645] sm:$0xff]
    %v10647 = vld [vmem:[%s10645 + $0x8] sm:$0xff]
    %v10648 = vld [vmem:[%s10645 + $0x10] sm:$0xff]
    %v10649 = vld [vmem:[%s10645 + $0x18] sm:$0xff]
    %v10650 = vld [vmem:[%s10 + $0x1] sm:$0x1]
    %v10651 = vlaneseq
    %v10652 = vshrl.u32 %v10651, 7
    %v10653 = vsub.s32 0, %v10652
    %v10654 = vrot.slane %v10650, %v10653
    %v10656 = vsel %vm431, %v8646, 0
    %v10659 = vsel %vm431, %v8647, 0
    %v10662 = vsel %vm431, %v8648, 0
    %v10665 = vsel %vm431, %v8649, 0
    %v10668 = vsel %vm431, %v8650, 0
    %v10671 = vsel %vm431, %v8651, 0
    %v10674 = vsel %vm431, %v8652, 0
    %v10677 = vsel %vm431, %v8653, 0
    %v10680 = vsel %vm431, %v10644, 0
    %v10682 = vsel %vm431, %v10628, 0
    %v10684 = vsel %vm431, %v10630, 0
    %v10686 = vsel %vm431, %v10632, 0
    %v10688 = vsel %vm431, %v10634, 0
    %v10690 = vsel %vm431, %v10636, 0
    %v10692 = vsel %vm431, %v10638, 0
    %v10694 = vsel %vm431, %v10640, 0
    %v10696 = vsel %vm431, %v10642, 0
    %10698 = vmatprep.subr.mxu0 0.0
    %10699 = vmatpush1.msra.mxu0 0.0
    %10700 = vmatprep.subr.mxu0 0.0
    %10701 = vmatpush1.msra.mxu0 0.0
    %10702 = vmatprep.subr.mxu0 0.0
    %10703 = vmatpush1.msra.mxu0 0.0
    %10704 = vmatprep.subr.mxu0 0.0
    %10705 = vmatpush1.msra.mxu0 0.0
    %10706 = vmatprep.subr.mxu0 0.0
    %10707 = vmatpush1.msra.mxu0 0.0
    %10708 = vmatprep.subr.mxu0 0.0
    %10709 = vmatpush1.msra.mxu0 0.0
    %10710 = vmatprep.subr.mxu0 0.0
    %10711 = vmatpush1.msra.mxu0 0.0
    %10712 = vmatprep.subr.mxu0 0.0
    %10713 = vmatpush1.msra.mxu0 0.0
    %10714 = vmatprep.subr.mxu0 0.0
    %10715 = vmatpush1.msra.mxu0 0.0
    %10716 = vmatprep.subr.mxu0 0.0
    %10717 = vmatpush1.msra.mxu0 0.0
    %10718 = vmatprep.subr.mxu0 0.0
    %10719 = vmatpush1.msra.mxu0 0.0
    %10720 = vmatprep.subr.mxu0 0.0
    %10721 = vmatpush1.msra.mxu0 0.0
    %10722 = vmatprep.subr.mxu0 0.0
    %10723 = vmatpush1.msra.mxu0 %v10649
    %10724 = vmatprep.subr.mxu0 0.0
    %10725 = vmatpush1.msra.mxu0 %v10648
    %10726 = vmatprep.subr.mxu0 0.0
    %10727 = vmatpush1.msra.mxu0 %v10647
    %10728 = vmatprep.subr.mxu0 0.0
    %10729 = vmatpush1.msra.mxu0 %v10646
    %10730 = vmatprep.subr.mxu0 0.0
    %10731 = vmatpush2.msra.mxu0 0.0
    %10732 = vmatprep.subr.mxu0 0.0
    %10733 = vmatpush2.msra.mxu0 0.0
    %10734 = vmatprep.subr.mxu0 0.0
    %10735 = vmatpush2.msra.mxu0 0.0
    %10736 = vmatprep.subr.mxu0 0.0
    %10737 = vmatpush2.msra.mxu0 0.0
    %10738 = vmatprep.subr.mxu0 0.0
    %10739 = vmatpush2.msra.mxu0 0.0
    %10740 = vmatprep.subr.mxu0 0.0
    %10741 = vmatpush2.msra.mxu0 0.0
    %10742 = vmatprep.subr.mxu0 0.0
    %10743 = vmatpush2.msra.mxu0 0.0
    %10744 = vmatprep.subr.mxu0 0.0
    %10745 = vmatpush2.msra.mxu0 0.0
    %10746 = vmatprep.subr.mxu0 0.0
    %10747 = vmatpush2.msra.mxu0 0.0
    %10748 = vmatprep.subr.mxu0 0.0
    %10749 = vmatpush2.msra.mxu0 0.0
    %10750 = vmatprep.subr.mxu0 0.0
    %10751 = vmatpush2.msra.mxu0 0.0
    %10752 = vmatprep.subr.mxu0 0.0
    %10753 = vmatpush2.msra.mxu0 0.0
    %10754 = vmatprep.subr.mxu0 0.0
    %10755 = vmatpush2.msra.mxu0 0.0
    %10756 = vmatprep.subr.mxu0 0.0
    %10757 = vmatpush2.msra.mxu0 0.0
    %10758 = vmatprep.subr.mxu0 0.0
    %10759 = vmatpush2.msra.mxu0 0.0
    %10760 = vmatprep.subr.mxu0 0.0
    %10761 = vmatpush2.msra.mxu0 0.0
    %10762 = vmatprep.mubr.f32.mxu0 0.0
    %10763 = vmatmul.mubr.f32.gmra.mxu0 %v10656
    %v10764 = vpop.f32.mrf.mxu0
    %v10765 = vadd.f32 %v10654, %v10764
    %v10766 = vpop.f32.mrf.mxu0
    %10767 = vmatprep.mubr.f32.mxu0 0.0
    %10768 = vmatmul.mubr.f32.gmra.mxu0 %v10659
    %v10769 = vpop.f32.mrf.mxu0
    %v10770 = vadd.f32 %v10654, %v10769
    %v10771 = vpop.f32.mrf.mxu0
    %10772 = vmatprep.mubr.f32.mxu0 0.0
    %10773 = vmatmul.mubr.f32.gmra.mxu0 %v10662
    %v10774 = vpop.f32.mrf.mxu0
    %v10775 = vadd.f32 %v10654, %v10774
    %v10776 = vpop.f32.mrf.mxu0
    %10777 = vmatprep.mubr.f32.mxu0 0.0
    %10778 = vmatmul.mubr.f32.gmra.mxu0 %v10665
    %v10779 = vpop.f32.mrf.mxu0
    %v10780 = vadd.f32 %v10654, %v10779
    %v10781 = vpop.f32.mrf.mxu0
    %10782 = vmatprep.mubr.f32.mxu0 0.0
    %10783 = vmatmul.mubr.f32.gmra.mxu0 %v10668
    %v10784 = vpop.f32.mrf.mxu0
    %v10785 = vadd.f32 %v10654, %v10784
    %v10786 = vpop.f32.mrf.mxu0
    %10787 = vmatprep.mubr.f32.mxu0 0.0
    %10788 = vmatmul.mubr.f32.gmra.mxu0 %v10671
    %v10789 = vpop.f32.mrf.mxu0
    %v10790 = vadd.f32 %v10654, %v10789
    %v10791 = vpop.f32.mrf.mxu0
    %10792 = vmatprep.mubr.f32.mxu0 0.0
    %10793 = vmatmul.mubr.f32.gmra.mxu0 %v10674
    %v10794 = vpop.f32.mrf.mxu0
    %v10795 = vadd.f32 %v10654, %v10794
    %v10796 = vpop.f32.mrf.mxu0
    %10797 = vmatprep.mubr.f32.mxu0 0.0
    %10798 = vmatmul.mubr.f32.gmra.mxu0 %v10677
    %v10799 = vpop.f32.mrf.mxu0
    %v10800 = vadd.f32 %v10654, %v10799
    %v10801 = vpop.f32.mrf.mxu0
    %10802 = vmatprep.mubr.f32.mxu0 0.0
    %10803 = vmatmul.mubr.f32.gmra.mxu0 %v10680
    %v10804 = vpop.f32.mrf.mxu0
    %v10805 = vadd.f32 %v10654, %v10804
    %v10806 = vpop.f32.mrf.mxu0
    %10807 = vmatprep.mubr.f32.mxu0 0.0
    %10808 = vmatmul.mubr.f32.gmra.mxu0 %v10682
    %v10809 = vpop.f32.mrf.mxu0
    %v10810 = vadd.f32 %v10654, %v10809
    %v10811 = vpop.f32.mrf.mxu0
    %10812 = vmatprep.mubr.f32.mxu0 0.0
    %10813 = vmatmul.mubr.f32.gmra.mxu0 %v10684
    %v10814 = vpop.f32.mrf.mxu0
    %v10815 = vadd.f32 %v10654, %v10814
    %v10816 = vpop.f32.mrf.mxu0
    %10817 = vmatprep.mubr.f32.mxu0 0.0
    %10818 = vmatmul.mubr.f32.gmra.mxu0 %v10686
    %v10819 = vpop.f32.mrf.mxu0
    %v10820 = vadd.f32 %v10654, %v10819
    %v10821 = vpop.f32.mrf.mxu0
    %10822 = vmatprep.mubr.f32.mxu0 0.0
    %10823 = vmatmul.mubr.f32.gmra.mxu0 %v10688
    %v10824 = vpop.f32.mrf.mxu0
    %v10825 = vadd.f32 %v10654, %v10824
    %v10826 = vpop.f32.mrf.mxu0
    %10827 = vmatprep.mubr.f32.mxu0 0.0
    %10828 = vmatmul.mubr.f32.gmra.mxu0 %v10690
    %v10829 = vpop.f32.mrf.mxu0
    %v10830 = vadd.f32 %v10654, %v10829
    %v10831 = vpop.f32.mrf.mxu0
    %10832 = vmatprep.mubr.f32.mxu0 0.0
    %10833 = vmatmul.mubr.f32.gmra.mxu0 %v10692
    %v10834 = vpop.f32.mrf.mxu0
    %v10835 = vadd.f32 %v10654, %v10834
    %v10836 = vpop.f32.mrf.mxu0
    %10837 = vmatprep.mubr.f32.mxu0 0.0
    %10838 = vmatmul.mubr.f32.gmra.mxu0 %v10694
    %v10839 = vpop.f32.mrf.mxu0
    %v10840 = vadd.f32 %v10654, %v10839
    %v10841 = vpop.f32.mrf.mxu0
    %10842 = vmatprep.mubr.f32.mxu0 0.0
    %10843 = vmatmul.mubr.f32.gmra.mxu0 %v10696
    %v10844 = vpop.f32.mrf.mxu0
    %v10845 = vadd.f32 %v10654, %v10844
    %v10846 = vpop.f32.mrf.mxu0
    %10847 = vdwg.mxu0
    %v10848 = vadd.f32 %v6216, %v10765
    %v10849 = vadd.f32 %v6217, %v10770
    %v10850 = vadd.f32 %v6218, %v10775
    %v10851 = vadd.f32 %v6219, %v10780
    %v10852 = vadd.f32 %v6220, %v10785
    %v10853 = vadd.f32 %v6221, %v10790
    %v10854 = vadd.f32 %v6222, %v10795
    %v10855 = vadd.f32 %v6223, %v10800
    %v10856 = vadd.f32 %v6224, %v10805
    %v10857 = vadd.f32 %v6225, %v10810
    %v10858 = vadd.f32 %v6226, %v10815
    %v10859 = vadd.f32 %v6227, %v10820
    %v10860 = vadd.f32 %v6228, %v10825
    %v10861 = vadd.f32 %v6229, %v10830
    %v10862 = vadd.f32 %v6230, %v10835
    %v10863 = vadd.f32 %v6231, %v10840
    %v10864 = vadd.f32 %v6232, %v10845
    %v10865 = vld [vmem:[%s11 + $0x1] sm:$0x1]
    %v10866 = vld [vmem:[%s12 + $0x1] sm:$0x1]
    %v10867 = vsel %vm431, %v10848, 0.0
    %10868 = vadd.xlane.f32.xlu0 %v10867
    %v10869 = vpop.xlane.xlu0 %10868
    %v10870 = vsel %vm431, %v10849, 0.0
    %10871 = vadd.xlane.f32.xlu0 %v10870
    %v10872 = vpop.xlane.xlu0 %10871
    %v10873 = vsel %vm431, %v10850, 0.0
    %10874 = vadd.xlane.f32.xlu0 %v10873
    %v10875 = vpop.xlane.xlu0 %10874
    %v10876 = vsel %vm431, %v10851, 0.0
    %10877 = vadd.xlane.f32.xlu0 %v10876
    %v10878 = vpop.xlane.xlu0 %10877
    %v10879 = vsel %vm431, %v10852, 0.0
    %10880 = vadd.xlane.f32.xlu0 %v10879
    %v10881 = vpop.xlane.xlu0 %10880
    %v10882 = vsel %vm431, %v10853, 0.0
    %10883 = vadd.xlane.f32.xlu0 %v10882
    %v10884 = vpop.xlane.xlu0 %10883
    %v10885 = vsel %vm431, %v10854, 0.0
    %10886 = vadd.xlane.f32.xlu0 %v10885
    %v10887 = vpop.xlane.xlu0 %10886
    %v10888 = vsel %vm431, %v10855, 0.0
    %10889 = vadd.xlane.f32.xlu0 %v10888
    %v10890 = vpop.xlane.xlu0 %10889
    %v10891 = vsel %vm431, %v10856, 0.0
    %10892 = vadd.xlane.f32.xlu0 %v10891
    %v10893 = vpop.xlane.xlu0 %10892
    %v10894 = vsel %vm431, %v10857, 0.0
    %10895 = vadd.xlane.f32.xlu0 %v10894
    %v10896 = vpop.xlane.xlu0 %10895
    %v10897 = vsel %vm431, %v10858, 0.0
    %10898 = vadd.xlane.f32.xlu0 %v10897
    %v10899 = vpop.xlane.xlu0 %10898
    %v10900 = vsel %vm431, %v10859, 0.0
    %10901 = vadd.xlane.f32.xlu0 %v10900
    %v10902 = vpop.xlane.xlu0 %10901
    %v10903 = vsel %vm431, %v10860, 0.0
    %10904 = vadd.xlane.f32.xlu0 %v10903
    %v10905 = vpop.xlane.xlu0 %10904
    %v10906 = vsel %vm431, %v10861, 0.0
    %10907 = vadd.xlane.f32.xlu0 %v10906
    %v10908 = vpop.xlane.xlu0 %10907
    %v10909 = vsel %vm431, %v10862, 0.0
    %10910 = vadd.xlane.f32.xlu0 %v10909
    %v10911 = vpop.xlane.xlu0 %10910
    %v10912 = vsel %vm431, %v10863, 0.0
    %10913 = vadd.xlane.f32.xlu0 %v10912
    %v10914 = vpop.xlane.xlu0 %10913
    %v10915 = vsel %vm480, %v10864, 0.0
    %10916 = vadd.xlane.f32.xlu0 %v10915
    %v10917 = vpop.xlane.xlu0 %10916
    %v10918 = vmul.f32 %v10869, %v484
    %v10919 = vmul.f32 %v10872, %v484
    %v10920 = vmul.f32 %v10875, %v484
    %v10921 = vmul.f32 %v10878, %v484
    %v10922 = vmul.f32 %v10881, %v484
    %v10923 = vmul.f32 %v10884, %v484
    %v10924 = vmul.f32 %v10887, %v484
    %v10925 = vmul.f32 %v10890, %v484
    %v10926 = vmul.f32 %v10893, %v484
    %v10927 = vmul.f32 %v10896, %v484
    %v10928 = vmul.f32 %v10899, %v484
    %v10929 = vmul.f32 %v10902, %v484
    %v10930 = vmul.f32 %v10905, %v484
    %v10931 = vmul.f32 %v10908, %v484
    %v10932 = vmul.f32 %v10911, %v484
    %v10933 = vmul.f32 %v10914, %v484
    %v10934 = vmul.f32 %v10917, %v484
    %v10935 = vsub.f32 %v10848, %v10918
    %v10936 = vsub.f32 %v10849, %v10919
    %v10937 = vsub.f32 %v10850, %v10920
    %v10938 = vsub.f32 %v10851, %v10921
    %v10939 = vsub.f32 %v10852, %v10922
    %v10940 = vsub.f32 %v10853, %v10923
    %v10941 = vsub.f32 %v10854, %v10924
    %v10942 = vsub.f32 %v10855, %v10925
    %v10943 = vsub.f32 %v10856, %v10926
    %v10944 = vsub.f32 %v10857, %v10927
    %v10945 = vsub.f32 %v10858, %v10928
    %v10946 = vsub.f32 %v10859, %v10929
    %v10947 = vsub.f32 %v10860, %v10930
    %v10948 = vsub.f32 %v10861, %v10931
    %v10949 = vsub.f32 %v10862, %v10932
    %v10950 = vsub.f32 %v10863, %v10933
    %v10951 = vsub.f32 %v10864, %v10934
    %v10952 = vmul.f32 %v10935, %v10935
    %v10953 = vmul.f32 %v10936, %v10936
    %v10954 = vmul.f32 %v10937, %v10937
    %v10955 = vmul.f32 %v10938, %v10938
    %v10956 = vmul.f32 %v10939, %v10939
    %v10957 = vmul.f32 %v10940, %v10940
    %v10958 = vmul.f32 %v10941, %v10941
    %v10959 = vmul.f32 %v10942, %v10942
    %v10960 = vmul.f32 %v10943, %v10943
    %v10961 = vmul.f32 %v10944, %v10944
    %v10962 = vmul.f32 %v10945, %v10945
    %v10963 = vmul.f32 %v10946, %v10946
    %v10964 = vmul.f32 %v10947, %v10947
    %v10965 = vmul.f32 %v10948, %v10948
    %v10966 = vmul.f32 %v10949, %v10949
    %v10967 = vmul.f32 %v10950, %v10950
    %v10968 = vmul.f32 %v10951, %v10951
    %v10969 = vsel %vm431, %v10952, 0.0
    %10970 = vadd.xlane.f32.xlu0 %v10969
    %v10971 = vpop.xlane.xlu0 %10970
    %v10972 = vsel %vm431, %v10953, 0.0
    %10973 = vadd.xlane.f32.xlu0 %v10972
    %v10974 = vpop.xlane.xlu0 %10973
    %v10975 = vsel %vm431, %v10954, 0.0
    %10976 = vadd.xlane.f32.xlu0 %v10975
    %v10977 = vpop.xlane.xlu0 %10976
    %v10978 = vsel %vm431, %v10955, 0.0
    %10979 = vadd.xlane.f32.xlu0 %v10978
    %v10980 = vpop.xlane.xlu0 %10979
    %v10981 = vsel %vm431, %v10956, 0.0
    %10982 = vadd.xlane.f32.xlu0 %v10981
    %v10983 = vpop.xlane.xlu0 %10982
    %v10984 = vsel %vm431, %v10957, 0.0
    %10985 = vadd.xlane.f32.xlu0 %v10984
    %v10986 = vpop.xlane.xlu0 %10985
    %v10987 = vsel %vm431, %v10958, 0.0
    %10988 = vadd.xlane.f32.xlu0 %v10987
    %v10989 = vpop.xlane.xlu0 %10988
    %v10990 = vsel %vm431, %v10959, 0.0
    %10991 = vadd.xlane.f32.xlu0 %v10990
    %v10992 = vpop.xlane.xlu0 %10991
    %v10993 = vsel %vm431, %v10960, 0.0
    %10994 = vadd.xlane.f32.xlu0 %v10993
    %v10995 = vpop.xlane.xlu0 %10994
    %v10996 = vsel %vm431, %v10961, 0.0
    %10997 = vadd.xlane.f32.xlu0 %v10996
    %v10998 = vpop.xlane.xlu0 %10997
    %v10999 = vsel %vm431, %v10962, 0.0
    %11000 = vadd.xlane.f32.xlu0 %v10999
    %v11001 = vpop.xlane.xlu0 %11000
    %v11002 = vsel %vm431, %v10963, 0.0
    %11003 = vadd.xlane.f32.xlu0 %v11002
    %v11004 = vpop.xlane.xlu0 %11003
    %v11005 = vsel %vm431, %v10964, 0.0
    %11006 = vadd.xlane.f32.xlu0 %v11005
    %v11007 = vpop.xlane.xlu0 %11006
    %v11008 = vsel %vm431, %v10965, 0.0
    %11009 = vadd.xlane.f32.xlu0 %v11008
    %v11010 = vpop.xlane.xlu0 %11009
    %v11011 = vsel %vm431, %v10966, 0.0
    %11012 = vadd.xlane.f32.xlu0 %v11011
    %v11013 = vpop.xlane.xlu0 %11012
    %v11014 = vsel %vm431, %v10967, 0.0
    %11015 = vadd.xlane.f32.xlu0 %v11014
    %v11016 = vpop.xlane.xlu0 %11015
    %v11017 = vsel %vm480, %v10968, 0.0
    %11018 = vadd.xlane.f32.xlu0 %v11017
    %v11019 = vpop.xlane.xlu0 %11018
    %v11020 = vmul.f32 %v10971, %v484
    %v11021 = vmul.f32 %v10974, %v484
    %v11022 = vmul.f32 %v10977, %v484
    %v11023 = vmul.f32 %v10980, %v484
    %v11024 = vmul.f32 %v10983, %v484
    %v11025 = vmul.f32 %v10986, %v484
    %v11026 = vmul.f32 %v10989, %v484
    %v11027 = vmul.f32 %v10992, %v484
    %v11028 = vmul.f32 %v10995, %v484
    %v11029 = vmul.f32 %v10998, %v484
    %v11030 = vmul.f32 %v11001, %v484
    %v11031 = vmul.f32 %v11004, %v484
    %v11032 = vmul.f32 %v11007, %v484
    %v11033 = vmul.f32 %v11010, %v484
    %v11034 = vmul.f32 %v11013, %v484
    %v11035 = vmul.f32 %v11016, %v484
    %v11036 = vmul.f32 %v11019, %v484
    %v11037 = vadd.f32 %v11020, 1e-05
    %v11038 = vadd.f32 %v11021, 1e-05
    %v11039 = vadd.f32 %v11022, 1e-05
    %v11040 = vadd.f32 %v11023, 1e-05
    %v11041 = vadd.f32 %v11024, 1e-05
    %v11042 = vadd.f32 %v11025, 1e-05
    %v11043 = vadd.f32 %v11026, 1e-05
    %v11044 = vadd.f32 %v11027, 1e-05
    %v11045 = vadd.f32 %v11028, 1e-05
    %v11046 = vadd.f32 %v11029, 1e-05
    %v11047 = vadd.f32 %v11030, 1e-05
    %v11048 = vadd.f32 %v11031, 1e-05
    %v11049 = vadd.f32 %v11032, 1e-05
    %v11050 = vadd.f32 %v11033, 1e-05
    %v11051 = vadd.f32 %v11034, 1e-05
    %v11052 = vadd.f32 %v11035, 1e-05
    %v11053 = vadd.f32 %v11036, 1e-05
    %v11054 = vrsqrt.pop %v11037
    %v11055 = vrsqrt.pop %v11038
    %v11056 = vrsqrt.pop %v11039
    %v11057 = vrsqrt.pop %v11040
    %v11058 = vrsqrt.pop %v11041
    %v11059 = vrsqrt.pop %v11042
    %v11060 = vrsqrt.pop %v11043
    %v11061 = vrsqrt.pop %v11044
    %v11062 = vrsqrt.pop %v11045
    %v11063 = vrsqrt.pop %v11046
    %v11064 = vrsqrt.pop %v11047
    %v11065 = vrsqrt.pop %v11048
    %v11066 = vrsqrt.pop %v11049
    %v11067 = vrsqrt.pop %v11050
    %v11068 = vrsqrt.pop %v11051
    %v11069 = vrsqrt.pop %v11052
    %v11070 = vrsqrt.pop %v11053
    %v11071 = vmul.f32 %v10935, %v11054
    %v11072 = vmul.f32 %v10936, %v11055
    %v11073 = vmul.f32 %v10937, %v11056
    %v11074 = vmul.f32 %v10938, %v11057
    %v11075 = vmul.f32 %v10939, %v11058
    %v11076 = vmul.f32 %v10940, %v11059
    %v11077 = vmul.f32 %v10941, %v11060
    %v11078 = vmul.f32 %v10942, %v11061
    %v11079 = vmul.f32 %v10943, %v11062
    %v11080 = vmul.f32 %v10944, %v11063
    %v11081 = vmul.f32 %v10945, %v11064
    %v11082 = vmul.f32 %v10946, %v11065
    %v11083 = vmul.f32 %v10947, %v11066
    %v11084 = vmul.f32 %v10948, %v11067
    %v11085 = vmul.f32 %v10949, %v11068
    %v11086 = vmul.f32 %v10950, %v11069
    %v11087 = vmul.f32 %v10951, %v11070
    %v11088 = vlaneseq
    %v11089 = vshrl.u32 %v11088, 7
    %v11090 = vsub.s32 0, %v11089
    %v11091 = vrot.slane %v10865, %v11090
    %v11092 = vmul.f32 %v11071, %v11091
    %v11093 = vmul.f32 %v11072, %v11091
    %v11094 = vmul.f32 %v11073, %v11091
    %v11095 = vmul.f32 %v11074, %v11091
    %v11096 = vmul.f32 %v11075, %v11091
    %v11097 = vmul.f32 %v11076, %v11091
    %v11098 = vmul.f32 %v11077, %v11091
    %v11099 = vmul.f32 %v11078, %v11091
    %v11100 = vmul.f32 %v11079, %v11091
    %v11101 = vmul.f32 %v11080, %v11091
    %v11102 = vmul.f32 %v11081, %v11091
    %v11103 = vmul.f32 %v11082, %v11091
    %v11104 = vmul.f32 %v11083, %v11091
    %v11105 = vmul.f32 %v11084, %v11091
    %v11106 = vmul.f32 %v11085, %v11091
    %v11107 = vmul.f32 %v11086, %v11091
    %v11108 = vmul.f32 %v11087, %v11091
    %v11109 = vlaneseq
    %v11110 = vshrl.u32 %v11109, 7
    %v11111 = vsub.s32 0, %v11110
    %v11112 = vrot.slane %v10866, %v11111
    %v11113 = vadd.f32 %v11092, %v11112
    %v11114 = vadd.f32 %v11093, %v11112
    %v11115 = vadd.f32 %v11094, %v11112
    %v11116 = vadd.f32 %v11095, %v11112
    %v11117 = vadd.f32 %v11096, %v11112
    %v11118 = vadd.f32 %v11097, %v11112
    %v11119 = vadd.f32 %v11098, %v11112
    %v11120 = vadd.f32 %v11099, %v11112
    %v11121 = vadd.f32 %v11100, %v11112
    %v11122 = vadd.f32 %v11101, %v11112
    %v11123 = vadd.f32 %v11102, %v11112
    %v11124 = vadd.f32 %v11103, %v11112
    %v11125 = vadd.f32 %v11104, %v11112
    %v11126 = vadd.f32 %v11105, %v11112
    %v11127 = vadd.f32 %v11106, %v11112
    %v11128 = vadd.f32 %v11107, %v11112
    %v11129 = vadd.f32 %v11108, %v11112
    %s11130 = scalar_lea.vmem %s13, 32
    %v11131 = vld [vmem:[%s11130] sm:$0xff]
    %v11132 = vld [vmem:[%s11130 + $0x8] sm:$0xff]
    %v11133 = vld [vmem:[%s11130 + $0x10] sm:$0xff]
    %v11134 = vld [vmem:[%s11130 + $0x18] sm:$0xff]
    %v11135 = vld [vmem:[%s14 + $0x1] sm:$0x1]
    %v11136 = vlaneseq
    %v11137 = vshrl.u32 %v11136, 7
    %v11138 = vsub.s32 0, %v11137
    %v11139 = vrot.slane %v11135, %v11138
    %v11141 = vsel %vm431, %v11113, 0
    %v11144 = vsel %vm431, %v11114, 0
    %v11147 = vsel %vm431, %v11115, 0
    %v11150 = vsel %vm431, %v11116, 0
    %v11153 = vsel %vm431, %v11117, 0
    %v11156 = vsel %vm431, %v11118, 0
    %v11159 = vsel %vm431, %v11119, 0
    %v11162 = vsel %vm431, %v11120, 0
    %v11165 = vsel %vm431, %v11121, 0
    %v11168 = vsel %vm431, %v11122, 0
    %v11171 = vsel %vm431, %v11123, 0
    %v11174 = vsel %vm431, %v11124, 0
    %v11177 = vsel %vm431, %v11125, 0
    %v11180 = vsel %vm431, %v11126, 0
    %v11183 = vsel %vm431, %v11127, 0
    %v11186 = vsel %vm431, %v11128, 0
    %v11189 = vsel %vm431, %v11129, 0
    %11191 = vmatprep.subr.mxu0 0.0
    %11192 = vmatpush1.msra.mxu0 0.0
    %11193 = vmatprep.subr.mxu0 0.0
    %11194 = vmatpush1.msra.mxu0 0.0
    %11195 = vmatprep.subr.mxu0 0.0
    %11196 = vmatpush1.msra.mxu0 0.0
    %11197 = vmatprep.subr.mxu0 0.0
    %11198 = vmatpush1.msra.mxu0 0.0
    %11199 = vmatprep.subr.mxu0 0.0
    %11200 = vmatpush1.msra.mxu0 0.0
    %11201 = vmatprep.subr.mxu0 0.0
    %11202 = vmatpush1.msra.mxu0 0.0
    %11203 = vmatprep.subr.mxu0 0.0
    %11204 = vmatpush1.msra.mxu0 0.0
    %11205 = vmatprep.subr.mxu0 0.0
    %11206 = vmatpush1.msra.mxu0 0.0
    %11207 = vmatprep.subr.mxu0 0.0
    %11208 = vmatpush1.msra.mxu0 0.0
    %11209 = vmatprep.subr.mxu0 0.0
    %11210 = vmatpush1.msra.mxu0 0.0
    %11211 = vmatprep.subr.mxu0 0.0
    %11212 = vmatpush1.msra.mxu0 0.0
    %11213 = vmatprep.subr.mxu0 0.0
    %11214 = vmatpush1.msra.mxu0 0.0
    %11215 = vmatprep.subr.mxu0 0.0
    %11216 = vmatpush1.msra.mxu0 %v11134
    %11217 = vmatprep.subr.mxu0 0.0
    %11218 = vmatpush1.msra.mxu0 %v11133
    %11219 = vmatprep.subr.mxu0 0.0
    %11220 = vmatpush1.msra.mxu0 %v11132
    %11221 = vmatprep.subr.mxu0 0.0
    %11222 = vmatpush1.msra.mxu0 %v11131
    %11223 = vmatprep.subr.mxu0 0.0
    %11224 = vmatpush2.msra.mxu0 0.0
    %11225 = vmatprep.subr.mxu0 0.0
    %11226 = vmatpush2.msra.mxu0 0.0
    %11227 = vmatprep.subr.mxu0 0.0
    %11228 = vmatpush2.msra.mxu0 0.0
    %11229 = vmatprep.subr.mxu0 0.0
    %11230 = vmatpush2.msra.mxu0 0.0
    %11231 = vmatprep.subr.mxu0 0.0
    %11232 = vmatpush2.msra.mxu0 0.0
    %11233 = vmatprep.subr.mxu0 0.0
    %11234 = vmatpush2.msra.mxu0 0.0
    %11235 = vmatprep.subr.mxu0 0.0
    %11236 = vmatpush2.msra.mxu0 0.0
    %11237 = vmatprep.subr.mxu0 0.0
    %11238 = vmatpush2.msra.mxu0 0.0
    %11239 = vmatprep.subr.mxu0 0.0
    %11240 = vmatpush2.msra.mxu0 0.0
    %11241 = vmatprep.subr.mxu0 0.0
    %11242 = vmatpush2.msra.mxu0 0.0
    %11243 = vmatprep.subr.mxu0 0.0
    %11244 = vmatpush2.msra.mxu0 0.0
    %11245 = vmatprep.subr.mxu0 0.0
    %11246 = vmatpush2.msra.mxu0 0.0
    %11247 = vmatprep.subr.mxu0 0.0
    %11248 = vmatpush2.msra.mxu0 0.0
    %11249 = vmatprep.subr.mxu0 0.0
    %11250 = vmatpush2.msra.mxu0 0.0
    %11251 = vmatprep.subr.mxu0 0.0
    %11252 = vmatpush2.msra.mxu0 0.0
    %11253 = vmatprep.subr.mxu0 0.0
    %11254 = vmatpush2.msra.mxu0 0.0
    %11255 = vmatprep.mubr.f32.mxu0 0.0
    %11256 = vmatmul.mubr.f32.gmra.mxu0 %v11141
    %v11257 = vpop.f32.mrf.mxu0
    %v11258 = vadd.f32 %v11139, %v11257
    %v11259 = vpop.f32.mrf.mxu0
    %11260 = vmatprep.mubr.f32.mxu0 0.0
    %11261 = vmatmul.mubr.f32.gmra.mxu0 %v11144
    %v11262 = vpop.f32.mrf.mxu0
    %v11263 = vadd.f32 %v11139, %v11262
    %v11264 = vpop.f32.mrf.mxu0
    %11265 = vmatprep.mubr.f32.mxu0 0.0
    %11266 = vmatmul.mubr.f32.gmra.mxu0 %v11147
    %v11267 = vpop.f32.mrf.mxu0
    %v11268 = vadd.f32 %v11139, %v11267
    %v11269 = vpop.f32.mrf.mxu0
    %11270 = vmatprep.mubr.f32.mxu0 0.0
    %11271 = vmatmul.mubr.f32.gmra.mxu0 %v11150
    %v11272 = vpop.f32.mrf.mxu0
    %v11273 = vadd.f32 %v11139, %v11272
    %v11274 = vpop.f32.mrf.mxu0
    %11275 = vmatprep.mubr.f32.mxu0 0.0
    %11276 = vmatmul.mubr.f32.gmra.mxu0 %v11153
    %v11277 = vpop.f32.mrf.mxu0
    %v11278 = vadd.f32 %v11139, %v11277
    %v11279 = vpop.f32.mrf.mxu0
    %11280 = vmatprep.mubr.f32.mxu0 0.0
    %11281 = vmatmul.mubr.f32.gmra.mxu0 %v11156
    %v11282 = vpop.f32.mrf.mxu0
    %v11283 = vadd.f32 %v11139, %v11282
    %v11284 = vpop.f32.mrf.mxu0
    %11285 = vmatprep.mubr.f32.mxu0 0.0
    %11286 = vmatmul.mubr.f32.gmra.mxu0 %v11159
    %v11287 = vpop.f32.mrf.mxu0
    %v11288 = vadd.f32 %v11139, %v11287
    %v11289 = vpop.f32.mrf.mxu0
    %11290 = vmatprep.mubr.f32.mxu0 0.0
    %11291 = vmatmul.mubr.f32.gmra.mxu0 %v11162
    %v11292 = vpop.f32.mrf.mxu0
    %v11293 = vadd.f32 %v11139, %v11292
    %v11294 = vpop.f32.mrf.mxu0
    %11295 = vmatprep.mubr.f32.mxu0 0.0
    %11296 = vmatmul.mubr.f32.gmra.mxu0 %v11165
    %v11297 = vpop.f32.mrf.mxu0
    %v11298 = vadd.f32 %v11139, %v11297
    %v11299 = vpop.f32.mrf.mxu0
    %11300 = vmatprep.mubr.f32.mxu0 0.0
    %11301 = vmatmul.mubr.f32.gmra.mxu0 %v11168
    %v11302 = vpop.f32.mrf.mxu0
    %v11303 = vadd.f32 %v11139, %v11302
    %v11304 = vpop.f32.mrf.mxu0
    %11305 = vmatprep.mubr.f32.mxu0 0.0
    %11306 = vmatmul.mubr.f32.gmra.mxu0 %v11171
    %v11307 = vpop.f32.mrf.mxu0
    %v11308 = vadd.f32 %v11139, %v11307
    %v11309 = vpop.f32.mrf.mxu0
    %11310 = vmatprep.mubr.f32.mxu0 0.0
    %11311 = vmatmul.mubr.f32.gmra.mxu0 %v11174
    %v11312 = vpop.f32.mrf.mxu0
    %v11313 = vadd.f32 %v11139, %v11312
    %v11314 = vpop.f32.mrf.mxu0
    %11315 = vmatprep.mubr.f32.mxu0 0.0
    %11316 = vmatmul.mubr.f32.gmra.mxu0 %v11177
    %v11317 = vpop.f32.mrf.mxu0
    %v11318 = vadd.f32 %v11139, %v11317
    %v11319 = vpop.f32.mrf.mxu0
    %11320 = vmatprep.mubr.f32.mxu0 0.0
    %11321 = vmatmul.mubr.f32.gmra.mxu0 %v11180
    %v11322 = vpop.f32.mrf.mxu0
    %v11323 = vadd.f32 %v11139, %v11322
    %v11324 = vpop.f32.mrf.mxu0
    %11325 = vmatprep.mubr.f32.mxu0 0.0
    %11326 = vmatmul.mubr.f32.gmra.mxu0 %v11183
    %v11327 = vpop.f32.mrf.mxu0
    %v11328 = vadd.f32 %v11139, %v11327
    %v11329 = vpop.f32.mrf.mxu0
    %11330 = vmatprep.mubr.f32.mxu0 0.0
    %11331 = vmatmul.mubr.f32.gmra.mxu0 %v11186
    %v11332 = vpop.f32.mrf.mxu0
    %v11333 = vadd.f32 %v11139, %v11332
    %v11334 = vpop.f32.mrf.mxu0
    %11335 = vmatprep.mubr.f32.mxu0 0.0
    %11336 = vmatmul.mubr.f32.gmra.mxu0 %v11189
    %v11337 = vpop.f32.mrf.mxu0
    %v11338 = vadd.f32 %v11139, %v11337
    %v11339 = vpop.f32.mrf.mxu0
    %11340 = vdwg.mxu0
    %v11341 = vmul.f32 %v11258, 0.5
    %v11342 = vmul.f32 %v11263, 0.5
    %v11343 = vmul.f32 %v11268, 0.5
    %v11344 = vmul.f32 %v11273, 0.5
    %v11345 = vmul.f32 %v11278, 0.5
    %v11346 = vmul.f32 %v11283, 0.5
    %v11347 = vmul.f32 %v11288, 0.5
    %v11348 = vmul.f32 %v11293, 0.5
    %v11349 = vmul.f32 %v11298, 0.5
    %v11350 = vmul.f32 %v11303, 0.5
    %v11351 = vmul.f32 %v11308, 0.5
    %v11352 = vmul.f32 %v11313, 0.5
    %v11353 = vmul.f32 %v11318, 0.5
    %v11354 = vmul.f32 %v11323, 0.5
    %v11355 = vmul.f32 %v11328, 0.5
    %v11356 = vmul.f32 %v11333, 0.5
    %v11357 = vmul.f32 %v11338, 0.5
    %v11358 = vmul.f32 %v11258, 0.70710677
    %v11359 = vmul.f32 %v11263, 0.70710677
    %v11360 = vmul.f32 %v11268, 0.70710677
    %v11361 = vmul.f32 %v11273, 0.70710677
    %v11362 = vmul.f32 %v11278, 0.70710677
    %v11363 = vmul.f32 %v11283, 0.70710677
    %v11364 = vmul.f32 %v11288, 0.70710677
    %v11365 = vmul.f32 %v11293, 0.70710677
    %v11366 = vmul.f32 %v11298, 0.70710677
    %v11367 = vmul.f32 %v11303, 0.70710677
    %v11368 = vmul.f32 %v11308, 0.70710677
    %v11369 = vmul.f32 %v11313, 0.70710677
    %v11370 = vmul.f32 %v11318, 0.70710677
    %v11371 = vmul.f32 %v11323, 0.70710677
    %v11372 = vmul.f32 %v11328, 0.70710677
    %v11373 = vmul.f32 %v11333, 0.70710677
    %v11374 = vmul.f32 %v11338, 0.70710677
    %v11375 = vand.u32 2147483647, %v11358
    %v11376 = vand.u32 2147483647, %v11359
    %v11377 = vand.u32 2147483647, %v11360
    %v11378 = vand.u32 2147483647, %v11361
    %v11379 = vand.u32 2147483647, %v11362
    %v11380 = vand.u32 2147483647, %v11363
    %v11381 = vand.u32 2147483647, %v11364
    %v11382 = vand.u32 2147483647, %v11365
    %v11383 = vand.u32 2147483647, %v11366
    %v11384 = vand.u32 2147483647, %v11367
    %v11385 = vand.u32 2147483647, %v11368
    %v11386 = vand.u32 2147483647, %v11369
    %v11387 = vand.u32 2147483647, %v11370
    %v11388 = vand.u32 2147483647, %v11371
    %v11389 = vand.u32 2147483647, %v11372
    %v11390 = vand.u32 2147483647, %v11373
    %v11391 = vand.u32 2147483647, %v11374
    %v11392 = vmul.f32 %v11375, 0.3275911
    %v11393 = vmul.f32 %v11376, 0.3275911
    %v11394 = vmul.f32 %v11377, 0.3275911
    %v11395 = vmul.f32 %v11378, 0.3275911
    %v11396 = vmul.f32 %v11379, 0.3275911
    %v11397 = vmul.f32 %v11380, 0.3275911
    %v11398 = vmul.f32 %v11381, 0.3275911
    %v11399 = vmul.f32 %v11382, 0.3275911
    %v11400 = vmul.f32 %v11383, 0.3275911
    %v11401 = vmul.f32 %v11384, 0.3275911
    %v11402 = vmul.f32 %v11385, 0.3275911
    %v11403 = vmul.f32 %v11386, 0.3275911
    %v11404 = vmul.f32 %v11387, 0.3275911
    %v11405 = vmul.f32 %v11388, 0.3275911
    %v11406 = vmul.f32 %v11389, 0.3275911
    %v11407 = vmul.f32 %v11390, 0.3275911
    %v11408 = vmul.f32 %v11391, 0.3275911
    %v11409 = vadd.f32 %v11392, 1.0
    %v11410 = vadd.f32 %v11393, 1.0
    %v11411 = vadd.f32 %v11394, 1.0
    %v11412 = vadd.f32 %v11395, 1.0
    %v11413 = vadd.f32 %v11396, 1.0
    %v11414 = vadd.f32 %v11397, 1.0
    %v11415 = vadd.f32 %v11398, 1.0
    %v11416 = vadd.f32 %v11399, 1.0
    %v11417 = vadd.f32 %v11400, 1.0
    %v11418 = vadd.f32 %v11401, 1.0
    %v11419 = vadd.f32 %v11402, 1.0
    %v11420 = vadd.f32 %v11403, 1.0
    %v11421 = vadd.f32 %v11404, 1.0
    %v11422 = vadd.f32 %v11405, 1.0
    %v11423 = vadd.f32 %v11406, 1.0
    %v11424 = vadd.f32 %v11407, 1.0
    %v11425 = vadd.f32 %v11408, 1.0
    %v11426 = vrcp.pop %v11409
    %v11427 = vmul.f32 1.0, %v11426
    %v11428 = vrcp.pop %v11410
    %v11429 = vmul.f32 1.0, %v11428
    %v11430 = vrcp.pop %v11411
    %v11431 = vmul.f32 1.0, %v11430
    %v11432 = vrcp.pop %v11412
    %v11433 = vmul.f32 1.0, %v11432
    %v11434 = vrcp.pop %v11413
    %v11435 = vmul.f32 1.0, %v11434
    %v11436 = vrcp.pop %v11414
    %v11437 = vmul.f32 1.0, %v11436
    %v11438 = vrcp.pop %v11415
    %v11439 = vmul.f32 1.0, %v11438
    %v11440 = vrcp.pop %v11416
    %v11441 = vmul.f32 1.0, %v11440
    %v11442 = vrcp.pop %v11417
    %v11443 = vmul.f32 1.0, %v11442
    %v11444 = vrcp.pop %v11418
    %v11445 = vmul.f32 1.0, %v11444
    %v11446 = vrcp.pop %v11419
    %v11447 = vmul.f32 1.0, %v11446
    %v11448 = vrcp.pop %v11420
    %v11449 = vmul.f32 1.0, %v11448
    %v11450 = vrcp.pop %v11421
    %v11451 = vmul.f32 1.0, %v11450
    %v11452 = vrcp.pop %v11422
    %v11453 = vmul.f32 1.0, %v11452
    %v11454 = vrcp.pop %v11423
    %v11455 = vmul.f32 1.0, %v11454
    %v11456 = vrcp.pop %v11424
    %v11457 = vmul.f32 1.0, %v11456
    %v11458 = vrcp.pop %v11425
    %v11459 = vmul.f32 1.0, %v11458
    %v11460 = vmul.f32 %v11427, 1.0614054
    %v11461 = vmul.f32 %v11429, 1.0614054
    %v11462 = vmul.f32 %v11431, 1.0614054
    %v11463 = vmul.f32 %v11433, 1.0614054
    %v11464 = vmul.f32 %v11435, 1.0614054
    %v11465 = vmul.f32 %v11437, 1.0614054
    %v11466 = vmul.f32 %v11439, 1.0614054
    %v11467 = vmul.f32 %v11441, 1.0614054
    %v11468 = vmul.f32 %v11443, 1.0614054
    %v11469 = vmul.f32 %v11445, 1.0614054
    %v11470 = vmul.f32 %v11447, 1.0614054
    %v11471 = vmul.f32 %v11449, 1.0614054
    %v11472 = vmul.f32 %v11451, 1.0614054
    %v11473 = vmul.f32 %v11453, 1.0614054
    %v11474 = vmul.f32 %v11455, 1.0614054
    %v11475 = vmul.f32 %v11457, 1.0614054
    %v11476 = vmul.f32 %v11459, 1.0614054
    %v11477 = vadd.f32 %v11460, -1.4531521
    %v11478 = vadd.f32 %v11461, -1.4531521
    %v11479 = vadd.f32 %v11462, -1.4531521
    %v11480 = vadd.f32 %v11463, -1.4531521
    %v11481 = vadd.f32 %v11464, -1.4531521
    %v11482 = vadd.f32 %v11465, -1.4531521
    %v11483 = vadd.f32 %v11466, -1.4531521
    %v11484 = vadd.f32 %v11467, -1.4531521
    %v11485 = vadd.f32 %v11468, -1.4531521
    %v11486 = vadd.f32 %v11469, -1.4531521
    %v11487 = vadd.f32 %v11470, -1.4531521
    %v11488 = vadd.f32 %v11471, -1.4531521
    %v11489 = vadd.f32 %v11472, -1.4531521
    %v11490 = vadd.f32 %v11473, -1.4531521
    %v11491 = vadd.f32 %v11474, -1.4531521
    %v11492 = vadd.f32 %v11475, -1.4531521
    %v11493 = vadd.f32 %v11476, -1.4531521
    %v11494 = vmul.f32 %v11477, %v11427
    %v11495 = vmul.f32 %v11478, %v11429
    %v11496 = vmul.f32 %v11479, %v11431
    %v11497 = vmul.f32 %v11480, %v11433
    %v11498 = vmul.f32 %v11481, %v11435
    %v11499 = vmul.f32 %v11482, %v11437
    %v11500 = vmul.f32 %v11483, %v11439
    %v11501 = vmul.f32 %v11484, %v11441
    %v11502 = vmul.f32 %v11485, %v11443
    %v11503 = vmul.f32 %v11486, %v11445
    %v11504 = vmul.f32 %v11487, %v11447
    %v11505 = vmul.f32 %v11488, %v11449
    %v11506 = vmul.f32 %v11489, %v11451
    %v11507 = vmul.f32 %v11490, %v11453
    %v11508 = vmul.f32 %v11491, %v11455
    %v11509 = vmul.f32 %v11492, %v11457
    %v11510 = vmul.f32 %v11493, %v11459
    %v11511 = vadd.f32 %v11494, 1.4214138
    %v11512 = vadd.f32 %v11495, 1.4214138
    %v11513 = vadd.f32 %v11496, 1.4214138
    %v11514 = vadd.f32 %v11497, 1.4214138
    %v11515 = vadd.f32 %v11498, 1.4214138
    %v11516 = vadd.f32 %v11499, 1.4214138
    %v11517 = vadd.f32 %v11500, 1.4214138
    %v11518 = vadd.f32 %v11501, 1.4214138
    %v11519 = vadd.f32 %v11502, 1.4214138
    %v11520 = vadd.f32 %v11503, 1.4214138
    %v11521 = vadd.f32 %v11504, 1.4214138
    %v11522 = vadd.f32 %v11505, 1.4214138
    %v11523 = vadd.f32 %v11506, 1.4214138
    %v11524 = vadd.f32 %v11507, 1.4214138
    %v11525 = vadd.f32 %v11508, 1.4214138
    %v11526 = vadd.f32 %v11509, 1.4214138
    %v11527 = vadd.f32 %v11510, 1.4214138
    %v11528 = vmul.f32 %v11511, %v11427
    %v11529 = vmul.f32 %v11512, %v11429
    %v11530 = vmul.f32 %v11513, %v11431
    %v11531 = vmul.f32 %v11514, %v11433
    %v11532 = vmul.f32 %v11515, %v11435
    %v11533 = vmul.f32 %v11516, %v11437
    %v11534 = vmul.f32 %v11517, %v11439
    %v11535 = vmul.f32 %v11518, %v11441
    %v11536 = vmul.f32 %v11519, %v11443
    %v11537 = vmul.f32 %v11520, %v11445
    %v11538 = vmul.f32 %v11521, %v11447
    %v11539 = vmul.f32 %v11522, %v11449
    %v11540 = vmul.f32 %v11523, %v11451
    %v11541 = vmul.f32 %v11524, %v11453
    %v11542 = vmul.f32 %v11525, %v11455
    %v11543 = vmul.f32 %v11526, %v11457
    %v11544 = vmul.f32 %v11527, %v11459
    %v11545 = vadd.f32 %v11528, -0.28449672
    %v11546 = vadd.f32 %v11529, -0.28449672
    %v11547 = vadd.f32 %v11530, -0.28449672
    %v11548 = vadd.f32 %v11531, -0.28449672
    %v11549 = vadd.f32 %v11532, -0.28449672
    %v11550 = vadd.f32 %v11533, -0.28449672
    %v11551 = vadd.f32 %v11534, -0.28449672
    %v11552 = vadd.f32 %v11535, -0.28449672
    %v11553 = vadd.f32 %v11536, -0.28449672
    %v11554 = vadd.f32 %v11537, -0.28449672
    %v11555 = vadd.f32 %v11538, -0.28449672
    %v11556 = vadd.f32 %v11539, -0.28449672
    %v11557 = vadd.f32 %v11540, -0.28449672
    %v11558 = vadd.f32 %v11541, -0.28449672
    %v11559 = vadd.f32 %v11542, -0.28449672
    %v11560 = vadd.f32 %v11543, -0.28449672
    %v11561 = vadd.f32 %v11544, -0.28449672
    %v11562 = vmul.f32 %v11545, %v11427
    %v11563 = vmul.f32 %v11546, %v11429
    %v11564 = vmul.f32 %v11547, %v11431
    %v11565 = vmul.f32 %v11548, %v11433
    %v11566 = vmul.f32 %v11549, %v11435
    %v11567 = vmul.f32 %v11550, %v11437
    %v11568 = vmul.f32 %v11551, %v11439
    %v11569 = vmul.f32 %v11552, %v11441
    %v11570 = vmul.f32 %v11553, %v11443
    %v11571 = vmul.f32 %v11554, %v11445
    %v11572 = vmul.f32 %v11555, %v11447
    %v11573 = vmul.f32 %v11556, %v11449
    %v11574 = vmul.f32 %v11557, %v11451
    %v11575 = vmul.f32 %v11558, %v11453
    %v11576 = vmul.f32 %v11559, %v11455
    %v11577 = vmul.f32 %v11560, %v11457
    %v11578 = vmul.f32 %v11561, %v11459
    %v11579 = vadd.f32 %v11562, 0.2548296
    %v11580 = vadd.f32 %v11563, 0.2548296
    %v11581 = vadd.f32 %v11564, 0.2548296
    %v11582 = vadd.f32 %v11565, 0.2548296
    %v11583 = vadd.f32 %v11566, 0.2548296
    %v11584 = vadd.f32 %v11567, 0.2548296
    %v11585 = vadd.f32 %v11568, 0.2548296
    %v11586 = vadd.f32 %v11569, 0.2548296
    %v11587 = vadd.f32 %v11570, 0.2548296
    %v11588 = vadd.f32 %v11571, 0.2548296
    %v11589 = vadd.f32 %v11572, 0.2548296
    %v11590 = vadd.f32 %v11573, 0.2548296
    %v11591 = vadd.f32 %v11574, 0.2548296
    %v11592 = vadd.f32 %v11575, 0.2548296
    %v11593 = vadd.f32 %v11576, 0.2548296
    %v11594 = vadd.f32 %v11577, 0.2548296
    %v11595 = vadd.f32 %v11578, 0.2548296
    %v11596 = vmul.f32 %v11579, %v11427
    %v11597 = vmul.f32 %v11580, %v11429
    %v11598 = vmul.f32 %v11581, %v11431
    %v11599 = vmul.f32 %v11582, %v11433
    %v11600 = vmul.f32 %v11583, %v11435
    %v11601 = vmul.f32 %v11584, %v11437
    %v11602 = vmul.f32 %v11585, %v11439
    %v11603 = vmul.f32 %v11586, %v11441
    %v11604 = vmul.f32 %v11587, %v11443
    %v11605 = vmul.f32 %v11588, %v11445
    %v11606 = vmul.f32 %v11589, %v11447
    %v11607 = vmul.f32 %v11590, %v11449
    %v11608 = vmul.f32 %v11591, %v11451
    %v11609 = vmul.f32 %v11592, %v11453
    %v11610 = vmul.f32 %v11593, %v11455
    %v11611 = vmul.f32 %v11594, %v11457
    %v11612 = vmul.f32 %v11595, %v11459
    %v11613 = vsub.f32 0.0, %v11375
    %v11614 = vsub.f32 0.0, %v11376
    %v11615 = vsub.f32 0.0, %v11377
    %v11616 = vsub.f32 0.0, %v11378
    %v11617 = vsub.f32 0.0, %v11379
    %v11618 = vsub.f32 0.0, %v11380
    %v11619 = vsub.f32 0.0, %v11381
    %v11620 = vsub.f32 0.0, %v11382
    %v11621 = vsub.f32 0.0, %v11383
    %v11622 = vsub.f32 0.0, %v11384
    %v11623 = vsub.f32 0.0, %v11385
    %v11624 = vsub.f32 0.0, %v11386
    %v11625 = vsub.f32 0.0, %v11387
    %v11626 = vsub.f32 0.0, %v11388
    %v11627 = vsub.f32 0.0, %v11389
    %v11628 = vsub.f32 0.0, %v11390
    %v11629 = vsub.f32 0.0, %v11391
    %v11630 = vmul.f32 %v11613, %v11375
    %v11631 = vmul.f32 %v11614, %v11376
    %v11632 = vmul.f32 %v11615, %v11377
    %v11633 = vmul.f32 %v11616, %v11378
    %v11634 = vmul.f32 %v11617, %v11379
    %v11635 = vmul.f32 %v11618, %v11380
    %v11636 = vmul.f32 %v11619, %v11381
    %v11637 = vmul.f32 %v11620, %v11382
    %v11638 = vmul.f32 %v11621, %v11383
    %v11639 = vmul.f32 %v11622, %v11384
    %v11640 = vmul.f32 %v11623, %v11385
    %v11641 = vmul.f32 %v11624, %v11386
    %v11642 = vmul.f32 %v11625, %v11387
    %v11643 = vmul.f32 %v11626, %v11388
    %v11644 = vmul.f32 %v11627, %v11389
    %v11645 = vmul.f32 %v11628, %v11390
    %v11646 = vmul.f32 %v11629, %v11391
    %v11647 = vmul.f32 %v11630, 1.442695
    %v11648 = vpow.pop %v11647
    %v11649 = vmul.f32 %v11631, 1.442695
    %v11650 = vpow.pop %v11649
    %v11651 = vmul.f32 %v11632, 1.442695
    %v11652 = vpow.pop %v11651
    %v11653 = vmul.f32 %v11633, 1.442695
    %v11654 = vpow.pop %v11653
    %v11655 = vmul.f32 %v11634, 1.442695
    %v11656 = vpow.pop %v11655
    %v11657 = vmul.f32 %v11635, 1.442695
    %v11658 = vpow.pop %v11657
    %v11659 = vmul.f32 %v11636, 1.442695
    %v11660 = vpow.pop %v11659
    %v11661 = vmul.f32 %v11637, 1.442695
    %v11662 = vpow.pop %v11661
    %v11663 = vmul.f32 %v11638, 1.442695
    %v11664 = vpow.pop %v11663
    %v11665 = vmul.f32 %v11639, 1.442695
    %v11666 = vpow.pop %v11665
    %v11667 = vmul.f32 %v11640, 1.442695
    %v11668 = vpow.pop %v11667
    %v11669 = vmul.f32 %v11641, 1.442695
    %v11670 = vpow.pop %v11669
    %v11671 = vmul.f32 %v11642, 1.442695
    %v11672 = vpow.pop %v11671
    %v11673 = vmul.f32 %v11643, 1.442695
    %v11674 = vpow.pop %v11673
    %v11675 = vmul.f32 %v11644, 1.442695
    %v11676 = vpow.pop %v11675
    %v11677 = vmul.f32 %v11645, 1.442695
    %v11678 = vpow.pop %v11677
    %v11679 = vmul.f32 %v11646, 1.442695
    %v11680 = vpow.pop %v11679
    %v11681 = vmul.f32 %v11596, %v11648
    %v11682 = vmul.f32 %v11597, %v11650
    %v11683 = vmul.f32 %v11598, %v11652
    %v11684 = vmul.f32 %v11599, %v11654
    %v11685 = vmul.f32 %v11600, %v11656
    %v11686 = vmul.f32 %v11601, %v11658
    %v11687 = vmul.f32 %v11602, %v11660
    %v11688 = vmul.f32 %v11603, %v11662
    %v11689 = vmul.f32 %v11604, %v11664
    %v11690 = vmul.f32 %v11605, %v11666
    %v11691 = vmul.f32 %v11606, %v11668
    %v11692 = vmul.f32 %v11607, %v11670
    %v11693 = vmul.f32 %v11608, %v11672
    %v11694 = vmul.f32 %v11609, %v11674
    %v11695 = vmul.f32 %v11610, %v11676
    %v11696 = vmul.f32 %v11611, %v11678
    %v11697 = vmul.f32 %v11612, %v11680
    %v11698 = vsub.f32 1.0, %v11681
    %v11699 = vsub.f32 1.0, %v11682
    %v11700 = vsub.f32 1.0, %v11683
    %v11701 = vsub.f32 1.0, %v11684
    %v11702 = vsub.f32 1.0, %v11685
    %v11703 = vsub.f32 1.0, %v11686
    %v11704 = vsub.f32 1.0, %v11687
    %v11705 = vsub.f32 1.0, %v11688
    %v11706 = vsub.f32 1.0, %v11689
    %v11707 = vsub.f32 1.0, %v11690
    %v11708 = vsub.f32 1.0, %v11691
    %v11709 = vsub.f32 1.0, %v11692
    %v11710 = vsub.f32 1.0, %v11693
    %v11711 = vsub.f32 1.0, %v11694
    %v11712 = vsub.f32 1.0, %v11695
    %v11713 = vsub.f32 1.0, %v11696
    %v11714 = vsub.f32 1.0, %v11697
    %vm11715 = vcmp.ge.f32.partialorder %v11358, 0.0
    %vm11716 = vcmp.ge.f32.partialorder %v11359, 0.0
    %vm11717 = vcmp.ge.f32.partialorder %v11360, 0.0
    %vm11718 = vcmp.ge.f32.partialorder %v11361, 0.0
    %vm11719 = vcmp.ge.f32.partialorder %v11362, 0.0
    %vm11720 = vcmp.ge.f32.partialorder %v11363, 0.0
    %vm11721 = vcmp.ge.f32.partialorder %v11364, 0.0
    %vm11722 = vcmp.ge.f32.partialorder %v11365, 0.0
    %vm11723 = vcmp.ge.f32.partialorder %v11366, 0.0
    %vm11724 = vcmp.ge.f32.partialorder %v11367, 0.0
    %vm11725 = vcmp.ge.f32.partialorder %v11368, 0.0
    %vm11726 = vcmp.ge.f32.partialorder %v11369, 0.0
    %vm11727 = vcmp.ge.f32.partialorder %v11370, 0.0
    %vm11728 = vcmp.ge.f32.partialorder %v11371, 0.0
    %vm11729 = vcmp.ge.f32.partialorder %v11372, 0.0
    %vm11730 = vcmp.ge.f32.partialorder %v11373, 0.0
    %vm11731 = vcmp.ge.f32.partialorder %v11374, 0.0
    %v11732 = vsub.f32 0.0, %v11698
    %v11733 = vsub.f32 0.0, %v11699
    %v11734 = vsub.f32 0.0, %v11700
    %v11735 = vsub.f32 0.0, %v11701
    %v11736 = vsub.f32 0.0, %v11702
    %v11737 = vsub.f32 0.0, %v11703
    %v11738 = vsub.f32 0.0, %v11704
    %v11739 = vsub.f32 0.0, %v11705
    %v11740 = vsub.f32 0.0, %v11706
    %v11741 = vsub.f32 0.0, %v11707
    %v11742 = vsub.f32 0.0, %v11708
    %v11743 = vsub.f32 0.0, %v11709
    %v11744 = vsub.f32 0.0, %v11710
    %v11745 = vsub.f32 0.0, %v11711
    %v11746 = vsub.f32 0.0, %v11712
    %v11747 = vsub.f32 0.0, %v11713
    %v11748 = vsub.f32 0.0, %v11714
    %v11749 = vsel %vm11715, %v11698, %v11732
    %v11750 = vsel %vm11716, %v11699, %v11733
    %v11751 = vsel %vm11717, %v11700, %v11734
    %v11752 = vsel %vm11718, %v11701, %v11735
    %v11753 = vsel %vm11719, %v11702, %v11736
    %v11754 = vsel %vm11720, %v11703, %v11737
    %v11755 = vsel %vm11721, %v11704, %v11738
    %v11756 = vsel %vm11722, %v11705, %v11739
    %v11757 = vsel %vm11723, %v11706, %v11740
    %v11758 = vsel %vm11724, %v11707, %v11741
    %v11759 = vsel %vm11725, %v11708, %v11742
    %v11760 = vsel %vm11726, %v11709, %v11743
    %v11761 = vsel %vm11727, %v11710, %v11744
    %v11762 = vsel %vm11728, %v11711, %v11745
    %v11763 = vsel %vm11729, %v11712, %v11746
    %v11764 = vsel %vm11730, %v11713, %v11747
    %v11765 = vsel %vm11731, %v11714, %v11748
    %v11766 = vadd.f32 %v11749, 1.0
    %v11767 = vadd.f32 %v11750, 1.0
    %v11768 = vadd.f32 %v11751, 1.0
    %v11769 = vadd.f32 %v11752, 1.0
    %v11770 = vadd.f32 %v11753, 1.0
    %v11771 = vadd.f32 %v11754, 1.0
    %v11772 = vadd.f32 %v11755, 1.0
    %v11773 = vadd.f32 %v11756, 1.0
    %v11774 = vadd.f32 %v11757, 1.0
    %v11775 = vadd.f32 %v11758, 1.0
    %v11776 = vadd.f32 %v11759, 1.0
    %v11777 = vadd.f32 %v11760, 1.0
    %v11778 = vadd.f32 %v11761, 1.0
    %v11779 = vadd.f32 %v11762, 1.0
    %v11780 = vadd.f32 %v11763, 1.0
    %v11781 = vadd.f32 %v11764, 1.0
    %v11782 = vadd.f32 %v11765, 1.0
    %v11783 = vmul.f32 %v11341, %v11766
    %v11784 = vmul.f32 %v11342, %v11767
    %v11785 = vmul.f32 %v11343, %v11768
    %v11786 = vmul.f32 %v11344, %v11769
    %v11787 = vmul.f32 %v11345, %v11770
    %v11788 = vmul.f32 %v11346, %v11771
    %v11789 = vmul.f32 %v11347, %v11772
    %v11790 = vmul.f32 %v11348, %v11773
    %v11791 = vmul.f32 %v11349, %v11774
    %v11792 = vmul.f32 %v11350, %v11775
    %v11793 = vmul.f32 %v11351, %v11776
    %v11794 = vmul.f32 %v11352, %v11777
    %v11795 = vmul.f32 %v11353, %v11778
    %v11796 = vmul.f32 %v11354, %v11779
    %v11797 = vmul.f32 %v11355, %v11780
    %v11798 = vmul.f32 %v11356, %v11781
    %v11799 = vmul.f32 %v11357, %v11782
    %s11800 = scalar_lea.vmem %s15, 64
    %v11801 = vld [vmem:[%s11800] sm:$0xff]
    %v11802 = vld [vmem:[%s11800 + $0x8] sm:$0xff]
    %v11803 = vld [vmem:[%s11800 + $0x10] sm:$0xff]
    %v11804 = vld [vmem:[%s11800 + $0x18] sm:$0xff]
    %v11805 = vld [vmem:[%s11800 + $0x20] sm:$0xff]
    %v11806 = vld [vmem:[%s11800 + $0x28] sm:$0xff]
    %v11807 = vld [vmem:[%s11800 + $0x30] sm:$0xff]
    %v11808 = vld [vmem:[%s11800 + $0x38] sm:$0xff]
    %v11809 = vld [vmem:[%s16 + $0x1] sm:$0x1]
    %v11810 = vlaneseq
    %v11811 = vshrl.u32 %v11810, 7
    %v11812 = vsub.s32 0, %v11811
    %v11813 = vrot.slane %v11809, %v11812
    %v11815 = vsel %vm6014, %v11783, 0
    %v11818 = vsel %vm6014, %v11784, 0
    %v11821 = vsel %vm6014, %v11785, 0
    %v11824 = vsel %vm6014, %v11786, 0
    %v11827 = vsel %vm6014, %v11787, 0
    %v11830 = vsel %vm6014, %v11788, 0
    %v11833 = vsel %vm6014, %v11789, 0
    %v11836 = vsel %vm6014, %v11790, 0
    %v11839 = vsel %vm6014, %v11791, 0
    %v11842 = vsel %vm6014, %v11792, 0
    %v11845 = vsel %vm6014, %v11793, 0
    %v11848 = vsel %vm6014, %v11794, 0
    %v11851 = vsel %vm6014, %v11795, 0
    %v11854 = vsel %vm6014, %v11796, 0
    %v11857 = vsel %vm6014, %v11797, 0
    %v11860 = vsel %vm6014, %v11798, 0
    %v11863 = vsel %vm6014, %v11799, 0
    %11865 = vmatprep.subr.mxu0 0.0
    %11866 = vmatpush1.msra.mxu0 0.0
    %11867 = vmatprep.subr.mxu0 0.0
    %11868 = vmatpush1.msra.mxu0 0.0
    %11869 = vmatprep.subr.mxu0 0.0
    %11870 = vmatpush1.msra.mxu0 0.0
    %11871 = vmatprep.subr.mxu0 0.0
    %11872 = vmatpush1.msra.mxu0 0.0
    %11873 = vmatprep.subr.mxu0 0.0
    %11874 = vmatpush1.msra.mxu0 0.0
    %11875 = vmatprep.subr.mxu0 0.0
    %11876 = vmatpush1.msra.mxu0 0.0
    %11877 = vmatprep.subr.mxu0 0.0
    %11878 = vmatpush1.msra.mxu0 0.0
    %11879 = vmatprep.subr.mxu0 0.0
    %11880 = vmatpush1.msra.mxu0 0.0
    %11881 = vmatprep.subr.mxu0 0.0
    %11882 = vmatpush1.msra.mxu0 %v11808
    %11883 = vmatprep.subr.mxu0 0.0
    %11884 = vmatpush1.msra.mxu0 %v11807
    %11885 = vmatprep.subr.mxu0 0.0
    %11886 = vmatpush1.msra.mxu0 %v11806
    %11887 = vmatprep.subr.mxu0 0.0
    %11888 = vmatpush1.msra.mxu0 %v11805
    %11889 = vmatprep.subr.mxu0 0.0
    %11890 = vmatpush1.msra.mxu0 %v11804
    %11891 = vmatprep.subr.mxu0 0.0
    %11892 = vmatpush1.msra.mxu0 %v11803
    %11893 = vmatprep.subr.mxu0 0.0
    %11894 = vmatpush1.msra.mxu0 %v11802
    %11895 = vmatprep.subr.mxu0 0.0
    %11896 = vmatpush1.msra.mxu0 %v11801
    %11897 = vmatprep.subr.mxu0 0.0
    %11898 = vmatpush2.msra.mxu0 0.0
    %11899 = vmatprep.subr.mxu0 0.0
    %11900 = vmatpush2.msra.mxu0 0.0
    %11901 = vmatprep.subr.mxu0 0.0
    %11902 = vmatpush2.msra.mxu0 0.0
    %11903 = vmatprep.subr.mxu0 0.0
    %11904 = vmatpush2.msra.mxu0 0.0
    %11905 = vmatprep.subr.mxu0 0.0
    %11906 = vmatpush2.msra.mxu0 0.0
    %11907 = vmatprep.subr.mxu0 0.0
    %11908 = vmatpush2.msra.mxu0 0.0
    %11909 = vmatprep.subr.mxu0 0.0
    %11910 = vmatpush2.msra.mxu0 0.0
    %11911 = vmatprep.subr.mxu0 0.0
    %11912 = vmatpush2.msra.mxu0 0.0
    %11913 = vmatprep.subr.mxu0 0.0
    %11914 = vmatpush2.msra.mxu0 0.0
    %11915 = vmatprep.subr.mxu0 0.0
    %11916 = vmatpush2.msra.mxu0 0.0
    %11917 = vmatprep.subr.mxu0 0.0
    %11918 = vmatpush2.msra.mxu0 0.0
    %11919 = vmatprep.subr.mxu0 0.0
    %11920 = vmatpush2.msra.mxu0 0.0
    %11921 = vmatprep.subr.mxu0 0.0
    %11922 = vmatpush2.msra.mxu0 0.0
    %11923 = vmatprep.subr.mxu0 0.0
    %11924 = vmatpush2.msra.mxu0 0.0
    %11925 = vmatprep.subr.mxu0 0.0
    %11926 = vmatpush2.msra.mxu0 0.0
    %11927 = vmatprep.subr.mxu0 0.0
    %11928 = vmatpush2.msra.mxu0 0.0
    %11929 = vmatprep.mubr.f32.mxu0 0.0
    %11930 = vmatmul.mubr.f32.gmra.mxu0 %v11815
    %v11931 = vpop.f32.mrf.mxu0
    %v11932 = vadd.f32 %v11813, %v11931
    %v11933 = vpop.f32.mrf.mxu0
    %11934 = vmatprep.mubr.f32.mxu0 0.0
    %11935 = vmatmul.mubr.f32.gmra.mxu0 %v11818
    %v11936 = vpop.f32.mrf.mxu0
    %v11937 = vpop.f32.mrf.mxu0
    %11938 = vmatprep.mubr.f32.mxu0 0.0
    %11939 = vmatmul.mubr.f32.gmra.mxu0 %v11821
    %v11940 = vpop.f32.mrf.mxu0
    %v11941 = vpop.f32.mrf.mxu0
    %11942 = vmatprep.mubr.f32.mxu0 0.0
    %11943 = vmatmul.mubr.f32.gmra.mxu0 %v11824
    %v11944 = vpop.f32.mrf.mxu0
    %v11945 = vpop.f32.mrf.mxu0
    %11946 = vmatprep.mubr.f32.mxu0 0.0
    %11947 = vmatmul.mubr.f32.gmra.mxu0 %v11827
    %v11948 = vpop.f32.mrf.mxu0
    %v11949 = vpop.f32.mrf.mxu0
    %11950 = vmatprep.mubr.f32.mxu0 0.0
    %11951 = vmatmul.mubr.f32.gmra.mxu0 %v11830
    %v11952 = vpop.f32.mrf.mxu0
    %v11953 = vpop.f32.mrf.mxu0
    %11954 = vmatprep.mubr.f32.mxu0 0.0
    %11955 = vmatmul.mubr.f32.gmra.mxu0 %v11833
    %v11956 = vpop.f32.mrf.mxu0
    %v11957 = vpop.f32.mrf.mxu0
    %11958 = vmatprep.mubr.f32.mxu0 0.0
    %11959 = vmatmul.mubr.f32.gmra.mxu0 %v11836
    %v11960 = vpop.f32.mrf.mxu0
    %v11961 = vpop.f32.mrf.mxu0
    %11962 = vmatprep.mubr.f32.mxu0 0.0
    %11963 = vmatmul.mubr.f32.gmra.mxu0 %v11839
    %v11964 = vpop.f32.mrf.mxu0
    %v11965 = vadd.f32 %v11813, %v11964
    %v11966 = vpop.f32.mrf.mxu0
    %11967 = vmatprep.mubr.f32.mxu0 0.0
    %11968 = vmatmul.mubr.f32.gmra.mxu0 %v11842
    %v11969 = vpop.f32.mrf.mxu0
    %v11970 = vpop.f32.mrf.mxu0
    %11971 = vmatprep.mubr.f32.mxu0 0.0
    %11972 = vmatmul.mubr.f32.gmra.mxu0 %v11845
    %v11973 = vpop.f32.mrf.mxu0
    %v11974 = vpop.f32.mrf.mxu0
    %11975 = vmatprep.mubr.f32.mxu0 0.0
    %11976 = vmatmul.mubr.f32.gmra.mxu0 %v11848
    %v11977 = vpop.f32.mrf.mxu0
    %v11978 = vpop.f32.mrf.mxu0
    %11979 = vmatprep.mubr.f32.mxu0 0.0
    %11980 = vmatmul.mubr.f32.gmra.mxu0 %v11851
    %v11981 = vpop.f32.mrf.mxu0
    %v11982 = vpop.f32.mrf.mxu0
    %11983 = vmatprep.mubr.f32.mxu0 0.0
    %11984 = vmatmul.mubr.f32.gmra.mxu0 %v11854
    %v11985 = vpop.f32.mrf.mxu0
    %v11986 = vpop.f32.mrf.mxu0
    %11987 = vmatprep.mubr.f32.mxu0 0.0
    %11988 = vmatmul.mubr.f32.gmra.mxu0 %v11857
    %v11989 = vpop.f32.mrf.mxu0
    %v11990 = vpop.f32.mrf.mxu0
    %11991 = vmatprep.mubr.f32.mxu0 0.0
    %11992 = vmatmul.mubr.f32.gmra.mxu0 %v11860
    %v11993 = vpop.f32.mrf.mxu0
    %v11994 = vpop.f32.mrf.mxu0
    %11995 = vmatprep.mubr.f32.mxu0 0.0
    %11996 = vmatmul.mubr.f32.gmra.mxu0 %v11863
    %v11997 = vpop.f32.mrf.mxu0
    %v11998 = vpop.f32.mrf.mxu0
    %11999 = vdwg.mxu0
    %v12000 = vadd.f32 %v10848, %v11932
    %v12001 = vadd.f32 %v10856, %v11965
    %v12002 = vsel %vm362, %v12000, %v12001
    %v12003 = vld [vmem:[%s17] sm:$0x1]
    %v12004 = vld [vmem:[%s18] sm:$0x1]
    %v12005 = vsel %vm480, %v12002, 0.0
    %12006 = vadd.xlane.f32.xlu0 %v12005
    %v12007 = vpop.xlane.xlu0 %12006
    %v12008 = vmul.f32 %v12007, %v484
    %v12009 = vsub.f32 %v12002, %v12008
    %v12010 = vmul.f32 %v12009, %v12009
    %v12011 = vsel %vm480, %v12010, 0.0
    %12012 = vadd.xlane.f32.xlu0 %v12011
    %v12013 = vpop.xlane.xlu0 %12012
    %v12014 = vmul.f32 %v12013, %v484
    %v12015 = vadd.f32 %v12014, 1e-05
    %v12016 = vrsqrt.pop %v12015
    %v12017 = vmul.f32 %v12009, %v12016
    %v12019 = vlaneseq
    %v12020 = vshrl.u32 %v12019, 7
    %v12021 = vsub.s32 0, %v12020
    %v12022 = vrot.slane %v12003, %v12021
    %v12024 = vmul.f32 %v12017, %v12022
    %v12026 = vlaneseq
    %v12027 = vshrl.u32 %v12026, 7
    %v12028 = vsub.s32 0, %v12027
    %v12029 = vrot.slane %v12004, %v12028
    %v12031 = vadd.f32 %v12024, %v12029
    %v12032 = vld [vmem:[%s19] sm:$0xff]
    %v12033 = vld [vmem:[%s19 + $0x8] sm:$0xff]
    %v12034 = vld [vmem:[%s19 + $0x10] sm:$0xff]
    %v12035 = vld [vmem:[%s19 + $0x18] sm:$0xff]
    %v12036 = vld [vmem:[%s20] sm:$0x1]
    %v12038 = vlaneseq
    %v12039 = vshrl.u32 %v12038, 7
    %v12040 = vsub.s32 0, %v12039
    %v12041 = vrot.slane %v12036, %v12040
    %v12044 = vsel %vm431, %v12031, 0
    %12046 = vmatprep.subr.mxu0 0.0
    %12047 = vmatpush1.msra.mxu0 0.0
    %12048 = vmatprep.subr.mxu0 0.0
    %12049 = vmatpush1.msra.mxu0 0.0
    %12050 = vmatprep.subr.mxu0 0.0
    %12051 = vmatpush1.msra.mxu0 0.0
    %12052 = vmatprep.subr.mxu0 0.0
    %12053 = vmatpush1.msra.mxu0 0.0
    %12054 = vmatprep.subr.mxu0 0.0
    %12055 = vmatpush1.msra.mxu0 0.0
    %12056 = vmatprep.subr.mxu0 0.0
    %12057 = vmatpush1.msra.mxu0 0.0
    %12058 = vmatprep.subr.mxu0 0.0
    %12059 = vmatpush1.msra.mxu0 0.0
    %12060 = vmatprep.subr.mxu0 0.0
    %12061 = vmatpush1.msra.mxu0 0.0
    %12062 = vmatprep.subr.mxu0 0.0
    %12063 = vmatpush1.msra.mxu0 0.0
    %12064 = vmatprep.subr.mxu0 0.0
    %12065 = vmatpush1.msra.mxu0 0.0
    %12066 = vmatprep.subr.mxu0 0.0
    %12067 = vmatpush1.msra.mxu0 0.0
    %12068 = vmatprep.subr.mxu0 0.0
    %12069 = vmatpush1.msra.mxu0 0.0
    %12070 = vmatprep.subr.mxu0 0.0
    %12071 = vmatpush1.msra.mxu0 %v12035
    %12072 = vmatprep.subr.mxu0 0.0
    %12073 = vmatpush1.msra.mxu0 %v12034
    %12074 = vmatprep.subr.mxu0 0.0
    %12075 = vmatpush1.msra.mxu0 %v12033
    %12076 = vmatprep.subr.mxu0 0.0
    %12077 = vmatpush1.msra.mxu0 %v12032
    %12078 = vmatprep.subr.mxu0 0.0
    %12079 = vmatpush2.msra.mxu0 0.0
    %12080 = vmatprep.subr.mxu0 0.0
    %12081 = vmatpush2.msra.mxu0 0.0
    %12082 = vmatprep.subr.mxu0 0.0
    %12083 = vmatpush2.msra.mxu0 0.0
    %12084 = vmatprep.subr.mxu0 0.0
    %12085 = vmatpush2.msra.mxu0 0.0
    %12086 = vmatprep.subr.mxu0 0.0
    %12087 = vmatpush2.msra.mxu0 0.0
    %12088 = vmatprep.subr.mxu0 0.0
    %12089 = vmatpush2.msra.mxu0 0.0
    %12090 = vmatprep.subr.mxu0 0.0
    %12091 = vmatpush2.msra.mxu0 0.0
    %12092 = vmatprep.subr.mxu0 0.0
    %12093 = vmatpush2.msra.mxu0 0.0
    %12094 = vmatprep.subr.mxu0 0.0
    %12095 = vmatpush2.msra.mxu0 0.0
    %12096 = vmatprep.subr.mxu0 0.0
    %12097 = vmatpush2.msra.mxu0 0.0
    %12098 = vmatprep.subr.mxu0 0.0
    %12099 = vmatpush2.msra.mxu0 0.0
    %12100 = vmatprep.subr.mxu0 0.0
    %12101 = vmatpush2.msra.mxu0 0.0
    %12102 = vmatprep.subr.mxu0 0.0
    %12103 = vmatpush2.msra.mxu0 0.0
    %12104 = vmatprep.subr.mxu0 0.0
    %12105 = vmatpush2.msra.mxu0 0.0
    %12106 = vmatprep.subr.mxu0 0.0
    %12107 = vmatpush2.msra.mxu0 0.0
    %12108 = vmatprep.subr.mxu0 0.0
    %12109 = vmatpush2.msra.mxu0 0.0
    %12110 = vmatprep.mubr.f32.mxu0 0.0
    %12111 = vmatmul.mubr.f32.gmra.mxu0 %v12044
    %v12112 = vpop.f32.mrf.mxu0
    %v12113 = vadd.f32 %v12041, %v12112
    %v12114 = vpop.f32.mrf.mxu0
    %12115 = vdwg.mxu0
    %vm12116 = vcmask 74752
    %12117 = vst.msk [vmem:[#allocation2] sm:$0x3] %vm12116, %v12113
    // Predicated region
    $region86: #{tpu_custom_call.1} parent=1 // pred_check
      _
    $region87: #{tpu_custom_call.1} parent=1 // pred_check_branch
      %12119 = sbr.rel (0) target = $region89
    $region88: #{tpu_custom_call.1} parent=1 // pred_region
      %s12121 = ssub.s32 32, 32
      %12122 = vsyncadd [#allocation3], %s12121
      %s12124 = sshll.u32 [#allocation2], 4
      %s12125 = int_to_ptr.vmem [resolvable:$true] %s12124
      %12127 = dma.vmem_to_hbm [thread:$0]  %s12125, 32, %s21, [#allocation3]
    $region89: #{tpu_custom_call.1} parent=1 // pred_fallthru
      _
    // Predicated region
    $region90: #{tpu_custom_call.1} parent=1 // pred_check
      _
    $region91: #{tpu_custom_call.1} parent=1 // pred_check_branch
      %12129 = sbr.rel (0) target = $region93
    $region92: #{tpu_custom_call.1} parent=1 // pred_region
      %12130 = dma.done [#allocation3], 32
    $region93: #{tpu_custom_call.1} parent=1 // pred_fallthru
      _
    %12131 = vsyncpa [#allocation3], 1

</llo_original>
